<compile_context>
chip_gen: v7x
topology: tpu7x:2x2x1
jax: 0.10.0
libtpu: 0.0.40
codegen_flags: <defaults>
</compile_context>

<pallas_src>
import numpy as np
import jax
import jax.numpy as jnp
from jax.experimental import pallas as pl
from jax.experimental.pallas import tpu as pltpu


ACTION_DIM = 4
ATOMS = 51
PAD_ATOMS = 64                       # 51 -> 64 lanes per action head (masked)
C1_OUT = 16
C2_OUT = 32
N_TAPS = 9                           # 3x3 conv2 kernel taps
N_POS = 49                           # 7x7 conv2 output positions
FC1_IN = N_POS * C2_OUT              # 1568
FC1_OUT = 800
PATCH_W = N_TAPS * 9 + N_TAPS        # 81 patch pixels + 9 bias indicators = 90
OUT_W = ACTION_DIM * PAD_ATOMS       # 256 (lane-dense output width)


def _vmem():
    return pl.BlockSpec(memory_space=pltpu.MemorySpace.VMEM)


# ----------------------------------------------------------------------------
# Fused kernel: conv1 + conv2 + HWC flatten + fc1 + fc2 + per-action softmax
# ----------------------------------------------------------------------------
def _actor_img_kernel(p_ref, w1_ref, w2_ref, b2_ref, wf1_ref, bf1_ref,
                      wf2_ref, bf2_ref, o_ref, conv_scr, feat_scr):
    # p_ref  : (49*pb, 90) f32  conv patches (tap-major) + per-tap bias indicator
    # w1_ref : (90, 144)   f32  block-diagonal conv1 weight (bias rows folded in)
    # w2_ref : (144, 32)   f32  conv2 weight, rows ordered (tap, cin)
    # b2_ref : (1, 32)     f32
    # wf1_ref: (1568, 800) bf16   bf1_ref: (1, 800) f32
    # wf2_ref: (800, 256)  bf16   bf2_ref: (1, 256) f32  (4 heads x 64 atoms)
    # o_ref  : (B, 256)    f32  lane-dense probabilities (pad lanes = 0)
    # conv_scr: (49*pb, 32) f32 scratch, feat_scr: (B, 1568) f32 scratch
    bsz = o_ref.shape[0]
    pb = conv_scr.shape[0] // N_POS

    # conv1 for all 9 conv2 taps in one MXU push (ring positions come out 0
    # because both their patch pixels and their bias-indicator are 0), + ReLU.
    c1 = jnp.dot(p_ref[...], w1_ref[...], preferred_element_type=jnp.float32)
    c1 = jnp.maximum(c1, 0.0)                                       # (R, 144)

    # conv2: one GEMM + bias + ReLU.
    conv_scr[...] = jnp.maximum(
        jnp.dot(c1, w2_ref[...], preferred_element_type=jnp.float32)
        + b2_ref[...], 0.0)                                         # (R, 32)

    # HWC flatten entirely in VMEM: feat[b, p*32 + c] = conv[p*pb + b, c]
    for p in range(N_POS):
        feat_scr[:, p * C2_OUT:(p + 1) * C2_OUT] = \
            conv_scr[p * pb:p * pb + bsz, :]

    # fc1 + ReLU (bf16 weights, f32 accumulation).
    h = jnp.dot(feat_scr[...].astype(jnp.bfloat16), wf1_ref[...],
                preferred_element_type=jnp.float32)
    h = jnp.maximum(h + bf1_ref[...], 0.0).astype(jnp.bfloat16)     # (B, 800)

    # fc2: all 4 action heads merged into one lane-dense N=256 GEMM.
    logits = jnp.dot(h, wf2_ref[...], preferred_element_type=jnp.float32)
    logits = logits + bf2_ref[...]                                  # (B, 256)

    # Per-action masked softmax over the first ATOMS lanes of each 64-lane
    # group; exact normalization; pad lanes end up exactly 0.
    lane = jax.lax.broadcasted_iota(jnp.int32, (bsz, OUT_W), 1)
    probs = jnp.zeros_like(logits)
    for a in range(ACTION_DIM):
        lo = a * PAD_ATOMS
        sel = (lane >= lo) & (lane < lo + ATOMS)
        m = jnp.max(jnp.where(sel, logits, -1e30), axis=-1, keepdims=True)
        e = jnp.where(sel, jnp.exp(jnp.where(sel, logits, m) - m), 0.0)
        denom = jnp.sum(e, axis=-1, keepdims=True)
        probs = probs + e / denom                                   # exact
    o_ref[...] = probs


# ----------------------------------------------------------------------------
# Wrapper-side patch construction: one static gather on the ~6 KB input
# ----------------------------------------------------------------------------
def _patch_indices():
    """Static gather indices into the flattened 31x31 low-padded image plus a
    trailing constant-1 slot (index 961).  Per conv2 output position the layout
    is [81 conv1-patch pixels, tap-major] + [9 per-tap bias indicators].
    Taps whose conv1 position lies on conv2's zero-padding ring gather only
    zero-pad pixels and get indicator index 0 (a guaranteed-zero pad pixel)."""
    idx = np.zeros((N_POS, PATCH_W), np.int32)
    for p in range(N_POS):
        i, j = divmod(p, 7)
        for t in range(N_TAPS):
            kh, kw = divmod(t, 3)
            oi, oj = 2 * i + kh - 1, 2 * j + kw - 1      # conv1 output coords
            valid = (0 <= oi < 14) and (0 <= oj < 14)
            for k in range(9):
                k1h, k1w = divmod(k, 3)
                r = 4 * i + 2 * kh + k1h                 # row in (31,31) image
                c = 4 * j + 2 * kw + k1w
                idx[p, t * 9 + k] = r * 31 + c
            idx[p, 81 + t] = 31 * 31 if valid else 0     # 961 -> 1.0, 0 -> pad
    return idx


_PATCH_IDX = _patch_indices()


def _build_patches(x, pb):
    """(B,28,28) -> (49*pb, 90) patch matrix, position-major rows (p*pb + b)."""
    bsz = x.shape[0]
    xp = jnp.pad(x, ((0, 0), (3, 0), (3, 0)))                       # (B,31,31)
    flat = jnp.concatenate([xp.reshape(bsz, 31 * 31),
                            jnp.ones((bsz, 1), x.dtype)], axis=1)   # (B, 962)
    pt = flat[:, jnp.asarray(_PATCH_IDX)]                           # (B,49,90)
    pt = jnp.transpose(pt, (1, 0, 2))                               # (49,B,90)
    pt = jnp.pad(pt, ((0, 0), (0, pb - bsz), (0, 0)))               # (49,pb,90)
    return pt.reshape(N_POS * pb, PATCH_W)


# ----------------------------------------------------------------------------
# Forward pass
# ----------------------------------------------------------------------------
def actor_img_forward(params, x_nchw):
    x = x_nchw[:, 0].astype(jnp.float32)                 # (B, 28, 28), Cin = 1
    bsz = x.shape[0]
    pb = -(-bsz // 8) * 8                                # 8-aligned rows per pos
    patches = _build_patches(x, pb)                      # (49*pb, 90)

    out = pl.pallas_call(
        _actor_img_kernel,
        out_shape=jax.ShapeDtypeStruct((bsz, OUT_W), jnp.float32),
        in_specs=[_vmem()] * 8,
        out_specs=_vmem(),
        scratch_shapes=[pltpu.VMEM((N_POS * pb, C2_OUT), jnp.float32),
                        pltpu.VMEM((bsz, FC1_IN), jnp.float32)],
    )(patches, params["w_conv1_blk"], params["w_conv2_mat"], params["b_conv2"],
      params["w_fc1"], params["b_fc1"], params["w_fc2"], params["b_fc2"])

    return out.reshape(bsz, ACTION_DIM, PAD_ATOMS)[:, :, :ATOMS]    # (B, A, 51)


# ----------------------------------------------------------------------------
# Deterministic synthetic parameters (shapes from Actor_img.__init__)
# ----------------------------------------------------------------------------
def init_params(key):
    ks = jax.random.split(key, 8)

    def w_init(k, shape, fan_in, dtype=jnp.float32):
        return (jax.random.normal(k, shape, jnp.float32)
                / np.sqrt(float(fan_in))).astype(dtype)

    # natural layouts (used by the pure-JAX reference)
    w_c1 = w_init(ks[0], (9, C1_OUT), 9)                    # im2col (k, cout)
    b_c1 = 0.1 * jax.random.normal(ks[1], (C1_OUT,), jnp.float32)
    w_c2 = w_init(ks[2], (N_TAPS, C1_OUT, C2_OUT), N_TAPS * C1_OUT)
    b_c2 = 0.1 * jax.random.normal(ks[3], (C2_OUT,), jnp.float32)
    w_f1 = w_init(ks[4], (FC1_IN, FC1_OUT), FC1_IN, jnp.bfloat16)
    b_f1 = w_init(ks[5], (1, FC1_OUT), FC1_IN)
    w_f2 = w_init(ks[6], (ACTION_DIM, FC1_OUT, ATOMS), FC1_OUT, jnp.bfloat16)
    b_f2 = w_init(ks[7], (ACTION_DIM, ATOMS), FC1_OUT)

    # block-diagonal conv1 weight with the bias folded into the last 9 rows
    blk = np.zeros((PATCH_W, N_TAPS * C1_OUT), np.float32)  # (90, 144)
    w_c1_np, b_c1_np = np.asarray(w_c1), np.asarray(b_c1)
    for t in range(N_TAPS):
        blk[t * 9:(t + 1) * 9, t * C1_OUT:(t + 1) * C1_OUT] = w_c1_np
        blk[81 + t, t * C1_OUT:(t + 1) * C1_OUT] = b_c1_np

    # fc2 heads packed along lanes: column a*64 + u <-> (action a, atom u)
    w_f2_pk = jnp.pad(w_f2, ((0, 0), (0, 0), (0, PAD_ATOMS - ATOMS)))
    w_f2_pk = jnp.transpose(w_f2_pk, (1, 0, 2)).reshape(FC1_OUT, OUT_W)
    b_f2_pk = jnp.pad(b_f2, ((0, 0), (0, PAD_ATOMS - ATOMS))).reshape(1, OUT_W)

    return {
        # natural parameters (reference path)
        "w_conv1": w_c1, "b_conv1": b_c1,
        "w_conv2": w_c2, "b_conv2_vec": b_c2,
        # packed parameters (fused kernel path)
        "w_conv1_blk": jnp.asarray(blk),
        "w_conv2_mat": w_c2.reshape(N_TAPS * C1_OUT, C2_OUT),
        "b_conv2": b_c2.reshape(1, C2_OUT),
        "w_fc1": w_f1, "b_fc1": b_f1,
        "w_fc2": w_f2_pk.astype(jnp.bfloat16), "b_fc2": b_f2_pk,
    }


# ----------------------------------------------------------------------------
# Pure-JAX reference (straightforward im2col path) for correctness checking
# ----------------------------------------------------------------------------
def reference_forward(params, x_nchw):
    hp = jax.lax.Precision.HIGHEST
    x = x_nchw[:, 0].astype(jnp.float32)
    bsz = x.shape[0]
    # conv1
    xp = jnp.pad(x, ((0, 0), (1, 1), (1, 1)))
    cols = [xp[:, kh:kh + 28:2, kw:kw + 28:2]
            for kh in range(3) for kw in range(3)]
    p1 = jnp.stack(cols, -1).reshape(bsz * 196, 9)
    y1 = jnp.maximum(jnp.dot(p1, params["w_conv1"], precision=hp)
                     + params["b_conv1"], 0.0).reshape(bsz, 14, 14, C1_OUT)
    # conv2
    y1p = jnp.pad(y1, ((0, 0), (1, 1), (1, 1), (0, 0)))
    cols2 = [y1p[:, kh:kh + 14:2, kw:kw + 14:2, :]
             for kh in range(3) for kw in range(3)]
    p2 = jnp.concatenate(cols2, -1).reshape(bsz * N_POS, N_TAPS * C1_OUT)
    w2 = params["w_conv2"].reshape(N_TAPS * C1_OUT, C2_OUT)
    y2 = jnp.maximum(jnp.dot(p2, w2, precision=hp)
                     + params["b_conv2_vec"], 0.0)
    feat = y2.reshape(bsz, FC1_IN)                       # HWC flatten order
    # fc head (same bf16-weight / f32-accumulation path as the kernel)
    h = jnp.maximum(jnp.dot(feat.astype(jnp.bfloat16), params["w_fc1"],
                            preferred_element_type=jnp.float32)
                    + params["b_fc1"], 0.0).astype(jnp.bfloat16)
    logits = jnp.dot(h, params["w_fc2"],
                     preferred_element_type=jnp.float32) + params["b_fc2"]
    outs = [jax.nn.softmax(logits[:, a * PAD_ATOMS:a * PAD_ATOMS + ATOMS], -1)
            for a in range(ACTION_DIM)]
    return jnp.stack(outs, axis=1)                       # (B, A, ATOMS)


if __name__ == "__main__":
    key = jax.random.PRNGKey(0)
    pkey, xkey = jax.random.split(key)

    params = init_params(pkey)
    x = jax.random.normal(xkey, (2, 1, 28, 28), jnp.float32)   # NCHW input

    fwd = jax.jit(actor_img_forward)
    out = jax.block_until_ready(fwd(params, x))

    assert out.shape == (2, ACTION_DIM, ATOMS), out.shape
    out_np = np.asarray(out)
    assert np.all(out_np >= 0.0)
    np.testing.assert_allclose(out_np.sum(axis=-1), 1.0, atol=5e-4)

    ref = np.asarray(jax.jit(reference_forward)(params, x))
    np.testing.assert_allclose(out_np, ref, atol=5e-3, rtol=0.0)

    print("KERNEL_OK")
</pallas_src>

<mosaic_0001>
module attributes {stable_mosaic.version = 11 : i64} {
  func.func @_actor_img_kernel(%arg0: memref<392x90xf32, #tpu.memory_space<vmem>>, %arg1: memref<90x144xf32, #tpu.memory_space<vmem>>, %arg2: memref<144x32xf32, #tpu.memory_space<vmem>>, %arg3: memref<1x32xf32, #tpu.memory_space<vmem>>, %arg4: memref<1568x800xbf16, #tpu.memory_space<vmem>>, %arg5: memref<1x800xf32, #tpu.memory_space<vmem>>, %arg6: memref<800x256xbf16, #tpu.memory_space<vmem>>, %arg7: memref<1x256xf32, #tpu.memory_space<vmem>>, %arg8: memref<2x256xf32, #tpu.memory_space<vmem>>, %arg9: memref<392x32xf32, #tpu.memory_space<vmem>>, %arg10: memref<2x1568xf32, #tpu.memory_space<vmem>>) attributes {dimension_semantics = [], scalar_prefetch = 0 : i64, scratch_operands = 2 : i64, tpu.core_type = #tpu.core_type<tc>} {
    %c0 = arith.constant 0 : index
    %c0_0 = arith.constant 0 : index
    %0 = vector.load %arg0[%c0, %c0_0] : memref<392x90xf32, #tpu.memory_space<vmem>>, vector<392x90xf32>
    %c0_1 = arith.constant 0 : index
    %c0_2 = arith.constant 0 : index
    %1 = vector.load %arg1[%c0_1, %c0_2] : memref<90x144xf32, #tpu.memory_space<vmem>>, vector<90x144xf32>
    %cst = arith.constant dense<0.000000e+00> : vector<392x144xf32>
    %2 = tpu.matmul %0, %1, %cst {dimension_numbers = #tpu.dot_dimension_numbers<[1], [0], [0], [1], [0, 0, 1, 1], [], []>} : vector<392x90xf32>, vector<90x144xf32>, vector<392x144xf32> -> vector<392x144xf32>
    %cst_3 = arith.constant 0.000000e+00 : f32
    %3 = vector.broadcast %cst_3 : f32 to vector<392x144xf32>
    %4 = arith.maximumf %2, %3 : vector<392x144xf32>
    %c0_4 = arith.constant 0 : index
    %c0_5 = arith.constant 0 : index
    %5 = vector.load %arg2[%c0_4, %c0_5] : memref<144x32xf32, #tpu.memory_space<vmem>>, vector<144x32xf32>
    %cst_6 = arith.constant dense<0.000000e+00> : vector<392x32xf32>
    %6 = tpu.matmul %4, %5, %cst_6 {dimension_numbers = #tpu.dot_dimension_numbers<[1], [0], [0], [1], [0, 0, 1, 1], [], []>} : vector<392x144xf32>, vector<144x32xf32>, vector<392x32xf32> -> vector<392x32xf32>
    %c0_7 = arith.constant 0 : index
    %c0_8 = arith.constant 0 : index
    %7 = vector.load %arg3[%c0_7, %c0_8] : memref<1x32xf32, #tpu.memory_space<vmem>>, vector<1x32xf32>
    %8 = vector.broadcast %7 : vector<1x32xf32> to vector<392x32xf32>
    %9 = arith.addf %6, %8 : vector<392x32xf32>
    %cst_9 = arith.constant 0.000000e+00 : f32
    %10 = vector.broadcast %cst_9 : f32 to vector<392x32xf32>
    %11 = arith.maximumf %9, %10 : vector<392x32xf32>
    %c0_10 = arith.constant 0 : index
    %c0_11 = arith.constant 0 : index
    %12 = vector.load %arg9[%c0_10, %c0_11] : memref<392x32xf32, #tpu.memory_space<vmem>>, vector<392x32xf32>
    tpu.vector_store %arg9[%c0_10, %c0_11], %11 {strides = array<i32>} : memref<392x32xf32, #tpu.memory_space<vmem>>, vector<392x32xf32>,
    %c0_12 = arith.constant 0 : index
    %c0_13 = arith.constant 0 : index
    %13 = vector.load %arg9[%c0_12, %c0_13] : memref<392x32xf32, #tpu.memory_space<vmem>>, vector<2x32xf32>
    %c0_14 = arith.constant 0 : index
    %c0_15 = arith.constant 0 : index
    %14 = vector.load %arg10[%c0_14, %c0_15] : memref<2x1568xf32, #tpu.memory_space<vmem>>, vector<2x32xf32>
    tpu.vector_store %arg10[%c0_14, %c0_15], %13 {strides = array<i32>} : memref<2x1568xf32, #tpu.memory_space<vmem>>, vector<2x32xf32>,
    %c8 = arith.constant 8 : index
    %c0_16 = arith.constant 0 : index
    %15 = vector.load %arg9[%c8, %c0_16] : memref<392x32xf32, #tpu.memory_space<vmem>>, vector<2x32xf32>
    %c0_17 = arith.constant 0 : index
    %c32 = arith.constant 32 : index
    %16 = vector.load %arg10[%c0_17, %c32] : memref<2x1568xf32, #tpu.memory_space<vmem>>, vector<2x32xf32>
    tpu.vector_store %arg10[%c0_17, %c32], %15 {strides = array<i32>} : memref<2x1568xf32, #tpu.memory_space<vmem>>, vector<2x32xf32>,
    %c16 = arith.constant 16 : index
    %c0_18 = arith.constant 0 : index
    %17 = vector.load %arg9[%c16, %c0_18] : memref<392x32xf32, #tpu.memory_space<vmem>>, vector<2x32xf32>
    %c0_19 = arith.constant 0 : index
    %c64 = arith.constant 64 : index
    %18 = vector.load %arg10[%c0_19, %c64] : memref<2x1568xf32, #tpu.memory_space<vmem>>, vector<2x32xf32>
    tpu.vector_store %arg10[%c0_19, %c64], %17 {strides = array<i32>} : memref<2x1568xf32, #tpu.memory_space<vmem>>, vector<2x32xf32>,
    %c24 = arith.constant 24 : index
    %c0_20 = arith.constant 0 : index
    %19 = vector.load %arg9[%c24, %c0_20] : memref<392x32xf32, #tpu.memory_space<vmem>>, vector<2x32xf32>
    %c0_21 = arith.constant 0 : index
    %c96 = arith.constant 96 : index
    %20 = vector.load %arg10[%c0_21, %c96] : memref<2x1568xf32, #tpu.memory_space<vmem>>, vector<2x32xf32>
    tpu.vector_store %arg10[%c0_21, %c96], %19 {strides = array<i32>} : memref<2x1568xf32, #tpu.memory_space<vmem>>, vector<2x32xf32>,
    %c32_22 = arith.constant 32 : index
    %c0_23 = arith.constant 0 : index
    %21 = vector.load %arg9[%c32_22, %c0_23] : memref<392x32xf32, #tpu.memory_space<vmem>>, vector<2x32xf32>
    %c0_24 = arith.constant 0 : index
    %c128 = arith.constant 128 : index
    %22 = vector.load %arg10[%c0_24, %c128] : memref<2x1568xf32, #tpu.memory_space<vmem>>, vector<2x32xf32>
    tpu.vector_store %arg10[%c0_24, %c128], %21 {strides = array<i32>} : memref<2x1568xf32, #tpu.memory_space<vmem>>, vector<2x32xf32>,
    %c40 = arith.constant 40 : index
    %c0_25 = arith.constant 0 : index
    %23 = vector.load %arg9[%c40, %c0_25] : memref<392x32xf32, #tpu.memory_space<vmem>>, vector<2x32xf32>
    %c0_26 = arith.constant 0 : index
    %c160 = arith.constant 160 : index
    %24 = vector.load %arg10[%c0_26, %c160] : memref<2x1568xf32, #tpu.memory_space<vmem>>, vector<2x32xf32>
    tpu.vector_store %arg10[%c0_26, %c160], %23 {strides = array<i32>} : memref<2x1568xf32, #tpu.memory_space<vmem>>, vector<2x32xf32>,
    %c48 = arith.constant 48 : index
    %c0_27 = arith.constant 0 : index
    %25 = vector.load %arg9[%c48, %c0_27] : memref<392x32xf32, #tpu.memory_space<vmem>>, vector<2x32xf32>
    %c0_28 = arith.constant 0 : index
    %c192 = arith.constant 192 : index
    %26 = vector.load %arg10[%c0_28, %c192] : memref<2x1568xf32, #tpu.memory_space<vmem>>, vector<2x32xf32>
    tpu.vector_store %arg10[%c0_28, %c192], %25 {strides = array<i32>} : memref<2x1568xf32, #tpu.memory_space<vmem>>, vector<2x32xf32>,
    %c56 = arith.constant 56 : index
    %c0_29 = arith.constant 0 : index
    %27 = vector.load %arg9[%c56, %c0_29] : memref<392x32xf32, #tpu.memory_space<vmem>>, vector<2x32xf32>
    %c0_30 = arith.constant 0 : index
    %c224 = arith.constant 224 : index
    %28 = vector.load %arg10[%c0_30, %c224] : memref<2x1568xf32, #tpu.memory_space<vmem>>, vector<2x32xf32>
    tpu.vector_store %arg10[%c0_30, %c224], %27 {strides = array<i32>} : memref<2x1568xf32, #tpu.memory_space<vmem>>, vector<2x32xf32>,
    %c64_31 = arith.constant 64 : index
    %c0_32 = arith.constant 0 : index
    %29 = vector.load %arg9[%c64_31, %c0_32] : memref<392x32xf32, #tpu.memory_space<vmem>>, vector<2x32xf32>
    %c0_33 = arith.constant 0 : index
    %c256 = arith.constant 256 : index
    %30 = vector.load %arg10[%c0_33, %c256] : memref<2x1568xf32, #tpu.memory_space<vmem>>, vector<2x32xf32>
    tpu.vector_store %arg10[%c0_33, %c256], %29 {strides = array<i32>} : memref<2x1568xf32, #tpu.memory_space<vmem>>, vector<2x32xf32>,
    %c72 = arith.constant 72 : index
    %c0_34 = arith.constant 0 : index
    %31 = vector.load %arg9[%c72, %c0_34] : memref<392x32xf32, #tpu.memory_space<vmem>>, vector<2x32xf32>
    %c0_35 = arith.constant 0 : index
    %c288 = arith.constant 288 : index
    %32 = vector.load %arg10[%c0_35, %c288] : memref<2x1568xf32, #tpu.memory_space<vmem>>, vector<2x32xf32>
    tpu.vector_store %arg10[%c0_35, %c288], %31 {strides = array<i32>} : memref<2x1568xf32, #tpu.memory_space<vmem>>, vector<2x32xf32>,
    %c80 = arith.constant 80 : index
    %c0_36 = arith.constant 0 : index
    %33 = vector.load %arg9[%c80, %c0_36] : memref<392x32xf32, #tpu.memory_space<vmem>>, vector<2x32xf32>
    %c0_37 = arith.constant 0 : index
    %c320 = arith.constant 320 : index
    %34 = vector.load %arg10[%c0_37, %c320] : memref<2x1568xf32, #tpu.memory_space<vmem>>, vector<2x32xf32>
    tpu.vector_store %arg10[%c0_37, %c320], %33 {strides = array<i32>} : memref<2x1568xf32, #tpu.memory_space<vmem>>, vector<2x32xf32>,
    %c88 = arith.constant 88 : index
    %c0_38 = arith.constant 0 : index
    %35 = vector.load %arg9[%c88, %c0_38] : memref<392x32xf32, #tpu.memory_space<vmem>>, vector<2x32xf32>
    %c0_39 = arith.constant 0 : index
    %c352 = arith.constant 352 : index
    %36 = vector.load %arg10[%c0_39, %c352] : memref<2x1568xf32, #tpu.memory_space<vmem>>, vector<2x32xf32>
    tpu.vector_store %arg10[%c0_39, %c352], %35 {strides = array<i32>} : memref<2x1568xf32, #tpu.memory_space<vmem>>, vector<2x32xf32>,
    %c96_40 = arith.constant 96 : index
    %c0_41 = arith.constant 0 : index
    %37 = vector.load %arg9[%c96_40, %c0_41] : memref<392x32xf32, #tpu.memory_space<vmem>>, vector<2x32xf32>
    %c0_42 = arith.constant 0 : index
    %c384 = arith.constant 384 : index
    %38 = vector.load %arg10[%c0_42, %c384] : memref<2x1568xf32, #tpu.memory_space<vmem>>, vector<2x32xf32>
    tpu.vector_store %arg10[%c0_42, %c384], %37 {strides = array<i32>} : memref<2x1568xf32, #tpu.memory_space<vmem>>, vector<2x32xf32>,
    %c104 = arith.constant 104 : index
    %c0_43 = arith.constant 0 : index
    %39 = vector.load %arg9[%c104, %c0_43] : memref<392x32xf32, #tpu.memory_space<vmem>>, vector<2x32xf32>
    %c0_44 = arith.constant 0 : index
    %c416 = arith.constant 416 : index
    %40 = vector.load %arg10[%c0_44, %c416] : memref<2x1568xf32, #tpu.memory_space<vmem>>, vector<2x32xf32>
    tpu.vector_store %arg10[%c0_44, %c416], %39 {strides = array<i32>} : memref<2x1568xf32, #tpu.memory_space<vmem>>, vector<2x32xf32>,
    %c112 = arith.constant 112 : index
    %c0_45 = arith.constant 0 : index
    %41 = vector.load %arg9[%c112, %c0_45] : memref<392x32xf32, #tpu.memory_space<vmem>>, vector<2x32xf32>
    %c0_46 = arith.constant 0 : index
    %c448 = arith.constant 448 : index
    %42 = vector.load %arg10[%c0_46, %c448] : memref<2x1568xf32, #tpu.memory_space<vmem>>, vector<2x32xf32>
    tpu.vector_store %arg10[%c0_46, %c448], %41 {strides = array<i32>} : memref<2x1568xf32, #tpu.memory_space<vmem>>, vector<2x32xf32>,
    %c120 = arith.constant 120 : index
    %c0_47 = arith.constant 0 : index
    %43 = vector.load %arg9[%c120, %c0_47] : memref<392x32xf32, #tpu.memory_space<vmem>>, vector<2x32xf32>
    %c0_48 = arith.constant 0 : index
    %c480 = arith.constant 480 : index
    %44 = vector.load %arg10[%c0_48, %c480] : memref<2x1568xf32, #tpu.memory_space<vmem>>, vector<2x32xf32>
    tpu.vector_store %arg10[%c0_48, %c480], %43 {strides = array<i32>} : memref<2x1568xf32, #tpu.memory_space<vmem>>, vector<2x32xf32>,
    %c128_49 = arith.constant 128 : index
    %c0_50 = arith.constant 0 : index
    %45 = vector.load %arg9[%c128_49, %c0_50] : memref<392x32xf32, #tpu.memory_space<vmem>>, vector<2x32xf32>
    %c0_51 = arith.constant 0 : index
    %c512 = arith.constant 512 : index
    %46 = vector.load %arg10[%c0_51, %c512] : memref<2x1568xf32, #tpu.memory_space<vmem>>, vector<2x32xf32>
    tpu.vector_store %arg10[%c0_51, %c512], %45 {strides = array<i32>} : memref<2x1568xf32, #tpu.memory_space<vmem>>, vector<2x32xf32>,
    %c136 = arith.constant 136 : index
    %c0_52 = arith.constant 0 : index
    %47 = vector.load %arg9[%c136, %c0_52] : memref<392x32xf32, #tpu.memory_space<vmem>>, vector<2x32xf32>
    %c0_53 = arith.constant 0 : index
    %c544 = arith.constant 544 : index
    %48 = vector.load %arg10[%c0_53, %c544] : memref<2x1568xf32, #tpu.memory_space<vmem>>, vector<2x32xf32>
    tpu.vector_store %arg10[%c0_53, %c544], %47 {strides = array<i32>} : memref<2x1568xf32, #tpu.memory_space<vmem>>, vector<2x32xf32>,
    %c144 = arith.constant 144 : index
    %c0_54 = arith.constant 0 : index
    %49 = vector.load %arg9[%c144, %c0_54] : memref<392x32xf32, #tpu.memory_space<vmem>>, vector<2x32xf32>
    %c0_55 = arith.constant 0 : index
    %c576 = arith.constant 576 : index
    %50 = vector.load %arg10[%c0_55, %c576] : memref<2x1568xf32, #tpu.memory_space<vmem>>, vector<2x32xf32>
    tpu.vector_store %arg10[%c0_55, %c576], %49 {strides = array<i32>} : memref<2x1568xf32, #tpu.memory_space<vmem>>, vector<2x32xf32>,
    %c152 = arith.constant 152 : index
    %c0_56 = arith.constant 0 : index
    %51 = vector.load %arg9[%c152, %c0_56] : memref<392x32xf32, #tpu.memory_space<vmem>>, vector<2x32xf32>
    %c0_57 = arith.constant 0 : index
    %c608 = arith.constant 608 : index
    %52 = vector.load %arg10[%c0_57, %c608] : memref<2x1568xf32, #tpu.memory_space<vmem>>, vector<2x32xf32>
    tpu.vector_store %arg10[%c0_57, %c608], %51 {strides = array<i32>} : memref<2x1568xf32, #tpu.memory_space<vmem>>, vector<2x32xf32>,
    %c160_58 = arith.constant 160 : index
    %c0_59 = arith.constant 0 : index
    %53 = vector.load %arg9[%c160_58, %c0_59] : memref<392x32xf32, #tpu.memory_space<vmem>>, vector<2x32xf32>
    %c0_60 = arith.constant 0 : index
    %c640 = arith.constant 640 : index
    %54 = vector.load %arg10[%c0_60, %c640] : memref<2x1568xf32, #tpu.memory_space<vmem>>, vector<2x32xf32>
    tpu.vector_store %arg10[%c0_60, %c640], %53 {strides = array<i32>} : memref<2x1568xf32, #tpu.memory_space<vmem>>, vector<2x32xf32>,
    %c168 = arith.constant 168 : index
    %c0_61 = arith.constant 0 : index
    %55 = vector.load %arg9[%c168, %c0_61] : memref<392x32xf32, #tpu.memory_space<vmem>>, vector<2x32xf32>
    %c0_62 = arith.constant 0 : index
    %c672 = arith.constant 672 : index
    %56 = vector.load %arg10[%c0_62, %c672] : memref<2x1568xf32, #tpu.memory_space<vmem>>, vector<2x32xf32>
    tpu.vector_store %arg10[%c0_62, %c672], %55 {strides = array<i32>} : memref<2x1568xf32, #tpu.memory_space<vmem>>, vector<2x32xf32>,
    %c176 = arith.constant 176 : index
    %c0_63 = arith.constant 0 : index
    %57 = vector.load %arg9[%c176, %c0_63] : memref<392x32xf32, #tpu.memory_space<vmem>>, vector<2x32xf32>
    %c0_64 = arith.constant 0 : index
    %c704 = arith.constant 704 : index
    %58 = vector.load %arg10[%c0_64, %c704] : memref<2x1568xf32, #tpu.memory_space<vmem>>, vector<2x32xf32>
    tpu.vector_store %arg10[%c0_64, %c704], %57 {strides = array<i32>} : memref<2x1568xf32, #tpu.memory_space<vmem>>, vector<2x32xf32>,
    %c184 = arith.constant 184 : index
    %c0_65 = arith.constant 0 : index
    %59 = vector.load %arg9[%c184, %c0_65] : memref<392x32xf32, #tpu.memory_space<vmem>>, vector<2x32xf32>
    %c0_66 = arith.constant 0 : index
    %c736 = arith.constant 736 : index
    %60 = vector.load %arg10[%c0_66, %c736] : memref<2x1568xf32, #tpu.memory_space<vmem>>, vector<2x32xf32>
    tpu.vector_store %arg10[%c0_66, %c736], %59 {strides = array<i32>} : memref<2x1568xf32, #tpu.memory_space<vmem>>, vector<2x32xf32>,
    %c192_67 = arith.constant 192 : index
    %c0_68 = arith.constant 0 : index
    %61 = vector.load %arg9[%c192_67, %c0_68] : memref<392x32xf32, #tpu.memory_space<vmem>>, vector<2x32xf32>
    %c0_69 = arith.constant 0 : index
    %c768 = arith.constant 768 : index
    %62 = vector.load %arg10[%c0_69, %c768] : memref<2x1568xf32, #tpu.memory_space<vmem>>, vector<2x32xf32>
    tpu.vector_store %arg10[%c0_69, %c768], %61 {strides = array<i32>} : memref<2x1568xf32, #tpu.memory_space<vmem>>, vector<2x32xf32>,
    %c200 = arith.constant 200 : index
    %c0_70 = arith.constant 0 : index
    %63 = vector.load %arg9[%c200, %c0_70] : memref<392x32xf32, #tpu.memory_space<vmem>>, vector<2x32xf32>
    %c0_71 = arith.constant 0 : index
    %c800 = arith.constant 800 : index
    %64 = vector.load %arg10[%c0_71, %c800] : memref<2x1568xf32, #tpu.memory_space<vmem>>, vector<2x32xf32>
    tpu.vector_store %arg10[%c0_71, %c800], %63 {strides = array<i32>} : memref<2x1568xf32, #tpu.memory_space<vmem>>, vector<2x32xf32>,
    %c208 = arith.constant 208 : index
    %c0_72 = arith.constant 0 : index
    %65 = vector.load %arg9[%c208, %c0_72] : memref<392x32xf32, #tpu.memory_space<vmem>>, vector<2x32xf32>
    %c0_73 = arith.constant 0 : index
    %c832 = arith.constant 832 : index
    %66 = vector.load %arg10[%c0_73, %c832] : memref<2x1568xf32, #tpu.memory_space<vmem>>, vector<2x32xf32>
    tpu.vector_store %arg10[%c0_73, %c832], %65 {strides = array<i32>} : memref<2x1568xf32, #tpu.memory_space<vmem>>, vector<2x32xf32>,
    %c216 = arith.constant 216 : index
    %c0_74 = arith.constant 0 : index
    %67 = vector.load %arg9[%c216, %c0_74] : memref<392x32xf32, #tpu.memory_space<vmem>>, vector<2x32xf32>
    %c0_75 = arith.constant 0 : index
    %c864 = arith.constant 864 : index
    %68 = vector.load %arg10[%c0_75, %c864] : memref<2x1568xf32, #tpu.memory_space<vmem>>, vector<2x32xf32>
    tpu.vector_store %arg10[%c0_75, %c864], %67 {strides = array<i32>} : memref<2x1568xf32, #tpu.memory_space<vmem>>, vector<2x32xf32>,
    %c224_76 = arith.constant 224 : index
    %c0_77 = arith.constant 0 : index
    %69 = vector.load %arg9[%c224_76, %c0_77] : memref<392x32xf32, #tpu.memory_space<vmem>>, vector<2x32xf32>
    %c0_78 = arith.constant 0 : index
    %c896 = arith.constant 896 : index
    %70 = vector.load %arg10[%c0_78, %c896] : memref<2x1568xf32, #tpu.memory_space<vmem>>, vector<2x32xf32>
    tpu.vector_store %arg10[%c0_78, %c896], %69 {strides = array<i32>} : memref<2x1568xf32, #tpu.memory_space<vmem>>, vector<2x32xf32>,
    %c232 = arith.constant 232 : index
    %c0_79 = arith.constant 0 : index
    %71 = vector.load %arg9[%c232, %c0_79] : memref<392x32xf32, #tpu.memory_space<vmem>>, vector<2x32xf32>
    %c0_80 = arith.constant 0 : index
    %c928 = arith.constant 928 : index
    %72 = vector.load %arg10[%c0_80, %c928] : memref<2x1568xf32, #tpu.memory_space<vmem>>, vector<2x32xf32>
    tpu.vector_store %arg10[%c0_80, %c928], %71 {strides = array<i32>} : memref<2x1568xf32, #tpu.memory_space<vmem>>, vector<2x32xf32>,
    %c240 = arith.constant 240 : index
    %c0_81 = arith.constant 0 : index
    %73 = vector.load %arg9[%c240, %c0_81] : memref<392x32xf32, #tpu.memory_space<vmem>>, vector<2x32xf32>
    %c0_82 = arith.constant 0 : index
    %c960 = arith.constant 960 : index
    %74 = vector.load %arg10[%c0_82, %c960] : memref<2x1568xf32, #tpu.memory_space<vmem>>, vector<2x32xf32>
    tpu.vector_store %arg10[%c0_82, %c960], %73 {strides = array<i32>} : memref<2x1568xf32, #tpu.memory_space<vmem>>, vector<2x32xf32>,
    %c248 = arith.constant 248 : index
    %c0_83 = arith.constant 0 : index
    %75 = vector.load %arg9[%c248, %c0_83] : memref<392x32xf32, #tpu.memory_space<vmem>>, vector<2x32xf32>
    %c0_84 = arith.constant 0 : index
    %c992 = arith.constant 992 : index
    %76 = vector.load %arg10[%c0_84, %c992] : memref<2x1568xf32, #tpu.memory_space<vmem>>, vector<2x32xf32>
    tpu.vector_store %arg10[%c0_84, %c992], %75 {strides = array<i32>} : memref<2x1568xf32, #tpu.memory_space<vmem>>, vector<2x32xf32>,
    %c256_85 = arith.constant 256 : index
    %c0_86 = arith.constant 0 : index
    %77 = vector.load %arg9[%c256_85, %c0_86] : memref<392x32xf32, #tpu.memory_space<vmem>>, vector<2x32xf32>
    %c0_87 = arith.constant 0 : index
    %c1024 = arith.constant 1024 : index
    %78 = vector.load %arg10[%c0_87, %c1024] : memref<2x1568xf32, #tpu.memory_space<vmem>>, vector<2x32xf32>
    tpu.vector_store %arg10[%c0_87, %c1024], %77 {strides = array<i32>} : memref<2x1568xf32, #tpu.memory_space<vmem>>, vector<2x32xf32>,
    %c264 = arith.constant 264 : index
    %c0_88 = arith.constant 0 : index
    %79 = vector.load %arg9[%c264, %c0_88] : memref<392x32xf32, #tpu.memory_space<vmem>>, vector<2x32xf32>
    %c0_89 = arith.constant 0 : index
    %c1056 = arith.constant 1056 : index
    %80 = vector.load %arg10[%c0_89, %c1056] : memref<2x1568xf32, #tpu.memory_space<vmem>>, vector<2x32xf32>
    tpu.vector_store %arg10[%c0_89, %c1056], %79 {strides = array<i32>} : memref<2x1568xf32, #tpu.memory_space<vmem>>, vector<2x32xf32>,
    %c272 = arith.constant 272 : index
    %c0_90 = arith.constant 0 : index
    %81 = vector.load %arg9[%c272, %c0_90] : memref<392x32xf32, #tpu.memory_space<vmem>>, vector<2x32xf32>
    %c0_91 = arith.constant 0 : index
    %c1088 = arith.constant 1088 : index
    %82 = vector.load %arg10[%c0_91, %c1088] : memref<2x1568xf32, #tpu.memory_space<vmem>>, vector<2x32xf32>
    tpu.vector_store %arg10[%c0_91, %c1088], %81 {strides = array<i32>} : memref<2x1568xf32, #tpu.memory_space<vmem>>, vector<2x32xf32>,
    %c280 = arith.constant 280 : index
    %c0_92 = arith.constant 0 : index
    %83 = vector.load %arg9[%c280, %c0_92] : memref<392x32xf32, #tpu.memory_space<vmem>>, vector<2x32xf32>
    %c0_93 = arith.constant 0 : index
    %c1120 = arith.constant 1120 : index
    %84 = vector.load %arg10[%c0_93, %c1120] : memref<2x1568xf32, #tpu.memory_space<vmem>>, vector<2x32xf32>
    tpu.vector_store %arg10[%c0_93, %c1120], %83 {strides = array<i32>} : memref<2x1568xf32, #tpu.memory_space<vmem>>, vector<2x32xf32>,
    %c288_94 = arith.constant 288 : index
    %c0_95 = arith.constant 0 : index
    %85 = vector.load %arg9[%c288_94, %c0_95] : memref<392x32xf32, #tpu.memory_space<vmem>>, vector<2x32xf32>
    %c0_96 = arith.constant 0 : index
    %c1152 = arith.constant 1152 : index
    %86 = vector.load %arg10[%c0_96, %c1152] : memref<2x1568xf32, #tpu.memory_space<vmem>>, vector<2x32xf32>
    tpu.vector_store %arg10[%c0_96, %c1152], %85 {strides = array<i32>} : memref<2x1568xf32, #tpu.memory_space<vmem>>, vector<2x32xf32>,
    %c296 = arith.constant 296 : index
    %c0_97 = arith.constant 0 : index
    %87 = vector.load %arg9[%c296, %c0_97] : memref<392x32xf32, #tpu.memory_space<vmem>>, vector<2x32xf32>
    %c0_98 = arith.constant 0 : index
    %c1184 = arith.constant 1184 : index
    %88 = vector.load %arg10[%c0_98, %c1184] : memref<2x1568xf32, #tpu.memory_space<vmem>>, vector<2x32xf32>
    tpu.vector_store %arg10[%c0_98, %c1184], %87 {strides = array<i32>} : memref<2x1568xf32, #tpu.memory_space<vmem>>, vector<2x32xf32>,
    %c304 = arith.constant 304 : index
    %c0_99 = arith.constant 0 : index
    %89 = vector.load %arg9[%c304, %c0_99] : memref<392x32xf32, #tpu.memory_space<vmem>>, vector<2x32xf32>
    %c0_100 = arith.constant 0 : index
    %c1216 = arith.constant 1216 : index
    %90 = vector.load %arg10[%c0_100, %c1216] : memref<2x1568xf32, #tpu.memory_space<vmem>>, vector<2x32xf32>
    tpu.vector_store %arg10[%c0_100, %c1216], %89 {strides = array<i32>} : memref<2x1568xf32, #tpu.memory_space<vmem>>, vector<2x32xf32>,
    %c312 = arith.constant 312 : index
    %c0_101 = arith.constant 0 : index
    %91 = vector.load %arg9[%c312, %c0_101] : memref<392x32xf32, #tpu.memory_space<vmem>>, vector<2x32xf32>
    %c0_102 = arith.constant 0 : index
    %c1248 = arith.constant 1248 : index
    %92 = vector.load %arg10[%c0_102, %c1248] : memref<2x1568xf32, #tpu.memory_space<vmem>>, vector<2x32xf32>
    tpu.vector_store %arg10[%c0_102, %c1248], %91 {strides = array<i32>} : memref<2x1568xf32, #tpu.memory_space<vmem>>, vector<2x32xf32>,
    %c320_103 = arith.constant 320 : index
    %c0_104 = arith.constant 0 : index
    %93 = vector.load %arg9[%c320_103, %c0_104] : memref<392x32xf32, #tpu.memory_space<vmem>>, vector<2x32xf32>
    %c0_105 = arith.constant 0 : index
    %c1280 = arith.constant 1280 : index
    %94 = vector.load %arg10[%c0_105, %c1280] : memref<2x1568xf32, #tpu.memory_space<vmem>>, vector<2x32xf32>
    tpu.vector_store %arg10[%c0_105, %c1280], %93 {strides = array<i32>} : memref<2x1568xf32, #tpu.memory_space<vmem>>, vector<2x32xf32>,
    %c328 = arith.constant 328 : index
    %c0_106 = arith.constant 0 : index
    %95 = vector.load %arg9[%c328, %c0_106] : memref<392x32xf32, #tpu.memory_space<vmem>>, vector<2x32xf32>
    %c0_107 = arith.constant 0 : index
    %c1312 = arith.constant 1312 : index
    %96 = vector.load %arg10[%c0_107, %c1312] : memref<2x1568xf32, #tpu.memory_space<vmem>>, vector<2x32xf32>
    tpu.vector_store %arg10[%c0_107, %c1312], %95 {strides = array<i32>} : memref<2x1568xf32, #tpu.memory_space<vmem>>, vector<2x32xf32>,
    %c336 = arith.constant 336 : index
    %c0_108 = arith.constant 0 : index
    %97 = vector.load %arg9[%c336, %c0_108] : memref<392x32xf32, #tpu.memory_space<vmem>>, vector<2x32xf32>
    %c0_109 = arith.constant 0 : index
    %c1344 = arith.constant 1344 : index
    %98 = vector.load %arg10[%c0_109, %c1344] : memref<2x1568xf32, #tpu.memory_space<vmem>>, vector<2x32xf32>
    tpu.vector_store %arg10[%c0_109, %c1344], %97 {strides = array<i32>} : memref<2x1568xf32, #tpu.memory_space<vmem>>, vector<2x32xf32>,
    %c344 = arith.constant 344 : index
    %c0_110 = arith.constant 0 : index
    %99 = vector.load %arg9[%c344, %c0_110] : memref<392x32xf32, #tpu.memory_space<vmem>>, vector<2x32xf32>
    %c0_111 = arith.constant 0 : index
    %c1376 = arith.constant 1376 : index
    %100 = vector.load %arg10[%c0_111, %c1376] : memref<2x1568xf32, #tpu.memory_space<vmem>>, vector<2x32xf32>
    tpu.vector_store %arg10[%c0_111, %c1376], %99 {strides = array<i32>} : memref<2x1568xf32, #tpu.memory_space<vmem>>, vector<2x32xf32>,
    %c352_112 = arith.constant 352 : index
    %c0_113 = arith.constant 0 : index
    %101 = vector.load %arg9[%c352_112, %c0_113] : memref<392x32xf32, #tpu.memory_space<vmem>>, vector<2x32xf32>
    %c0_114 = arith.constant 0 : index
    %c1408 = arith.constant 1408 : index
    %102 = vector.load %arg10[%c0_114, %c1408] : memref<2x1568xf32, #tpu.memory_space<vmem>>, vector<2x32xf32>
    tpu.vector_store %arg10[%c0_114, %c1408], %101 {strides = array<i32>} : memref<2x1568xf32, #tpu.memory_space<vmem>>, vector<2x32xf32>,
    %c360 = arith.constant 360 : index
    %c0_115 = arith.constant 0 : index
    %103 = vector.load %arg9[%c360, %c0_115] : memref<392x32xf32, #tpu.memory_space<vmem>>, vector<2x32xf32>
    %c0_116 = arith.constant 0 : index
    %c1440 = arith.constant 1440 : index
    %104 = vector.load %arg10[%c0_116, %c1440] : memref<2x1568xf32, #tpu.memory_space<vmem>>, vector<2x32xf32>
    tpu.vector_store %arg10[%c0_116, %c1440], %103 {strides = array<i32>} : memref<2x1568xf32, #tpu.memory_space<vmem>>, vector<2x32xf32>,
    %c368 = arith.constant 368 : index
    %c0_117 = arith.constant 0 : index
    %105 = vector.load %arg9[%c368, %c0_117] : memref<392x32xf32, #tpu.memory_space<vmem>>, vector<2x32xf32>
    %c0_118 = arith.constant 0 : index
    %c1472 = arith.constant 1472 : index
    %106 = vector.load %arg10[%c0_118, %c1472] : memref<2x1568xf32, #tpu.memory_space<vmem>>, vector<2x32xf32>
    tpu.vector_store %arg10[%c0_118, %c1472], %105 {strides = array<i32>} : memref<2x1568xf32, #tpu.memory_space<vmem>>, vector<2x32xf32>,
    %c376 = arith.constant 376 : index
    %c0_119 = arith.constant 0 : index
    %107 = vector.load %arg9[%c376, %c0_119] : memref<392x32xf32, #tpu.memory_space<vmem>>, vector<2x32xf32>
    %c0_120 = arith.constant 0 : index
    %c1504 = arith.constant 1504 : index
    %108 = vector.load %arg10[%c0_120, %c1504] : memref<2x1568xf32, #tpu.memory_space<vmem>>, vector<2x32xf32>
    tpu.vector_store %arg10[%c0_120, %c1504], %107 {strides = array<i32>} : memref<2x1568xf32, #tpu.memory_space<vmem>>, vector<2x32xf32>,
    %c384_121 = arith.constant 384 : index
    %c0_122 = arith.constant 0 : index
    %109 = vector.load %arg9[%c384_121, %c0_122] : memref<392x32xf32, #tpu.memory_space<vmem>>, vector<2x32xf32>
    %c0_123 = arith.constant 0 : index
    %c1536 = arith.constant 1536 : index
    %110 = vector.load %arg10[%c0_123, %c1536] : memref<2x1568xf32, #tpu.memory_space<vmem>>, vector<2x32xf32>
    tpu.vector_store %arg10[%c0_123, %c1536], %109 {strides = array<i32>} : memref<2x1568xf32, #tpu.memory_space<vmem>>, vector<2x32xf32>,
    %c0_124 = arith.constant 0 : index
    %c0_125 = arith.constant 0 : index
    %111 = vector.load %arg10[%c0_124, %c0_125] : memref<2x1568xf32, #tpu.memory_space<vmem>>, vector<2x1568xf32>
    %112 = arith.truncf %111 : vector<2x1568xf32> to vector<2x1568xbf16>
    %c0_126 = arith.constant 0 : index
    %c0_127 = arith.constant 0 : index
    %113 = vector.load %arg4[%c0_126, %c0_127] : memref<1568x800xbf16, #tpu.memory_space<vmem>>, vector<1568x800xbf16>
    %cst_128 = arith.constant dense<0.000000e+00> : vector<2x800xf32>
    %114 = tpu.matmul %112, %113, %cst_128 {dimension_numbers = #tpu.dot_dimension_numbers<[1], [0], [0], [1], [0, 0, 1, 1], [], []>} : vector<2x1568xbf16>, vector<1568x800xbf16>, vector<2x800xf32> -> vector<2x800xf32>
    %c0_129 = arith.constant 0 : index
    %c0_130 = arith.constant 0 : index
    %115 = vector.load %arg5[%c0_129, %c0_130] : memref<1x800xf32, #tpu.memory_space<vmem>>, vector<1x800xf32>
    %116 = vector.broadcast %115 : vector<1x800xf32> to vector<2x800xf32>
    %117 = arith.addf %114, %116 : vector<2x800xf32>
    %cst_131 = arith.constant 0.000000e+00 : f32
    %118 = vector.broadcast %cst_131 : f32 to vector<2x800xf32>
    %119 = arith.maximumf %117, %118 : vector<2x800xf32>
    %120 = arith.truncf %119 : vector<2x800xf32> to vector<2x800xbf16>
    %c0_132 = arith.constant 0 : index
    %c0_133 = arith.constant 0 : index
    %121 = vector.load %arg6[%c0_132, %c0_133] : memref<800x256xbf16, #tpu.memory_space<vmem>>, vector<800x256xbf16>
    %cst_134 = arith.constant dense<0.000000e+00> : vector<2x256xf32>
    %122 = tpu.matmul %120, %121, %cst_134 {dimension_numbers = #tpu.dot_dimension_numbers<[1], [0], [0], [1], [0, 0, 1, 1], [], []>} : vector<2x800xbf16>, vector<800x256xbf16>, vector<2x256xf32> -> vector<2x256xf32>
    %c0_135 = arith.constant 0 : index
    %c0_136 = arith.constant 0 : index
    %123 = vector.load %arg7[%c0_135, %c0_136] : memref<1x256xf32, #tpu.memory_space<vmem>>, vector<1x256xf32>
    %124 = vector.broadcast %123 : vector<1x256xf32> to vector<2x256xf32>
    %125 = arith.addf %122, %124 : vector<2x256xf32>
    %126 = tpu.iota {dimensions = array<i32: 1>} : vector<2x256xi32>
    %cst_137 = arith.constant 0.000000e+00 : f32
    %127 = vector.broadcast %cst_137 : f32 to vector<2x256xf32>
    %c0_i32 = arith.constant 0 : i32
    %128 = vector.broadcast %c0_i32 : i32 to vector<2x256xi32>
    %129 = arith.cmpi sge, %126, %128 : vector<2x256xi32>
    %c51_i32 = arith.constant 51 : i32
    %130 = vector.broadcast %c51_i32 : i32 to vector<2x256xi32>
    %131 = arith.cmpi slt, %126, %130 : vector<2x256xi32>
    %132 = arith.andi %129, %131 : vector<2x256xi1>
    %cst_138 = arith.constant -1.000000e+30 : f32
    %133 = vector.broadcast %cst_138 : f32 to vector<2x256xf32>
    %134 = arith.select %132, %125, %133 : vector<2x256xi1>, vector<2x256xf32>
    %cst_139 = arith.constant dense<0xFF800000> : vector<2xf32>
    %135 = vector.multi_reduction <maximumf>, %134, %cst_139 [1] : vector<2x256xf32> to vector<2xf32>
    %136 = vector.shape_cast %135 : vector<2xf32> to vector<2x1xf32>
    %137 = vector.shape_cast %136 : vector<2x1xf32> to vector<2x1xf32>
    %138 = vector.broadcast %137 : vector<2x1xf32> to vector<2x256xf32>
    %139 = arith.select %132, %125, %138 : vector<2x256xi1>, vector<2x256xf32>
    %140 = vector.broadcast %136 : vector<2x1xf32> to vector<2x256xf32>
    %141 = arith.subf %139, %140 : vector<2x256xf32>
    %142 = math.exp %141 : vector<2x256xf32>
    %cst_140 = arith.constant 0.000000e+00 : f32
    %143 = vector.broadcast %cst_140 : f32 to vector<2x256xf32>
    %144 = arith.select %132, %142, %143 : vector<2x256xi1>, vector<2x256xf32>
    %cst_141 = arith.constant dense<0.000000e+00> : vector<2xf32>
    %145 = vector.multi_reduction <add>, %144, %cst_141 [1] : vector<2x256xf32> to vector<2xf32>
    %146 = vector.shape_cast %145 : vector<2xf32> to vector<2x1xf32>
    %147 = vector.broadcast %146 : vector<2x1xf32> to vector<2x256xf32>
    %148 = arith.divf %144, %147 : vector<2x256xf32>
    %149 = arith.addf %127, %148 : vector<2x256xf32>
    %c64_i32 = arith.constant 64 : i32
    %150 = vector.broadcast %c64_i32 : i32 to vector<2x256xi32>
    %151 = arith.cmpi sge, %126, %150 : vector<2x256xi32>
    %c115_i32 = arith.constant 115 : i32
    %152 = vector.broadcast %c115_i32 : i32 to vector<2x256xi32>
    %153 = arith.cmpi slt, %126, %152 : vector<2x256xi32>
    %154 = arith.andi %151, %153 : vector<2x256xi1>
    %cst_142 = arith.constant -1.000000e+30 : f32
    %155 = vector.broadcast %cst_142 : f32 to vector<2x256xf32>
    %156 = arith.select %154, %125, %155 : vector<2x256xi1>, vector<2x256xf32>
    %cst_143 = arith.constant dense<0xFF800000> : vector<2xf32>
    %157 = vector.multi_reduction <maximumf>, %156, %cst_143 [1] : vector<2x256xf32> to vector<2xf32>
    %158 = vector.shape_cast %157 : vector<2xf32> to vector<2x1xf32>
    %159 = vector.shape_cast %158 : vector<2x1xf32> to vector<2x1xf32>
    %160 = vector.broadcast %159 : vector<2x1xf32> to vector<2x256xf32>
    %161 = arith.select %154, %125, %160 : vector<2x256xi1>, vector<2x256xf32>
    %162 = vector.broadcast %158 : vector<2x1xf32> to vector<2x256xf32>
    %163 = arith.subf %161, %162 : vector<2x256xf32>
    %164 = math.exp %163 : vector<2x256xf32>
    %cst_144 = arith.constant 0.000000e+00 : f32
    %165 = vector.broadcast %cst_144 : f32 to vector<2x256xf32>
    %166 = arith.select %154, %164, %165 : vector<2x256xi1>, vector<2x256xf32>
    %cst_145 = arith.constant dense<0.000000e+00> : vector<2xf32>
    %167 = vector.multi_reduction <add>, %166, %cst_145 [1] : vector<2x256xf32> to vector<2xf32>
    %168 = vector.shape_cast %167 : vector<2xf32> to vector<2x1xf32>
    %169 = vector.broadcast %168 : vector<2x1xf32> to vector<2x256xf32>
    %170 = arith.divf %166, %169 : vector<2x256xf32>
    %171 = arith.addf %149, %170 : vector<2x256xf32>
    %c128_i32 = arith.constant 128 : i32
    %172 = vector.broadcast %c128_i32 : i32 to vector<2x256xi32>
    %173 = arith.cmpi sge, %126, %172 : vector<2x256xi32>
    %c179_i32 = arith.constant 179 : i32
    %174 = vector.broadcast %c179_i32 : i32 to vector<2x256xi32>
    %175 = arith.cmpi slt, %126, %174 : vector<2x256xi32>
    %176 = arith.andi %173, %175 : vector<2x256xi1>
    %cst_146 = arith.constant -1.000000e+30 : f32
    %177 = vector.broadcast %cst_146 : f32 to vector<2x256xf32>
    %178 = arith.select %176, %125, %177 : vector<2x256xi1>, vector<2x256xf32>
    %cst_147 = arith.constant dense<0xFF800000> : vector<2xf32>
    %179 = vector.multi_reduction <maximumf>, %178, %cst_147 [1] : vector<2x256xf32> to vector<2xf32>
    %180 = vector.shape_cast %179 : vector<2xf32> to vector<2x1xf32>
    %181 = vector.shape_cast %180 : vector<2x1xf32> to vector<2x1xf32>
    %182 = vector.broadcast %181 : vector<2x1xf32> to vector<2x256xf32>
    %183 = arith.select %176, %125, %182 : vector<2x256xi1>, vector<2x256xf32>
    %184 = vector.broadcast %180 : vector<2x1xf32> to vector<2x256xf32>
    %185 = arith.subf %183, %184 : vector<2x256xf32>
    %186 = math.exp %185 : vector<2x256xf32>
    %cst_148 = arith.constant 0.000000e+00 : f32
    %187 = vector.broadcast %cst_148 : f32 to vector<2x256xf32>
    %188 = arith.select %176, %186, %187 : vector<2x256xi1>, vector<2x256xf32>
    %cst_149 = arith.constant dense<0.000000e+00> : vector<2xf32>
    %189 = vector.multi_reduction <add>, %188, %cst_149 [1] : vector<2x256xf32> to vector<2xf32>
    %190 = vector.shape_cast %189 : vector<2xf32> to vector<2x1xf32>
    %191 = vector.broadcast %190 : vector<2x1xf32> to vector<2x256xf32>
    %192 = arith.divf %188, %191 : vector<2x256xf32>
    %193 = arith.addf %171, %192 : vector<2x256xf32>
    %c192_i32 = arith.constant 192 : i32
    %194 = vector.broadcast %c192_i32 : i32 to vector<2x256xi32>
    %195 = arith.cmpi sge, %126, %194 : vector<2x256xi32>
    %c243_i32 = arith.constant 243 : i32
    %196 = vector.broadcast %c243_i32 : i32 to vector<2x256xi32>
    %197 = arith.cmpi slt, %126, %196 : vector<2x256xi32>
    %198 = arith.andi %195, %197 : vector<2x256xi1>
    %cst_150 = arith.constant -1.000000e+30 : f32
    %199 = vector.broadcast %cst_150 : f32 to vector<2x256xf32>
    %200 = arith.select %198, %125, %199 : vector<2x256xi1>, vector<2x256xf32>
    %cst_151 = arith.constant dense<0xFF800000> : vector<2xf32>
    %201 = vector.multi_reduction <maximumf>, %200, %cst_151 [1] : vector<2x256xf32> to vector<2xf32>
    %202 = vector.shape_cast %201 : vector<2xf32> to vector<2x1xf32>
    %203 = vector.shape_cast %202 : vector<2x1xf32> to vector<2x1xf32>
    %204 = vector.broadcast %203 : vector<2x1xf32> to vector<2x256xf32>
    %205 = arith.select %198, %125, %204 : vector<2x256xi1>, vector<2x256xf32>
    %206 = vector.broadcast %202 : vector<2x1xf32> to vector<2x256xf32>
    %207 = arith.subf %205, %206 : vector<2x256xf32>
    %208 = math.exp %207 : vector<2x256xf32>
    %cst_152 = arith.constant 0.000000e+00 : f32
    %209 = vector.broadcast %cst_152 : f32 to vector<2x256xf32>
    %210 = arith.select %198, %208, %209 : vector<2x256xi1>, vector<2x256xf32>
    %cst_153 = arith.constant dense<0.000000e+00> : vector<2xf32>
    %211 = vector.multi_reduction <add>, %210, %cst_153 [1] : vector<2x256xf32> to vector<2xf32>
    %212 = vector.shape_cast %211 : vector<2xf32> to vector<2x1xf32>
    %213 = vector.broadcast %212 : vector<2x1xf32> to vector<2x256xf32>
    %214 = arith.divf %210, %213 : vector<2x256xf32>
    %215 = arith.addf %193, %214 : vector<2x256xf32>
    %c0_154 = arith.constant 0 : index
    %c0_155 = arith.constant 0 : index
    %216 = vector.load %arg8[%c0_154, %c0_155] : memref<2x256xf32, #tpu.memory_space<vmem>>, vector<2x256xf32>
    tpu.vector_store %arg8[%c0_154, %c0_155], %215 {strides = array<i32>} : memref<2x256xf32, #tpu.memory_space<vmem>>, vector<2x256xf32>,
    return
  }
}

</mosaic_0001>

<llo_original>
// kernel: actor_img_forward.1
$region0: #{actor_img_forward.1}
  #allocation0 [shape = 'u32[]', space=smem, size = 0x4, offset = 0x4, fixed_abs, tag = 'smem constant byte address 0x4 - core index']
  #allocation1 [shape = 'u32[144,128]{1,0:T(1,128)}', space=vmem, size = 0x12000, scoped, tag = 'internal scratch']
  #allocation2 [shape = 'f32[392,32]{1,0:T(8,128)}', space=vmem, size = 0x31000, scoped, tag = 'scratch operand']
  #allocation3 [shape = 'f32[2,1568]{1,0:T(2,128)}', space=vmem, size = 0x3400, scoped, tag = 'scratch operand']
  %s0 = inlined_call_operand.vmem [shape: f32[392,90], index: 0, kind: input, shape index: {}]
  %s1 = inlined_call_operand.vmem [shape: f32[90,144], index: 1, kind: input, shape index: {}]
  %s2 = inlined_call_operand.vmem [shape: f32[144,32], index: 2, kind: input, shape index: {}]
  %s3 = inlined_call_operand.vmem [shape: f32[1,32], index: 3, kind: input, shape index: {}]
  %s4 = inlined_call_operand.vmem [shape: bf16[1568,800], index: 4, kind: input, shape index: {}]
  %s5 = inlined_call_operand.vmem [shape: f32[1,800], index: 5, kind: input, shape index: {}]
  %s6 = inlined_call_operand.vmem [shape: bf16[800,256], index: 6, kind: input, shape index: {}]
  %s7 = inlined_call_operand.vmem [shape: f32[1,256], index: 7, kind: input, shape index: {}]
  %s8 = inlined_call_operand.vmem [shape: f32[2,256], index: 8, kind: output, shape index: {}]
  %s9 = sld [smem:[#allocation0]]
  $region42: #{actor_img_forward.1} parent=0
    _
  %s11 = ssub.s32 1, %s9
  %s12 = scalar_select 0, %s11, %s9
  // Predicated region
  $region2: #{actor_img_forward.1} parent=0 // pred_check
    _
  $region3: #{actor_img_forward.1} parent=0 // pred_check_branch
    %14 = sbr.rel (0) target = $region5
  $region4: #{actor_img_forward.1} parent=0 // pred_region
    _
  $region5: #{actor_img_forward.1} parent=0 // pred_fallthru
    _
  // Predicated region
  $region6: #{actor_img_forward.1} parent=0 // pred_check
    _
  $region7: #{actor_img_forward.1} parent=0 // pred_check_branch
    %16 = sbr.rel (0) target = $region9
  $region8: #{actor_img_forward.1} parent=0 // pred_region
    _
  $region9: #{actor_img_forward.1} parent=0 // pred_fallthru
    _
  // Predicated region
  $region10: #{actor_img_forward.1} parent=0 // pred_check
    _
  $region11: #{actor_img_forward.1} parent=0 // pred_check_branch
    %18 = sbr.rel (0) target = $region13
  $region12: #{actor_img_forward.1} parent=0 // pred_region
    _
  $region13: #{actor_img_forward.1} parent=0 // pred_fallthru
    _
  // Predicated region
  $region14: #{actor_img_forward.1} parent=0 // pred_check
    _
  $region15: #{actor_img_forward.1} parent=0 // pred_check_branch
    %20 = sbr.rel (0) target = $region17
  $region16: #{actor_img_forward.1} parent=0 // pred_region
    _
  $region17: #{actor_img_forward.1} parent=0 // pred_fallthru
    _
  // Predicated region
  $region18: #{actor_img_forward.1} parent=0 // pred_check
    _
  $region19: #{actor_img_forward.1} parent=0 // pred_check_branch
    %22 = sbr.rel (0) target = $region21
  $region20: #{actor_img_forward.1} parent=0 // pred_region
    _
  $region21: #{actor_img_forward.1} parent=0 // pred_fallthru
    _
  // Predicated region
  $region22: #{actor_img_forward.1} parent=0 // pred_check
    _
  $region23: #{actor_img_forward.1} parent=0 // pred_check_branch
    %24 = sbr.rel (0) target = $region25
  $region24: #{actor_img_forward.1} parent=0 // pred_region
    _
  $region25: #{actor_img_forward.1} parent=0 // pred_fallthru
    _
  // Predicated region
  $region26: #{actor_img_forward.1} parent=0 // pred_check
    _
  $region27: #{actor_img_forward.1} parent=0 // pred_check_branch
    %26 = sbr.rel (0) target = $region29
  $region28: #{actor_img_forward.1} parent=0 // pred_region
    _
  $region29: #{actor_img_forward.1} parent=0 // pred_fallthru
    _
  // Predicated region
  $region30: #{actor_img_forward.1} parent=0 // pred_check
    _
  $region31: #{actor_img_forward.1} parent=0 // pred_check_branch
    %28 = sbr.rel (0) target = $region33
  $region32: #{actor_img_forward.1} parent=0 // pred_region
    _
  $region33: #{actor_img_forward.1} parent=0 // pred_fallthru
    _
  %v30 = vld [vmem:[%s0] sm:$0xff]
  %v31 = vld [vmem:[%s0 + $0x8] sm:$0xff]
  %v32 = vld [vmem:[%s0 + $0x10] sm:$0xff]
  %v33 = vld [vmem:[%s0 + $0x18] sm:$0xff]
  %v34 = vld [vmem:[%s0 + $0x20] sm:$0xff]
  %v35 = vld [vmem:[%s0 + $0x28] sm:$0xff]
  %v36 = vld [vmem:[%s0 + $0x30] sm:$0xff]
  %v37 = vld [vmem:[%s0 + $0x38] sm:$0xff]
  %v38 = vld [vmem:[%s0 + $0x40] sm:$0xff]
  %v39 = vld [vmem:[%s0 + $0x48] sm:$0xff]
  %v40 = vld [vmem:[%s0 + $0x50] sm:$0xff]
  %v41 = vld [vmem:[%s0 + $0x58] sm:$0xff]
  %v42 = vld [vmem:[%s0 + $0x60] sm:$0xff]
  %v43 = vld [vmem:[%s0 + $0x68] sm:$0xff]
  %v44 = vld [vmem:[%s0 + $0x70] sm:$0xff]
  %v45 = vld [vmem:[%s0 + $0x78] sm:$0xff]
  %v46 = vld [vmem:[%s0 + $0x80] sm:$0xff]
  %v47 = vld [vmem:[%s0 + $0x88] sm:$0xff]
  %v48 = vld [vmem:[%s0 + $0x90] sm:$0xff]
  %v49 = vld [vmem:[%s0 + $0x98] sm:$0xff]
  %v50 = vld [vmem:[%s0 + $0xa0] sm:$0xff]
  %v51 = vld [vmem:[%s0 + $0xa8] sm:$0xff]
  %v52 = vld [vmem:[%s0 + $0xb0] sm:$0xff]
  %v53 = vld [vmem:[%s0 + $0xb8] sm:$0xff]
  %v54 = vld [vmem:[%s0 + $0xc0] sm:$0xff]
  %v55 = vld [vmem:[%s0 + $0xc8] sm:$0xff]
  %v56 = vld [vmem:[%s0 + $0xd0] sm:$0xff]
  %v57 = vld [vmem:[%s0 + $0xd8] sm:$0xff]
  %v58 = vld [vmem:[%s0 + $0xe0] sm:$0xff]
  %v59 = vld [vmem:[%s0 + $0xe8] sm:$0xff]
  %v60 = vld [vmem:[%s0 + $0xf0] sm:$0xff]
  %v61 = vld [vmem:[%s0 + $0xf8] sm:$0xff]
  %v62 = vld [vmem:[%s0 + $0x100] sm:$0xff]
  %v63 = vld [vmem:[%s0 + $0x108] sm:$0xff]
  %v64 = vld [vmem:[%s0 + $0x110] sm:$0xff]
  %v65 = vld [vmem:[%s0 + $0x118] sm:$0xff]
  %v66 = vld [vmem:[%s0 + $0x120] sm:$0xff]
  %v67 = vld [vmem:[%s0 + $0x128] sm:$0xff]
  %v68 = vld [vmem:[%s0 + $0x130] sm:$0xff]
  %v69 = vld [vmem:[%s0 + $0x138] sm:$0xff]
  %v70 = vld [vmem:[%s0 + $0x140] sm:$0xff]
  %v71 = vld [vmem:[%s0 + $0x148] sm:$0xff]
  %v72 = vld [vmem:[%s0 + $0x150] sm:$0xff]
  %v73 = vld [vmem:[%s0 + $0x158] sm:$0xff]
  %v74 = vld [vmem:[%s0 + $0x160] sm:$0xff]
  %v75 = vld [vmem:[%s0 + $0x168] sm:$0xff]
  %v76 = vld [vmem:[%s0 + $0x170] sm:$0xff]
  %v77 = vld [vmem:[%s0 + $0x178] sm:$0xff]
  %v78 = vld [vmem:[%s0 + $0x180] sm:$0xff]
  %v79 = vld [vmem:[%s1] sm:$0xff]
  %v80 = vld [vmem:[%s1 + $0x8] sm:$0xff]
  %v81 = vld [vmem:[%s1 + $0x10] sm:$0xff]
  %v82 = vld [vmem:[%s1 + $0x18] sm:$0xff]
  %v83 = vld [vmem:[%s1 + $0x20] sm:$0xff]
  %v84 = vld [vmem:[%s1 + $0x28] sm:$0xff]
  %v85 = vld [vmem:[%s1 + $0x30] sm:$0xff]
  %v86 = vld [vmem:[%s1 + $0x38] sm:$0xff]
  %v87 = vld [vmem:[%s1 + $0x40] sm:$0xff]
  %v88 = vld [vmem:[%s1 + $0x48] sm:$0xff]
  %v89 = vld [vmem:[%s1 + $0x50] sm:$0xff]
  %v90 = vld [vmem:[%s1 + $0x58] sm:$0xff]
  %v91 = vld [vmem:[%s1 + $0x60] sm:$0xff]
  %v92 = vld [vmem:[%s1 + $0x68] sm:$0xff]
  %v93 = vld [vmem:[%s1 + $0x70] sm:$0xff]
  %v94 = vld [vmem:[%s1 + $0x78] sm:$0xff]
  %v95 = vld [vmem:[%s1 + $0x80] sm:$0xff]
  %v96 = vld [vmem:[%s1 + $0x88] sm:$0xff]
  %v97 = vld [vmem:[%s1 + $0x90] sm:$0xff]
  %v98 = vld [vmem:[%s1 + $0x98] sm:$0xff]
  %v99 = vld [vmem:[%s1 + $0xa0] sm:$0xff]
  %v100 = vld [vmem:[%s1 + $0xa8] sm:$0xff]
  %v101 = vld [vmem:[%s1 + $0xb0] sm:$0x3]
  %v102 = vld [vmem:[%s1 + $0xb8] sm:$0x3]
  %vm103 = vcmask 736256
  %v105 = vsel %vm103, %v30, 0
  %v108 = vsel %vm103, %v31, 0
  %v111 = vsel %vm103, %v32, 0
  %v114 = vsel %vm103, %v33, 0
  %v117 = vsel %vm103, %v34, 0
  %v120 = vsel %vm103, %v35, 0
  %v123 = vsel %vm103, %v36, 0
  %v126 = vsel %vm103, %v37, 0
  %v129 = vsel %vm103, %v38, 0
  %v132 = vsel %vm103, %v39, 0
  %v135 = vsel %vm103, %v40, 0
  %v138 = vsel %vm103, %v41, 0
  %v141 = vsel %vm103, %v42, 0
  %v144 = vsel %vm103, %v43, 0
  %v147 = vsel %vm103, %v44, 0
  %v150 = vsel %vm103, %v45, 0
  %v153 = vsel %vm103, %v46, 0
  %v156 = vsel %vm103, %v47, 0
  %v159 = vsel %vm103, %v48, 0
  %v162 = vsel %vm103, %v49, 0
  %v165 = vsel %vm103, %v50, 0
  %v168 = vsel %vm103, %v51, 0
  %v171 = vsel %vm103, %v52, 0
  %v174 = vsel %vm103, %v53, 0
  %v177 = vsel %vm103, %v54, 0
  %v180 = vsel %vm103, %v55, 0
  %v183 = vsel %vm103, %v56, 0
  %v186 = vsel %vm103, %v57, 0
  %v189 = vsel %vm103, %v58, 0
  %v192 = vsel %vm103, %v59, 0
  %v195 = vsel %vm103, %v60, 0
  %v198 = vsel %vm103, %v61, 0
  %v201 = vsel %vm103, %v62, 0
  %v204 = vsel %vm103, %v63, 0
  %v207 = vsel %vm103, %v64, 0
  %v210 = vsel %vm103, %v65, 0
  %v213 = vsel %vm103, %v66, 0
  %v216 = vsel %vm103, %v67, 0
  %v219 = vsel %vm103, %v68, 0
  %v222 = vsel %vm103, %v69, 0
  %v225 = vsel %vm103, %v70, 0
  %v228 = vsel %vm103, %v71, 0
  %v231 = vsel %vm103, %v72, 0
  %v234 = vsel %vm103, %v73, 0
  %v237 = vsel %vm103, %v74, 0
  %v240 = vsel %vm103, %v75, 0
  %v243 = vsel %vm103, %v76, 0
  %v246 = vsel %vm103, %v77, 0
  %v249 = vsel %vm103, %v78, 0
  %vm251 = vcmask 1041408
  %v253 = vsel %vm251, %v101, 0
  %v256 = vsel %vm251, %v102, 0
  %258 = vmatprep.subr.mxu0 %v80
  %259 = vmatpush1.msra.mxu0 %v79
  %260 = vmatprep.subr.mxu0 %v82
  %261 = vmatpush1.msra.mxu0 %v81
  %262 = vmatprep.subr.mxu0 %v84
  %263 = vmatpush1.msra.mxu0 %v83
  %264 = vmatprep.subr.mxu0 %v86
  %265 = vmatpush1.msra.mxu0 %v85
  %266 = vmatprep.subr.mxu0 %v88
  %267 = vmatpush1.msra.mxu0 %v87
  %268 = vmatprep.subr.mxu0 %v90
  %269 = vmatpush1.msra.mxu0 %v89
  %270 = vmatprep.subr.mxu0 %v92
  %271 = vmatpush1.msra.mxu0 %v91
  %272 = vmatprep.subr.mxu0 %v94
  %273 = vmatpush1.msra.mxu0 %v93
  %274 = vmatprep.subr.mxu0 %v96
  %275 = vmatpush1.msra.mxu0 %v95
  %276 = vmatprep.subr.mxu0 %v98
  %277 = vmatpush1.msra.mxu0 %v97
  %278 = vmatprep.subr.mxu0 %v100
  %279 = vmatpush1.msra.mxu0 %v99
  %280 = vmatprep.subr.mxu0 %v256
  %281 = vmatpush1.msra.mxu0 %v253
  %282 = vmatprep.subr.mxu0 0.0
  %283 = vmatpush1.msra.mxu0 0.0
  %284 = vmatprep.subr.mxu0 0.0
  %285 = vmatpush1.msra.mxu0 0.0
  %286 = vmatprep.subr.mxu0 0.0
  %287 = vmatpush1.msra.mxu0 0.0
  %288 = vmatprep.subr.mxu0 0.0
  %289 = vmatpush1.msra.mxu0 0.0
  %290 = vmatprep.subr.mxu0 0.0
  %291 = vmatpush1.msra.mxu0 0.0
  %292 = vmatprep.subr.mxu0 0.0
  %293 = vmatpush1.msra.mxu0 0.0
  %294 = vmatprep.subr.mxu0 0.0
  %295 = vmatpush1.msra.mxu0 0.0
  %296 = vmatprep.subr.mxu0 0.0
  %297 = vmatpush1.msra.mxu0 0.0
  %298 = vmatprep.subr.mxu0 0.0
  %299 = vmatpush1.msra.mxu0 0.0
  %300 = vmatprep.subr.mxu0 0.0
  %301 = vmatpush1.msra.mxu0 0.0
  %302 = vmatprep.subr.mxu0 0.0
  %303 = vmatpush1.msra.mxu0 0.0
  %304 = vmatprep.subr.mxu0 0.0
  %305 = vmatpush1.msra.mxu0 0.0
  %306 = vmatprep.subr.mxu0 0.0
  %307 = vmatpush1.msra.mxu0 0.0
  %308 = vmatprep.subr.mxu0 0.0
  %309 = vmatpush1.msra.mxu0 0.0
  %310 = vmatprep.subr.mxu0 0.0
  %311 = vmatpush1.msra.mxu0 0.0
  %312 = vmatprep.subr.mxu0 0.0
  %313 = vmatpush1.msra.mxu0 0.0
  %314 = vmatprep.subr.mxu0 0.0
  %315 = vmatpush1.msra.mxu0 0.0
  %316 = vmatprep.subr.mxu0 0.0
  %317 = vmatpush1.msra.mxu0 0.0
  %318 = vmatprep.subr.mxu0 0.0
  %319 = vmatpush1.msra.mxu0 0.0
  %320 = vmatprep.subr.mxu0 0.0
  %321 = vmatpush1.msra.mxu0 0.0
  %322 = vmatprep.mubr.f32.mxu0 0.0
  %323 = vmatmul.mubr.f32.gmra.mrb[0].mxu0 %v105
  %v324 = vpop.f32.mrb[0].mxu0
  %v325 = vadd.f32 0.0, %v324
  %v326 = vpop.f32.mrb[0].mxu0
  %v327 = vadd.f32 0.0, %v326
  %328 = vmatprep.mubr.f32.mxu0 0.0
  %329 = vmatmul.mubr.f32.gmra.mrb[0].mxu0 %v108
  %v330 = vpop.f32.mrb[0].mxu0
  %v331 = vadd.f32 0.0, %v330
  %v332 = vpop.f32.mrb[0].mxu0
  %v333 = vadd.f32 0.0, %v332
  %334 = vmatprep.mubr.f32.mxu0 0.0
  %335 = vmatmul.mubr.f32.gmra.mrb[0].mxu0 %v111
  %v336 = vpop.f32.mrb[0].mxu0
  %v337 = vadd.f32 0.0, %v336
  %v338 = vpop.f32.mrb[0].mxu0
  %v339 = vadd.f32 0.0, %v338
  %340 = vmatprep.mubr.f32.mxu0 0.0
  %341 = vmatmul.mubr.f32.gmra.mrb[0].mxu0 %v114
  %v342 = vpop.f32.mrb[0].mxu0
  %v343 = vadd.f32 0.0, %v342
  %v344 = vpop.f32.mrb[0].mxu0
  %v345 = vadd.f32 0.0, %v344
  %346 = vmatprep.mubr.f32.mxu0 0.0
  %347 = vmatmul.mubr.f32.gmra.mrb[0].mxu0 %v117
  %v348 = vpop.f32.mrb[0].mxu0
  %v349 = vadd.f32 0.0, %v348
  %v350 = vpop.f32.mrb[0].mxu0
  %v351 = vadd.f32 0.0, %v350
  %352 = vmatprep.mubr.f32.mxu0 0.0
  %353 = vmatmul.mubr.f32.gmra.mrb[0].mxu0 %v120
  %v354 = vpop.f32.mrb[0].mxu0
  %v355 = vadd.f32 0.0, %v354
  %v356 = vpop.f32.mrb[0].mxu0
  %v357 = vadd.f32 0.0, %v356
  %358 = vmatprep.mubr.f32.mxu0 0.0
  %359 = vmatmul.mubr.f32.gmra.mrb[0].mxu0 %v123
  %v360 = vpop.f32.mrb[0].mxu0
  %v361 = vadd.f32 0.0, %v360
  %v362 = vpop.f32.mrb[0].mxu0
  %v363 = vadd.f32 0.0, %v362
  %364 = vmatprep.mubr.f32.mxu0 0.0
  %365 = vmatmul.mubr.f32.gmra.mrb[0].mxu0 %v126
  %v366 = vpop.f32.mrb[0].mxu0
  %v367 = vadd.f32 0.0, %v366
  %v368 = vpop.f32.mrb[0].mxu0
  %v369 = vadd.f32 0.0, %v368
  %370 = vmatprep.mubr.f32.mxu0 0.0
  %371 = vmatmul.mubr.f32.gmra.mrb[0].mxu0 %v129
  %v372 = vpop.f32.mrb[0].mxu0
  %v373 = vadd.f32 0.0, %v372
  %v374 = vpop.f32.mrb[0].mxu0
  %v375 = vadd.f32 0.0, %v374
  %376 = vmatprep.mubr.f32.mxu0 0.0
  %377 = vmatmul.mubr.f32.gmra.mrb[0].mxu0 %v132
  %v378 = vpop.f32.mrb[0].mxu0
  %v379 = vadd.f32 0.0, %v378
  %v380 = vpop.f32.mrb[0].mxu0
  %v381 = vadd.f32 0.0, %v380
  %382 = vmatprep.mubr.f32.mxu0 0.0
  %383 = vmatmul.mubr.f32.gmra.mrb[0].mxu0 %v135
  %v384 = vpop.f32.mrb[0].mxu0
  %v385 = vadd.f32 0.0, %v384
  %v386 = vpop.f32.mrb[0].mxu0
  %v387 = vadd.f32 0.0, %v386
  %388 = vmatprep.mubr.f32.mxu0 0.0
  %389 = vmatmul.mubr.f32.gmra.mrb[0].mxu0 %v138
  %v390 = vpop.f32.mrb[0].mxu0
  %v391 = vadd.f32 0.0, %v390
  %v392 = vpop.f32.mrb[0].mxu0
  %v393 = vadd.f32 0.0, %v392
  %394 = vmatprep.mubr.f32.mxu0 0.0
  %395 = vmatmul.mubr.f32.gmra.mrb[0].mxu0 %v141
  %v396 = vpop.f32.mrb[0].mxu0
  %v397 = vadd.f32 0.0, %v396
  %v398 = vpop.f32.mrb[0].mxu0
  %v399 = vadd.f32 0.0, %v398
  %400 = vmatprep.mubr.f32.mxu0 0.0
  %401 = vmatmul.mubr.f32.gmra.mrb[0].mxu0 %v144
  %v402 = vpop.f32.mrb[0].mxu0
  %v403 = vadd.f32 0.0, %v402
  %v404 = vpop.f32.mrb[0].mxu0
  %v405 = vadd.f32 0.0, %v404
  %406 = vmatprep.mubr.f32.mxu0 0.0
  %407 = vmatmul.mubr.f32.gmra.mrb[0].mxu0 %v147
  %v408 = vpop.f32.mrb[0].mxu0
  %v409 = vadd.f32 0.0, %v408
  %v410 = vpop.f32.mrb[0].mxu0
  %v411 = vadd.f32 0.0, %v410
  %412 = vmatprep.mubr.f32.mxu0 0.0
  %413 = vmatmul.mubr.f32.gmra.mrb[0].mxu0 %v150
  %v414 = vpop.f32.mrb[0].mxu0
  %v415 = vadd.f32 0.0, %v414
  %v416 = vpop.f32.mrb[0].mxu0
  %v417 = vadd.f32 0.0, %v416
  %418 = vmatprep.mubr.f32.mxu0 0.0
  %419 = vmatmul.mubr.f32.gmra.mrb[0].mxu0 %v153
  %v420 = vpop.f32.mrb[0].mxu0
  %v421 = vadd.f32 0.0, %v420
  %v422 = vpop.f32.mrb[0].mxu0
  %v423 = vadd.f32 0.0, %v422
  %424 = vmatprep.mubr.f32.mxu0 0.0
  %425 = vmatmul.mubr.f32.gmra.mrb[0].mxu0 %v156
  %v426 = vpop.f32.mrb[0].mxu0
  %v427 = vadd.f32 0.0, %v426
  %v428 = vpop.f32.mrb[0].mxu0
  %v429 = vadd.f32 0.0, %v428
  %430 = vmatprep.mubr.f32.mxu0 0.0
  %431 = vmatmul.mubr.f32.gmra.mrb[0].mxu0 %v159
  %v432 = vpop.f32.mrb[0].mxu0
  %v433 = vadd.f32 0.0, %v432
  %v434 = vpop.f32.mrb[0].mxu0
  %v435 = vadd.f32 0.0, %v434
  %436 = vmatprep.mubr.f32.mxu0 0.0
  %437 = vmatmul.mubr.f32.gmra.mrb[0].mxu0 %v162
  %v438 = vpop.f32.mrb[0].mxu0
  %v439 = vadd.f32 0.0, %v438
  %v440 = vpop.f32.mrb[0].mxu0
  %v441 = vadd.f32 0.0, %v440
  %442 = vmatprep.mubr.f32.mxu0 0.0
  %443 = vmatmul.mubr.f32.gmra.mrb[0].mxu0 %v165
  %v444 = vpop.f32.mrb[0].mxu0
  %v445 = vadd.f32 0.0, %v444
  %v446 = vpop.f32.mrb[0].mxu0
  %v447 = vadd.f32 0.0, %v446
  %448 = vmatprep.mubr.f32.mxu0 0.0
  %449 = vmatmul.mubr.f32.gmra.mrb[0].mxu0 %v168
  %v450 = vpop.f32.mrb[0].mxu0
  %v451 = vadd.f32 0.0, %v450
  %v452 = vpop.f32.mrb[0].mxu0
  %v453 = vadd.f32 0.0, %v452
  %454 = vmatprep.mubr.f32.mxu0 0.0
  %455 = vmatmul.mubr.f32.gmra.mrb[0].mxu0 %v171
  %v456 = vpop.f32.mrb[0].mxu0
  %v457 = vadd.f32 0.0, %v456
  %v458 = vpop.f32.mrb[0].mxu0
  %v459 = vadd.f32 0.0, %v458
  %460 = vmatprep.mubr.f32.mxu0 0.0
  %461 = vmatmul.mubr.f32.gmra.mrb[0].mxu0 %v174
  %v462 = vpop.f32.mrb[0].mxu0
  %v463 = vadd.f32 0.0, %v462
  %v464 = vpop.f32.mrb[0].mxu0
  %v465 = vadd.f32 0.0, %v464
  %466 = vmatprep.mubr.f32.mxu0 0.0
  %467 = vmatmul.mubr.f32.gmra.mrb[0].mxu0 %v177
  %v468 = vpop.f32.mrb[0].mxu0
  %v469 = vadd.f32 0.0, %v468
  %v470 = vpop.f32.mrb[0].mxu0
  %v471 = vadd.f32 0.0, %v470
  %472 = vmatprep.mubr.f32.mxu0 0.0
  %473 = vmatmul.mubr.f32.gmra.mrb[0].mxu0 %v180
  %v474 = vpop.f32.mrb[0].mxu0
  %v475 = vadd.f32 0.0, %v474
  %v476 = vpop.f32.mrb[0].mxu0
  %v477 = vadd.f32 0.0, %v476
  %478 = vmatprep.mubr.f32.mxu0 0.0
  %479 = vmatmul.mubr.f32.gmra.mrb[0].mxu0 %v183
  %v480 = vpop.f32.mrb[0].mxu0
  %v481 = vadd.f32 0.0, %v480
  %v482 = vpop.f32.mrb[0].mxu0
  %v483 = vadd.f32 0.0, %v482
  %484 = vmatprep.mubr.f32.mxu0 0.0
  %485 = vmatmul.mubr.f32.gmra.mrb[0].mxu0 %v186
  %v486 = vpop.f32.mrb[0].mxu0
  %v487 = vadd.f32 0.0, %v486
  %v488 = vpop.f32.mrb[0].mxu0
  %v489 = vadd.f32 0.0, %v488
  %490 = vmatprep.mubr.f32.mxu0 0.0
  %491 = vmatmul.mubr.f32.gmra.mrb[0].mxu0 %v189
  %v492 = vpop.f32.mrb[0].mxu0
  %v493 = vadd.f32 0.0, %v492
  %v494 = vpop.f32.mrb[0].mxu0
  %v495 = vadd.f32 0.0, %v494
  %496 = vmatprep.mubr.f32.mxu0 0.0
  %497 = vmatmul.mubr.f32.gmra.mrb[0].mxu0 %v192
  %v498 = vpop.f32.mrb[0].mxu0
  %v499 = vadd.f32 0.0, %v498
  %v500 = vpop.f32.mrb[0].mxu0
  %v501 = vadd.f32 0.0, %v500
  %502 = vmatprep.mubr.f32.mxu0 0.0
  %503 = vmatmul.mubr.f32.gmra.mrb[0].mxu0 %v195
  %v504 = vpop.f32.mrb[0].mxu0
  %v505 = vadd.f32 0.0, %v504
  %v506 = vpop.f32.mrb[0].mxu0
  %v507 = vadd.f32 0.0, %v506
  %508 = vmatprep.mubr.f32.mxu0 0.0
  %509 = vmatmul.mubr.f32.gmra.mrb[0].mxu0 %v198
  %v510 = vpop.f32.mrb[0].mxu0
  %v511 = vadd.f32 0.0, %v510
  %v512 = vpop.f32.mrb[0].mxu0
  %v513 = vadd.f32 0.0, %v512
  %514 = vmatprep.mubr.f32.mxu0 0.0
  %515 = vmatmul.mubr.f32.gmra.mrb[0].mxu0 %v201
  %v516 = vpop.f32.mrb[0].mxu0
  %v517 = vadd.f32 0.0, %v516
  %v518 = vpop.f32.mrb[0].mxu0
  %v519 = vadd.f32 0.0, %v518
  %520 = vmatprep.mubr.f32.mxu0 0.0
  %521 = vmatmul.mubr.f32.gmra.mrb[0].mxu0 %v204
  %v522 = vpop.f32.mrb[0].mxu0
  %v523 = vadd.f32 0.0, %v522
  %v524 = vpop.f32.mrb[0].mxu0
  %v525 = vadd.f32 0.0, %v524
  %526 = vmatprep.mubr.f32.mxu0 0.0
  %527 = vmatmul.mubr.f32.gmra.mrb[0].mxu0 %v207
  %v528 = vpop.f32.mrb[0].mxu0
  %v529 = vadd.f32 0.0, %v528
  %v530 = vpop.f32.mrb[0].mxu0
  %v531 = vadd.f32 0.0, %v530
  %532 = vmatprep.mubr.f32.mxu0 0.0
  %533 = vmatmul.mubr.f32.gmra.mrb[0].mxu0 %v210
  %v534 = vpop.f32.mrb[0].mxu0
  %v535 = vadd.f32 0.0, %v534
  %v536 = vpop.f32.mrb[0].mxu0
  %v537 = vadd.f32 0.0, %v536
  %538 = vmatprep.mubr.f32.mxu0 0.0
  %539 = vmatmul.mubr.f32.gmra.mrb[0].mxu0 %v213
  %v540 = vpop.f32.mrb[0].mxu0
  %v541 = vadd.f32 0.0, %v540
  %v542 = vpop.f32.mrb[0].mxu0
  %v543 = vadd.f32 0.0, %v542
  %544 = vmatprep.mubr.f32.mxu0 0.0
  %545 = vmatmul.mubr.f32.gmra.mrb[0].mxu0 %v216
  %v546 = vpop.f32.mrb[0].mxu0
  %v547 = vadd.f32 0.0, %v546
  %v548 = vpop.f32.mrb[0].mxu0
  %v549 = vadd.f32 0.0, %v548
  %550 = vmatprep.mubr.f32.mxu0 0.0
  %551 = vmatmul.mubr.f32.gmra.mrb[0].mxu0 %v219
  %v552 = vpop.f32.mrb[0].mxu0
  %v553 = vadd.f32 0.0, %v552
  %v554 = vpop.f32.mrb[0].mxu0
  %v555 = vadd.f32 0.0, %v554
  %556 = vmatprep.mubr.f32.mxu0 0.0
  %557 = vmatmul.mubr.f32.gmra.mrb[0].mxu0 %v222
  %v558 = vpop.f32.mrb[0].mxu0
  %v559 = vadd.f32 0.0, %v558
  %v560 = vpop.f32.mrb[0].mxu0
  %v561 = vadd.f32 0.0, %v560
  %562 = vmatprep.mubr.f32.mxu0 0.0
  %563 = vmatmul.mubr.f32.gmra.mrb[0].mxu0 %v225
  %v564 = vpop.f32.mrb[0].mxu0
  %v565 = vadd.f32 0.0, %v564
  %v566 = vpop.f32.mrb[0].mxu0
  %v567 = vadd.f32 0.0, %v566
  %568 = vmatprep.mubr.f32.mxu0 0.0
  %569 = vmatmul.mubr.f32.gmra.mrb[0].mxu0 %v228
  %v570 = vpop.f32.mrb[0].mxu0
  %v571 = vadd.f32 0.0, %v570
  %v572 = vpop.f32.mrb[0].mxu0
  %v573 = vadd.f32 0.0, %v572
  %574 = vmatprep.mubr.f32.mxu0 0.0
  %575 = vmatmul.mubr.f32.gmra.mrb[0].mxu0 %v231
  %v576 = vpop.f32.mrb[0].mxu0
  %v577 = vadd.f32 0.0, %v576
  %v578 = vpop.f32.mrb[0].mxu0
  %v579 = vadd.f32 0.0, %v578
  %580 = vmatprep.mubr.f32.mxu0 0.0
  %581 = vmatmul.mubr.f32.gmra.mrb[0].mxu0 %v234
  %v582 = vpop.f32.mrb[0].mxu0
  %v583 = vadd.f32 0.0, %v582
  %v584 = vpop.f32.mrb[0].mxu0
  %v585 = vadd.f32 0.0, %v584
  %586 = vmatprep.mubr.f32.mxu0 0.0
  %587 = vmatmul.mubr.f32.gmra.mrb[0].mxu0 %v237
  %v588 = vpop.f32.mrb[0].mxu0
  %v589 = vadd.f32 0.0, %v588
  %v590 = vpop.f32.mrb[0].mxu0
  %v591 = vadd.f32 0.0, %v590
  %592 = vmatprep.mubr.f32.mxu0 0.0
  %593 = vmatmul.mubr.f32.gmra.mrb[0].mxu0 %v240
  %v594 = vpop.f32.mrb[0].mxu0
  %v595 = vadd.f32 0.0, %v594
  %v596 = vpop.f32.mrb[0].mxu0
  %v597 = vadd.f32 0.0, %v596
  %598 = vmatprep.mubr.f32.mxu0 0.0
  %599 = vmatmul.mubr.f32.gmra.mrb[0].mxu0 %v243
  %v600 = vpop.f32.mrb[0].mxu0
  %v601 = vadd.f32 0.0, %v600
  %v602 = vpop.f32.mrb[0].mxu0
  %v603 = vadd.f32 0.0, %v602
  %604 = vmatprep.mubr.f32.mxu0 0.0
  %605 = vmatmul.mubr.f32.gmra.mrb[0].mxu0 %v246
  %v606 = vpop.f32.mrb[0].mxu0
  %v607 = vadd.f32 0.0, %v606
  %v608 = vpop.f32.mrb[0].mxu0
  %v609 = vadd.f32 0.0, %v608
  %610 = vmatprep.mubr.f32.mxu0 0.0
  %611 = vmatmul.mubr.f32.gmra.mrb[0].mxu0 %v249
  %v612 = vpop.f32.mrb[0].mxu0
  %v613 = vadd.f32 0.0, %v612
  %v614 = vpop.f32.mrb[0].mxu0
  %v615 = vadd.f32 0.0, %v614
  %616 = vdwg.mxu0
  %v617 = vmax.f32 %v325, 0.0
  %v618 = vmax.f32 %v327, 0.0
  %v619 = vmax.f32 %v331, 0.0
  %v620 = vmax.f32 %v333, 0.0
  %v621 = vmax.f32 %v337, 0.0
  %v622 = vmax.f32 %v339, 0.0
  %v623 = vmax.f32 %v343, 0.0
  %v624 = vmax.f32 %v345, 0.0
  %v625 = vmax.f32 %v349, 0.0
  %v626 = vmax.f32 %v351, 0.0
  %v627 = vmax.f32 %v355, 0.0
  %v628 = vmax.f32 %v357, 0.0
  %v629 = vmax.f32 %v361, 0.0
  %v630 = vmax.f32 %v363, 0.0
  %v631 = vmax.f32 %v367, 0.0
  %v632 = vmax.f32 %v369, 0.0
  %v633 = vmax.f32 %v373, 0.0
  %v634 = vmax.f32 %v375, 0.0
  %v635 = vmax.f32 %v379, 0.0
  %v636 = vmax.f32 %v381, 0.0
  %v637 = vmax.f32 %v385, 0.0
  %v638 = vmax.f32 %v387, 0.0
  %v639 = vmax.f32 %v391, 0.0
  %v640 = vmax.f32 %v393, 0.0
  %v641 = vmax.f32 %v397, 0.0
  %v642 = vmax.f32 %v399, 0.0
  %v643 = vmax.f32 %v403, 0.0
  %v644 = vmax.f32 %v405, 0.0
  %v645 = vmax.f32 %v409, 0.0
  %v646 = vmax.f32 %v411, 0.0
  %v647 = vmax.f32 %v415, 0.0
  %v648 = vmax.f32 %v417, 0.0
  %v649 = vmax.f32 %v421, 0.0
  %v650 = vmax.f32 %v423, 0.0
  %v651 = vmax.f32 %v427, 0.0
  %v652 = vmax.f32 %v429, 0.0
  %v653 = vmax.f32 %v433, 0.0
  %v654 = vmax.f32 %v435, 0.0
  %v655 = vmax.f32 %v439, 0.0
  %v656 = vmax.f32 %v441, 0.0
  %v657 = vmax.f32 %v445, 0.0
  %v658 = vmax.f32 %v447, 0.0
  %v659 = vmax.f32 %v451, 0.0
  %v660 = vmax.f32 %v453, 0.0
  %v661 = vmax.f32 %v457, 0.0
  %v662 = vmax.f32 %v459, 0.0
  %v663 = vmax.f32 %v463, 0.0
  %v664 = vmax.f32 %v465, 0.0
  %v665 = vmax.f32 %v469, 0.0
  %v666 = vmax.f32 %v471, 0.0
  %v667 = vmax.f32 %v475, 0.0
  %v668 = vmax.f32 %v477, 0.0
  %v669 = vmax.f32 %v481, 0.0
  %v670 = vmax.f32 %v483, 0.0
  %v671 = vmax.f32 %v487, 0.0
  %v672 = vmax.f32 %v489, 0.0
  %v673 = vmax.f32 %v493, 0.0
  %v674 = vmax.f32 %v495, 0.0
  %v675 = vmax.f32 %v499, 0.0
  %v676 = vmax.f32 %v501, 0.0
  %v677 = vmax.f32 %v505, 0.0
  %v678 = vmax.f32 %v507, 0.0
  %v679 = vmax.f32 %v511, 0.0
  %v680 = vmax.f32 %v513, 0.0
  %v681 = vmax.f32 %v517, 0.0
  %v682 = vmax.f32 %v519, 0.0
  %v683 = vmax.f32 %v523, 0.0
  %v684 = vmax.f32 %v525, 0.0
  %v685 = vmax.f32 %v529, 0.0
  %v686 = vmax.f32 %v531, 0.0
  %v687 = vmax.f32 %v535, 0.0
  %v688 = vmax.f32 %v537, 0.0
  %v689 = vmax.f32 %v541, 0.0
  %v690 = vmax.f32 %v543, 0.0
  %v691 = vmax.f32 %v547, 0.0
  %v692 = vmax.f32 %v549, 0.0
  %v693 = vmax.f32 %v553, 0.0
  %v694 = vmax.f32 %v555, 0.0
  %v695 = vmax.f32 %v559, 0.0
  %v696 = vmax.f32 %v561, 0.0
  %v697 = vmax.f32 %v565, 0.0
  %v698 = vmax.f32 %v567, 0.0
  %v699 = vmax.f32 %v571, 0.0
  %v700 = vmax.f32 %v573, 0.0
  %v701 = vmax.f32 %v577, 0.0
  %v702 = vmax.f32 %v579, 0.0
  %v703 = vmax.f32 %v583, 0.0
  %v704 = vmax.f32 %v585, 0.0
  %v705 = vmax.f32 %v589, 0.0
  %v706 = vmax.f32 %v591, 0.0
  %v707 = vmax.f32 %v595, 0.0
  %v708 = vmax.f32 %v597, 0.0
  %v709 = vmax.f32 %v601, 0.0
  %v710 = vmax.f32 %v603, 0.0
  %v711 = vmax.f32 %v607, 0.0
  %v712 = vmax.f32 %v609, 0.0
  %v713 = vmax.f32 %v613, 0.0
  %v714 = vmax.f32 %v615, 0.0
  %v715 = vld [vmem:[%s2] sm:$0xff]
  %v716 = vld [vmem:[%s2 + $0x8] sm:$0xff]
  %v717 = vld [vmem:[%s2 + $0x10] sm:$0xff]
  %v718 = vld [vmem:[%s2 + $0x18] sm:$0xff]
  %v719 = vld [vmem:[%s2 + $0x20] sm:$0xff]
  %v720 = vld [vmem:[%s2 + $0x28] sm:$0xff]
  %v721 = vld [vmem:[%s2 + $0x30] sm:$0xff]
  %v722 = vld [vmem:[%s2 + $0x38] sm:$0xff]
  %v723 = vld [vmem:[%s2 + $0x40] sm:$0xff]
  %v724 = vld [vmem:[%s2 + $0x48] sm:$0xff]
  %v725 = vld [vmem:[%s2 + $0x50] sm:$0xff]
  %v726 = vld [vmem:[%s2 + $0x58] sm:$0xff]
  %v727 = vld [vmem:[%s2 + $0x60] sm:$0xff]
  %v728 = vld [vmem:[%s2 + $0x68] sm:$0xff]
  %v729 = vld [vmem:[%s2 + $0x70] sm:$0xff]
  %v730 = vld [vmem:[%s2 + $0x78] sm:$0xff]
  %v731 = vld [vmem:[%s2 + $0x80] sm:$0xff]
  %v732 = vld [vmem:[%s2 + $0x88] sm:$0xff]
  %v733 = vld [vmem:[%s3] sm:$0x1]
  %v735 = vlaneseq
  %v736 = vshrl.u32 %v735, 7
  %v737 = vsub.s32 0, %v736
  %v738 = vrot.slane %v733, %v737
  %vm740 = vcmask 130048
  %v742 = vsel %vm740, %v618, 0
  %v745 = vsel %vm740, %v620, 0
  %v748 = vsel %vm740, %v622, 0
  %v751 = vsel %vm740, %v624, 0
  %v754 = vsel %vm740, %v626, 0
  %v757 = vsel %vm740, %v628, 0
  %v760 = vsel %vm740, %v630, 0
  %v763 = vsel %vm740, %v632, 0
  %v766 = vsel %vm740, %v634, 0
  %v769 = vsel %vm740, %v636, 0
  %v772 = vsel %vm740, %v638, 0
  %v775 = vsel %vm740, %v640, 0
  %v778 = vsel %vm740, %v642, 0
  %v781 = vsel %vm740, %v644, 0
  %v784 = vsel %vm740, %v646, 0
  %v787 = vsel %vm740, %v648, 0
  %v790 = vsel %vm740, %v650, 0
  %v793 = vsel %vm740, %v652, 0
  %v796 = vsel %vm740, %v654, 0
  %v799 = vsel %vm740, %v656, 0
  %v802 = vsel %vm740, %v658, 0
  %v805 = vsel %vm740, %v660, 0
  %v808 = vsel %vm740, %v662, 0
  %v811 = vsel %vm740, %v664, 0
  %v814 = vsel %vm740, %v666, 0
  %v817 = vsel %vm740, %v668, 0
  %v820 = vsel %vm740, %v670, 0
  %v823 = vsel %vm740, %v672, 0
  %v826 = vsel %vm740, %v674, 0
  %v829 = vsel %vm740, %v676, 0
  %v832 = vsel %vm740, %v678, 0
  %v835 = vsel %vm740, %v680, 0
  %v838 = vsel %vm740, %v682, 0
  %v841 = vsel %vm740, %v684, 0
  %v844 = vsel %vm740, %v686, 0
  %v847 = vsel %vm740, %v688, 0
  %v850 = vsel %vm740, %v690, 0
  %v853 = vsel %vm740, %v692, 0
  %v856 = vsel %vm740, %v694, 0
  %v859 = vsel %vm740, %v696, 0
  %v862 = vsel %vm740, %v698, 0
  %v865 = vsel %vm740, %v700, 0
  %v868 = vsel %vm740, %v702, 0
  %v871 = vsel %vm740, %v704, 0
  %v874 = vsel %vm740, %v706, 0
  %v877 = vsel %vm740, %v708, 0
  %v880 = vsel %vm740, %v710, 0
  %v883 = vsel %vm740, %v712, 0
  %v886 = vsel %vm740, %v714, 0
  %888 = vmatprep.subr.mxu0 0.0
  %889 = vmatpush1.msra.mxu0 %v715
  %890 = vmatprep.subr.mxu0 0.0
  %891 = vmatpush1.msra.mxu0 %v716
  %892 = vmatprep.subr.mxu0 0.0
  %893 = vmatpush1.msra.mxu0 %v717
  %894 = vmatprep.subr.mxu0 0.0
  %895 = vmatpush1.msra.mxu0 %v718
  %896 = vmatprep.subr.mxu0 0.0
  %897 = vmatpush1.msra.mxu0 %v719
  %898 = vmatprep.subr.mxu0 0.0
  %899 = vmatpush1.msra.mxu0 %v720
  %900 = vmatprep.subr.mxu0 0.0
  %901 = vmatpush1.msra.mxu0 %v721
  %902 = vmatprep.subr.mxu0 0.0
  %903 = vmatpush1.msra.mxu0 %v722
  %904 = vmatprep.subr.mxu0 0.0
  %905 = vmatpush1.msra.mxu0 %v723
  %906 = vmatprep.subr.mxu0 0.0
  %907 = vmatpush1.msra.mxu0 %v724
  %908 = vmatprep.subr.mxu0 0.0
  %909 = vmatpush1.msra.mxu0 %v725
  %910 = vmatprep.subr.mxu0 0.0
  %911 = vmatpush1.msra.mxu0 %v726
  %912 = vmatprep.subr.mxu0 0.0
  %913 = vmatpush1.msra.mxu0 %v727
  %914 = vmatprep.subr.mxu0 0.0
  %915 = vmatpush1.msra.mxu0 %v728
  %916 = vmatprep.subr.mxu0 0.0
  %917 = vmatpush1.msra.mxu0 %v729
  %918 = vmatprep.subr.mxu0 0.0
  %919 = vmatpush1.msra.mxu0 %v730
  %920 = vmatprep.subr.mxu0 0.0
  %921 = vmatpush1.msra.mxu0 %v731
  %922 = vmatprep.subr.mxu0 0.0
  %923 = vmatpush1.msra.mxu0 %v732
  %924 = vmatprep.subr.mxu0 0.0
  %925 = vmatpush1.msra.mxu0 0.0
  %926 = vmatprep.subr.mxu0 0.0
  %927 = vmatpush1.msra.mxu0 0.0
  %928 = vmatprep.subr.mxu0 0.0
  %929 = vmatpush1.msra.mxu0 0.0
  %930 = vmatprep.subr.mxu0 0.0
  %931 = vmatpush1.msra.mxu0 0.0
  %932 = vmatprep.subr.mxu0 0.0
  %933 = vmatpush1.msra.mxu0 0.0
  %934 = vmatprep.subr.mxu0 0.0
  %935 = vmatpush1.msra.mxu0 0.0
  %936 = vmatprep.subr.mxu0 0.0
  %937 = vmatpush1.msra.mxu0 0.0
  %938 = vmatprep.subr.mxu0 0.0
  %939 = vmatpush1.msra.mxu0 0.0
  %940 = vmatprep.subr.mxu0 0.0
  %941 = vmatpush1.msra.mxu0 0.0
  %942 = vmatprep.subr.mxu0 0.0
  %943 = vmatpush1.msra.mxu0 0.0
  %944 = vmatprep.subr.mxu0 0.0
  %945 = vmatpush1.msra.mxu0 0.0
  %946 = vmatprep.subr.mxu0 0.0
  %947 = vmatpush1.msra.mxu0 0.0
  %948 = vmatprep.subr.mxu0 0.0
  %949 = vmatpush1.msra.mxu0 0.0
  %950 = vmatprep.subr.mxu0 0.0
  %951 = vmatpush1.msra.mxu0 0.0
  %952 = vmatprep.mubr.f32.mxu0 %v742
  %953 = vmatmul.mubr.f32.gmra.mrb[0].mxu0 %v617
  %v954 = vpop.f32.mrb[0].mxu0
  %v955 = vadd.f32 %v738, %v954
  %v956 = vpop.f32.mrb[0].mxu0
  %957 = vmatprep.mubr.f32.mxu0 %v745
  %958 = vmatmul.mubr.f32.gmra.mrb[0].mxu0 %v619
  %v959 = vpop.f32.mrb[0].mxu0
  %v960 = vadd.f32 %v738, %v959
  %v961 = vpop.f32.mrb[0].mxu0
  %962 = vmatprep.mubr.f32.mxu0 %v748
  %963 = vmatmul.mubr.f32.gmra.mrb[0].mxu0 %v621
  %v964 = vpop.f32.mrb[0].mxu0
  %v965 = vadd.f32 %v738, %v964
  %v966 = vpop.f32.mrb[0].mxu0
  %967 = vmatprep.mubr.f32.mxu0 %v751
  %968 = vmatmul.mubr.f32.gmra.mrb[0].mxu0 %v623
  %v969 = vpop.f32.mrb[0].mxu0
  %v970 = vadd.f32 %v738, %v969
  %v971 = vpop.f32.mrb[0].mxu0
  %972 = vmatprep.mubr.f32.mxu0 %v754
  %973 = vmatmul.mubr.f32.gmra.mrb[0].mxu0 %v625
  %v974 = vpop.f32.mrb[0].mxu0
  %v975 = vadd.f32 %v738, %v974
  %v976 = vpop.f32.mrb[0].mxu0
  %977 = vmatprep.mubr.f32.mxu0 %v757
  %978 = vmatmul.mubr.f32.gmra.mrb[0].mxu0 %v627
  %v979 = vpop.f32.mrb[0].mxu0
  %v980 = vadd.f32 %v738, %v979
  %v981 = vpop.f32.mrb[0].mxu0
  %982 = vmatprep.mubr.f32.mxu0 %v760
  %983 = vmatmul.mubr.f32.gmra.mrb[0].mxu0 %v629
  %v984 = vpop.f32.mrb[0].mxu0
  %v985 = vadd.f32 %v738, %v984
  %v986 = vpop.f32.mrb[0].mxu0
  %987 = vmatprep.mubr.f32.mxu0 %v763
  %988 = vmatmul.mubr.f32.gmra.mrb[0].mxu0 %v631
  %v989 = vpop.f32.mrb[0].mxu0
  %v990 = vadd.f32 %v738, %v989
  %v991 = vpop.f32.mrb[0].mxu0
  %992 = vmatprep.mubr.f32.mxu0 %v766
  %993 = vmatmul.mubr.f32.gmra.mrb[0].mxu0 %v633
  %v994 = vpop.f32.mrb[0].mxu0
  %v995 = vadd.f32 %v738, %v994
  %v996 = vpop.f32.mrb[0].mxu0
  %997 = vmatprep.mubr.f32.mxu0 %v769
  %998 = vmatmul.mubr.f32.gmra.mrb[0].mxu0 %v635
  %v999 = vpop.f32.mrb[0].mxu0
  %v1000 = vadd.f32 %v738, %v999
  %v1001 = vpop.f32.mrb[0].mxu0
  %1002 = vmatprep.mubr.f32.mxu0 %v772
  %1003 = vmatmul.mubr.f32.gmra.mrb[0].mxu0 %v637
  %v1004 = vpop.f32.mrb[0].mxu0
  %v1005 = vadd.f32 %v738, %v1004
  %v1006 = vpop.f32.mrb[0].mxu0
  %1007 = vmatprep.mubr.f32.mxu0 %v775
  %1008 = vmatmul.mubr.f32.gmra.mrb[0].mxu0 %v639
  %v1009 = vpop.f32.mrb[0].mxu0
  %v1010 = vadd.f32 %v738, %v1009
  %v1011 = vpop.f32.mrb[0].mxu0
  %1012 = vmatprep.mubr.f32.mxu0 %v778
  %1013 = vmatmul.mubr.f32.gmra.mrb[0].mxu0 %v641
  %v1014 = vpop.f32.mrb[0].mxu0
  %v1015 = vadd.f32 %v738, %v1014
  %v1016 = vpop.f32.mrb[0].mxu0
  %1017 = vmatprep.mubr.f32.mxu0 %v781
  %1018 = vmatmul.mubr.f32.gmra.mrb[0].mxu0 %v643
  %v1019 = vpop.f32.mrb[0].mxu0
  %v1020 = vadd.f32 %v738, %v1019
  %v1021 = vpop.f32.mrb[0].mxu0
  %1022 = vmatprep.mubr.f32.mxu0 %v784
  %1023 = vmatmul.mubr.f32.gmra.mrb[0].mxu0 %v645
  %v1024 = vpop.f32.mrb[0].mxu0
  %v1025 = vadd.f32 %v738, %v1024
  %v1026 = vpop.f32.mrb[0].mxu0
  %1027 = vmatprep.mubr.f32.mxu0 %v787
  %1028 = vmatmul.mubr.f32.gmra.mrb[0].mxu0 %v647
  %v1029 = vpop.f32.mrb[0].mxu0
  %v1030 = vadd.f32 %v738, %v1029
  %v1031 = vpop.f32.mrb[0].mxu0
  %1032 = vmatprep.mubr.f32.mxu0 %v790
  %1033 = vmatmul.mubr.f32.gmra.mrb[0].mxu0 %v649
  %v1034 = vpop.f32.mrb[0].mxu0
  %v1035 = vadd.f32 %v738, %v1034
  %v1036 = vpop.f32.mrb[0].mxu0
  %1037 = vmatprep.mubr.f32.mxu0 %v793
  %1038 = vmatmul.mubr.f32.gmra.mrb[0].mxu0 %v651
  %v1039 = vpop.f32.mrb[0].mxu0
  %v1040 = vadd.f32 %v738, %v1039
  %v1041 = vpop.f32.mrb[0].mxu0
  %1042 = vmatprep.mubr.f32.mxu0 %v796
  %1043 = vmatmul.mubr.f32.gmra.mrb[0].mxu0 %v653
  %v1044 = vpop.f32.mrb[0].mxu0
  %v1045 = vadd.f32 %v738, %v1044
  %v1046 = vpop.f32.mrb[0].mxu0
  %1047 = vmatprep.mubr.f32.mxu0 %v799
  %1048 = vmatmul.mubr.f32.gmra.mrb[0].mxu0 %v655
  %v1049 = vpop.f32.mrb[0].mxu0
  %v1050 = vadd.f32 %v738, %v1049
  %v1051 = vpop.f32.mrb[0].mxu0
  %1052 = vmatprep.mubr.f32.mxu0 %v802
  %1053 = vmatmul.mubr.f32.gmra.mrb[0].mxu0 %v657
  %v1054 = vpop.f32.mrb[0].mxu0
  %v1055 = vadd.f32 %v738, %v1054
  %v1056 = vpop.f32.mrb[0].mxu0
  %1057 = vmatprep.mubr.f32.mxu0 %v805
  %1058 = vmatmul.mubr.f32.gmra.mrb[0].mxu0 %v659
  %v1059 = vpop.f32.mrb[0].mxu0
  %v1060 = vadd.f32 %v738, %v1059
  %v1061 = vpop.f32.mrb[0].mxu0
  %1062 = vmatprep.mubr.f32.mxu0 %v808
  %1063 = vmatmul.mubr.f32.gmra.mrb[0].mxu0 %v661
  %v1064 = vpop.f32.mrb[0].mxu0
  %v1065 = vadd.f32 %v738, %v1064
  %v1066 = vpop.f32.mrb[0].mxu0
  %1067 = vmatprep.mubr.f32.mxu0 %v811
  %1068 = vmatmul.mubr.f32.gmra.mrb[0].mxu0 %v663
  %v1069 = vpop.f32.mrb[0].mxu0
  %v1070 = vadd.f32 %v738, %v1069
  %v1071 = vpop.f32.mrb[0].mxu0
  %1072 = vmatprep.mubr.f32.mxu0 %v814
  %1073 = vmatmul.mubr.f32.gmra.mrb[0].mxu0 %v665
  %v1074 = vpop.f32.mrb[0].mxu0
  %v1075 = vadd.f32 %v738, %v1074
  %v1076 = vpop.f32.mrb[0].mxu0
  %1077 = vmatprep.mubr.f32.mxu0 %v817
  %1078 = vmatmul.mubr.f32.gmra.mrb[0].mxu0 %v667
  %v1079 = vpop.f32.mrb[0].mxu0
  %v1080 = vadd.f32 %v738, %v1079
  %v1081 = vpop.f32.mrb[0].mxu0
  %1082 = vmatprep.mubr.f32.mxu0 %v820
  %1083 = vmatmul.mubr.f32.gmra.mrb[0].mxu0 %v669
  %v1084 = vpop.f32.mrb[0].mxu0
  %v1085 = vadd.f32 %v738, %v1084
  %v1086 = vpop.f32.mrb[0].mxu0
  %1087 = vmatprep.mubr.f32.mxu0 %v823
  %1088 = vmatmul.mubr.f32.gmra.mrb[0].mxu0 %v671
  %v1089 = vpop.f32.mrb[0].mxu0
  %v1090 = vadd.f32 %v738, %v1089
  %v1091 = vpop.f32.mrb[0].mxu0
  %1092 = vmatprep.mubr.f32.mxu0 %v826
  %1093 = vmatmul.mubr.f32.gmra.mrb[0].mxu0 %v673
  %v1094 = vpop.f32.mrb[0].mxu0
  %v1095 = vadd.f32 %v738, %v1094
  %v1096 = vpop.f32.mrb[0].mxu0
  %1097 = vmatprep.mubr.f32.mxu0 %v829
  %1098 = vmatmul.mubr.f32.gmra.mrb[0].mxu0 %v675
  %v1099 = vpop.f32.mrb[0].mxu0
  %v1100 = vadd.f32 %v738, %v1099
  %v1101 = vpop.f32.mrb[0].mxu0
  %1102 = vmatprep.mubr.f32.mxu0 %v832
  %1103 = vmatmul.mubr.f32.gmra.mrb[0].mxu0 %v677
  %v1104 = vpop.f32.mrb[0].mxu0
  %v1105 = vadd.f32 %v738, %v1104
  %v1106 = vpop.f32.mrb[0].mxu0
  %1107 = vmatprep.mubr.f32.mxu0 %v835
  %1108 = vmatmul.mubr.f32.gmra.mrb[0].mxu0 %v679
  %v1109 = vpop.f32.mrb[0].mxu0
  %v1110 = vadd.f32 %v738, %v1109
  %v1111 = vpop.f32.mrb[0].mxu0
  %1112 = vmatprep.mubr.f32.mxu0 %v838
  %1113 = vmatmul.mubr.f32.gmra.mrb[0].mxu0 %v681
  %v1114 = vpop.f32.mrb[0].mxu0
  %v1115 = vadd.f32 %v738, %v1114
  %v1116 = vpop.f32.mrb[0].mxu0
  %1117 = vmatprep.mubr.f32.mxu0 %v841
  %1118 = vmatmul.mubr.f32.gmra.mrb[0].mxu0 %v683
  %v1119 = vpop.f32.mrb[0].mxu0
  %v1120 = vadd.f32 %v738, %v1119
  %v1121 = vpop.f32.mrb[0].mxu0
  %1122 = vmatprep.mubr.f32.mxu0 %v844
  %1123 = vmatmul.mubr.f32.gmra.mrb[0].mxu0 %v685
  %v1124 = vpop.f32.mrb[0].mxu0
  %v1125 = vadd.f32 %v738, %v1124
  %v1126 = vpop.f32.mrb[0].mxu0
  %1127 = vmatprep.mubr.f32.mxu0 %v847
  %1128 = vmatmul.mubr.f32.gmra.mrb[0].mxu0 %v687
  %v1129 = vpop.f32.mrb[0].mxu0
  %v1130 = vadd.f32 %v738, %v1129
  %v1131 = vpop.f32.mrb[0].mxu0
  %1132 = vmatprep.mubr.f32.mxu0 %v850
  %1133 = vmatmul.mubr.f32.gmra.mrb[0].mxu0 %v689
  %v1134 = vpop.f32.mrb[0].mxu0
  %v1135 = vadd.f32 %v738, %v1134
  %v1136 = vpop.f32.mrb[0].mxu0
  %1137 = vmatprep.mubr.f32.mxu0 %v853
  %1138 = vmatmul.mubr.f32.gmra.mrb[0].mxu0 %v691
  %v1139 = vpop.f32.mrb[0].mxu0
  %v1140 = vadd.f32 %v738, %v1139
  %v1141 = vpop.f32.mrb[0].mxu0
  %1142 = vmatprep.mubr.f32.mxu0 %v856
  %1143 = vmatmul.mubr.f32.gmra.mrb[0].mxu0 %v693
  %v1144 = vpop.f32.mrb[0].mxu0
  %v1145 = vadd.f32 %v738, %v1144
  %v1146 = vpop.f32.mrb[0].mxu0
  %1147 = vmatprep.mubr.f32.mxu0 %v859
  %1148 = vmatmul.mubr.f32.gmra.mrb[0].mxu0 %v695
  %v1149 = vpop.f32.mrb[0].mxu0
  %v1150 = vadd.f32 %v738, %v1149
  %v1151 = vpop.f32.mrb[0].mxu0
  %1152 = vmatprep.mubr.f32.mxu0 %v862
  %1153 = vmatmul.mubr.f32.gmra.mrb[0].mxu0 %v697
  %v1154 = vpop.f32.mrb[0].mxu0
  %v1155 = vadd.f32 %v738, %v1154
  %v1156 = vpop.f32.mrb[0].mxu0
  %1157 = vmatprep.mubr.f32.mxu0 %v865
  %1158 = vmatmul.mubr.f32.gmra.mrb[0].mxu0 %v699
  %v1159 = vpop.f32.mrb[0].mxu0
  %v1160 = vadd.f32 %v738, %v1159
  %v1161 = vpop.f32.mrb[0].mxu0
  %1162 = vmatprep.mubr.f32.mxu0 %v868
  %1163 = vmatmul.mubr.f32.gmra.mrb[0].mxu0 %v701
  %v1164 = vpop.f32.mrb[0].mxu0
  %v1165 = vadd.f32 %v738, %v1164
  %v1166 = vpop.f32.mrb[0].mxu0
  %1167 = vmatprep.mubr.f32.mxu0 %v871
  %1168 = vmatmul.mubr.f32.gmra.mrb[0].mxu0 %v703
  %v1169 = vpop.f32.mrb[0].mxu0
  %v1170 = vadd.f32 %v738, %v1169
  %v1171 = vpop.f32.mrb[0].mxu0
  %1172 = vmatprep.mubr.f32.mxu0 %v874
  %1173 = vmatmul.mubr.f32.gmra.mrb[0].mxu0 %v705
  %v1174 = vpop.f32.mrb[0].mxu0
  %v1175 = vadd.f32 %v738, %v1174
  %v1176 = vpop.f32.mrb[0].mxu0
  %1177 = vmatprep.mubr.f32.mxu0 %v877
  %1178 = vmatmul.mubr.f32.gmra.mrb[0].mxu0 %v707
  %v1179 = vpop.f32.mrb[0].mxu0
  %v1180 = vadd.f32 %v738, %v1179
  %v1181 = vpop.f32.mrb[0].mxu0
  %1182 = vmatprep.mubr.f32.mxu0 %v880
  %1183 = vmatmul.mubr.f32.gmra.mrb[0].mxu0 %v709
  %v1184 = vpop.f32.mrb[0].mxu0
  %v1185 = vadd.f32 %v738, %v1184
  %v1186 = vpop.f32.mrb[0].mxu0
  %1187 = vmatprep.mubr.f32.mxu0 %v883
  %1188 = vmatmul.mubr.f32.gmra.mrb[0].mxu0 %v711
  %v1189 = vpop.f32.mrb[0].mxu0
  %v1190 = vadd.f32 %v738, %v1189
  %v1191 = vpop.f32.mrb[0].mxu0
  %1192 = vmatprep.mubr.f32.mxu0 %v886
  %1193 = vmatmul.mubr.f32.gmra.mrb[0].mxu0 %v713
  %v1194 = vpop.f32.mrb[0].mxu0
  %v1195 = vadd.f32 %v738, %v1194
  %v1196 = vpop.f32.mrb[0].mxu0
  %1197 = vdwg.mxu0
  %v1198 = vmax.f32 %v955, 0.0
  %v1199 = vmax.f32 %v960, 0.0
  %v1200 = vmax.f32 %v965, 0.0
  %v1201 = vmax.f32 %v970, 0.0
  %v1202 = vmax.f32 %v975, 0.0
  %v1203 = vmax.f32 %v980, 0.0
  %v1204 = vmax.f32 %v985, 0.0
  %v1205 = vmax.f32 %v990, 0.0
  %v1206 = vmax.f32 %v995, 0.0
  %v1207 = vmax.f32 %v1000, 0.0
  %v1208 = vmax.f32 %v1005, 0.0
  %v1209 = vmax.f32 %v1010, 0.0
  %v1210 = vmax.f32 %v1015, 0.0
  %v1211 = vmax.f32 %v1020, 0.0
  %v1212 = vmax.f32 %v1025, 0.0
  %v1213 = vmax.f32 %v1030, 0.0
  %v1214 = vmax.f32 %v1035, 0.0
  %v1215 = vmax.f32 %v1040, 0.0
  %v1216 = vmax.f32 %v1045, 0.0
  %v1217 = vmax.f32 %v1050, 0.0
  %v1218 = vmax.f32 %v1055, 0.0
  %v1219 = vmax.f32 %v1060, 0.0
  %v1220 = vmax.f32 %v1065, 0.0
  %v1221 = vmax.f32 %v1070, 0.0
  %v1222 = vmax.f32 %v1075, 0.0
  %v1223 = vmax.f32 %v1080, 0.0
  %v1224 = vmax.f32 %v1085, 0.0
  %v1225 = vmax.f32 %v1090, 0.0
  %v1226 = vmax.f32 %v1095, 0.0
  %v1227 = vmax.f32 %v1100, 0.0
  %v1228 = vmax.f32 %v1105, 0.0
  %v1229 = vmax.f32 %v1110, 0.0
  %v1230 = vmax.f32 %v1115, 0.0
  %v1231 = vmax.f32 %v1120, 0.0
  %v1232 = vmax.f32 %v1125, 0.0
  %v1233 = vmax.f32 %v1130, 0.0
  %v1234 = vmax.f32 %v1135, 0.0
  %v1235 = vmax.f32 %v1140, 0.0
  %v1236 = vmax.f32 %v1145, 0.0
  %v1237 = vmax.f32 %v1150, 0.0
  %v1238 = vmax.f32 %v1155, 0.0
  %v1239 = vmax.f32 %v1160, 0.0
  %v1240 = vmax.f32 %v1165, 0.0
  %v1241 = vmax.f32 %v1170, 0.0
  %v1242 = vmax.f32 %v1175, 0.0
  %v1243 = vmax.f32 %v1180, 0.0
  %v1244 = vmax.f32 %v1185, 0.0
  %v1245 = vmax.f32 %v1190, 0.0
  %v1246 = vmax.f32 %v1195, 0.0
  %vm1247 = vcmask 261120
  %1248 = vst.msk [vmem:[#allocation2] sm:$0xff] %vm1247, %v1198
  %1249 = vst.msk [vmem:[#allocation2 + $0x8] sm:$0xff] %vm1247, %v1199
  %1250 = vst.msk [vmem:[#allocation2 + $0x10] sm:$0xff] %vm1247, %v1200
  %1251 = vst.msk [vmem:[#allocation2 + $0x18] sm:$0xff] %vm1247, %v1201
  %1252 = vst.msk [vmem:[#allocation2 + $0x20] sm:$0xff] %vm1247, %v1202
  %1253 = vst.msk [vmem:[#allocation2 + $0x28] sm:$0xff] %vm1247, %v1203
  %1254 = vst.msk [vmem:[#allocation2 + $0x30] sm:$0xff] %vm1247, %v1204
  %1255 = vst.msk [vmem:[#allocation2 + $0x38] sm:$0xff] %vm1247, %v1205
  %1256 = vst.msk [vmem:[#allocation2 + $0x40] sm:$0xff] %vm1247, %v1206
  %1257 = vst.msk [vmem:[#allocation2 + $0x48] sm:$0xff] %vm1247, %v1207
  %1258 = vst.msk [vmem:[#allocation2 + $0x50] sm:$0xff] %vm1247, %v1208
  %1259 = vst.msk [vmem:[#allocation2 + $0x58] sm:$0xff] %vm1247, %v1209
  %1260 = vst.msk [vmem:[#allocation2 + $0x60] sm:$0xff] %vm1247, %v1210
  %1261 = vst.msk [vmem:[#allocation2 + $0x68] sm:$0xff] %vm1247, %v1211
  %1262 = vst.msk [vmem:[#allocation2 + $0x70] sm:$0xff] %vm1247, %v1212
  %1263 = vst.msk [vmem:[#allocation2 + $0x78] sm:$0xff] %vm1247, %v1213
  %1264 = vst.msk [vmem:[#allocation2 + $0x80] sm:$0xff] %vm1247, %v1214
  %1265 = vst.msk [vmem:[#allocation2 + $0x88] sm:$0xff] %vm1247, %v1215
  %1266 = vst.msk [vmem:[#allocation2 + $0x90] sm:$0xff] %vm1247, %v1216
  %1267 = vst.msk [vmem:[#allocation2 + $0x98] sm:$0xff] %vm1247, %v1217
  %1268 = vst.msk [vmem:[#allocation2 + $0xa0] sm:$0xff] %vm1247, %v1218
  %1269 = vst.msk [vmem:[#allocation2 + $0xa8] sm:$0xff] %vm1247, %v1219
  %1270 = vst.msk [vmem:[#allocation2 + $0xb0] sm:$0xff] %vm1247, %v1220
  %1271 = vst.msk [vmem:[#allocation2 + $0xb8] sm:$0xff] %vm1247, %v1221
  %1272 = vst.msk [vmem:[#allocation2 + $0xc0] sm:$0xff] %vm1247, %v1222
  %1273 = vst.msk [vmem:[#allocation2 + $0xc8] sm:$0xff] %vm1247, %v1223
  %1274 = vst.msk [vmem:[#allocation2 + $0xd0] sm:$0xff] %vm1247, %v1224
  %1275 = vst.msk [vmem:[#allocation2 + $0xd8] sm:$0xff] %vm1247, %v1225
  %1276 = vst.msk [vmem:[#allocation2 + $0xe0] sm:$0xff] %vm1247, %v1226
  %1277 = vst.msk [vmem:[#allocation2 + $0xe8] sm:$0xff] %vm1247, %v1227
  %1278 = vst.msk [vmem:[#allocation2 + $0xf0] sm:$0xff] %vm1247, %v1228
  %1279 = vst.msk [vmem:[#allocation2 + $0xf8] sm:$0xff] %vm1247, %v1229
  %1280 = vst.msk [vmem:[#allocation2 + $0x100] sm:$0xff] %vm1247, %v1230
  %1281 = vst.msk [vmem:[#allocation2 + $0x108] sm:$0xff] %vm1247, %v1231
  %1282 = vst.msk [vmem:[#allocation2 + $0x110] sm:$0xff] %vm1247, %v1232
  %1283 = vst.msk [vmem:[#allocation2 + $0x118] sm:$0xff] %vm1247, %v1233
  %1284 = vst.msk [vmem:[#allocation2 + $0x120] sm:$0xff] %vm1247, %v1234
  %1285 = vst.msk [vmem:[#allocation2 + $0x128] sm:$0xff] %vm1247, %v1235
  %1286 = vst.msk [vmem:[#allocation2 + $0x130] sm:$0xff] %vm1247, %v1236
  %1287 = vst.msk [vmem:[#allocation2 + $0x138] sm:$0xff] %vm1247, %v1237
  %1288 = vst.msk [vmem:[#allocation2 + $0x140] sm:$0xff] %vm1247, %v1238
  %1289 = vst.msk [vmem:[#allocation2 + $0x148] sm:$0xff] %vm1247, %v1239
  %1290 = vst.msk [vmem:[#allocation2 + $0x150] sm:$0xff] %vm1247, %v1240
  %1291 = vst.msk [vmem:[#allocation2 + $0x158] sm:$0xff] %vm1247, %v1241
  %1292 = vst.msk [vmem:[#allocation2 + $0x160] sm:$0xff] %vm1247, %v1242
  %1293 = vst.msk [vmem:[#allocation2 + $0x168] sm:$0xff] %vm1247, %v1243
  %1294 = vst.msk [vmem:[#allocation2 + $0x170] sm:$0xff] %vm1247, %v1244
  %1295 = vst.msk [vmem:[#allocation2 + $0x178] sm:$0xff] %vm1247, %v1245
  %1296 = vst.msk [vmem:[#allocation2 + $0x180] sm:$0xff] %vm1247, %v1246
  %v1297 = vld [vmem:[#allocation2] sm:$0x3]
  %vm1298 = vcmask 254976
  %1299 = vst.msk [vmem:[#allocation3] sm:$0x3] %vm1298, %v1297
  %v1300 = vld [vmem:[#allocation2 + $0x8] sm:$0x3]
  %v1303 = vunpack.c.l.s4 1983009808
  %v1304 = vunpack.c.0.s8 %v1303
  %v1305 = vlaneseq
  %v1306 = vshrl.u32 %v1305, 7
  %v1307 = vsub.s32 %v1304, %v1306
  %v1308 = vrot.slane %v1300, %v1307
  %1309 = vrot.lane.b32.xlu0 %v1308, 32
  %v1310 = vpop.permute.xlu0 %1309
  %vm1312 = vcmask 517376
  %1313 = vst.msk [vmem:[#allocation3] sm:$0x3] %vm1312, %v1310
  %v1314 = vld [vmem:[#allocation2 + $0x10] sm:$0x3]
  %v1317 = vunpack.c.l.s4 1983009808
  %v1318 = vunpack.c.0.s8 %v1317
  %v1319 = vlaneseq
  %v1320 = vshrl.u32 %v1319, 7
  %v1321 = vsub.s32 %v1318, %v1320
  %v1322 = vrot.slane %v1314, %v1321
  %1323 = vrot.lane.b32.xlu0 %v1322, 64
  %v1324 = vpop.permute.xlu0 %1323
  %vm1326 = vcmask 779776
  %1327 = vst.msk [vmem:[#allocation3] sm:$0x3] %vm1326, %v1324
  %v1328 = vld [vmem:[#allocation2 + $0x18] sm:$0x3]
  %v1331 = vunpack.c.l.s4 1983009808
  %v1332 = vunpack.c.0.s8 %v1331
  %v1333 = vlaneseq
  %v1334 = vshrl.u32 %v1333, 7
  %v1335 = vsub.s32 %v1332, %v1334
  %v1336 = vrot.slane %v1328, %v1335
  %1337 = vrot.lane.b32.xlu0 %v1336, 96
  %v1338 = vpop.permute.xlu0 %1337
  %vm1340 = vcmask 1042176
  %1341 = vst.msk [vmem:[#allocation3] sm:$0x3] %vm1340, %v1338
  %v1342 = vld [vmem:[#allocation2 + $0x20] sm:$0x3]
  %1343 = vst.msk [vmem:[#allocation3 + $0x2] sm:$0x3] %vm1298, %v1342
  %v1344 = vld [vmem:[#allocation2 + $0x28] sm:$0x3]
  %v1347 = vunpack.c.l.s4 1983009808
  %v1348 = vunpack.c.0.s8 %v1347
  %v1349 = vlaneseq
  %v1350 = vshrl.u32 %v1349, 7
  %v1351 = vsub.s32 %v1348, %v1350
  %v1352 = vrot.slane %v1344, %v1351
  %1353 = vrot.lane.b32.xlu0 %v1352, 32
  %v1354 = vpop.permute.xlu0 %1353
  %1356 = vst.msk [vmem:[#allocation3 + $0x2] sm:$0x3] %vm1312, %v1354
  %v1357 = vld [vmem:[#allocation2 + $0x30] sm:$0x3]
  %v1360 = vunpack.c.l.s4 1983009808
  %v1361 = vunpack.c.0.s8 %v1360
  %v1362 = vlaneseq
  %v1363 = vshrl.u32 %v1362, 7
  %v1364 = vsub.s32 %v1361, %v1363
  %v1365 = vrot.slane %v1357, %v1364
  %1366 = vrot.lane.b32.xlu0 %v1365, 64
  %v1367 = vpop.permute.xlu0 %1366
  %1369 = vst.msk [vmem:[#allocation3 + $0x2] sm:$0x3] %vm1326, %v1367
  %v1370 = vld [vmem:[#allocation2 + $0x38] sm:$0x3]
  %v1373 = vunpack.c.l.s4 1983009808
  %v1374 = vunpack.c.0.s8 %v1373
  %v1375 = vlaneseq
  %v1376 = vshrl.u32 %v1375, 7
  %v1377 = vsub.s32 %v1374, %v1376
  %v1378 = vrot.slane %v1370, %v1377
  %1379 = vrot.lane.b32.xlu0 %v1378, 96
  %v1380 = vpop.permute.xlu0 %1379
  %1382 = vst.msk [vmem:[#allocation3 + $0x2] sm:$0x3] %vm1340, %v1380
  %v1383 = vld [vmem:[#allocation2 + $0x40] sm:$0x3]
  %1384 = vst.msk [vmem:[#allocation3 + $0x4] sm:$0x3] %vm1298, %v1383
  %v1385 = vld [vmem:[#allocation2 + $0x48] sm:$0x3]
  %v1388 = vunpack.c.l.s4 1983009808
  %v1389 = vunpack.c.0.s8 %v1388
  %v1390 = vlaneseq
  %v1391 = vshrl.u32 %v1390, 7
  %v1392 = vsub.s32 %v1389, %v1391
  %v1393 = vrot.slane %v1385, %v1392
  %1394 = vrot.lane.b32.xlu0 %v1393, 32
  %v1395 = vpop.permute.xlu0 %1394
  %1397 = vst.msk [vmem:[#allocation3 + $0x4] sm:$0x3] %vm1312, %v1395
  %v1398 = vld [vmem:[#allocation2 + $0x50] sm:$0x3]
  %v1401 = vunpack.c.l.s4 1983009808
  %v1402 = vunpack.c.0.s8 %v1401
  %v1403 = vlaneseq
  %v1404 = vshrl.u32 %v1403, 7
  %v1405 = vsub.s32 %v1402, %v1404
  %v1406 = vrot.slane %v1398, %v1405
  %1407 = vrot.lane.b32.xlu0 %v1406, 64
  %v1408 = vpop.permute.xlu0 %1407
  %1410 = vst.msk [vmem:[#allocation3 + $0x4] sm:$0x3] %vm1326, %v1408
  %v1411 = vld [vmem:[#allocation2 + $0x58] sm:$0x3]
  %v1414 = vunpack.c.l.s4 1983009808
  %v1415 = vunpack.c.0.s8 %v1414
  %v1416 = vlaneseq
  %v1417 = vshrl.u32 %v1416, 7
  %v1418 = vsub.s32 %v1415, %v1417
  %v1419 = vrot.slane %v1411, %v1418
  %1420 = vrot.lane.b32.xlu0 %v1419, 96
  %v1421 = vpop.permute.xlu0 %1420
  %1423 = vst.msk [vmem:[#allocation3 + $0x4] sm:$0x3] %vm1340, %v1421
  %v1424 = vld [vmem:[#allocation2 + $0x60] sm:$0x3]
  %1425 = vst.msk [vmem:[#allocation3 + $0x6] sm:$0x3] %vm1298, %v1424
  %v1426 = vld [vmem:[#allocation2 + $0x68] sm:$0x3]
  %v1429 = vunpack.c.l.s4 1983009808
  %v1430 = vunpack.c.0.s8 %v1429
  %v1431 = vlaneseq
  %v1432 = vshrl.u32 %v1431, 7
  %v1433 = vsub.s32 %v1430, %v1432
  %v1434 = vrot.slane %v1426, %v1433
  %1435 = vrot.lane.b32.xlu0 %v1434, 32
  %v1436 = vpop.permute.xlu0 %1435
  %1438 = vst.msk [vmem:[#allocation3 + $0x6] sm:$0x3] %vm1312, %v1436
  %v1439 = vld [vmem:[#allocation2 + $0x70] sm:$0x3]
  %v1442 = vunpack.c.l.s4 1983009808
  %v1443 = vunpack.c.0.s8 %v1442
  %v1444 = vlaneseq
  %v1445 = vshrl.u32 %v1444, 7
  %v1446 = vsub.s32 %v1443, %v1445
  %v1447 = vrot.slane %v1439, %v1446
  %1448 = vrot.lane.b32.xlu0 %v1447, 64
  %v1449 = vpop.permute.xlu0 %1448
  %1451 = vst.msk [vmem:[#allocation3 + $0x6] sm:$0x3] %vm1326, %v1449
  %v1452 = vld [vmem:[#allocation2 + $0x78] sm:$0x3]
  %v1455 = vunpack.c.l.s4 1983009808
  %v1456 = vunpack.c.0.s8 %v1455
  %v1457 = vlaneseq
  %v1458 = vshrl.u32 %v1457, 7
  %v1459 = vsub.s32 %v1456, %v1458
  %v1460 = vrot.slane %v1452, %v1459
  %1461 = vrot.lane.b32.xlu0 %v1460, 96
  %v1462 = vpop.permute.xlu0 %1461
  %1464 = vst.msk [vmem:[#allocation3 + $0x6] sm:$0x3] %vm1340, %v1462
  %v1465 = vld [vmem:[#allocation2 + $0x80] sm:$0x3]
  %1466 = vst.msk [vmem:[#allocation3 + $0x8] sm:$0x3] %vm1298, %v1465
  %v1467 = vld [vmem:[#allocation2 + $0x88] sm:$0x3]
  %v1470 = vunpack.c.l.s4 1983009808
  %v1471 = vunpack.c.0.s8 %v1470
  %v1472 = vlaneseq
  %v1473 = vshrl.u32 %v1472, 7
  %v1474 = vsub.s32 %v1471, %v1473
  %v1475 = vrot.slane %v1467, %v1474
  %1476 = vrot.lane.b32.xlu0 %v1475, 32
  %v1477 = vpop.permute.xlu0 %1476
  %1479 = vst.msk [vmem:[#allocation3 + $0x8] sm:$0x3] %vm1312, %v1477
  %v1480 = vld [vmem:[#allocation2 + $0x90] sm:$0x3]
  %v1483 = vunpack.c.l.s4 1983009808
  %v1484 = vunpack.c.0.s8 %v1483
  %v1485 = vlaneseq
  %v1486 = vshrl.u32 %v1485, 7
  %v1487 = vsub.s32 %v1484, %v1486
  %v1488 = vrot.slane %v1480, %v1487
  %1489 = vrot.lane.b32.xlu0 %v1488, 64
  %v1490 = vpop.permute.xlu0 %1489
  %1492 = vst.msk [vmem:[#allocation3 + $0x8] sm:$0x3] %vm1326, %v1490
  %v1493 = vld [vmem:[#allocation2 + $0x98] sm:$0x3]
  %v1496 = vunpack.c.l.s4 1983009808
  %v1497 = vunpack.c.0.s8 %v1496
  %v1498 = vlaneseq
  %v1499 = vshrl.u32 %v1498, 7
  %v1500 = vsub.s32 %v1497, %v1499
  %v1501 = vrot.slane %v1493, %v1500
  %1502 = vrot.lane.b32.xlu0 %v1501, 96
  %v1503 = vpop.permute.xlu0 %1502
  %1505 = vst.msk [vmem:[#allocation3 + $0x8] sm:$0x3] %vm1340, %v1503
  %v1506 = vld [vmem:[#allocation2 + $0xa0] sm:$0x3]
  %1507 = vst.msk [vmem:[#allocation3 + $0xa] sm:$0x3] %vm1298, %v1506
  %v1508 = vld [vmem:[#allocation2 + $0xa8] sm:$0x3]
  %v1511 = vunpack.c.l.s4 1983009808
  %v1512 = vunpack.c.0.s8 %v1511
  %v1513 = vlaneseq
  %v1514 = vshrl.u32 %v1513, 7
  %v1515 = vsub.s32 %v1512, %v1514
  %v1516 = vrot.slane %v1508, %v1515
  %1517 = vrot.lane.b32.xlu0 %v1516, 32
  %v1518 = vpop.permute.xlu0 %1517
  %1520 = vst.msk [vmem:[#allocation3 + $0xa] sm:$0x3] %vm1312, %v1518
  %v1521 = vld [vmem:[#allocation2 + $0xb0] sm:$0x3]
  %v1524 = vunpack.c.l.s4 1983009808
  %v1525 = vunpack.c.0.s8 %v1524
  %v1526 = vlaneseq
  %v1527 = vshrl.u32 %v1526, 7
  %v1528 = vsub.s32 %v1525, %v1527
  %v1529 = vrot.slane %v1521, %v1528
  %1530 = vrot.lane.b32.xlu0 %v1529, 64
  %v1531 = vpop.permute.xlu0 %1530
  %1533 = vst.msk [vmem:[#allocation3 + $0xa] sm:$0x3] %vm1326, %v1531
  %v1534 = vld [vmem:[#allocation2 + $0xb8] sm:$0x3]
  %v1537 = vunpack.c.l.s4 1983009808
  %v1538 = vunpack.c.0.s8 %v1537
  %v1539 = vlaneseq
  %v1540 = vshrl.u32 %v1539, 7
  %v1541 = vsub.s32 %v1538, %v1540
  %v1542 = vrot.slane %v1534, %v1541
  %1543 = vrot.lane.b32.xlu0 %v1542, 96
  %v1544 = vpop.permute.xlu0 %1543
  %1546 = vst.msk [vmem:[#allocation3 + $0xa] sm:$0x3] %vm1340, %v1544
  %v1547 = vld [vmem:[#allocation2 + $0xc0] sm:$0x3]
  %1548 = vst.msk [vmem:[#allocation3 + $0xc] sm:$0x3] %vm1298, %v1547
  %v1549 = vld [vmem:[#allocation2 + $0xc8] sm:$0x3]
  %v1552 = vunpack.c.l.s4 1983009808
  %v1553 = vunpack.c.0.s8 %v1552
  %v1554 = vlaneseq
  %v1555 = vshrl.u32 %v1554, 7
  %v1556 = vsub.s32 %v1553, %v1555
  %v1557 = vrot.slane %v1549, %v1556
  %1558 = vrot.lane.b32.xlu0 %v1557, 32
  %v1559 = vpop.permute.xlu0 %1558
  %1561 = vst.msk [vmem:[#allocation3 + $0xc] sm:$0x3] %vm1312, %v1559
  %v1562 = vld [vmem:[#allocation2 + $0xd0] sm:$0x3]
  %v1565 = vunpack.c.l.s4 1983009808
  %v1566 = vunpack.c.0.s8 %v1565
  %v1567 = vlaneseq
  %v1568 = vshrl.u32 %v1567, 7
  %v1569 = vsub.s32 %v1566, %v1568
  %v1570 = vrot.slane %v1562, %v1569
  %1571 = vrot.lane.b32.xlu0 %v1570, 64
  %v1572 = vpop.permute.xlu0 %1571
  %1574 = vst.msk [vmem:[#allocation3 + $0xc] sm:$0x3] %vm1326, %v1572
  %v1575 = vld [vmem:[#allocation2 + $0xd8] sm:$0x3]
  %v1578 = vunpack.c.l.s4 1983009808
  %v1579 = vunpack.c.0.s8 %v1578
  %v1580 = vlaneseq
  %v1581 = vshrl.u32 %v1580, 7
  %v1582 = vsub.s32 %v1579, %v1581
  %v1583 = vrot.slane %v1575, %v1582
  %1584 = vrot.lane.b32.xlu0 %v1583, 96
  %v1585 = vpop.permute.xlu0 %1584
  %1587 = vst.msk [vmem:[#allocation3 + $0xc] sm:$0x3] %vm1340, %v1585
  %v1588 = vld [vmem:[#allocation2 + $0xe0] sm:$0x3]
  %1589 = vst.msk [vmem:[#allocation3 + $0xe] sm:$0x3] %vm1298, %v1588
  %v1590 = vld [vmem:[#allocation2 + $0xe8] sm:$0x3]
  %v1593 = vunpack.c.l.s4 1983009808
  %v1594 = vunpack.c.0.s8 %v1593
  %v1595 = vlaneseq
  %v1596 = vshrl.u32 %v1595, 7
  %v1597 = vsub.s32 %v1594, %v1596
  %v1598 = vrot.slane %v1590, %v1597
  %1599 = vrot.lane.b32.xlu0 %v1598, 32
  %v1600 = vpop.permute.xlu0 %1599
  %1602 = vst.msk [vmem:[#allocation3 + $0xe] sm:$0x3] %vm1312, %v1600
  %v1603 = vld [vmem:[#allocation2 + $0xf0] sm:$0x3]
  %v1606 = vunpack.c.l.s4 1983009808
  %v1607 = vunpack.c.0.s8 %v1606
  %v1608 = vlaneseq
  %v1609 = vshrl.u32 %v1608, 7
  %v1610 = vsub.s32 %v1607, %v1609
  %v1611 = vrot.slane %v1603, %v1610
  %1612 = vrot.lane.b32.xlu0 %v1611, 64
  %v1613 = vpop.permute.xlu0 %1612
  %1615 = vst.msk [vmem:[#allocation3 + $0xe] sm:$0x3] %vm1326, %v1613
  %v1616 = vld [vmem:[#allocation2 + $0xf8] sm:$0x3]
  %v1619 = vunpack.c.l.s4 1983009808
  %v1620 = vunpack.c.0.s8 %v1619
  %v1621 = vlaneseq
  %v1622 = vshrl.u32 %v1621, 7
  %v1623 = vsub.s32 %v1620, %v1622
  %v1624 = vrot.slane %v1616, %v1623
  %1625 = vrot.lane.b32.xlu0 %v1624, 96
  %v1626 = vpop.permute.xlu0 %1625
  %1628 = vst.msk [vmem:[#allocation3 + $0xe] sm:$0x3] %vm1340, %v1626
  %v1629 = vld [vmem:[#allocation2 + $0x100] sm:$0x3]
  %1630 = vst.msk [vmem:[#allocation3 + $0x10] sm:$0x3] %vm1298, %v1629
  %v1631 = vld [vmem:[#allocation2 + $0x108] sm:$0x3]
  %v1634 = vunpack.c.l.s4 1983009808
  %v1635 = vunpack.c.0.s8 %v1634
  %v1636 = vlaneseq
  %v1637 = vshrl.u32 %v1636, 7
  %v1638 = vsub.s32 %v1635, %v1637
  %v1639 = vrot.slane %v1631, %v1638
  %1640 = vrot.lane.b32.xlu0 %v1639, 32
  %v1641 = vpop.permute.xlu0 %1640
  %1643 = vst.msk [vmem:[#allocation3 + $0x10] sm:$0x3] %vm1312, %v1641
  %v1644 = vld [vmem:[#allocation2 + $0x110] sm:$0x3]
  %v1647 = vunpack.c.l.s4 1983009808
  %v1648 = vunpack.c.0.s8 %v1647
  %v1649 = vlaneseq
  %v1650 = vshrl.u32 %v1649, 7
  %v1651 = vsub.s32 %v1648, %v1650
  %v1652 = vrot.slane %v1644, %v1651
  %1653 = vrot.lane.b32.xlu0 %v1652, 64
  %v1654 = vpop.permute.xlu0 %1653
  %1656 = vst.msk [vmem:[#allocation3 + $0x10] sm:$0x3] %vm1326, %v1654
  %v1657 = vld [vmem:[#allocation2 + $0x118] sm:$0x3]
  %v1660 = vunpack.c.l.s4 1983009808
  %v1661 = vunpack.c.0.s8 %v1660
  %v1662 = vlaneseq
  %v1663 = vshrl.u32 %v1662, 7
  %v1664 = vsub.s32 %v1661, %v1663
  %v1665 = vrot.slane %v1657, %v1664
  %1666 = vrot.lane.b32.xlu0 %v1665, 96
  %v1667 = vpop.permute.xlu0 %1666
  %1669 = vst.msk [vmem:[#allocation3 + $0x10] sm:$0x3] %vm1340, %v1667
  %v1670 = vld [vmem:[#allocation2 + $0x120] sm:$0x3]
  %1671 = vst.msk [vmem:[#allocation3 + $0x12] sm:$0x3] %vm1298, %v1670
  %v1672 = vld [vmem:[#allocation2 + $0x128] sm:$0x3]
  %v1675 = vunpack.c.l.s4 1983009808
  %v1676 = vunpack.c.0.s8 %v1675
  %v1677 = vlaneseq
  %v1678 = vshrl.u32 %v1677, 7
  %v1679 = vsub.s32 %v1676, %v1678
  %v1680 = vrot.slane %v1672, %v1679
  %1681 = vrot.lane.b32.xlu0 %v1680, 32
  %v1682 = vpop.permute.xlu0 %1681
  %1684 = vst.msk [vmem:[#allocation3 + $0x12] sm:$0x3] %vm1312, %v1682
  %v1685 = vld [vmem:[#allocation2 + $0x130] sm:$0x3]
  %v1688 = vunpack.c.l.s4 1983009808
  %v1689 = vunpack.c.0.s8 %v1688
  %v1690 = vlaneseq
  %v1691 = vshrl.u32 %v1690, 7
  %v1692 = vsub.s32 %v1689, %v1691
  %v1693 = vrot.slane %v1685, %v1692
  %1694 = vrot.lane.b32.xlu0 %v1693, 64
  %v1695 = vpop.permute.xlu0 %1694
  %1697 = vst.msk [vmem:[#allocation3 + $0x12] sm:$0x3] %vm1326, %v1695
  %v1698 = vld [vmem:[#allocation2 + $0x138] sm:$0x3]
  %v1701 = vunpack.c.l.s4 1983009808
  %v1702 = vunpack.c.0.s8 %v1701
  %v1703 = vlaneseq
  %v1704 = vshrl.u32 %v1703, 7
  %v1705 = vsub.s32 %v1702, %v1704
  %v1706 = vrot.slane %v1698, %v1705
  %1707 = vrot.lane.b32.xlu0 %v1706, 96
  %v1708 = vpop.permute.xlu0 %1707
  %1710 = vst.msk [vmem:[#allocation3 + $0x12] sm:$0x3] %vm1340, %v1708
  %v1711 = vld [vmem:[#allocation2 + $0x140] sm:$0x3]
  %1712 = vst.msk [vmem:[#allocation3 + $0x14] sm:$0x3] %vm1298, %v1711
  %v1713 = vld [vmem:[#allocation2 + $0x148] sm:$0x3]
  %v1716 = vunpack.c.l.s4 1983009808
  %v1717 = vunpack.c.0.s8 %v1716
  %v1718 = vlaneseq
  %v1719 = vshrl.u32 %v1718, 7
  %v1720 = vsub.s32 %v1717, %v1719
  %v1721 = vrot.slane %v1713, %v1720
  %1722 = vrot.lane.b32.xlu0 %v1721, 32
  %v1723 = vpop.permute.xlu0 %1722
  %1725 = vst.msk [vmem:[#allocation3 + $0x14] sm:$0x3] %vm1312, %v1723
  %v1726 = vld [vmem:[#allocation2 + $0x150] sm:$0x3]
  %v1729 = vunpack.c.l.s4 1983009808
  %v1730 = vunpack.c.0.s8 %v1729
  %v1731 = vlaneseq
  %v1732 = vshrl.u32 %v1731, 7
  %v1733 = vsub.s32 %v1730, %v1732
  %v1734 = vrot.slane %v1726, %v1733
  %1735 = vrot.lane.b32.xlu0 %v1734, 64
  %v1736 = vpop.permute.xlu0 %1735
  %1738 = vst.msk [vmem:[#allocation3 + $0x14] sm:$0x3] %vm1326, %v1736
  %v1739 = vld [vmem:[#allocation2 + $0x158] sm:$0x3]
  %v1742 = vunpack.c.l.s4 1983009808
  %v1743 = vunpack.c.0.s8 %v1742
  %v1744 = vlaneseq
  %v1745 = vshrl.u32 %v1744, 7
  %v1746 = vsub.s32 %v1743, %v1745
  %v1747 = vrot.slane %v1739, %v1746
  %1748 = vrot.lane.b32.xlu0 %v1747, 96
  %v1749 = vpop.permute.xlu0 %1748
  %1751 = vst.msk [vmem:[#allocation3 + $0x14] sm:$0x3] %vm1340, %v1749
  %v1752 = vld [vmem:[#allocation2 + $0x160] sm:$0x3]
  %1753 = vst.msk [vmem:[#allocation3 + $0x16] sm:$0x3] %vm1298, %v1752
  %v1754 = vld [vmem:[#allocation2 + $0x168] sm:$0x3]
  %v1757 = vunpack.c.l.s4 1983009808
  %v1758 = vunpack.c.0.s8 %v1757
  %v1759 = vlaneseq
  %v1760 = vshrl.u32 %v1759, 7
  %v1761 = vsub.s32 %v1758, %v1760
  %v1762 = vrot.slane %v1754, %v1761
  %1763 = vrot.lane.b32.xlu0 %v1762, 32
  %v1764 = vpop.permute.xlu0 %1763
  %1766 = vst.msk [vmem:[#allocation3 + $0x16] sm:$0x3] %vm1312, %v1764
  %v1767 = vld [vmem:[#allocation2 + $0x170] sm:$0x3]
  %v1770 = vunpack.c.l.s4 1983009808
  %v1771 = vunpack.c.0.s8 %v1770
  %v1772 = vlaneseq
  %v1773 = vshrl.u32 %v1772, 7
  %v1774 = vsub.s32 %v1771, %v1773
  %v1775 = vrot.slane %v1767, %v1774
  %1776 = vrot.lane.b32.xlu0 %v1775, 64
  %v1777 = vpop.permute.xlu0 %1776
  %1779 = vst.msk [vmem:[#allocation3 + $0x16] sm:$0x3] %vm1326, %v1777
  %v1780 = vld [vmem:[#allocation2 + $0x178] sm:$0x3]
  %v1783 = vunpack.c.l.s4 1983009808
  %v1784 = vunpack.c.0.s8 %v1783
  %v1785 = vlaneseq
  %v1786 = vshrl.u32 %v1785, 7
  %v1787 = vsub.s32 %v1784, %v1786
  %v1788 = vrot.slane %v1780, %v1787
  %1789 = vrot.lane.b32.xlu0 %v1788, 96
  %v1790 = vpop.permute.xlu0 %1789
  %1792 = vst.msk [vmem:[#allocation3 + $0x16] sm:$0x3] %vm1340, %v1790
  %v1793 = vld [vmem:[#allocation2 + $0x180] sm:$0x3]
  %1794 = vst.msk [vmem:[#allocation3 + $0x18] sm:$0x3] %vm1298, %v1793
  %v1795 = vld [vmem:[#allocation3] sm:$0xff]
  %v1796 = vld [vmem:[#allocation3 + $0x8] sm:$0xff]
  %v1797 = vld [vmem:[#allocation3 + $0x10] sm:$0xff]
  %v1798 = vld [vmem:[#allocation3 + $0x18] sm:$0x3]
  %v1803 = vcombine.high %v1795, %v1795
  %v1805 = vunpack.c.l.s4 1983009808
  %v1806 = vunpack.c.0.s8 %v1805
  %v1807 = vlaneseq
  %v1808 = vshrl.u32 %v1807, 7
  %v1809 = vsub.s32 %v1806, %v1808
  %v1810 = vrot.slane %v1795, %v1809
  %v1812 = vunpack.c.l.s4 1983009808
  %v1813 = vunpack.c.0.s8 %v1812
  %v1814 = vlaneseq
  %v1815 = vshrl.u32 %v1814, 7
  %v1816 = vsub.s32 %v1813, %v1815
  %v1817 = vrot.slane %v1803, %v1816
  %v1818 = vcombine.high %v1810, %v1810
  %v1819 = vcombine.high %v1817, %v1817
  %v1820 = vcombine.high %v1796, %v1796
  %v1822 = vunpack.c.l.s4 1983009808
  %v1823 = vunpack.c.0.s8 %v1822
  %v1824 = vlaneseq
  %v1825 = vshrl.u32 %v1824, 7
  %v1826 = vsub.s32 %v1823, %v1825
  %v1827 = vrot.slane %v1796, %v1826
  %v1829 = vunpack.c.l.s4 1983009808
  %v1830 = vunpack.c.0.s8 %v1829
  %v1831 = vlaneseq
  %v1832 = vshrl.u32 %v1831, 7
  %v1833 = vsub.s32 %v1830, %v1832
  %v1834 = vrot.slane %v1820, %v1833
  %v1835 = vcombine.high %v1827, %v1827
  %v1836 = vcombine.high %v1834, %v1834
  %v1837 = vcombine.high %v1797, %v1797
  %v1839 = vunpack.c.l.s4 1983009808
  %v1840 = vunpack.c.0.s8 %v1839
  %v1841 = vlaneseq
  %v1842 = vshrl.u32 %v1841, 7
  %v1843 = vsub.s32 %v1840, %v1842
  %v1844 = vrot.slane %v1797, %v1843
  %v1846 = vunpack.c.l.s4 1983009808
  %v1847 = vunpack.c.0.s8 %v1846
  %v1848 = vlaneseq
  %v1849 = vshrl.u32 %v1848, 7
  %v1850 = vsub.s32 %v1847, %v1849
  %v1851 = vrot.slane %v1837, %v1850
  %v1852 = vcombine.high %v1844, %v1844
  %v1853 = vcombine.high %v1851, %v1851
  %v1855 = vunpack.c.l.s4 1983009808
  %v1856 = vunpack.c.0.s8 %v1855
  %v1857 = vlaneseq
  %v1858 = vshrl.u32 %v1857, 7
  %v1859 = vsub.s32 %v1856, %v1858
  %v1860 = vrot.slane %v1798, %v1859
  %v1874 = vpack.c.bf16 %v1810, %v1810
  %v1875 = vpack.c.bf16 %v1818, %v1818
  %v1876 = vpack.c.bf16 %v1817, %v1817
  %v1877 = vpack.c.bf16 %v1819, %v1819
  %v1878 = vpack.c.bf16 %v1827, %v1827
  %v1879 = vpack.c.bf16 %v1835, %v1835
  %v1880 = vpack.c.bf16 %v1834, %v1834
  %v1881 = vpack.c.bf16 %v1836, %v1836
  %v1882 = vpack.c.bf16 %v1844, %v1844
  %v1883 = vpack.c.bf16 %v1852, %v1852
  %v1884 = vpack.c.bf16 %v1851, %v1851
  %v1885 = vpack.c.bf16 %v1853, %v1853
  %v1886 = vpack.c.bf16 %v1860, %v1860
  %v1887 = vld [vmem:[%s4] sm:$0xff]
  %v1888 = vld [vmem:[%s4 + $0x8] sm:$0xff]
  %v1889 = vld [vmem:[%s4 + $0x10] sm:$0xff]
  %v1890 = vld [vmem:[%s4 + $0x18] sm:$0xf]
  %v1891 = vld [vmem:[%s4 + $0x1c] sm:$0xff]
  %v1892 = vld [vmem:[%s4 + $0x24] sm:$0xff]
  %v1893 = vld [vmem:[%s4 + $0x2c] sm:$0xff]
  %v1894 = vld [vmem:[%s4 + $0x34] sm:$0xf]
  %v1895 = vld [vmem:[%s4 + $0x38] sm:$0xff]
  %v1896 = vld [vmem:[%s4 + $0x40] sm:$0xff]
  %v1897 = vld [vmem:[%s4 + $0x48] sm:$0xff]
  %v1898 = vld [vmem:[%s4 + $0x50] sm:$0xf]
  %v1899 = vld [vmem:[%s4 + $0x54] sm:$0xff]
  %v1900 = vld [vmem:[%s4 + $0x5c] sm:$0xff]
  %v1901 = vld [vmem:[%s4 + $0x64] sm:$0xff]
  %v1902 = vld [vmem:[%s4 + $0x6c] sm:$0xf]
  %v1903 = vld [vmem:[%s4 + $0x70] sm:$0xff]
  %v1904 = vld [vmem:[%s4 + $0x78] sm:$0xff]
  %v1905 = vld [vmem:[%s4 + $0x80] sm:$0xff]
  %v1906 = vld [vmem:[%s4 + $0x88] sm:$0xf]
  %v1907 = vld [vmem:[%s4 + $0x8c] sm:$0xff]
  %v1908 = vld [vmem:[%s4 + $0x94] sm:$0xff]
  %v1909 = vld [vmem:[%s4 + $0x9c] sm:$0xff]
  %v1910 = vld [vmem:[%s4 + $0xa4] sm:$0xf]
  %v1911 = vld [vmem:[%s4 + $0xa8] sm:$0xff]
  %v1912 = vld [vmem:[%s4 + $0xb0] sm:$0xff]
  %v1913 = vld [vmem:[%s4 + $0xb8] sm:$0xff]
  %v1914 = vld [vmem:[%s4 + $0xc0] sm:$0xf]
  %v1915 = vld [vmem:[%s4 + $0xc4] sm:$0xff]
  %v1916 = vld [vmem:[%s4 + $0xcc] sm:$0xff]
  %v1917 = vld [vmem:[%s4 + $0xd4] sm:$0xff]
  %v1918 = vld [vmem:[%s4 + $0xdc] sm:$0xf]
  %v1919 = vld [vmem:[%s4 + $0xe0] sm:$0xff]
  %v1920 = vld [vmem:[%s4 + $0xe8] sm:$0xff]
  %v1921 = vld [vmem:[%s4 + $0xf0] sm:$0xff]
  %v1922 = vld [vmem:[%s4 + $0xf8] sm:$0xf]
  %v1923 = vld [vmem:[%s4 + $0xfc] sm:$0xff]
  %v1924 = vld [vmem:[%s4 + $0x104] sm:$0xff]
  %v1925 = vld [vmem:[%s4 + $0x10c] sm:$0xff]
  %v1926 = vld [vmem:[%s4 + $0x114] sm:$0xf]
  %v1927 = vld [vmem:[%s4 + $0x118] sm:$0xff]
  %v1928 = vld [vmem:[%s4 + $0x120] sm:$0xff]
  %v1929 = vld [vmem:[%s4 + $0x128] sm:$0xff]
  %v1930 = vld [vmem:[%s4 + $0x130] sm:$0xf]
  %v1931 = vld [vmem:[%s4 + $0x134] sm:$0xff]
  %v1932 = vld [vmem:[%s4 + $0x13c] sm:$0xff]
  %v1933 = vld [vmem:[%s4 + $0x144] sm:$0xff]
  %v1934 = vld [vmem:[%s4 + $0x14c] sm:$0xf]
  %v1935 = vld [vmem:[%s4 + $0x150] sm:$0xff]
  %v1936 = vld [vmem:[%s4 + $0x158] sm:$0xff]
  %v1937 = vld [vmem:[%s4 + $0x160] sm:$0xff]
  %v1938 = vld [vmem:[%s4 + $0x168] sm:$0xf]
  %v1939 = vld [vmem:[%s4 + $0x16c] sm:$0xff]
  %v1940 = vld [vmem:[%s4 + $0x174] sm:$0xff]
  %v1941 = vld [vmem:[%s4 + $0x17c] sm:$0xff]
  %v1942 = vld [vmem:[%s4 + $0x184] sm:$0xf]
  %v1943 = vld [vmem:[%s4 + $0x188] sm:$0xff]
  %v1944 = vld [vmem:[%s4 + $0x190] sm:$0xff]
  %v1945 = vld [vmem:[%s4 + $0x198] sm:$0xff]
  %v1946 = vld [vmem:[%s4 + $0x1a0] sm:$0xf]
  %v1947 = vld [vmem:[%s4 + $0x1a4] sm:$0xff]
  %v1948 = vld [vmem:[%s4 + $0x1ac] sm:$0xff]
  %v1949 = vld [vmem:[%s4 + $0x1b4] sm:$0xff]
  %v1950 = vld [vmem:[%s4 + $0x1bc] sm:$0xf]
  %v1951 = vld [vmem:[%s4 + $0x1c0] sm:$0xff]
  %v1952 = vld [vmem:[%s4 + $0x1c8] sm:$0xff]
  %v1953 = vld [vmem:[%s4 + $0x1d0] sm:$0xff]
  %v1954 = vld [vmem:[%s4 + $0x1d8] sm:$0xf]
  %v1955 = vld [vmem:[%s4 + $0x1dc] sm:$0xff]
  %v1956 = vld [vmem:[%s4 + $0x1e4] sm:$0xff]
  %v1957 = vld [vmem:[%s4 + $0x1ec] sm:$0xff]
  %v1958 = vld [vmem:[%s4 + $0x1f4] sm:$0xf]
  %v1959 = vld [vmem:[%s4 + $0x1f8] sm:$0xff]
  %v1960 = vld [vmem:[%s4 + $0x200] sm:$0xff]
  %v1961 = vld [vmem:[%s4 + $0x208] sm:$0xff]
  %v1962 = vld [vmem:[%s4 + $0x210] sm:$0xf]
  %v1963 = vld [vmem:[%s4 + $0x214] sm:$0xff]
  %v1964 = vld [vmem:[%s4 + $0x21c] sm:$0xff]
  %v1965 = vld [vmem:[%s4 + $0x224] sm:$0xff]
  %v1966 = vld [vmem:[%s4 + $0x22c] sm:$0xf]
  %v1967 = vld [vmem:[%s4 + $0x230] sm:$0xff]
  %v1968 = vld [vmem:[%s4 + $0x238] sm:$0xff]
  %v1969 = vld [vmem:[%s4 + $0x240] sm:$0xff]
  %v1970 = vld [vmem:[%s4 + $0x248] sm:$0xf]
  %v1971 = vld [vmem:[%s4 + $0x24c] sm:$0xff]
  %v1972 = vld [vmem:[%s4 + $0x254] sm:$0xff]
  %v1973 = vld [vmem:[%s4 + $0x25c] sm:$0xff]
  %v1974 = vld [vmem:[%s4 + $0x264] sm:$0xf]
  %v1975 = vld [vmem:[%s4 + $0x268] sm:$0xff]
  %v1976 = vld [vmem:[%s4 + $0x270] sm:$0xff]
  %v1977 = vld [vmem:[%s4 + $0x278] sm:$0xff]
  %v1978 = vld [vmem:[%s4 + $0x280] sm:$0xf]
  %v1979 = vld [vmem:[%s4 + $0x284] sm:$0xff]
  %v1980 = vld [vmem:[%s4 + $0x28c] sm:$0xff]
  %v1981 = vld [vmem:[%s4 + $0x294] sm:$0xff]
  %v1982 = vld [vmem:[%s4 + $0x29c] sm:$0xf]
  %v1983 = vld [vmem:[%s4 + $0x2a0] sm:$0xff]
  %v1984 = vld [vmem:[%s4 + $0x2a8] sm:$0xff]
  %v1985 = vld [vmem:[%s4 + $0x2b0] sm:$0xff]
  %v1986 = vld [vmem:[%s4 + $0x2b8] sm:$0xf]
  %v1987 = vld [vmem:[%s4 + $0x2bc] sm:$0xff]
  %v1988 = vld [vmem:[%s4 + $0x2c4] sm:$0xff]
  %v1989 = vld [vmem:[%s4 + $0x2cc] sm:$0xff]
  %v1990 = vld [vmem:[%s4 + $0x2d4] sm:$0xf]
  %v1991 = vld [vmem:[%s4 + $0x2d8] sm:$0xff]
  %v1992 = vld [vmem:[%s4 + $0x2e0] sm:$0xff]
  %v1993 = vld [vmem:[%s4 + $0x2e8] sm:$0xff]
  %v1994 = vld [vmem:[%s4 + $0x2f0] sm:$0xf]
  %v1995 = vld [vmem:[%s4 + $0x2f4] sm:$0xff]
  %v1996 = vld [vmem:[%s4 + $0x2fc] sm:$0xff]
  %v1997 = vld [vmem:[%s4 + $0x304] sm:$0xff]
  %v1998 = vld [vmem:[%s4 + $0x30c] sm:$0xf]
  %v1999 = vld [vmem:[%s4 + $0x310] sm:$0xff]
  %v2000 = vld [vmem:[%s4 + $0x318] sm:$0xff]
  %v2001 = vld [vmem:[%s4 + $0x320] sm:$0xff]
  %v2002 = vld [vmem:[%s4 + $0x328] sm:$0xf]
  %v2003 = vld [vmem:[%s4 + $0x32c] sm:$0xff]
  %v2004 = vld [vmem:[%s4 + $0x334] sm:$0xff]
  %v2005 = vld [vmem:[%s4 + $0x33c] sm:$0xff]
  %v2006 = vld [vmem:[%s4 + $0x344] sm:$0xf]
  %v2007 = vld [vmem:[%s4 + $0x348] sm:$0xff]
  %v2008 = vld [vmem:[%s4 + $0x350] sm:$0xff]
  %v2009 = vld [vmem:[%s4 + $0x358] sm:$0xff]
  %v2010 = vld [vmem:[%s4 + $0x360] sm:$0xf]
  %v2011 = vld [vmem:[%s4 + $0x364] sm:$0xff]
  %v2012 = vld [vmem:[%s4 + $0x36c] sm:$0xff]
  %v2013 = vld [vmem:[%s4 + $0x374] sm:$0xff]
  %v2014 = vld [vmem:[%s4 + $0x37c] sm:$0xf]
  %v2015 = vld [vmem:[%s4 + $0x380] sm:$0xff]
  %v2016 = vld [vmem:[%s4 + $0x388] sm:$0xff]
  %v2017 = vld [vmem:[%s4 + $0x390] sm:$0xff]
  %v2018 = vld [vmem:[%s4 + $0x398] sm:$0xf]
  %v2019 = vld [vmem:[%s4 + $0x39c] sm:$0xff]
  %v2020 = vld [vmem:[%s4 + $0x3a4] sm:$0xff]
  %v2021 = vld [vmem:[%s4 + $0x3ac] sm:$0xff]
  %v2022 = vld [vmem:[%s4 + $0x3b4] sm:$0xf]
  %v2023 = vld [vmem:[%s4 + $0x3b8] sm:$0xff]
  %v2024 = vld [vmem:[%s4 + $0x3c0] sm:$0xff]
  %v2025 = vld [vmem:[%s4 + $0x3c8] sm:$0xff]
  %v2026 = vld [vmem:[%s4 + $0x3d0] sm:$0xf]
  %v2027 = vld [vmem:[%s4 + $0x3d4] sm:$0xff]
  %v2028 = vld [vmem:[%s4 + $0x3dc] sm:$0xff]
  %v2029 = vld [vmem:[%s4 + $0x3e4] sm:$0xff]
  %v2030 = vld [vmem:[%s4 + $0x3ec] sm:$0xf]
  %v2031 = vld [vmem:[%s4 + $0x3f0] sm:$0xff]
  %v2032 = vld [vmem:[%s4 + $0x3f8] sm:$0xff]
  %v2033 = vld [vmem:[%s4 + $0x400] sm:$0xff]
  %v2034 = vld [vmem:[%s4 + $0x408] sm:$0xf]
  %v2035 = vld [vmem:[%s4 + $0x40c] sm:$0xff]
  %v2036 = vld [vmem:[%s4 + $0x414] sm:$0xff]
  %v2037 = vld [vmem:[%s4 + $0x41c] sm:$0xff]
  %v2038 = vld [vmem:[%s4 + $0x424] sm:$0xf]
  %v2039 = vld [vmem:[%s4 + $0x428] sm:$0xff]
  %v2040 = vld [vmem:[%s4 + $0x430] sm:$0xff]
  %v2041 = vld [vmem:[%s4 + $0x438] sm:$0xff]
  %v2042 = vld [vmem:[%s4 + $0x440] sm:$0xf]
  %v2043 = vld [vmem:[%s4 + $0x444] sm:$0xff]
  %v2044 = vld [vmem:[%s4 + $0x44c] sm:$0xff]
  %v2045 = vld [vmem:[%s4 + $0x454] sm:$0xff]
  %v2046 = vld [vmem:[%s4 + $0x45c] sm:$0xf]
  %v2047 = vld [vmem:[%s4 + $0x460] sm:$0xff]
  %v2048 = vld [vmem:[%s4 + $0x468] sm:$0xff]
  %v2049 = vld [vmem:[%s4 + $0x470] sm:$0xff]
  %v2050 = vld [vmem:[%s4 + $0x478] sm:$0xf]
  %v2051 = vld [vmem:[%s4 + $0x47c] sm:$0xff]
  %v2052 = vld [vmem:[%s4 + $0x484] sm:$0xff]
  %v2053 = vld [vmem:[%s4 + $0x48c] sm:$0xff]
  %v2054 = vld [vmem:[%s4 + $0x494] sm:$0xf]
  %v2055 = vld [vmem:[%s4 + $0x498] sm:$0xff]
  %v2056 = vld [vmem:[%s4 + $0x4a0] sm:$0xff]
  %v2057 = vld [vmem:[%s4 + $0x4a8] sm:$0xff]
  %v2058 = vld [vmem:[%s4 + $0x4b0] sm:$0xf]
  %v2059 = vld [vmem:[%s4 + $0x4b4] sm:$0xff]
  %v2060 = vld [vmem:[%s4 + $0x4bc] sm:$0xff]
  %v2061 = vld [vmem:[%s4 + $0x4c4] sm:$0xff]
  %v2062 = vld [vmem:[%s4 + $0x4cc] sm:$0xf]
  %v2063 = vld [vmem:[%s4 + $0x4d0] sm:$0xff]
  %v2064 = vld [vmem:[%s4 + $0x4d8] sm:$0xff]
  %v2065 = vld [vmem:[%s4 + $0x4e0] sm:$0xff]
  %v2066 = vld [vmem:[%s4 + $0x4e8] sm:$0xf]
  %v2067 = vld [vmem:[%s4 + $0x4ec] sm:$0xff]
  %v2068 = vld [vmem:[%s4 + $0x4f4] sm:$0xff]
  %v2069 = vld [vmem:[%s4 + $0x4fc] sm:$0xff]
  %v2070 = vld [vmem:[%s4 + $0x504] sm:$0xf]
  %v2071 = vld [vmem:[%s4 + $0x508] sm:$0xff]
  %v2072 = vld [vmem:[%s4 + $0x510] sm:$0xff]
  %v2073 = vld [vmem:[%s4 + $0x518] sm:$0xff]
  %v2074 = vld [vmem:[%s4 + $0x520] sm:$0xf]
  %v2075 = vld [vmem:[%s4 + $0x524] sm:$0xff]
  %v2076 = vld [vmem:[%s4 + $0x52c] sm:$0xff]
  %v2077 = vld [vmem:[%s4 + $0x534] sm:$0xff]
  %v2078 = vld [vmem:[%s4 + $0x53c] sm:$0xf]
  %v2079 = vld [vmem:[%s4 + $0x540] sm:$0xff]
  %v2080 = vld [vmem:[%s4 + $0x548] sm:$0xff]
  %v2081 = vld [vmem:[%s4 + $0x550] sm:$0xff]
  %v2082 = vld [vmem:[%s4 + $0x558] sm:$0xf]
  %v2083 = vld [vmem:[%s4 + $0x55c] sm:$0xff]
  %v2084 = vld [vmem:[%s4 + $0x564] sm:$0xff]
  %v2085 = vld [vmem:[%s4 + $0x56c] sm:$0xff]
  %v2086 = vld [vmem:[%s4 + $0x574] sm:$0xf]
  %v2087 = vld [vmem:[%s4 + $0x578] sm:$0xff]
  %v2088 = vld [vmem:[%s4 + $0x580] sm:$0xff]
  %v2089 = vld [vmem:[%s4 + $0x588] sm:$0xff]
  %v2090 = vld [vmem:[%s4 + $0x590] sm:$0xf]
  %v2091 = vld [vmem:[%s4 + $0x594] sm:$0xff]
  %v2092 = vld [vmem:[%s4 + $0x59c] sm:$0xff]
  %v2093 = vld [vmem:[%s4 + $0x5a4] sm:$0xff]
  %v2094 = vld [vmem:[%s4 + $0x5ac] sm:$0xf]
  %v2095 = vld [vmem:[%s4 + $0x5b0] sm:$0xff]
  %v2096 = vld [vmem:[%s4 + $0x5b8] sm:$0xff]
  %v2097 = vld [vmem:[%s4 + $0x5c0] sm:$0xff]
  %v2098 = vld [vmem:[%s4 + $0x5c8] sm:$0xf]
  %v2099 = vld [vmem:[%s4 + $0x5cc] sm:$0xff]
  %v2100 = vld [vmem:[%s4 + $0x5d4] sm:$0xff]
  %v2101 = vld [vmem:[%s4 + $0x5dc] sm:$0xff]
  %v2102 = vld [vmem:[%s4 + $0x5e4] sm:$0xf]
  %v2103 = vld [vmem:[%s4 + $0x5e8] sm:$0xff]
  %v2104 = vld [vmem:[%s4 + $0x5f0] sm:$0xff]
  %v2105 = vld [vmem:[%s4 + $0x5f8] sm:$0xff]
  %v2106 = vld [vmem:[%s4 + $0x600] sm:$0xf]
  %v2107 = vld [vmem:[%s4 + $0x604] sm:$0xff]
  %v2108 = vld [vmem:[%s4 + $0x60c] sm:$0xff]
  %v2109 = vld [vmem:[%s4 + $0x614] sm:$0xff]
  %v2110 = vld [vmem:[%s4 + $0x61c] sm:$0xf]
  %v2111 = vld [vmem:[%s4 + $0x620] sm:$0xff]
  %v2112 = vld [vmem:[%s4 + $0x628] sm:$0xff]
  %v2113 = vld [vmem:[%s4 + $0x630] sm:$0xff]
  %v2114 = vld [vmem:[%s4 + $0x638] sm:$0xf]
  %v2115 = vld [vmem:[%s4 + $0x63c] sm:$0xff]
  %v2116 = vld [vmem:[%s4 + $0x644] sm:$0xff]
  %v2117 = vld [vmem:[%s4 + $0x64c] sm:$0xff]
  %v2118 = vld [vmem:[%s4 + $0x654] sm:$0xf]
  %v2119 = vld [vmem:[%s4 + $0x658] sm:$0xff]
  %v2120 = vld [vmem:[%s4 + $0x660] sm:$0xff]
  %v2121 = vld [vmem:[%s4 + $0x668] sm:$0xff]
  %v2122 = vld [vmem:[%s4 + $0x670] sm:$0xf]
  %v2123 = vld [vmem:[%s4 + $0x674] sm:$0xff]
  %v2124 = vld [vmem:[%s4 + $0x67c] sm:$0xff]
  %v2125 = vld [vmem:[%s4 + $0x684] sm:$0xff]
  %v2126 = vld [vmem:[%s4 + $0x68c] sm:$0xf]
  %v2127 = vld [vmem:[%s4 + $0x690] sm:$0xff]
  %v2128 = vld [vmem:[%s4 + $0x698] sm:$0xff]
  %v2129 = vld [vmem:[%s4 + $0x6a0] sm:$0xff]
  %v2130 = vld [vmem:[%s4 + $0x6a8] sm:$0xf]
  %v2131 = vld [vmem:[%s4 + $0x6ac] sm:$0xff]
  %v2132 = vld [vmem:[%s4 + $0x6b4] sm:$0xff]
  %v2133 = vld [vmem:[%s4 + $0x6bc] sm:$0xff]
  %v2134 = vld [vmem:[%s4 + $0x6c4] sm:$0xf]
  %v2135 = vld [vmem:[%s4 + $0x6c8] sm:$0xff]
  %v2136 = vld [vmem:[%s4 + $0x6d0] sm:$0xff]
  %v2137 = vld [vmem:[%s4 + $0x6d8] sm:$0xff]
  %v2138 = vld [vmem:[%s4 + $0x6e0] sm:$0xf]
  %v2139 = vld [vmem:[%s4 + $0x6e4] sm:$0xff]
  %v2140 = vld [vmem:[%s4 + $0x6ec] sm:$0xff]
  %v2141 = vld [vmem:[%s4 + $0x6f4] sm:$0xff]
  %v2142 = vld [vmem:[%s4 + $0x6fc] sm:$0xf]
  %v2143 = vld [vmem:[%s4 + $0x700] sm:$0xff]
  %v2144 = vld [vmem:[%s4 + $0x708] sm:$0xff]
  %v2145 = vld [vmem:[%s4 + $0x710] sm:$0xff]
  %v2146 = vld [vmem:[%s4 + $0x718] sm:$0xf]
  %v2147 = vld [vmem:[%s4 + $0x71c] sm:$0xff]
  %v2148 = vld [vmem:[%s4 + $0x724] sm:$0xff]
  %v2149 = vld [vmem:[%s4 + $0x72c] sm:$0xff]
  %v2150 = vld [vmem:[%s4 + $0x734] sm:$0xf]
  %v2151 = vld [vmem:[%s4 + $0x738] sm:$0xff]
  %v2152 = vld [vmem:[%s4 + $0x740] sm:$0xff]
  %v2153 = vld [vmem:[%s4 + $0x748] sm:$0xff]
  %v2154 = vld [vmem:[%s4 + $0x750] sm:$0xf]
  %v2155 = vld [vmem:[%s4 + $0x754] sm:$0xff]
  %v2156 = vld [vmem:[%s4 + $0x75c] sm:$0xff]
  %v2157 = vld [vmem:[%s4 + $0x764] sm:$0xff]
  %v2158 = vld [vmem:[%s4 + $0x76c] sm:$0xf]
  %v2159 = vld [vmem:[%s4 + $0x770] sm:$0xff]
  %v2160 = vld [vmem:[%s4 + $0x778] sm:$0xff]
  %v2161 = vld [vmem:[%s4 + $0x780] sm:$0xff]
  %v2162 = vld [vmem:[%s4 + $0x788] sm:$0xf]
  %v2163 = vld [vmem:[%s4 + $0x78c] sm:$0xff]
  %v2164 = vld [vmem:[%s4 + $0x794] sm:$0xff]
  %v2165 = vld [vmem:[%s4 + $0x79c] sm:$0xff]
  %v2166 = vld [vmem:[%s4 + $0x7a4] sm:$0xf]
  %v2167 = vld [vmem:[%s4 + $0x7a8] sm:$0xff]
  %v2168 = vld [vmem:[%s4 + $0x7b0] sm:$0xff]
  %v2169 = vld [vmem:[%s4 + $0x7b8] sm:$0xff]
  %v2170 = vld [vmem:[%s4 + $0x7c0] sm:$0xf]
  %v2171 = vld [vmem:[%s4 + $0x7c4] sm:$0xff]
  %v2172 = vld [vmem:[%s4 + $0x7cc] sm:$0xff]
  %v2173 = vld [vmem:[%s4 + $0x7d4] sm:$0xff]
  %v2174 = vld [vmem:[%s4 + $0x7dc] sm:$0xf]
  %v2175 = vld [vmem:[%s4 + $0x7e0] sm:$0xff]
  %v2176 = vld [vmem:[%s4 + $0x7e8] sm:$0xff]
  %v2177 = vld [vmem:[%s4 + $0x7f0] sm:$0xff]
  %v2178 = vld [vmem:[%s4 + $0x7f8] sm:$0xf]
  %v2179 = vld [vmem:[%s4 + $0x7fc] sm:$0xff]
  %v2180 = vld [vmem:[%s4 + $0x804] sm:$0xff]
  %v2181 = vld [vmem:[%s4 + $0x80c] sm:$0xff]
  %v2182 = vld [vmem:[%s4 + $0x814] sm:$0xf]
  %v2183 = vld [vmem:[%s4 + $0x818] sm:$0xff]
  %v2184 = vld [vmem:[%s4 + $0x820] sm:$0xff]
  %v2185 = vld [vmem:[%s4 + $0x828] sm:$0xff]
  %v2186 = vld [vmem:[%s4 + $0x830] sm:$0xf]
  %v2187 = vld [vmem:[%s4 + $0x834] sm:$0xff]
  %v2188 = vld [vmem:[%s4 + $0x83c] sm:$0xff]
  %v2189 = vld [vmem:[%s4 + $0x844] sm:$0xff]
  %v2190 = vld [vmem:[%s4 + $0x84c] sm:$0xf]
  %v2191 = vld [vmem:[%s4 + $0x850] sm:$0xff]
  %v2192 = vld [vmem:[%s4 + $0x858] sm:$0xff]
  %v2193 = vld [vmem:[%s4 + $0x860] sm:$0xff]
  %v2194 = vld [vmem:[%s4 + $0x868] sm:$0xf]
  %v2195 = vld [vmem:[%s4 + $0x86c] sm:$0xff]
  %v2196 = vld [vmem:[%s4 + $0x874] sm:$0xff]
  %v2197 = vld [vmem:[%s4 + $0x87c] sm:$0xff]
  %v2198 = vld [vmem:[%s4 + $0x884] sm:$0xf]
  %v2199 = vld [vmem:[%s4 + $0x888] sm:$0xff]
  %v2200 = vld [vmem:[%s4 + $0x890] sm:$0xff]
  %v2201 = vld [vmem:[%s4 + $0x898] sm:$0xff]
  %v2202 = vld [vmem:[%s4 + $0x8a0] sm:$0xf]
  %v2203 = vld [vmem:[%s4 + $0x8a4] sm:$0xff]
  %v2204 = vld [vmem:[%s4 + $0x8ac] sm:$0xff]
  %v2205 = vld [vmem:[%s4 + $0x8b4] sm:$0xff]
  %v2206 = vld [vmem:[%s4 + $0x8bc] sm:$0xf]
  %v2207 = vld [vmem:[%s4 + $0x8c0] sm:$0xff]
  %v2208 = vld [vmem:[%s4 + $0x8c8] sm:$0xff]
  %v2209 = vld [vmem:[%s4 + $0x8d0] sm:$0xff]
  %v2210 = vld [vmem:[%s4 + $0x8d8] sm:$0xf]
  %v2211 = vld [vmem:[%s4 + $0x8dc] sm:$0xff]
  %v2212 = vld [vmem:[%s4 + $0x8e4] sm:$0xff]
  %v2213 = vld [vmem:[%s4 + $0x8ec] sm:$0xff]
  %v2214 = vld [vmem:[%s4 + $0x8f4] sm:$0xf]
  %v2215 = vld [vmem:[%s4 + $0x8f8] sm:$0xff]
  %v2216 = vld [vmem:[%s4 + $0x900] sm:$0xff]
  %v2217 = vld [vmem:[%s4 + $0x908] sm:$0xff]
  %v2218 = vld [vmem:[%s4 + $0x910] sm:$0xf]
  %v2219 = vld [vmem:[%s4 + $0x914] sm:$0xff]
  %v2220 = vld [vmem:[%s4 + $0x91c] sm:$0xff]
  %v2221 = vld [vmem:[%s4 + $0x924] sm:$0xff]
  %v2222 = vld [vmem:[%s4 + $0x92c] sm:$0xf]
  %v2223 = vld [vmem:[%s4 + $0x930] sm:$0xff]
  %v2224 = vld [vmem:[%s4 + $0x938] sm:$0xff]
  %v2225 = vld [vmem:[%s4 + $0x940] sm:$0xff]
  %v2226 = vld [vmem:[%s4 + $0x948] sm:$0xf]
  %v2227 = vld [vmem:[%s4 + $0x94c] sm:$0xff]
  %v2228 = vld [vmem:[%s4 + $0x954] sm:$0xff]
  %v2229 = vld [vmem:[%s4 + $0x95c] sm:$0xff]
  %v2230 = vld [vmem:[%s4 + $0x964] sm:$0xf]
  %v2231 = vld [vmem:[%s4 + $0x968] sm:$0xff]
  %v2232 = vld [vmem:[%s4 + $0x970] sm:$0xff]
  %v2233 = vld [vmem:[%s4 + $0x978] sm:$0xff]
  %v2234 = vld [vmem:[%s4 + $0x980] sm:$0xf]
  %v2235 = vld [vmem:[%s4 + $0x984] sm:$0xff]
  %v2236 = vld [vmem:[%s4 + $0x98c] sm:$0xff]
  %v2237 = vld [vmem:[%s4 + $0x994] sm:$0xff]
  %v2238 = vld [vmem:[%s4 + $0x99c] sm:$0xf]
  %v2239 = vld [vmem:[%s4 + $0x9a0] sm:$0xff]
  %v2240 = vld [vmem:[%s4 + $0x9a8] sm:$0xff]
  %v2241 = vld [vmem:[%s4 + $0x9b0] sm:$0xff]
  %v2242 = vld [vmem:[%s4 + $0x9b8] sm:$0xf]
  %v2243 = vld [vmem:[%s4 + $0x9bc] sm:$0xff]
  %v2244 = vld [vmem:[%s4 + $0x9c4] sm:$0xff]
  %v2245 = vld [vmem:[%s4 + $0x9cc] sm:$0xff]
  %v2246 = vld [vmem:[%s4 + $0x9d4] sm:$0xf]
  %v2247 = vld [vmem:[%s4 + $0x9d8] sm:$0xff]
  %v2248 = vld [vmem:[%s4 + $0x9e0] sm:$0xff]
  %v2249 = vld [vmem:[%s4 + $0x9e8] sm:$0xff]
  %v2250 = vld [vmem:[%s4 + $0x9f0] sm:$0xf]
  %v2251 = vld [vmem:[%s4 + $0x9f4] sm:$0xff]
  %v2252 = vld [vmem:[%s4 + $0x9fc] sm:$0xff]
  %v2253 = vld [vmem:[%s4 + $0xa04] sm:$0xff]
  %v2254 = vld [vmem:[%s4 + $0xa0c] sm:$0xf]
  %v2255 = vld [vmem:[%s4 + $0xa10] sm:$0xff]
  %v2256 = vld [vmem:[%s4 + $0xa18] sm:$0xff]
  %v2257 = vld [vmem:[%s4 + $0xa20] sm:$0xff]
  %v2258 = vld [vmem:[%s4 + $0xa28] sm:$0xf]
  %v2259 = vld [vmem:[%s4 + $0xa2c] sm:$0xff]
  %v2260 = vld [vmem:[%s4 + $0xa34] sm:$0xff]
  %v2261 = vld [vmem:[%s4 + $0xa3c] sm:$0xff]
  %v2262 = vld [vmem:[%s4 + $0xa44] sm:$0xf]
  %v2263 = vld [vmem:[%s4 + $0xa48] sm:$0xff]
  %v2264 = vld [vmem:[%s4 + $0xa50] sm:$0xff]
  %v2265 = vld [vmem:[%s4 + $0xa58] sm:$0xff]
  %v2266 = vld [vmem:[%s4 + $0xa60] sm:$0xf]
  %v2267 = vld [vmem:[%s4 + $0xa64] sm:$0xff]
  %v2268 = vld [vmem:[%s4 + $0xa6c] sm:$0xff]
  %v2269 = vld [vmem:[%s4 + $0xa74] sm:$0xff]
  %v2270 = vld [vmem:[%s4 + $0xa7c] sm:$0xf]
  %v2271 = vld [vmem:[%s4 + $0xa80] sm:$0xff]
  %v2272 = vld [vmem:[%s4 + $0xa88] sm:$0xff]
  %v2273 = vld [vmem:[%s4 + $0xa90] sm:$0xff]
  %v2274 = vld [vmem:[%s4 + $0xa98] sm:$0xf]
  %v2275 = vld [vmem:[%s4 + $0xa9c] sm:$0xff]
  %v2276 = vld [vmem:[%s4 + $0xaa4] sm:$0xff]
  %v2277 = vld [vmem:[%s4 + $0xaac] sm:$0xff]
  %v2278 = vld [vmem:[%s4 + $0xab4] sm:$0xf]
  %v2279 = vld [vmem:[%s4 + $0xab8] sm:$0xff]
  %v2280 = vld [vmem:[%s4 + $0xac0] sm:$0xff]
  %v2281 = vld [vmem:[%s4 + $0xac8] sm:$0xff]
  %v2282 = vld [vmem:[%s4 + $0xad0] sm:$0xf]
  %v2283 = vld [vmem:[%s4 + $0xad4] sm:$0xff]
  %v2284 = vld [vmem:[%s4 + $0xadc] sm:$0xff]
  %v2285 = vld [vmem:[%s4 + $0xae4] sm:$0xff]
  %v2286 = vld [vmem:[%s4 + $0xaec] sm:$0xf]
  %v2287 = vld [vmem:[%s4 + $0xaf0] sm:$0xff]
  %v2288 = vld [vmem:[%s4 + $0xaf8] sm:$0xff]
  %v2289 = vld [vmem:[%s4 + $0xb00] sm:$0xff]
  %v2290 = vld [vmem:[%s4 + $0xb08] sm:$0xf]
  %v2291 = vld [vmem:[%s4 + $0xb0c] sm:$0xff]
  %v2292 = vld [vmem:[%s4 + $0xb14] sm:$0xff]
  %v2293 = vld [vmem:[%s4 + $0xb1c] sm:$0xff]
  %v2294 = vld [vmem:[%s4 + $0xb24] sm:$0xf]
  %v2295 = vld [vmem:[%s4 + $0xb28] sm:$0xff]
  %v2296 = vld [vmem:[%s4 + $0xb30] sm:$0xff]
  %v2297 = vld [vmem:[%s4 + $0xb38] sm:$0xff]
  %v2298 = vld [vmem:[%s4 + $0xb40] sm:$0xf]
  %v2299 = vld [vmem:[%s4 + $0xb44] sm:$0xff]
  %v2300 = vld [vmem:[%s4 + $0xb4c] sm:$0xff]
  %v2301 = vld [vmem:[%s4 + $0xb54] sm:$0xff]
  %v2302 = vld [vmem:[%s4 + $0xb5c] sm:$0xf]
  %v2303 = vld [vmem:[%s4 + $0xb60] sm:$0xff]
  %v2304 = vld [vmem:[%s4 + $0xb68] sm:$0xff]
  %v2305 = vld [vmem:[%s4 + $0xb70] sm:$0xff]
  %v2306 = vld [vmem:[%s4 + $0xb78] sm:$0xf]
  %v2307 = vld [vmem:[%s4 + $0xb7c] sm:$0xff]
  %v2308 = vld [vmem:[%s4 + $0xb84] sm:$0xff]
  %v2309 = vld [vmem:[%s4 + $0xb8c] sm:$0xff]
  %v2310 = vld [vmem:[%s4 + $0xb94] sm:$0xf]
  %v2311 = vld [vmem:[%s4 + $0xb98] sm:$0xff]
  %v2312 = vld [vmem:[%s4 + $0xba0] sm:$0xff]
  %v2313 = vld [vmem:[%s4 + $0xba8] sm:$0xff]
  %v2314 = vld [vmem:[%s4 + $0xbb0] sm:$0xf]
  %v2315 = vld [vmem:[%s4 + $0xbb4] sm:$0xff]
  %v2316 = vld [vmem:[%s4 + $0xbbc] sm:$0xff]
  %v2317 = vld [vmem:[%s4 + $0xbc4] sm:$0xff]
  %v2318 = vld [vmem:[%s4 + $0xbcc] sm:$0xf]
  %v2319 = vld [vmem:[%s4 + $0xbd0] sm:$0xff]
  %v2320 = vld [vmem:[%s4 + $0xbd8] sm:$0xff]
  %v2321 = vld [vmem:[%s4 + $0xbe0] sm:$0xff]
  %v2322 = vld [vmem:[%s4 + $0xbe8] sm:$0xf]
  %v2323 = vld [vmem:[%s4 + $0xbec] sm:$0xff]
  %v2324 = vld [vmem:[%s4 + $0xbf4] sm:$0xff]
  %v2325 = vld [vmem:[%s4 + $0xbfc] sm:$0xff]
  %v2326 = vld [vmem:[%s4 + $0xc04] sm:$0xf]
  %v2327 = vld [vmem:[%s4 + $0xc08] sm:$0xff]
  %v2328 = vld [vmem:[%s4 + $0xc10] sm:$0xff]
  %v2329 = vld [vmem:[%s4 + $0xc18] sm:$0xff]
  %v2330 = vld [vmem:[%s4 + $0xc20] sm:$0xf]
  %v2331 = vld [vmem:[%s4 + $0xc24] sm:$0xff]
  %v2332 = vld [vmem:[%s4 + $0xc2c] sm:$0xff]
  %v2333 = vld [vmem:[%s4 + $0xc34] sm:$0xff]
  %v2334 = vld [vmem:[%s4 + $0xc3c] sm:$0xf]
  %v2335 = vld [vmem:[%s4 + $0xc40] sm:$0xff]
  %v2336 = vld [vmem:[%s4 + $0xc48] sm:$0xff]
  %v2337 = vld [vmem:[%s4 + $0xc50] sm:$0xff]
  %v2338 = vld [vmem:[%s4 + $0xc58] sm:$0xf]
  %v2339 = vld [vmem:[%s4 + $0xc5c] sm:$0xff]
  %v2340 = vld [vmem:[%s4 + $0xc64] sm:$0xff]
  %v2341 = vld [vmem:[%s4 + $0xc6c] sm:$0xff]
  %v2342 = vld [vmem:[%s4 + $0xc74] sm:$0xf]
  %v2343 = vld [vmem:[%s4 + $0xc78] sm:$0xff]
  %v2344 = vld [vmem:[%s4 + $0xc80] sm:$0xff]
  %v2345 = vld [vmem:[%s4 + $0xc88] sm:$0xff]
  %v2346 = vld [vmem:[%s4 + $0xc90] sm:$0xf]
  %v2347 = vld [vmem:[%s4 + $0xc94] sm:$0xff]
  %v2348 = vld [vmem:[%s4 + $0xc9c] sm:$0xff]
  %v2349 = vld [vmem:[%s4 + $0xca4] sm:$0xff]
  %v2350 = vld [vmem:[%s4 + $0xcac] sm:$0xf]
  %v2351 = vld [vmem:[%s4 + $0xcb0] sm:$0xff]
  %v2352 = vld [vmem:[%s4 + $0xcb8] sm:$0xff]
  %v2353 = vld [vmem:[%s4 + $0xcc0] sm:$0xff]
  %v2354 = vld [vmem:[%s4 + $0xcc8] sm:$0xf]
  %v2355 = vld [vmem:[%s4 + $0xccc] sm:$0xff]
  %v2356 = vld [vmem:[%s4 + $0xcd4] sm:$0xff]
  %v2357 = vld [vmem:[%s4 + $0xcdc] sm:$0xff]
  %v2358 = vld [vmem:[%s4 + $0xce4] sm:$0xf]
  %v2359 = vld [vmem:[%s4 + $0xce8] sm:$0xff]
  %v2360 = vld [vmem:[%s4 + $0xcf0] sm:$0xff]
  %v2361 = vld [vmem:[%s4 + $0xcf8] sm:$0xff]
  %v2362 = vld [vmem:[%s4 + $0xd00] sm:$0xf]
  %v2363 = vld [vmem:[%s4 + $0xd04] sm:$0xff]
  %v2364 = vld [vmem:[%s4 + $0xd0c] sm:$0xff]
  %v2365 = vld [vmem:[%s4 + $0xd14] sm:$0xff]
  %v2366 = vld [vmem:[%s4 + $0xd1c] sm:$0xf]
  %v2367 = vld [vmem:[%s4 + $0xd20] sm:$0xff]
  %v2368 = vld [vmem:[%s4 + $0xd28] sm:$0xff]
  %v2369 = vld [vmem:[%s4 + $0xd30] sm:$0xff]
  %v2370 = vld [vmem:[%s4 + $0xd38] sm:$0xf]
  %v2371 = vld [vmem:[%s4 + $0xd3c] sm:$0xff]
  %v2372 = vld [vmem:[%s4 + $0xd44] sm:$0xff]
  %v2373 = vld [vmem:[%s4 + $0xd4c] sm:$0xff]
  %v2374 = vld [vmem:[%s4 + $0xd54] sm:$0xf]
  %v2375 = vld [vmem:[%s4 + $0xd58] sm:$0xff]
  %v2376 = vld [vmem:[%s4 + $0xd60] sm:$0xff]
  %v2377 = vld [vmem:[%s4 + $0xd68] sm:$0xff]
  %v2378 = vld [vmem:[%s4 + $0xd70] sm:$0xf]
  %v2379 = vld [vmem:[%s4 + $0xd74] sm:$0xff]
  %v2380 = vld [vmem:[%s4 + $0xd7c] sm:$0xff]
  %v2381 = vld [vmem:[%s4 + $0xd84] sm:$0xff]
  %v2382 = vld [vmem:[%s4 + $0xd8c] sm:$0xf]
  %v2383 = vld [vmem:[%s4 + $0xd90] sm:$0xff]
  %v2384 = vld [vmem:[%s4 + $0xd98] sm:$0xff]
  %v2385 = vld [vmem:[%s4 + $0xda0] sm:$0xff]
  %v2386 = vld [vmem:[%s4 + $0xda8] sm:$0xf]
  %v2387 = vld [vmem:[%s4 + $0xdac] sm:$0xff]
  %v2388 = vld [vmem:[%s4 + $0xdb4] sm:$0xff]
  %v2389 = vld [vmem:[%s4 + $0xdbc] sm:$0xff]
  %v2390 = vld [vmem:[%s4 + $0xdc4] sm:$0xf]
  %v2391 = vld [vmem:[%s4 + $0xdc8] sm:$0xff]
  %v2392 = vld [vmem:[%s4 + $0xdd0] sm:$0xff]
  %v2393 = vld [vmem:[%s4 + $0xdd8] sm:$0xff]
  %v2394 = vld [vmem:[%s4 + $0xde0] sm:$0xf]
  %v2395 = vld [vmem:[%s4 + $0xde4] sm:$0xff]
  %v2396 = vld [vmem:[%s4 + $0xdec] sm:$0xff]
  %v2397 = vld [vmem:[%s4 + $0xdf4] sm:$0xff]
  %v2398 = vld [vmem:[%s4 + $0xdfc] sm:$0xf]
  %v2399 = vld [vmem:[%s4 + $0xe00] sm:$0xff]
  %v2400 = vld [vmem:[%s4 + $0xe08] sm:$0xff]
  %v2401 = vld [vmem:[%s4 + $0xe10] sm:$0xff]
  %v2402 = vld [vmem:[%s4 + $0xe18] sm:$0xf]
  %v2403 = vld [vmem:[%s4 + $0xe1c] sm:$0xff]
  %v2404 = vld [vmem:[%s4 + $0xe24] sm:$0xff]
  %v2405 = vld [vmem:[%s4 + $0xe2c] sm:$0xff]
  %v2406 = vld [vmem:[%s4 + $0xe34] sm:$0xf]
  %v2407 = vld [vmem:[%s4 + $0xe38] sm:$0xff]
  %v2408 = vld [vmem:[%s4 + $0xe40] sm:$0xff]
  %v2409 = vld [vmem:[%s4 + $0xe48] sm:$0xff]
  %v2410 = vld [vmem:[%s4 + $0xe50] sm:$0xf]
  %v2411 = vld [vmem:[%s4 + $0xe54] sm:$0xff]
  %v2412 = vld [vmem:[%s4 + $0xe5c] sm:$0xff]
  %v2413 = vld [vmem:[%s4 + $0xe64] sm:$0xff]
  %v2414 = vld [vmem:[%s4 + $0xe6c] sm:$0xf]
  %v2415 = vld [vmem:[%s4 + $0xe70] sm:$0xff]
  %v2416 = vld [vmem:[%s4 + $0xe78] sm:$0xff]
  %v2417 = vld [vmem:[%s4 + $0xe80] sm:$0xff]
  %v2418 = vld [vmem:[%s4 + $0xe88] sm:$0xf]
  %v2419 = vld [vmem:[%s4 + $0xe8c] sm:$0xff]
  %v2420 = vld [vmem:[%s4 + $0xe94] sm:$0xff]
  %v2421 = vld [vmem:[%s4 + $0xe9c] sm:$0xff]
  %v2422 = vld [vmem:[%s4 + $0xea4] sm:$0xf]
  %v2423 = vld [vmem:[%s4 + $0xea8] sm:$0xff]
  %v2424 = vld [vmem:[%s4 + $0xeb0] sm:$0xff]
  %v2425 = vld [vmem:[%s4 + $0xeb8] sm:$0xff]
  %v2426 = vld [vmem:[%s4 + $0xec0] sm:$0xf]
  %v2427 = vld [vmem:[%s4 + $0xec4] sm:$0xff]
  %v2428 = vld [vmem:[%s4 + $0xecc] sm:$0xff]
  %v2429 = vld [vmem:[%s4 + $0xed4] sm:$0xff]
  %v2430 = vld [vmem:[%s4 + $0xedc] sm:$0xf]
  %v2431 = vld [vmem:[%s4 + $0xee0] sm:$0xff]
  %v2432 = vld [vmem:[%s4 + $0xee8] sm:$0xff]
  %v2433 = vld [vmem:[%s4 + $0xef0] sm:$0xff]
  %v2434 = vld [vmem:[%s4 + $0xef8] sm:$0xf]
  %v2435 = vld [vmem:[%s4 + $0xefc] sm:$0xff]
  %v2436 = vld [vmem:[%s4 + $0xf04] sm:$0xff]
  %v2437 = vld [vmem:[%s4 + $0xf0c] sm:$0xff]
  %v2438 = vld [vmem:[%s4 + $0xf14] sm:$0xf]
  %v2439 = vld [vmem:[%s4 + $0xf18] sm:$0xff]
  %v2440 = vld [vmem:[%s4 + $0xf20] sm:$0xff]
  %v2441 = vld [vmem:[%s4 + $0xf28] sm:$0xff]
  %v2442 = vld [vmem:[%s4 + $0xf30] sm:$0xf]
  %v2443 = vld [vmem:[%s4 + $0xf34] sm:$0xff]
  %v2444 = vld [vmem:[%s4 + $0xf3c] sm:$0xff]
  %v2445 = vld [vmem:[%s4 + $0xf44] sm:$0xff]
  %v2446 = vld [vmem:[%s4 + $0xf4c] sm:$0xf]
  %v2447 = vld [vmem:[%s4 + $0xf50] sm:$0xff]
  %v2448 = vld [vmem:[%s4 + $0xf58] sm:$0xff]
  %v2449 = vld [vmem:[%s4 + $0xf60] sm:$0xff]
  %v2450 = vld [vmem:[%s4 + $0xf68] sm:$0xf]
  %v2451 = vld [vmem:[%s4 + $0xf6c] sm:$0xff]
  %v2452 = vld [vmem:[%s4 + $0xf74] sm:$0xff]
  %v2453 = vld [vmem:[%s4 + $0xf7c] sm:$0xff]
  %v2454 = vld [vmem:[%s4 + $0xf84] sm:$0xf]
  %v2455 = vld [vmem:[%s4 + $0xf88] sm:$0xff]
  %v2456 = vld [vmem:[%s4 + $0xf90] sm:$0xff]
  %v2457 = vld [vmem:[%s4 + $0xf98] sm:$0xff]
  %v2458 = vld [vmem:[%s4 + $0xfa0] sm:$0xf]
  %v2459 = vld [vmem:[%s4 + $0xfa4] sm:$0xff]
  %v2460 = vld [vmem:[%s4 + $0xfac] sm:$0xff]
  %v2461 = vld [vmem:[%s4 + $0xfb4] sm:$0xff]
  %v2462 = vld [vmem:[%s4 + $0xfbc] sm:$0xf]
  %v2463 = vld [vmem:[%s4 + $0xfc0] sm:$0xff]
  %v2464 = vld [vmem:[%s4 + $0xfc8] sm:$0xff]
  %v2465 = vld [vmem:[%s4 + $0xfd0] sm:$0xff]
  %v2466 = vld [vmem:[%s4 + $0xfd8] sm:$0xf]
  %v2467 = vld [vmem:[%s4 + $0xfdc] sm:$0xff]
  %v2468 = vld [vmem:[%s4 + $0xfe4] sm:$0xff]
  %v2469 = vld [vmem:[%s4 + $0xfec] sm:$0xff]
  %v2470 = vld [vmem:[%s4 + $0xff4] sm:$0xf]
  %v2471 = vld [vmem:[%s4 + $0xff8] sm:$0xff]
  %v2472 = vld [vmem:[%s4 + $0x1000] sm:$0xff]
  %v2473 = vld [vmem:[%s4 + $0x1008] sm:$0xff]
  %v2474 = vld [vmem:[%s4 + $0x1010] sm:$0xf]
  %v2475 = vld [vmem:[%s4 + $0x1014] sm:$0xff]
  %v2476 = vld [vmem:[%s4 + $0x101c] sm:$0xff]
  %v2477 = vld [vmem:[%s4 + $0x1024] sm:$0xff]
  %v2478 = vld [vmem:[%s4 + $0x102c] sm:$0xf]
  %v2479 = vld [vmem:[%s4 + $0x1030] sm:$0xff]
  %v2480 = vld [vmem:[%s4 + $0x1038] sm:$0xff]
  %v2481 = vld [vmem:[%s4 + $0x1040] sm:$0xff]
  %v2482 = vld [vmem:[%s4 + $0x1048] sm:$0xf]
  %v2483 = vld [vmem:[%s4 + $0x104c] sm:$0xff]
  %v2484 = vld [vmem:[%s4 + $0x1054] sm:$0xff]
  %v2485 = vld [vmem:[%s4 + $0x105c] sm:$0xff]
  %v2486 = vld [vmem:[%s4 + $0x1064] sm:$0xf]
  %v2487 = vld [vmem:[%s4 + $0x1068] sm:$0xff]
  %v2488 = vld [vmem:[%s4 + $0x1070] sm:$0xff]
  %v2489 = vld [vmem:[%s4 + $0x1078] sm:$0xff]
  %v2490 = vld [vmem:[%s4 + $0x1080] sm:$0xf]
  %v2491 = vld [vmem:[%s4 + $0x1084] sm:$0xff]
  %v2492 = vld [vmem:[%s4 + $0x108c] sm:$0xff]
  %v2493 = vld [vmem:[%s4 + $0x1094] sm:$0xff]
  %v2494 = vld [vmem:[%s4 + $0x109c] sm:$0xf]
  %v2495 = vld [vmem:[%s4 + $0x10a0] sm:$0xff]
  %v2496 = vld [vmem:[%s4 + $0x10a8] sm:$0xff]
  %v2497 = vld [vmem:[%s4 + $0x10b0] sm:$0xff]
  %v2498 = vld [vmem:[%s4 + $0x10b8] sm:$0xf]
  %v2499 = vld [vmem:[%s4 + $0x10bc] sm:$0xff]
  %v2500 = vld [vmem:[%s4 + $0x10c4] sm:$0xff]
  %v2501 = vld [vmem:[%s4 + $0x10cc] sm:$0xff]
  %v2502 = vld [vmem:[%s4 + $0x10d4] sm:$0xf]
  %v2503 = vld [vmem:[%s4 + $0x10d8] sm:$0xff]
  %v2504 = vld [vmem:[%s4 + $0x10e0] sm:$0xff]
  %v2505 = vld [vmem:[%s4 + $0x10e8] sm:$0xff]
  %v2506 = vld [vmem:[%s4 + $0x10f0] sm:$0xf]
  %v2507 = vld [vmem:[%s4 + $0x10f4] sm:$0xff]
  %v2508 = vld [vmem:[%s4 + $0x10fc] sm:$0xff]
  %v2509 = vld [vmem:[%s4 + $0x1104] sm:$0xff]
  %v2510 = vld [vmem:[%s4 + $0x110c] sm:$0xf]
  %v2511 = vld [vmem:[%s4 + $0x1110] sm:$0xff]
  %v2512 = vld [vmem:[%s4 + $0x1118] sm:$0xff]
  %v2513 = vld [vmem:[%s4 + $0x1120] sm:$0xff]
  %v2514 = vld [vmem:[%s4 + $0x1128] sm:$0xf]
  %v2515 = vld [vmem:[%s4 + $0x112c] sm:$0xff]
  %v2516 = vld [vmem:[%s4 + $0x1134] sm:$0xff]
  %v2517 = vld [vmem:[%s4 + $0x113c] sm:$0xff]
  %v2518 = vld [vmem:[%s4 + $0x1144] sm:$0xf]
  %v2519 = vld [vmem:[%s4 + $0x1148] sm:$0xff]
  %v2520 = vld [vmem:[%s4 + $0x1150] sm:$0xff]
  %v2521 = vld [vmem:[%s4 + $0x1158] sm:$0xff]
  %v2522 = vld [vmem:[%s4 + $0x1160] sm:$0xf]
  %v2523 = vld [vmem:[%s4 + $0x1164] sm:$0xff]
  %v2524 = vld [vmem:[%s4 + $0x116c] sm:$0xff]
  %v2525 = vld [vmem:[%s4 + $0x1174] sm:$0xff]
  %v2526 = vld [vmem:[%s4 + $0x117c] sm:$0xf]
  %v2527 = vld [vmem:[%s4 + $0x1180] sm:$0xff]
  %v2528 = vld [vmem:[%s4 + $0x1188] sm:$0xff]
  %v2529 = vld [vmem:[%s4 + $0x1190] sm:$0xff]
  %v2530 = vld [vmem:[%s4 + $0x1198] sm:$0xf]
  %v2531 = vld [vmem:[%s4 + $0x119c] sm:$0xff]
  %v2532 = vld [vmem:[%s4 + $0x11a4] sm:$0xff]
  %v2533 = vld [vmem:[%s4 + $0x11ac] sm:$0xff]
  %v2534 = vld [vmem:[%s4 + $0x11b4] sm:$0xf]
  %v2535 = vld [vmem:[%s4 + $0x11b8] sm:$0xff]
  %v2536 = vld [vmem:[%s4 + $0x11c0] sm:$0xff]
  %v2537 = vld [vmem:[%s4 + $0x11c8] sm:$0xff]
  %v2538 = vld [vmem:[%s4 + $0x11d0] sm:$0xf]
  %v2539 = vld [vmem:[%s4 + $0x11d4] sm:$0xff]
  %v2540 = vld [vmem:[%s4 + $0x11dc] sm:$0xff]
  %v2541 = vld [vmem:[%s4 + $0x11e4] sm:$0xff]
  %v2542 = vld [vmem:[%s4 + $0x11ec] sm:$0xf]
  %v2543 = vld [vmem:[%s4 + $0x11f0] sm:$0xff]
  %v2544 = vld [vmem:[%s4 + $0x11f8] sm:$0xff]
  %v2545 = vld [vmem:[%s4 + $0x1200] sm:$0xff]
  %v2546 = vld [vmem:[%s4 + $0x1208] sm:$0xf]
  %v2547 = vld [vmem:[%s4 + $0x120c] sm:$0xff]
  %v2548 = vld [vmem:[%s4 + $0x1214] sm:$0xff]
  %v2549 = vld [vmem:[%s4 + $0x121c] sm:$0xff]
  %v2550 = vld [vmem:[%s4 + $0x1224] sm:$0xf]
  %v2551 = vld [vmem:[%s4 + $0x1228] sm:$0xff]
  %v2552 = vld [vmem:[%s4 + $0x1230] sm:$0xff]
  %v2553 = vld [vmem:[%s4 + $0x1238] sm:$0xff]
  %v2554 = vld [vmem:[%s4 + $0x1240] sm:$0xf]
  %v2555 = vld [vmem:[%s4 + $0x1244] sm:$0xff]
  %v2556 = vld [vmem:[%s4 + $0x124c] sm:$0xff]
  %v2557 = vld [vmem:[%s4 + $0x1254] sm:$0xff]
  %v2558 = vld [vmem:[%s4 + $0x125c] sm:$0xf]
  %v2559 = vld [vmem:[%s4 + $0x1260] sm:$0xff]
  %v2560 = vld [vmem:[%s4 + $0x1268] sm:$0xff]
  %v2561 = vld [vmem:[%s4 + $0x1270] sm:$0xff]
  %v2562 = vld [vmem:[%s4 + $0x1278] sm:$0xf]
  %v2563 = vld [vmem:[%s4 + $0x127c] sm:$0xff]
  %v2564 = vld [vmem:[%s4 + $0x1284] sm:$0xff]
  %v2565 = vld [vmem:[%s4 + $0x128c] sm:$0xff]
  %v2566 = vld [vmem:[%s4 + $0x1294] sm:$0xf]
  %v2567 = vld [vmem:[%s4 + $0x1298] sm:$0xff]
  %v2568 = vld [vmem:[%s4 + $0x12a0] sm:$0xff]
  %v2569 = vld [vmem:[%s4 + $0x12a8] sm:$0xff]
  %v2570 = vld [vmem:[%s4 + $0x12b0] sm:$0xf]
  %v2571 = vld [vmem:[%s4 + $0x12b4] sm:$0xff]
  %v2572 = vld [vmem:[%s4 + $0x12bc] sm:$0xff]
  %v2573 = vld [vmem:[%s4 + $0x12c4] sm:$0xff]
  %v2574 = vld [vmem:[%s4 + $0x12cc] sm:$0xf]
  %v2575 = vld [vmem:[%s4 + $0x12d0] sm:$0xff]
  %v2576 = vld [vmem:[%s4 + $0x12d8] sm:$0xff]
  %v2577 = vld [vmem:[%s4 + $0x12e0] sm:$0xff]
  %v2578 = vld [vmem:[%s4 + $0x12e8] sm:$0xf]
  %v2579 = vld [vmem:[%s4 + $0x12ec] sm:$0xff]
  %v2580 = vld [vmem:[%s4 + $0x12f4] sm:$0xff]
  %v2581 = vld [vmem:[%s4 + $0x12fc] sm:$0xff]
  %v2582 = vld [vmem:[%s4 + $0x1304] sm:$0xf]
  %v2583 = vld [vmem:[%s4 + $0x1308] sm:$0xff]
  %v2584 = vld [vmem:[%s4 + $0x1310] sm:$0xff]
  %v2585 = vld [vmem:[%s4 + $0x1318] sm:$0xff]
  %v2586 = vld [vmem:[%s4 + $0x1320] sm:$0xf]
  %v2587 = vld [vmem:[%s4 + $0x1324] sm:$0xff]
  %v2588 = vld [vmem:[%s4 + $0x132c] sm:$0xff]
  %v2589 = vld [vmem:[%s4 + $0x1334] sm:$0xff]
  %v2590 = vld [vmem:[%s4 + $0x133c] sm:$0xf]
  %v2591 = vld [vmem:[%s4 + $0x1340] sm:$0xff]
  %v2592 = vld [vmem:[%s4 + $0x1348] sm:$0xff]
  %v2593 = vld [vmem:[%s4 + $0x1350] sm:$0xff]
  %v2594 = vld [vmem:[%s4 + $0x1358] sm:$0xf]
  %v2595 = vld [vmem:[%s4 + $0x135c] sm:$0xff]
  %v2596 = vld [vmem:[%s4 + $0x1364] sm:$0xff]
  %v2597 = vld [vmem:[%s4 + $0x136c] sm:$0xff]
  %v2598 = vld [vmem:[%s4 + $0x1374] sm:$0xf]
  %v2599 = vld [vmem:[%s4 + $0x1378] sm:$0xff]
  %v2600 = vld [vmem:[%s4 + $0x1380] sm:$0xff]
  %v2601 = vld [vmem:[%s4 + $0x1388] sm:$0xff]
  %v2602 = vld [vmem:[%s4 + $0x1390] sm:$0xf]
  %v2603 = vld [vmem:[%s4 + $0x1394] sm:$0xff]
  %v2604 = vld [vmem:[%s4 + $0x139c] sm:$0xff]
  %v2605 = vld [vmem:[%s4 + $0x13a4] sm:$0xff]
  %v2606 = vld [vmem:[%s4 + $0x13ac] sm:$0xf]
  %v2607 = vld [vmem:[%s4 + $0x13b0] sm:$0xff]
  %v2608 = vld [vmem:[%s4 + $0x13b8] sm:$0xff]
  %v2609 = vld [vmem:[%s4 + $0x13c0] sm:$0xff]
  %v2610 = vld [vmem:[%s4 + $0x13c8] sm:$0xf]
  %v2611 = vld [vmem:[%s4 + $0x13cc] sm:$0xff]
  %v2612 = vld [vmem:[%s4 + $0x13d4] sm:$0xff]
  %v2613 = vld [vmem:[%s4 + $0x13dc] sm:$0xff]
  %v2614 = vld [vmem:[%s4 + $0x13e4] sm:$0xf]
  %v2615 = vld [vmem:[%s4 + $0x13e8] sm:$0xff]
  %v2616 = vld [vmem:[%s4 + $0x13f0] sm:$0xff]
  %v2617 = vld [vmem:[%s4 + $0x13f8] sm:$0xff]
  %v2618 = vld [vmem:[%s4 + $0x1400] sm:$0xf]
  %v2619 = vld [vmem:[%s4 + $0x1404] sm:$0xff]
  %v2620 = vld [vmem:[%s4 + $0x140c] sm:$0xff]
  %v2621 = vld [vmem:[%s4 + $0x1414] sm:$0xff]
  %v2622 = vld [vmem:[%s4 + $0x141c] sm:$0xf]
  %v2623 = vld [vmem:[%s4 + $0x1420] sm:$0xff]
  %v2624 = vld [vmem:[%s4 + $0x1428] sm:$0xff]
  %v2625 = vld [vmem:[%s4 + $0x1430] sm:$0xff]
  %v2626 = vld [vmem:[%s4 + $0x1438] sm:$0xf]
  %v2627 = vld [vmem:[%s4 + $0x143c] sm:$0xff]
  %v2628 = vld [vmem:[%s4 + $0x1444] sm:$0xff]
  %v2629 = vld [vmem:[%s4 + $0x144c] sm:$0xff]
  %v2630 = vld [vmem:[%s4 + $0x1454] sm:$0xf]
  %v2631 = vld [vmem:[%s4 + $0x1458] sm:$0xff]
  %v2632 = vld [vmem:[%s4 + $0x1460] sm:$0xff]
  %v2633 = vld [vmem:[%s4 + $0x1468] sm:$0xff]
  %v2634 = vld [vmem:[%s4 + $0x1470] sm:$0xf]
  %v2635 = vld [vmem:[%s4 + $0x1474] sm:$0xff]
  %v2636 = vld [vmem:[%s4 + $0x147c] sm:$0xff]
  %v2637 = vld [vmem:[%s4 + $0x1484] sm:$0xff]
  %v2638 = vld [vmem:[%s4 + $0x148c] sm:$0xf]
  %v2639 = vld [vmem:[%s4 + $0x1490] sm:$0xff]
  %v2640 = vld [vmem:[%s4 + $0x1498] sm:$0xff]
  %v2641 = vld [vmem:[%s4 + $0x14a0] sm:$0xff]
  %v2642 = vld [vmem:[%s4 + $0x14a8] sm:$0xf]
  %v2643 = vld [vmem:[%s4 + $0x14ac] sm:$0xff]
  %v2644 = vld [vmem:[%s4 + $0x14b4] sm:$0xff]
  %v2645 = vld [vmem:[%s4 + $0x14bc] sm:$0xff]
  %v2646 = vld [vmem:[%s4 + $0x14c4] sm:$0xf]
  %v2647 = vld [vmem:[%s4 + $0x14c8] sm:$0xff]
  %v2648 = vld [vmem:[%s4 + $0x14d0] sm:$0xff]
  %v2649 = vld [vmem:[%s4 + $0x14d8] sm:$0xff]
  %v2650 = vld [vmem:[%s4 + $0x14e0] sm:$0xf]
  %v2651 = vld [vmem:[%s4 + $0x14e4] sm:$0xff]
  %v2652 = vld [vmem:[%s4 + $0x14ec] sm:$0xff]
  %v2653 = vld [vmem:[%s4 + $0x14f4] sm:$0xff]
  %v2654 = vld [vmem:[%s4 + $0x14fc] sm:$0xf]
  %v2655 = vld [vmem:[%s4 + $0x1500] sm:$0xff]
  %v2656 = vld [vmem:[%s4 + $0x1508] sm:$0xff]
  %v2657 = vld [vmem:[%s4 + $0x1510] sm:$0xff]
  %v2658 = vld [vmem:[%s4 + $0x1518] sm:$0xf]
  %v2659 = vld [vmem:[%s4 + $0x151c] sm:$0xff]
  %v2660 = vld [vmem:[%s4 + $0x1524] sm:$0xff]
  %v2661 = vld [vmem:[%s4 + $0x152c] sm:$0xff]
  %v2662 = vld [vmem:[%s4 + $0x1534] sm:$0xf]
  %v2663 = vld [vmem:[%s4 + $0x1538] sm:$0xff]
  %v2664 = vld [vmem:[%s4 + $0x1540] sm:$0xff]
  %v2665 = vld [vmem:[%s4 + $0x1548] sm:$0xff]
  %v2666 = vld [vmem:[%s4 + $0x1550] sm:$0xf]
  %v2667 = vld [vmem:[%s4 + $0x1554] sm:$0xff]
  %v2668 = vld [vmem:[%s4 + $0x155c] sm:$0xff]
  %v2669 = vld [vmem:[%s4 + $0x1564] sm:$0xff]
  %v2670 = vld [vmem:[%s4 + $0x156c] sm:$0xf]
  %v2671 = vld [vmem:[%s5] sm:$0x7f]
  %v2673 = vlaneseq
  %v2674 = vshrl.u32 %v2673, 7
  %v2675 = vsub.s32 0, %v2674
  %v2676 = vrot.slane %v2671, %v2675
  %v2677 = vlaneseq
  %v2678 = vshrl.u32 %v2677, 7
  %v2679 = vsub.s32 1, %v2678
  %v2680 = vrot.slane %v2671, %v2679
  %v2681 = vlaneseq
  %v2682 = vshrl.u32 %v2681, 7
  %v2683 = vsub.s32 2, %v2682
  %v2684 = vrot.slane %v2671, %v2683
  %v2685 = vlaneseq
  %v2686 = vshrl.u32 %v2685, 7
  %v2687 = vsub.s32 3, %v2686
  %v2688 = vrot.slane %v2671, %v2687
  %v2689 = vlaneseq
  %v2690 = vshrl.u32 %v2689, 7
  %v2691 = vsub.s32 4, %v2690
  %v2692 = vrot.slane %v2671, %v2691
  %v2693 = vlaneseq
  %v2694 = vshrl.u32 %v2693, 7
  %v2695 = vsub.s32 5, %v2694
  %v2696 = vrot.slane %v2671, %v2695
  %v2697 = vlaneseq
  %v2698 = vshrl.u32 %v2697, 7
  %v2699 = vsub.s32 6, %v2698
  %v2700 = vrot.slane %v2671, %v2699
  %v3492 = vunpack.c.l.b16 %v1887
  %v3493 = vunpack.c.h.b16 %v1887
  %v3494 = vunpack.c.l.b16 %v1888
  %v3495 = vunpack.c.h.b16 %v1888
  %v3496 = vunpack.c.l.b16 %v1889
  %v3497 = vunpack.c.h.b16 %v1889
  %v3498 = vunpack.c.l.b16 %v1890
  %v3499 = vunpack.c.l.b16 %v1891
  %v3500 = vunpack.c.h.b16 %v1891
  %v3501 = vunpack.c.l.b16 %v1892
  %v3502 = vunpack.c.h.b16 %v1892
  %v3503 = vunpack.c.l.b16 %v1893
  %v3504 = vunpack.c.h.b16 %v1893
  %v3505 = vunpack.c.l.b16 %v1894
  %v3506 = vunpack.c.l.b16 %v1895
  %v3507 = vunpack.c.h.b16 %v1895
  %v3508 = vunpack.c.l.b16 %v1896
  %v3509 = vunpack.c.h.b16 %v1896
  %v3510 = vunpack.c.l.b16 %v1897
  %v3511 = vunpack.c.h.b16 %v1897
  %v3512 = vunpack.c.l.b16 %v1898
  %v3513 = vunpack.c.l.b16 %v1899
  %v3514 = vunpack.c.h.b16 %v1899
  %v3515 = vunpack.c.l.b16 %v1900
  %v3516 = vunpack.c.h.b16 %v1900
  %v3517 = vunpack.c.l.b16 %v1901
  %v3518 = vunpack.c.h.b16 %v1901
  %v3519 = vunpack.c.l.b16 %v1902
  %v3520 = vunpack.c.l.b16 %v1903
  %v3521 = vunpack.c.h.b16 %v1903
  %v3522 = vunpack.c.l.b16 %v1904
  %v3523 = vunpack.c.h.b16 %v1904
  %v3524 = vunpack.c.l.b16 %v1905
  %v3525 = vunpack.c.h.b16 %v1905
  %v3526 = vunpack.c.l.b16 %v1906
  %v3527 = vunpack.c.l.b16 %v1907
  %v3528 = vunpack.c.h.b16 %v1907
  %v3529 = vunpack.c.l.b16 %v1908
  %v3530 = vunpack.c.h.b16 %v1908
  %v3531 = vunpack.c.l.b16 %v1909
  %v3532 = vunpack.c.h.b16 %v1909
  %v3533 = vunpack.c.l.b16 %v1910
  %v3534 = vunpack.c.l.b16 %v1911
  %v3535 = vunpack.c.h.b16 %v1911
  %v3536 = vunpack.c.l.b16 %v1912
  %v3537 = vunpack.c.h.b16 %v1912
  %v3538 = vunpack.c.l.b16 %v1913
  %v3539 = vunpack.c.h.b16 %v1913
  %v3540 = vunpack.c.l.b16 %v1914
  %v3541 = vunpack.c.l.b16 %v1915
  %v3542 = vunpack.c.h.b16 %v1915
  %v3543 = vunpack.c.l.b16 %v1916
  %v3544 = vunpack.c.h.b16 %v1916
  %v3545 = vunpack.c.l.b16 %v1917
  %v3546 = vunpack.c.h.b16 %v1917
  %v3547 = vunpack.c.l.b16 %v1918
  %v3548 = vunpack.c.l.b16 %v1919
  %v3549 = vunpack.c.h.b16 %v1919
  %v3550 = vunpack.c.l.b16 %v1920
  %v3551 = vunpack.c.h.b16 %v1920
  %v3552 = vunpack.c.l.b16 %v1921
  %v3553 = vunpack.c.h.b16 %v1921
  %v3554 = vunpack.c.l.b16 %v1922
  %v3555 = vunpack.c.l.b16 %v1923
  %v3556 = vunpack.c.h.b16 %v1923
  %v3557 = vunpack.c.l.b16 %v1924
  %v3558 = vunpack.c.h.b16 %v1924
  %v3559 = vunpack.c.l.b16 %v1925
  %v3560 = vunpack.c.h.b16 %v1925
  %v3561 = vunpack.c.l.b16 %v1926
  %v3562 = vunpack.c.l.b16 %v1927
  %v3563 = vunpack.c.h.b16 %v1927
  %v3564 = vunpack.c.l.b16 %v1928
  %v3565 = vunpack.c.h.b16 %v1928
  %v3566 = vunpack.c.l.b16 %v1929
  %v3567 = vunpack.c.h.b16 %v1929
  %v3568 = vunpack.c.l.b16 %v1930
  %v3569 = vunpack.c.l.b16 %v1931
  %v3570 = vunpack.c.h.b16 %v1931
  %v3571 = vunpack.c.l.b16 %v1932
  %v3572 = vunpack.c.h.b16 %v1932
  %v3573 = vunpack.c.l.b16 %v1933
  %v3574 = vunpack.c.h.b16 %v1933
  %v3575 = vunpack.c.l.b16 %v1934
  %v3576 = vunpack.c.l.b16 %v1935
  %v3577 = vunpack.c.h.b16 %v1935
  %v3578 = vunpack.c.l.b16 %v1936
  %v3579 = vunpack.c.h.b16 %v1936
  %v3580 = vunpack.c.l.b16 %v1937
  %v3581 = vunpack.c.h.b16 %v1937
  %v3582 = vunpack.c.l.b16 %v1938
  %v3583 = vunpack.c.l.b16 %v1939
  %v3584 = vunpack.c.h.b16 %v1939
  %v3585 = vunpack.c.l.b16 %v1940
  %v3586 = vunpack.c.h.b16 %v1940
  %v3587 = vunpack.c.l.b16 %v1941
  %v3588 = vunpack.c.h.b16 %v1941
  %v3589 = vunpack.c.l.b16 %v1942
  %v3590 = vunpack.c.l.b16 %v1943
  %v3591 = vunpack.c.h.b16 %v1943
  %v3592 = vunpack.c.l.b16 %v1944
  %v3593 = vunpack.c.h.b16 %v1944
  %v3594 = vunpack.c.l.b16 %v1945
  %v3595 = vunpack.c.h.b16 %v1945
  %v3596 = vunpack.c.l.b16 %v1946
  %v3597 = vunpack.c.l.b16 %v1947
  %v3598 = vunpack.c.h.b16 %v1947
  %v3599 = vunpack.c.l.b16 %v1948
  %v3600 = vunpack.c.h.b16 %v1948
  %v3601 = vunpack.c.l.b16 %v1949
  %v3602 = vunpack.c.h.b16 %v1949
  %v3603 = vunpack.c.l.b16 %v1950
  %v3604 = vunpack.c.l.b16 %v1951
  %v3605 = vunpack.c.h.b16 %v1951
  %v3606 = vunpack.c.l.b16 %v1952
  %v3607 = vunpack.c.h.b16 %v1952
  %v3608 = vunpack.c.l.b16 %v1953
  %v3609 = vunpack.c.h.b16 %v1953
  %v3610 = vunpack.c.l.b16 %v1954
  %v3611 = vunpack.c.l.b16 %v1955
  %v3612 = vunpack.c.h.b16 %v1955
  %v3613 = vunpack.c.l.b16 %v1956
  %v3614 = vunpack.c.h.b16 %v1956
  %v3615 = vunpack.c.l.b16 %v1957
  %v3616 = vunpack.c.h.b16 %v1957
  %v3617 = vunpack.c.l.b16 %v1958
  %v3618 = vunpack.c.l.b16 %v1959
  %v3619 = vunpack.c.h.b16 %v1959
  %v3620 = vunpack.c.l.b16 %v1960
  %v3621 = vunpack.c.h.b16 %v1960
  %v3622 = vunpack.c.l.b16 %v1961
  %v3623 = vunpack.c.h.b16 %v1961
  %v3624 = vunpack.c.l.b16 %v1962
  %v3625 = vunpack.c.l.b16 %v1963
  %v3626 = vunpack.c.h.b16 %v1963
  %v3627 = vunpack.c.l.b16 %v1964
  %v3628 = vunpack.c.h.b16 %v1964
  %v3629 = vunpack.c.l.b16 %v1965
  %v3630 = vunpack.c.h.b16 %v1965
  %v3631 = vunpack.c.l.b16 %v1966
  %v3632 = vunpack.c.l.b16 %v1967
  %v3633 = vunpack.c.h.b16 %v1967
  %v3634 = vunpack.c.l.b16 %v1968
  %v3635 = vunpack.c.h.b16 %v1968
  %v3636 = vunpack.c.l.b16 %v1969
  %v3637 = vunpack.c.h.b16 %v1969
  %v3638 = vunpack.c.l.b16 %v1970
  %v3639 = vunpack.c.l.b16 %v1971
  %v3640 = vunpack.c.h.b16 %v1971
  %v3641 = vunpack.c.l.b16 %v1972
  %v3642 = vunpack.c.h.b16 %v1972
  %v3643 = vunpack.c.l.b16 %v1973
  %v3644 = vunpack.c.h.b16 %v1973
  %v3645 = vunpack.c.l.b16 %v1974
  %v3646 = vunpack.c.l.b16 %v1975
  %v3647 = vunpack.c.h.b16 %v1975
  %v3648 = vunpack.c.l.b16 %v1976
  %v3649 = vunpack.c.h.b16 %v1976
  %v3650 = vunpack.c.l.b16 %v1977
  %v3651 = vunpack.c.h.b16 %v1977
  %v3652 = vunpack.c.l.b16 %v1978
  %v3653 = vunpack.c.l.b16 %v1979
  %v3654 = vunpack.c.h.b16 %v1979
  %v3655 = vunpack.c.l.b16 %v1980
  %v3656 = vunpack.c.h.b16 %v1980
  %v3657 = vunpack.c.l.b16 %v1981
  %v3658 = vunpack.c.h.b16 %v1981
  %v3659 = vunpack.c.l.b16 %v1982
  %v3660 = vunpack.c.l.b16 %v1983
  %v3661 = vunpack.c.h.b16 %v1983
  %v3662 = vunpack.c.l.b16 %v1984
  %v3663 = vunpack.c.h.b16 %v1984
  %v3664 = vunpack.c.l.b16 %v1985
  %v3665 = vunpack.c.h.b16 %v1985
  %v3666 = vunpack.c.l.b16 %v1986
  %v3667 = vunpack.c.l.b16 %v1987
  %v3668 = vunpack.c.h.b16 %v1987
  %v3669 = vunpack.c.l.b16 %v1988
  %v3670 = vunpack.c.h.b16 %v1988
  %v3671 = vunpack.c.l.b16 %v1989
  %v3672 = vunpack.c.h.b16 %v1989
  %v3673 = vunpack.c.l.b16 %v1990
  %v3674 = vunpack.c.l.b16 %v1991
  %v3675 = vunpack.c.h.b16 %v1991
  %v3676 = vunpack.c.l.b16 %v1992
  %v3677 = vunpack.c.h.b16 %v1992
  %v3678 = vunpack.c.l.b16 %v1993
  %v3679 = vunpack.c.h.b16 %v1993
  %v3680 = vunpack.c.l.b16 %v1994
  %v3681 = vunpack.c.l.b16 %v1995
  %v3682 = vunpack.c.h.b16 %v1995
  %v3683 = vunpack.c.l.b16 %v1996
  %v3684 = vunpack.c.h.b16 %v1996
  %v3685 = vunpack.c.l.b16 %v1997
  %v3686 = vunpack.c.h.b16 %v1997
  %v3687 = vunpack.c.l.b16 %v1998
  %v3688 = vunpack.c.l.b16 %v1999
  %v3689 = vunpack.c.h.b16 %v1999
  %v3690 = vunpack.c.l.b16 %v2000
  %v3691 = vunpack.c.h.b16 %v2000
  %v3692 = vunpack.c.l.b16 %v2001
  %v3693 = vunpack.c.h.b16 %v2001
  %v3694 = vunpack.c.l.b16 %v2002
  %v3695 = vunpack.c.l.b16 %v2003
  %v3696 = vunpack.c.h.b16 %v2003
  %v3697 = vunpack.c.l.b16 %v2004
  %v3698 = vunpack.c.h.b16 %v2004
  %v3699 = vunpack.c.l.b16 %v2005
  %v3700 = vunpack.c.h.b16 %v2005
  %v3701 = vunpack.c.l.b16 %v2006
  %v3702 = vunpack.c.l.b16 %v2007
  %v3703 = vunpack.c.h.b16 %v2007
  %v3704 = vunpack.c.l.b16 %v2008
  %v3705 = vunpack.c.h.b16 %v2008
  %v3706 = vunpack.c.l.b16 %v2009
  %v3707 = vunpack.c.h.b16 %v2009
  %v3708 = vunpack.c.l.b16 %v2010
  %v3709 = vunpack.c.l.b16 %v2011
  %v3710 = vunpack.c.h.b16 %v2011
  %v3711 = vunpack.c.l.b16 %v2012
  %v3712 = vunpack.c.h.b16 %v2012
  %v3713 = vunpack.c.l.b16 %v2013
  %v3714 = vunpack.c.h.b16 %v2013
  %v3715 = vunpack.c.l.b16 %v2014
  %v3716 = vunpack.c.l.b16 %v2015
  %v3717 = vunpack.c.h.b16 %v2015
  %v3718 = vunpack.c.l.b16 %v2016
  %v3719 = vunpack.c.h.b16 %v2016
  %v3720 = vunpack.c.l.b16 %v2017
  %v3721 = vunpack.c.h.b16 %v2017
  %v3722 = vunpack.c.l.b16 %v2018
  %v3723 = vunpack.c.l.b16 %v2019
  %v3724 = vunpack.c.h.b16 %v2019
  %v3725 = vunpack.c.l.b16 %v2020
  %v3726 = vunpack.c.h.b16 %v2020
  %v3727 = vunpack.c.l.b16 %v2021
  %v3728 = vunpack.c.h.b16 %v2021
  %v3729 = vunpack.c.l.b16 %v2022
  %v3730 = vunpack.c.l.b16 %v2023
  %v3731 = vunpack.c.h.b16 %v2023
  %v3732 = vunpack.c.l.b16 %v2024
  %v3733 = vunpack.c.h.b16 %v2024
  %v3734 = vunpack.c.l.b16 %v2025
  %v3735 = vunpack.c.h.b16 %v2025
  %v3736 = vunpack.c.l.b16 %v2026
  %v3737 = vunpack.c.l.b16 %v2027
  %v3738 = vunpack.c.h.b16 %v2027
  %v3739 = vunpack.c.l.b16 %v2028
  %v3740 = vunpack.c.h.b16 %v2028
  %v3741 = vunpack.c.l.b16 %v2029
  %v3742 = vunpack.c.h.b16 %v2029
  %v3743 = vunpack.c.l.b16 %v2030
  %v3744 = vunpack.c.l.b16 %v2031
  %v3745 = vunpack.c.h.b16 %v2031
  %v3746 = vunpack.c.l.b16 %v2032
  %v3747 = vunpack.c.h.b16 %v2032
  %v3748 = vunpack.c.l.b16 %v2033
  %v3749 = vunpack.c.h.b16 %v2033
  %v3750 = vunpack.c.l.b16 %v2034
  %v3751 = vunpack.c.l.b16 %v2035
  %v3752 = vunpack.c.h.b16 %v2035
  %v3753 = vunpack.c.l.b16 %v2036
  %v3754 = vunpack.c.h.b16 %v2036
  %v3755 = vunpack.c.l.b16 %v2037
  %v3756 = vunpack.c.h.b16 %v2037
  %v3757 = vunpack.c.l.b16 %v2038
  %v3758 = vunpack.c.l.b16 %v2039
  %v3759 = vunpack.c.h.b16 %v2039
  %v3760 = vunpack.c.l.b16 %v2040
  %v3761 = vunpack.c.h.b16 %v2040
  %v3762 = vunpack.c.l.b16 %v2041
  %v3763 = vunpack.c.h.b16 %v2041
  %v3764 = vunpack.c.l.b16 %v2042
  %v3765 = vunpack.c.l.b16 %v2043
  %v3766 = vunpack.c.h.b16 %v2043
  %v3767 = vunpack.c.l.b16 %v2044
  %v3768 = vunpack.c.h.b16 %v2044
  %v3769 = vunpack.c.l.b16 %v2045
  %v3770 = vunpack.c.h.b16 %v2045
  %v3771 = vunpack.c.l.b16 %v2046
  %v3772 = vunpack.c.l.b16 %v2047
  %v3773 = vunpack.c.h.b16 %v2047
  %v3774 = vunpack.c.l.b16 %v2048
  %v3775 = vunpack.c.h.b16 %v2048
  %v3776 = vunpack.c.l.b16 %v2049
  %v3777 = vunpack.c.h.b16 %v2049
  %v3778 = vunpack.c.l.b16 %v2050
  %v3779 = vunpack.c.l.b16 %v2051
  %v3780 = vunpack.c.h.b16 %v2051
  %v3781 = vunpack.c.l.b16 %v2052
  %v3782 = vunpack.c.h.b16 %v2052
  %v3783 = vunpack.c.l.b16 %v2053
  %v3784 = vunpack.c.h.b16 %v2053
  %v3785 = vunpack.c.l.b16 %v2054
  %v3786 = vunpack.c.l.b16 %v2055
  %v3787 = vunpack.c.h.b16 %v2055
  %v3788 = vunpack.c.l.b16 %v2056
  %v3789 = vunpack.c.h.b16 %v2056
  %v3790 = vunpack.c.l.b16 %v2057
  %v3791 = vunpack.c.h.b16 %v2057
  %v3792 = vunpack.c.l.b16 %v2058
  %v3793 = vunpack.c.l.b16 %v2059
  %v3794 = vunpack.c.h.b16 %v2059
  %v3795 = vunpack.c.l.b16 %v2060
  %v3796 = vunpack.c.h.b16 %v2060
  %v3797 = vunpack.c.l.b16 %v2061
  %v3798 = vunpack.c.h.b16 %v2061
  %v3799 = vunpack.c.l.b16 %v2062
  %v3800 = vunpack.c.l.b16 %v2063
  %v3801 = vunpack.c.h.b16 %v2063
  %v3802 = vunpack.c.l.b16 %v2064
  %v3803 = vunpack.c.h.b16 %v2064
  %v3804 = vunpack.c.l.b16 %v2065
  %v3805 = vunpack.c.h.b16 %v2065
  %v3806 = vunpack.c.l.b16 %v2066
  %v3807 = vunpack.c.l.b16 %v2067
  %v3808 = vunpack.c.h.b16 %v2067
  %v3809 = vunpack.c.l.b16 %v2068
  %v3810 = vunpack.c.h.b16 %v2068
  %v3811 = vunpack.c.l.b16 %v2069
  %v3812 = vunpack.c.h.b16 %v2069
  %v3813 = vunpack.c.l.b16 %v2070
  %v3814 = vunpack.c.l.b16 %v2071
  %v3815 = vunpack.c.h.b16 %v2071
  %v3816 = vunpack.c.l.b16 %v2072
  %v3817 = vunpack.c.h.b16 %v2072
  %v3818 = vunpack.c.l.b16 %v2073
  %v3819 = vunpack.c.h.b16 %v2073
  %v3820 = vunpack.c.l.b16 %v2074
  %v3821 = vunpack.c.l.b16 %v2075
  %v3822 = vunpack.c.h.b16 %v2075
  %v3823 = vunpack.c.l.b16 %v2076
  %v3824 = vunpack.c.h.b16 %v2076
  %v3825 = vunpack.c.l.b16 %v2077
  %v3826 = vunpack.c.h.b16 %v2077
  %v3827 = vunpack.c.l.b16 %v2078
  %v3828 = vunpack.c.l.b16 %v2079
  %v3829 = vunpack.c.h.b16 %v2079
  %v3830 = vunpack.c.l.b16 %v2080
  %v3831 = vunpack.c.h.b16 %v2080
  %v3832 = vunpack.c.l.b16 %v2081
  %v3833 = vunpack.c.h.b16 %v2081
  %v3834 = vunpack.c.l.b16 %v2082
  %v3835 = vunpack.c.l.b16 %v2083
  %v3836 = vunpack.c.h.b16 %v2083
  %v3837 = vunpack.c.l.b16 %v2084
  %v3838 = vunpack.c.h.b16 %v2084
  %v3839 = vunpack.c.l.b16 %v2085
  %v3840 = vunpack.c.h.b16 %v2085
  %v3841 = vunpack.c.l.b16 %v2086
  %v3842 = vunpack.c.l.b16 %v2087
  %v3843 = vunpack.c.h.b16 %v2087
  %v3844 = vunpack.c.l.b16 %v2088
  %v3845 = vunpack.c.h.b16 %v2088
  %v3846 = vunpack.c.l.b16 %v2089
  %v3847 = vunpack.c.h.b16 %v2089
  %v3848 = vunpack.c.l.b16 %v2090
  %v3849 = vunpack.c.l.b16 %v2091
  %v3850 = vunpack.c.h.b16 %v2091
  %v3851 = vunpack.c.l.b16 %v2092
  %v3852 = vunpack.c.h.b16 %v2092
  %v3853 = vunpack.c.l.b16 %v2093
  %v3854 = vunpack.c.h.b16 %v2093
  %v3855 = vunpack.c.l.b16 %v2094
  %v3856 = vunpack.c.l.b16 %v2095
  %v3857 = vunpack.c.h.b16 %v2095
  %v3858 = vunpack.c.l.b16 %v2096
  %v3859 = vunpack.c.h.b16 %v2096
  %v3860 = vunpack.c.l.b16 %v2097
  %v3861 = vunpack.c.h.b16 %v2097
  %v3862 = vunpack.c.l.b16 %v2098
  %v3863 = vunpack.c.l.b16 %v2099
  %v3864 = vunpack.c.h.b16 %v2099
  %v3865 = vunpack.c.l.b16 %v2100
  %v3866 = vunpack.c.h.b16 %v2100
  %v3867 = vunpack.c.l.b16 %v2101
  %v3868 = vunpack.c.h.b16 %v2101
  %v3869 = vunpack.c.l.b16 %v2102
  %v3870 = vunpack.c.l.b16 %v2103
  %v3871 = vunpack.c.h.b16 %v2103
  %v3872 = vunpack.c.l.b16 %v2104
  %v3873 = vunpack.c.h.b16 %v2104
  %v3874 = vunpack.c.l.b16 %v2105
  %v3875 = vunpack.c.h.b16 %v2105
  %v3876 = vunpack.c.l.b16 %v2106
  %v3877 = vunpack.c.l.b16 %v2107
  %v3878 = vunpack.c.h.b16 %v2107
  %v3879 = vunpack.c.l.b16 %v2108
  %v3880 = vunpack.c.h.b16 %v2108
  %v3881 = vunpack.c.l.b16 %v2109
  %v3882 = vunpack.c.h.b16 %v2109
  %v3883 = vunpack.c.l.b16 %v2110
  %v3884 = vunpack.c.l.b16 %v2111
  %v3885 = vunpack.c.h.b16 %v2111
  %v3886 = vunpack.c.l.b16 %v2112
  %v3887 = vunpack.c.h.b16 %v2112
  %v3888 = vunpack.c.l.b16 %v2113
  %v3889 = vunpack.c.h.b16 %v2113
  %v3890 = vunpack.c.l.b16 %v2114
  %v3891 = vunpack.c.l.b16 %v2115
  %v3892 = vunpack.c.h.b16 %v2115
  %v3893 = vunpack.c.l.b16 %v2116
  %v3894 = vunpack.c.h.b16 %v2116
  %v3895 = vunpack.c.l.b16 %v2117
  %v3896 = vunpack.c.h.b16 %v2117
  %v3897 = vunpack.c.l.b16 %v2118
  %v3898 = vunpack.c.l.b16 %v2119
  %v3899 = vunpack.c.h.b16 %v2119
  %v3900 = vunpack.c.l.b16 %v2120
  %v3901 = vunpack.c.h.b16 %v2120
  %v3902 = vunpack.c.l.b16 %v2121
  %v3903 = vunpack.c.h.b16 %v2121
  %v3904 = vunpack.c.l.b16 %v2122
  %v3905 = vunpack.c.l.b16 %v2123
  %v3906 = vunpack.c.h.b16 %v2123
  %v3907 = vunpack.c.l.b16 %v2124
  %v3908 = vunpack.c.h.b16 %v2124
  %v3909 = vunpack.c.l.b16 %v2125
  %v3910 = vunpack.c.h.b16 %v2125
  %v3911 = vunpack.c.l.b16 %v2126
  %v3912 = vunpack.c.l.b16 %v2127
  %v3913 = vunpack.c.h.b16 %v2127
  %v3914 = vunpack.c.l.b16 %v2128
  %v3915 = vunpack.c.h.b16 %v2128
  %v3916 = vunpack.c.l.b16 %v2129
  %v3917 = vunpack.c.h.b16 %v2129
  %v3918 = vunpack.c.l.b16 %v2130
  %v3919 = vunpack.c.l.b16 %v2131
  %v3920 = vunpack.c.h.b16 %v2131
  %v3921 = vunpack.c.l.b16 %v2132
  %v3922 = vunpack.c.h.b16 %v2132
  %v3923 = vunpack.c.l.b16 %v2133
  %v3924 = vunpack.c.h.b16 %v2133
  %v3925 = vunpack.c.l.b16 %v2134
  %v3926 = vunpack.c.l.b16 %v2135
  %v3927 = vunpack.c.h.b16 %v2135
  %v3928 = vunpack.c.l.b16 %v2136
  %v3929 = vunpack.c.h.b16 %v2136
  %v3930 = vunpack.c.l.b16 %v2137
  %v3931 = vunpack.c.h.b16 %v2137
  %v3932 = vunpack.c.l.b16 %v2138
  %v3933 = vunpack.c.l.b16 %v2139
  %v3934 = vunpack.c.h.b16 %v2139
  %v3935 = vunpack.c.l.b16 %v2140
  %v3936 = vunpack.c.h.b16 %v2140
  %v3937 = vunpack.c.l.b16 %v2141
  %v3938 = vunpack.c.h.b16 %v2141
  %v3939 = vunpack.c.l.b16 %v2142
  %v3940 = vunpack.c.l.b16 %v2143
  %v3941 = vunpack.c.h.b16 %v2143
  %v3942 = vunpack.c.l.b16 %v2144
  %v3943 = vunpack.c.h.b16 %v2144
  %v3944 = vunpack.c.l.b16 %v2145
  %v3945 = vunpack.c.h.b16 %v2145
  %v3946 = vunpack.c.l.b16 %v2146
  %v3947 = vunpack.c.l.b16 %v2147
  %v3948 = vunpack.c.h.b16 %v2147
  %v3949 = vunpack.c.l.b16 %v2148
  %v3950 = vunpack.c.h.b16 %v2148
  %v3951 = vunpack.c.l.b16 %v2149
  %v3952 = vunpack.c.h.b16 %v2149
  %v3953 = vunpack.c.l.b16 %v2150
  %v3954 = vunpack.c.l.b16 %v2151
  %v3955 = vunpack.c.h.b16 %v2151
  %v3956 = vunpack.c.l.b16 %v2152
  %v3957 = vunpack.c.h.b16 %v2152
  %v3958 = vunpack.c.l.b16 %v2153
  %v3959 = vunpack.c.h.b16 %v2153
  %v3960 = vunpack.c.l.b16 %v2154
  %v3961 = vunpack.c.l.b16 %v2155
  %v3962 = vunpack.c.h.b16 %v2155
  %v3963 = vunpack.c.l.b16 %v2156
  %v3964 = vunpack.c.h.b16 %v2156
  %v3965 = vunpack.c.l.b16 %v2157
  %v3966 = vunpack.c.h.b16 %v2157
  %v3967 = vunpack.c.l.b16 %v2158
  %v3968 = vunpack.c.l.b16 %v2159
  %v3969 = vunpack.c.h.b16 %v2159
  %v3970 = vunpack.c.l.b16 %v2160
  %v3971 = vunpack.c.h.b16 %v2160
  %v3972 = vunpack.c.l.b16 %v2161
  %v3973 = vunpack.c.h.b16 %v2161
  %v3974 = vunpack.c.l.b16 %v2162
  %v3975 = vunpack.c.l.b16 %v2163
  %v3976 = vunpack.c.h.b16 %v2163
  %v3977 = vunpack.c.l.b16 %v2164
  %v3978 = vunpack.c.h.b16 %v2164
  %v3979 = vunpack.c.l.b16 %v2165
  %v3980 = vunpack.c.h.b16 %v2165
  %v3981 = vunpack.c.l.b16 %v2166
  %v3982 = vunpack.c.l.b16 %v2167
  %v3983 = vunpack.c.h.b16 %v2167
  %v3984 = vunpack.c.l.b16 %v2168
  %v3985 = vunpack.c.h.b16 %v2168
  %v3986 = vunpack.c.l.b16 %v2169
  %v3987 = vunpack.c.h.b16 %v2169
  %v3988 = vunpack.c.l.b16 %v2170
  %v3989 = vunpack.c.l.b16 %v2171
  %v3990 = vunpack.c.h.b16 %v2171
  %v3991 = vunpack.c.l.b16 %v2172
  %v3992 = vunpack.c.h.b16 %v2172
  %v3993 = vunpack.c.l.b16 %v2173
  %v3994 = vunpack.c.h.b16 %v2173
  %v3995 = vunpack.c.l.b16 %v2174
  %v3996 = vunpack.c.l.b16 %v2175
  %v3997 = vunpack.c.h.b16 %v2175
  %v3998 = vunpack.c.l.b16 %v2176
  %v3999 = vunpack.c.h.b16 %v2176
  %v4000 = vunpack.c.l.b16 %v2177
  %v4001 = vunpack.c.h.b16 %v2177
  %v4002 = vunpack.c.l.b16 %v2178
  %v4003 = vunpack.c.l.b16 %v2179
  %v4004 = vunpack.c.h.b16 %v2179
  %v4005 = vunpack.c.l.b16 %v2180
  %v4006 = vunpack.c.h.b16 %v2180
  %v4007 = vunpack.c.l.b16 %v2181
  %v4008 = vunpack.c.h.b16 %v2181
  %v4009 = vunpack.c.l.b16 %v2182
  %v4010 = vunpack.c.l.b16 %v2183
  %v4011 = vunpack.c.h.b16 %v2183
  %v4012 = vunpack.c.l.b16 %v2184
  %v4013 = vunpack.c.h.b16 %v2184
  %v4014 = vunpack.c.l.b16 %v2185
  %v4015 = vunpack.c.h.b16 %v2185
  %v4016 = vunpack.c.l.b16 %v2186
  %v4017 = vunpack.c.l.b16 %v2187
  %v4018 = vunpack.c.h.b16 %v2187
  %v4019 = vunpack.c.l.b16 %v2188
  %v4020 = vunpack.c.h.b16 %v2188
  %v4021 = vunpack.c.l.b16 %v2189
  %v4022 = vunpack.c.h.b16 %v2189
  %v4023 = vunpack.c.l.b16 %v2190
  %v4024 = vunpack.c.l.b16 %v2191
  %v4025 = vunpack.c.h.b16 %v2191
  %v4026 = vunpack.c.l.b16 %v2192
  %v4027 = vunpack.c.h.b16 %v2192
  %v4028 = vunpack.c.l.b16 %v2193
  %v4029 = vunpack.c.h.b16 %v2193
  %v4030 = vunpack.c.l.b16 %v2194
  %v4031 = vunpack.c.l.b16 %v2195
  %v4032 = vunpack.c.h.b16 %v2195
  %v4033 = vunpack.c.l.b16 %v2196
  %v4034 = vunpack.c.h.b16 %v2196
  %v4035 = vunpack.c.l.b16 %v2197
  %v4036 = vunpack.c.h.b16 %v2197
  %v4037 = vunpack.c.l.b16 %v2198
  %v4038 = vunpack.c.l.b16 %v2199
  %v4039 = vunpack.c.h.b16 %v2199
  %v4040 = vunpack.c.l.b16 %v2200
  %v4041 = vunpack.c.h.b16 %v2200
  %v4042 = vunpack.c.l.b16 %v2201
  %v4043 = vunpack.c.h.b16 %v2201
  %v4044 = vunpack.c.l.b16 %v2202
  %v4045 = vunpack.c.l.b16 %v2203
  %v4046 = vunpack.c.h.b16 %v2203
  %v4047 = vunpack.c.l.b16 %v2204
  %v4048 = vunpack.c.h.b16 %v2204
  %v4049 = vunpack.c.l.b16 %v2205
  %v4050 = vunpack.c.h.b16 %v2205
  %v4051 = vunpack.c.l.b16 %v2206
  %v4052 = vunpack.c.l.b16 %v2207
  %v4053 = vunpack.c.h.b16 %v2207
  %v4054 = vunpack.c.l.b16 %v2208
  %v4055 = vunpack.c.h.b16 %v2208
  %v4056 = vunpack.c.l.b16 %v2209
  %v4057 = vunpack.c.h.b16 %v2209
  %v4058 = vunpack.c.l.b16 %v2210
  %v4059 = vunpack.c.l.b16 %v2211
  %v4060 = vunpack.c.h.b16 %v2211
  %v4061 = vunpack.c.l.b16 %v2212
  %v4062 = vunpack.c.h.b16 %v2212
  %v4063 = vunpack.c.l.b16 %v2213
  %v4064 = vunpack.c.h.b16 %v2213
  %v4065 = vunpack.c.l.b16 %v2214
  %v4066 = vunpack.c.l.b16 %v2215
  %v4067 = vunpack.c.h.b16 %v2215
  %v4068 = vunpack.c.l.b16 %v2216
  %v4069 = vunpack.c.h.b16 %v2216
  %v4070 = vunpack.c.l.b16 %v2217
  %v4071 = vunpack.c.h.b16 %v2217
  %v4072 = vunpack.c.l.b16 %v2218
  %v4073 = vunpack.c.l.b16 %v2219
  %v4074 = vunpack.c.h.b16 %v2219
  %v4075 = vunpack.c.l.b16 %v2220
  %v4076 = vunpack.c.h.b16 %v2220
  %v4077 = vunpack.c.l.b16 %v2221
  %v4078 = vunpack.c.h.b16 %v2221
  %v4079 = vunpack.c.l.b16 %v2222
  %v4080 = vunpack.c.l.b16 %v2223
  %v4081 = vunpack.c.h.b16 %v2223
  %v4082 = vunpack.c.l.b16 %v2224
  %v4083 = vunpack.c.h.b16 %v2224
  %v4084 = vunpack.c.l.b16 %v2225
  %v4085 = vunpack.c.h.b16 %v2225
  %v4086 = vunpack.c.l.b16 %v2226
  %v4087 = vunpack.c.l.b16 %v2227
  %v4088 = vunpack.c.h.b16 %v2227
  %v4089 = vunpack.c.l.b16 %v2228
  %v4090 = vunpack.c.h.b16 %v2228
  %v4091 = vunpack.c.l.b16 %v2229
  %v4092 = vunpack.c.h.b16 %v2229
  %v4093 = vunpack.c.l.b16 %v2230
  %v4094 = vunpack.c.l.b16 %v2231
  %v4095 = vunpack.c.h.b16 %v2231
  %v4096 = vunpack.c.l.b16 %v2232
  %v4097 = vunpack.c.h.b16 %v2232
  %v4098 = vunpack.c.l.b16 %v2233
  %v4099 = vunpack.c.h.b16 %v2233
  %v4100 = vunpack.c.l.b16 %v2234
  %v4101 = vunpack.c.l.b16 %v2235
  %v4102 = vunpack.c.h.b16 %v2235
  %v4103 = vunpack.c.l.b16 %v2236
  %v4104 = vunpack.c.h.b16 %v2236
  %v4105 = vunpack.c.l.b16 %v2237
  %v4106 = vunpack.c.h.b16 %v2237
  %v4107 = vunpack.c.l.b16 %v2238
  %v4108 = vunpack.c.l.b16 %v2239
  %v4109 = vunpack.c.h.b16 %v2239
  %v4110 = vunpack.c.l.b16 %v2240
  %v4111 = vunpack.c.h.b16 %v2240
  %v4112 = vunpack.c.l.b16 %v2241
  %v4113 = vunpack.c.h.b16 %v2241
  %v4114 = vunpack.c.l.b16 %v2242
  %v4115 = vunpack.c.l.b16 %v2243
  %v4116 = vunpack.c.h.b16 %v2243
  %v4117 = vunpack.c.l.b16 %v2244
  %v4118 = vunpack.c.h.b16 %v2244
  %v4119 = vunpack.c.l.b16 %v2245
  %v4120 = vunpack.c.h.b16 %v2245
  %v4121 = vunpack.c.l.b16 %v2246
  %v4122 = vunpack.c.l.b16 %v2247
  %v4123 = vunpack.c.h.b16 %v2247
  %v4124 = vunpack.c.l.b16 %v2248
  %v4125 = vunpack.c.h.b16 %v2248
  %v4126 = vunpack.c.l.b16 %v2249
  %v4127 = vunpack.c.h.b16 %v2249
  %v4128 = vunpack.c.l.b16 %v2250
  %v4129 = vunpack.c.l.b16 %v2251
  %v4130 = vunpack.c.h.b16 %v2251
  %v4131 = vunpack.c.l.b16 %v2252
  %v4132 = vunpack.c.h.b16 %v2252
  %v4133 = vunpack.c.l.b16 %v2253
  %v4134 = vunpack.c.h.b16 %v2253
  %v4135 = vunpack.c.l.b16 %v2254
  %v4136 = vunpack.c.l.b16 %v2255
  %v4137 = vunpack.c.h.b16 %v2255
  %v4138 = vunpack.c.l.b16 %v2256
  %v4139 = vunpack.c.h.b16 %v2256
  %v4140 = vunpack.c.l.b16 %v2257
  %v4141 = vunpack.c.h.b16 %v2257
  %v4142 = vunpack.c.l.b16 %v2258
  %v4143 = vunpack.c.l.b16 %v2259
  %v4144 = vunpack.c.h.b16 %v2259
  %v4145 = vunpack.c.l.b16 %v2260
  %v4146 = vunpack.c.h.b16 %v2260
  %v4147 = vunpack.c.l.b16 %v2261
  %v4148 = vunpack.c.h.b16 %v2261
  %v4149 = vunpack.c.l.b16 %v2262
  %v4150 = vunpack.c.l.b16 %v2263
  %v4151 = vunpack.c.h.b16 %v2263
  %v4152 = vunpack.c.l.b16 %v2264
  %v4153 = vunpack.c.h.b16 %v2264
  %v4154 = vunpack.c.l.b16 %v2265
  %v4155 = vunpack.c.h.b16 %v2265
  %v4156 = vunpack.c.l.b16 %v2266
  %v4157 = vunpack.c.l.b16 %v2267
  %v4158 = vunpack.c.h.b16 %v2267
  %v4159 = vunpack.c.l.b16 %v2268
  %v4160 = vunpack.c.h.b16 %v2268
  %v4161 = vunpack.c.l.b16 %v2269
  %v4162 = vunpack.c.h.b16 %v2269
  %v4163 = vunpack.c.l.b16 %v2270
  %v4164 = vunpack.c.l.b16 %v2271
  %v4165 = vunpack.c.h.b16 %v2271
  %v4166 = vunpack.c.l.b16 %v2272
  %v4167 = vunpack.c.h.b16 %v2272
  %v4168 = vunpack.c.l.b16 %v2273
  %v4169 = vunpack.c.h.b16 %v2273
  %v4170 = vunpack.c.l.b16 %v2274
  %v4171 = vunpack.c.l.b16 %v2275
  %v4172 = vunpack.c.h.b16 %v2275
  %v4173 = vunpack.c.l.b16 %v2276
  %v4174 = vunpack.c.h.b16 %v2276
  %v4175 = vunpack.c.l.b16 %v2277
  %v4176 = vunpack.c.h.b16 %v2277
  %v4177 = vunpack.c.l.b16 %v2278
  %v4178 = vunpack.c.l.b16 %v2279
  %v4179 = vunpack.c.h.b16 %v2279
  %v4180 = vunpack.c.l.b16 %v2280
  %v4181 = vunpack.c.h.b16 %v2280
  %v4182 = vunpack.c.l.b16 %v2281
  %v4183 = vunpack.c.h.b16 %v2281
  %v4184 = vunpack.c.l.b16 %v2282
  %v4185 = vunpack.c.l.b16 %v2283
  %v4186 = vunpack.c.h.b16 %v2283
  %v4187 = vunpack.c.l.b16 %v2284
  %v4188 = vunpack.c.h.b16 %v2284
  %v4189 = vunpack.c.l.b16 %v2285
  %v4190 = vunpack.c.h.b16 %v2285
  %v4191 = vunpack.c.l.b16 %v2286
  %v4192 = vunpack.c.l.b16 %v2287
  %v4193 = vunpack.c.h.b16 %v2287
  %v4194 = vunpack.c.l.b16 %v2288
  %v4195 = vunpack.c.h.b16 %v2288
  %v4196 = vunpack.c.l.b16 %v2289
  %v4197 = vunpack.c.h.b16 %v2289
  %v4198 = vunpack.c.l.b16 %v2290
  %v4199 = vunpack.c.l.b16 %v2291
  %v4200 = vunpack.c.h.b16 %v2291
  %v4201 = vunpack.c.l.b16 %v2292
  %v4202 = vunpack.c.h.b16 %v2292
  %v4203 = vunpack.c.l.b16 %v2293
  %v4204 = vunpack.c.h.b16 %v2293
  %v4205 = vunpack.c.l.b16 %v2294
  %v4206 = vunpack.c.l.b16 %v2295
  %v4207 = vunpack.c.h.b16 %v2295
  %v4208 = vunpack.c.l.b16 %v2296
  %v4209 = vunpack.c.h.b16 %v2296
  %v4210 = vunpack.c.l.b16 %v2297
  %v4211 = vunpack.c.h.b16 %v2297
  %v4212 = vunpack.c.l.b16 %v2298
  %v4213 = vunpack.c.l.b16 %v2299
  %v4214 = vunpack.c.h.b16 %v2299
  %v4215 = vunpack.c.l.b16 %v2300
  %v4216 = vunpack.c.h.b16 %v2300
  %v4217 = vunpack.c.l.b16 %v2301
  %v4218 = vunpack.c.h.b16 %v2301
  %v4219 = vunpack.c.l.b16 %v2302
  %v4220 = vunpack.c.l.b16 %v2303
  %v4221 = vunpack.c.h.b16 %v2303
  %v4222 = vunpack.c.l.b16 %v2304
  %v4223 = vunpack.c.h.b16 %v2304
  %v4224 = vunpack.c.l.b16 %v2305
  %v4225 = vunpack.c.h.b16 %v2305
  %v4226 = vunpack.c.l.b16 %v2306
  %v4227 = vunpack.c.l.b16 %v2307
  %v4228 = vunpack.c.h.b16 %v2307
  %v4229 = vunpack.c.l.b16 %v2308
  %v4230 = vunpack.c.h.b16 %v2308
  %v4231 = vunpack.c.l.b16 %v2309
  %v4232 = vunpack.c.h.b16 %v2309
  %v4233 = vunpack.c.l.b16 %v2310
  %v4234 = vunpack.c.l.b16 %v2311
  %v4235 = vunpack.c.h.b16 %v2311
  %v4236 = vunpack.c.l.b16 %v2312
  %v4237 = vunpack.c.h.b16 %v2312
  %v4238 = vunpack.c.l.b16 %v2313
  %v4239 = vunpack.c.h.b16 %v2313
  %v4240 = vunpack.c.l.b16 %v2314
  %v4241 = vunpack.c.l.b16 %v2315
  %v4242 = vunpack.c.h.b16 %v2315
  %v4243 = vunpack.c.l.b16 %v2316
  %v4244 = vunpack.c.h.b16 %v2316
  %v4245 = vunpack.c.l.b16 %v2317
  %v4246 = vunpack.c.h.b16 %v2317
  %v4247 = vunpack.c.l.b16 %v2318
  %v4248 = vunpack.c.l.b16 %v2319
  %v4249 = vunpack.c.h.b16 %v2319
  %v4250 = vunpack.c.l.b16 %v2320
  %v4251 = vunpack.c.h.b16 %v2320
  %v4252 = vunpack.c.l.b16 %v2321
  %v4253 = vunpack.c.h.b16 %v2321
  %v4254 = vunpack.c.l.b16 %v2322
  %v4255 = vunpack.c.l.b16 %v2323
  %v4256 = vunpack.c.h.b16 %v2323
  %v4257 = vunpack.c.l.b16 %v2324
  %v4258 = vunpack.c.h.b16 %v2324
  %v4259 = vunpack.c.l.b16 %v2325
  %v4260 = vunpack.c.h.b16 %v2325
  %v4261 = vunpack.c.l.b16 %v2326
  %v4262 = vunpack.c.l.b16 %v2327
  %v4263 = vunpack.c.h.b16 %v2327
  %v4264 = vunpack.c.l.b16 %v2328
  %v4265 = vunpack.c.h.b16 %v2328
  %v4266 = vunpack.c.l.b16 %v2329
  %v4267 = vunpack.c.h.b16 %v2329
  %v4268 = vunpack.c.l.b16 %v2330
  %v4269 = vunpack.c.l.b16 %v2331
  %v4270 = vunpack.c.h.b16 %v2331
  %v4271 = vunpack.c.l.b16 %v2332
  %v4272 = vunpack.c.h.b16 %v2332
  %v4273 = vunpack.c.l.b16 %v2333
  %v4274 = vunpack.c.h.b16 %v2333
  %v4275 = vunpack.c.l.b16 %v2334
  %v4276 = vunpack.c.l.b16 %v2335
  %v4277 = vunpack.c.h.b16 %v2335
  %v4278 = vunpack.c.l.b16 %v2336
  %v4279 = vunpack.c.h.b16 %v2336
  %v4280 = vunpack.c.l.b16 %v2337
  %v4281 = vunpack.c.h.b16 %v2337
  %v4282 = vunpack.c.l.b16 %v2338
  %v4283 = vunpack.c.l.b16 %v2339
  %v4284 = vunpack.c.h.b16 %v2339
  %v4285 = vunpack.c.l.b16 %v2340
  %v4286 = vunpack.c.h.b16 %v2340
  %v4287 = vunpack.c.l.b16 %v2341
  %v4288 = vunpack.c.h.b16 %v2341
  %v4289 = vunpack.c.l.b16 %v2342
  %v4290 = vunpack.c.l.b16 %v2343
  %v4291 = vunpack.c.h.b16 %v2343
  %v4292 = vunpack.c.l.b16 %v2344
  %v4293 = vunpack.c.h.b16 %v2344
  %v4294 = vunpack.c.l.b16 %v2345
  %v4295 = vunpack.c.h.b16 %v2345
  %v4296 = vunpack.c.l.b16 %v2346
  %v4297 = vunpack.c.l.b16 %v2347
  %v4298 = vunpack.c.h.b16 %v2347
  %v4299 = vunpack.c.l.b16 %v2348
  %v4300 = vunpack.c.h.b16 %v2348
  %v4301 = vunpack.c.l.b16 %v2349
  %v4302 = vunpack.c.h.b16 %v2349
  %v4303 = vunpack.c.l.b16 %v2350
  %v4304 = vunpack.c.l.b16 %v2351
  %v4305 = vunpack.c.h.b16 %v2351
  %v4306 = vunpack.c.l.b16 %v2352
  %v4307 = vunpack.c.h.b16 %v2352
  %v4308 = vunpack.c.l.b16 %v2353
  %v4309 = vunpack.c.h.b16 %v2353
  %v4310 = vunpack.c.l.b16 %v2354
  %v4311 = vunpack.c.l.b16 %v2355
  %v4312 = vunpack.c.h.b16 %v2355
  %v4313 = vunpack.c.l.b16 %v2356
  %v4314 = vunpack.c.h.b16 %v2356
  %v4315 = vunpack.c.l.b16 %v2357
  %v4316 = vunpack.c.h.b16 %v2357
  %v4317 = vunpack.c.l.b16 %v2358
  %v4318 = vunpack.c.l.b16 %v2359
  %v4319 = vunpack.c.h.b16 %v2359
  %v4320 = vunpack.c.l.b16 %v2360
  %v4321 = vunpack.c.h.b16 %v2360
  %v4322 = vunpack.c.l.b16 %v2361
  %v4323 = vunpack.c.h.b16 %v2361
  %v4324 = vunpack.c.l.b16 %v2362
  %v4325 = vunpack.c.l.b16 %v2363
  %v4326 = vunpack.c.h.b16 %v2363
  %v4327 = vunpack.c.l.b16 %v2364
  %v4328 = vunpack.c.h.b16 %v2364
  %v4329 = vunpack.c.l.b16 %v2365
  %v4330 = vunpack.c.h.b16 %v2365
  %v4331 = vunpack.c.l.b16 %v2366
  %v4332 = vunpack.c.l.b16 %v2367
  %v4333 = vunpack.c.h.b16 %v2367
  %v4334 = vunpack.c.l.b16 %v2368
  %v4335 = vunpack.c.h.b16 %v2368
  %v4336 = vunpack.c.l.b16 %v2369
  %v4337 = vunpack.c.h.b16 %v2369
  %v4338 = vunpack.c.l.b16 %v2370
  %v4339 = vunpack.c.l.b16 %v2371
  %v4340 = vunpack.c.h.b16 %v2371
  %v4341 = vunpack.c.l.b16 %v2372
  %v4342 = vunpack.c.h.b16 %v2372
  %v4343 = vunpack.c.l.b16 %v2373
  %v4344 = vunpack.c.h.b16 %v2373
  %v4345 = vunpack.c.l.b16 %v2374
  %v4346 = vunpack.c.l.b16 %v2375
  %v4347 = vunpack.c.h.b16 %v2375
  %v4348 = vunpack.c.l.b16 %v2376
  %v4349 = vunpack.c.h.b16 %v2376
  %v4350 = vunpack.c.l.b16 %v2377
  %v4351 = vunpack.c.h.b16 %v2377
  %v4352 = vunpack.c.l.b16 %v2378
  %v4353 = vunpack.c.l.b16 %v2379
  %v4354 = vunpack.c.h.b16 %v2379
  %v4355 = vunpack.c.l.b16 %v2380
  %v4356 = vunpack.c.h.b16 %v2380
  %v4357 = vunpack.c.l.b16 %v2381
  %v4358 = vunpack.c.h.b16 %v2381
  %v4359 = vunpack.c.l.b16 %v2382
  %v4360 = vunpack.c.l.b16 %v2383
  %v4361 = vunpack.c.h.b16 %v2383
  %v4362 = vunpack.c.l.b16 %v2384
  %v4363 = vunpack.c.h.b16 %v2384
  %v4364 = vunpack.c.l.b16 %v2385
  %v4365 = vunpack.c.h.b16 %v2385
  %v4366 = vunpack.c.l.b16 %v2386
  %v4367 = vunpack.c.l.b16 %v2387
  %v4368 = vunpack.c.h.b16 %v2387
  %v4369 = vunpack.c.l.b16 %v2388
  %v4370 = vunpack.c.h.b16 %v2388
  %v4371 = vunpack.c.l.b16 %v2389
  %v4372 = vunpack.c.h.b16 %v2389
  %v4373 = vunpack.c.l.b16 %v2390
  %v4374 = vunpack.c.l.b16 %v2391
  %v4375 = vunpack.c.h.b16 %v2391
  %v4376 = vunpack.c.l.b16 %v2392
  %v4377 = vunpack.c.h.b16 %v2392
  %v4378 = vunpack.c.l.b16 %v2393
  %v4379 = vunpack.c.h.b16 %v2393
  %v4380 = vunpack.c.l.b16 %v2394
  %v4381 = vunpack.c.l.b16 %v2395
  %v4382 = vunpack.c.h.b16 %v2395
  %v4383 = vunpack.c.l.b16 %v2396
  %v4384 = vunpack.c.h.b16 %v2396
  %v4385 = vunpack.c.l.b16 %v2397
  %v4386 = vunpack.c.h.b16 %v2397
  %v4387 = vunpack.c.l.b16 %v2398
  %v4388 = vunpack.c.l.b16 %v2399
  %v4389 = vunpack.c.h.b16 %v2399
  %v4390 = vunpack.c.l.b16 %v2400
  %v4391 = vunpack.c.h.b16 %v2400
  %v4392 = vunpack.c.l.b16 %v2401
  %v4393 = vunpack.c.h.b16 %v2401
  %v4394 = vunpack.c.l.b16 %v2402
  %v4395 = vunpack.c.l.b16 %v2403
  %v4396 = vunpack.c.h.b16 %v2403
  %v4397 = vunpack.c.l.b16 %v2404
  %v4398 = vunpack.c.h.b16 %v2404
  %v4399 = vunpack.c.l.b16 %v2405
  %v4400 = vunpack.c.h.b16 %v2405
  %v4401 = vunpack.c.l.b16 %v2406
  %v4402 = vunpack.c.l.b16 %v2407
  %v4403 = vunpack.c.h.b16 %v2407
  %v4404 = vunpack.c.l.b16 %v2408
  %v4405 = vunpack.c.h.b16 %v2408
  %v4406 = vunpack.c.l.b16 %v2409
  %v4407 = vunpack.c.h.b16 %v2409
  %v4408 = vunpack.c.l.b16 %v2410
  %v4409 = vunpack.c.l.b16 %v2411
  %v4410 = vunpack.c.h.b16 %v2411
  %v4411 = vunpack.c.l.b16 %v2412
  %v4412 = vunpack.c.h.b16 %v2412
  %v4413 = vunpack.c.l.b16 %v2413
  %v4414 = vunpack.c.h.b16 %v2413
  %v4415 = vunpack.c.l.b16 %v2414
  %v4416 = vunpack.c.l.b16 %v2415
  %v4417 = vunpack.c.h.b16 %v2415
  %v4418 = vunpack.c.l.b16 %v2416
  %v4419 = vunpack.c.h.b16 %v2416
  %v4420 = vunpack.c.l.b16 %v2417
  %v4421 = vunpack.c.h.b16 %v2417
  %v4422 = vunpack.c.l.b16 %v2418
  %v4423 = vunpack.c.l.b16 %v2419
  %v4424 = vunpack.c.h.b16 %v2419
  %v4425 = vunpack.c.l.b16 %v2420
  %v4426 = vunpack.c.h.b16 %v2420
  %v4427 = vunpack.c.l.b16 %v2421
  %v4428 = vunpack.c.h.b16 %v2421
  %v4429 = vunpack.c.l.b16 %v2422
  %v4430 = vunpack.c.l.b16 %v2423
  %v4431 = vunpack.c.h.b16 %v2423
  %v4432 = vunpack.c.l.b16 %v2424
  %v4433 = vunpack.c.h.b16 %v2424
  %v4434 = vunpack.c.l.b16 %v2425
  %v4435 = vunpack.c.h.b16 %v2425
  %v4436 = vunpack.c.l.b16 %v2426
  %v4437 = vunpack.c.l.b16 %v2427
  %v4438 = vunpack.c.h.b16 %v2427
  %v4439 = vunpack.c.l.b16 %v2428
  %v4440 = vunpack.c.h.b16 %v2428
  %v4441 = vunpack.c.l.b16 %v2429
  %v4442 = vunpack.c.h.b16 %v2429
  %v4443 = vunpack.c.l.b16 %v2430
  %v4444 = vunpack.c.l.b16 %v2431
  %v4445 = vunpack.c.h.b16 %v2431
  %v4446 = vunpack.c.l.b16 %v2432
  %v4447 = vunpack.c.h.b16 %v2432
  %v4448 = vunpack.c.l.b16 %v2433
  %v4449 = vunpack.c.h.b16 %v2433
  %v4450 = vunpack.c.l.b16 %v2434
  %v4451 = vunpack.c.l.b16 %v2435
  %v4452 = vunpack.c.h.b16 %v2435
  %v4453 = vunpack.c.l.b16 %v2436
  %v4454 = vunpack.c.h.b16 %v2436
  %v4455 = vunpack.c.l.b16 %v2437
  %v4456 = vunpack.c.h.b16 %v2437
  %v4457 = vunpack.c.l.b16 %v2438
  %v4458 = vunpack.c.l.b16 %v2439
  %v4459 = vunpack.c.h.b16 %v2439
  %v4460 = vunpack.c.l.b16 %v2440
  %v4461 = vunpack.c.h.b16 %v2440
  %v4462 = vunpack.c.l.b16 %v2441
  %v4463 = vunpack.c.h.b16 %v2441
  %v4464 = vunpack.c.l.b16 %v2442
  %v4465 = vunpack.c.l.b16 %v2443
  %v4466 = vunpack.c.h.b16 %v2443
  %v4467 = vunpack.c.l.b16 %v2444
  %v4468 = vunpack.c.h.b16 %v2444
  %v4469 = vunpack.c.l.b16 %v2445
  %v4470 = vunpack.c.h.b16 %v2445
  %v4471 = vunpack.c.l.b16 %v2446
  %v4472 = vunpack.c.l.b16 %v2447
  %v4473 = vunpack.c.h.b16 %v2447
  %v4474 = vunpack.c.l.b16 %v2448
  %v4475 = vunpack.c.h.b16 %v2448
  %v4476 = vunpack.c.l.b16 %v2449
  %v4477 = vunpack.c.h.b16 %v2449
  %v4478 = vunpack.c.l.b16 %v2450
  %v4479 = vunpack.c.l.b16 %v2451
  %v4480 = vunpack.c.h.b16 %v2451
  %v4481 = vunpack.c.l.b16 %v2452
  %v4482 = vunpack.c.h.b16 %v2452
  %v4483 = vunpack.c.l.b16 %v2453
  %v4484 = vunpack.c.h.b16 %v2453
  %v4485 = vunpack.c.l.b16 %v2454
  %v4486 = vunpack.c.l.b16 %v2455
  %v4487 = vunpack.c.h.b16 %v2455
  %v4488 = vunpack.c.l.b16 %v2456
  %v4489 = vunpack.c.h.b16 %v2456
  %v4490 = vunpack.c.l.b16 %v2457
  %v4491 = vunpack.c.h.b16 %v2457
  %v4492 = vunpack.c.l.b16 %v2458
  %v4493 = vunpack.c.l.b16 %v2459
  %v4494 = vunpack.c.h.b16 %v2459
  %v4495 = vunpack.c.l.b16 %v2460
  %v4496 = vunpack.c.h.b16 %v2460
  %v4497 = vunpack.c.l.b16 %v2461
  %v4498 = vunpack.c.h.b16 %v2461
  %v4499 = vunpack.c.l.b16 %v2462
  %v4500 = vunpack.c.l.b16 %v2463
  %v4501 = vunpack.c.h.b16 %v2463
  %v4502 = vunpack.c.l.b16 %v2464
  %v4503 = vunpack.c.h.b16 %v2464
  %v4504 = vunpack.c.l.b16 %v2465
  %v4505 = vunpack.c.h.b16 %v2465
  %v4506 = vunpack.c.l.b16 %v2466
  %v4507 = vunpack.c.l.b16 %v2467
  %v4508 = vunpack.c.h.b16 %v2467
  %v4509 = vunpack.c.l.b16 %v2468
  %v4510 = vunpack.c.h.b16 %v2468
  %v4511 = vunpack.c.l.b16 %v2469
  %v4512 = vunpack.c.h.b16 %v2469
  %v4513 = vunpack.c.l.b16 %v2470
  %v4514 = vunpack.c.l.b16 %v2471
  %v4515 = vunpack.c.h.b16 %v2471
  %v4516 = vunpack.c.l.b16 %v2472
  %v4517 = vunpack.c.h.b16 %v2472
  %v4518 = vunpack.c.l.b16 %v2473
  %v4519 = vunpack.c.h.b16 %v2473
  %v4520 = vunpack.c.l.b16 %v2474
  %v4521 = vunpack.c.l.b16 %v2475
  %v4522 = vunpack.c.h.b16 %v2475
  %v4523 = vunpack.c.l.b16 %v2476
  %v4524 = vunpack.c.h.b16 %v2476
  %v4525 = vunpack.c.l.b16 %v2477
  %v4526 = vunpack.c.h.b16 %v2477
  %v4527 = vunpack.c.l.b16 %v2478
  %v4528 = vunpack.c.l.b16 %v2479
  %v4529 = vunpack.c.h.b16 %v2479
  %v4530 = vunpack.c.l.b16 %v2480
  %v4531 = vunpack.c.h.b16 %v2480
  %v4532 = vunpack.c.l.b16 %v2481
  %v4533 = vunpack.c.h.b16 %v2481
  %v4534 = vunpack.c.l.b16 %v2482
  %v4535 = vunpack.c.l.b16 %v2483
  %v4536 = vunpack.c.h.b16 %v2483
  %v4537 = vunpack.c.l.b16 %v2484
  %v4538 = vunpack.c.h.b16 %v2484
  %v4539 = vunpack.c.l.b16 %v2485
  %v4540 = vunpack.c.h.b16 %v2485
  %v4541 = vunpack.c.l.b16 %v2486
  %v4542 = vunpack.c.l.b16 %v2487
  %v4543 = vunpack.c.h.b16 %v2487
  %v4544 = vunpack.c.l.b16 %v2488
  %v4545 = vunpack.c.h.b16 %v2488
  %v4546 = vunpack.c.l.b16 %v2489
  %v4547 = vunpack.c.h.b16 %v2489
  %v4548 = vunpack.c.l.b16 %v2490
  %v4549 = vunpack.c.l.b16 %v2491
  %v4550 = vunpack.c.h.b16 %v2491
  %v4551 = vunpack.c.l.b16 %v2492
  %v4552 = vunpack.c.h.b16 %v2492
  %v4553 = vunpack.c.l.b16 %v2493
  %v4554 = vunpack.c.h.b16 %v2493
  %v4555 = vunpack.c.l.b16 %v2494
  %v4556 = vunpack.c.l.b16 %v2495
  %v4557 = vunpack.c.h.b16 %v2495
  %v4558 = vunpack.c.l.b16 %v2496
  %v4559 = vunpack.c.h.b16 %v2496
  %v4560 = vunpack.c.l.b16 %v2497
  %v4561 = vunpack.c.h.b16 %v2497
  %v4562 = vunpack.c.l.b16 %v2498
  %v4563 = vunpack.c.l.b16 %v2499
  %v4564 = vunpack.c.h.b16 %v2499
  %v4565 = vunpack.c.l.b16 %v2500
  %v4566 = vunpack.c.h.b16 %v2500
  %v4567 = vunpack.c.l.b16 %v2501
  %v4568 = vunpack.c.h.b16 %v2501
  %v4569 = vunpack.c.l.b16 %v2502
  %v4570 = vunpack.c.l.b16 %v2503
  %v4571 = vunpack.c.h.b16 %v2503
  %v4572 = vunpack.c.l.b16 %v2504
  %v4573 = vunpack.c.h.b16 %v2504
  %v4574 = vunpack.c.l.b16 %v2505
  %v4575 = vunpack.c.h.b16 %v2505
  %v4576 = vunpack.c.l.b16 %v2506
  %v4577 = vunpack.c.l.b16 %v2507
  %v4578 = vunpack.c.h.b16 %v2507
  %v4579 = vunpack.c.l.b16 %v2508
  %v4580 = vunpack.c.h.b16 %v2508
  %v4581 = vunpack.c.l.b16 %v2509
  %v4582 = vunpack.c.h.b16 %v2509
  %v4583 = vunpack.c.l.b16 %v2510
  %v4584 = vunpack.c.l.b16 %v2511
  %v4585 = vunpack.c.h.b16 %v2511
  %v4586 = vunpack.c.l.b16 %v2512
  %v4587 = vunpack.c.h.b16 %v2512
  %v4588 = vunpack.c.l.b16 %v2513
  %v4589 = vunpack.c.h.b16 %v2513
  %v4590 = vunpack.c.l.b16 %v2514
  %v4591 = vunpack.c.l.b16 %v2515
  %v4592 = vunpack.c.h.b16 %v2515
  %v4593 = vunpack.c.l.b16 %v2516
  %v4594 = vunpack.c.h.b16 %v2516
  %v4595 = vunpack.c.l.b16 %v2517
  %v4596 = vunpack.c.h.b16 %v2517
  %v4597 = vunpack.c.l.b16 %v2518
  %v4598 = vunpack.c.l.b16 %v2519
  %v4599 = vunpack.c.h.b16 %v2519
  %v4600 = vunpack.c.l.b16 %v2520
  %v4601 = vunpack.c.h.b16 %v2520
  %v4602 = vunpack.c.l.b16 %v2521
  %v4603 = vunpack.c.h.b16 %v2521
  %v4604 = vunpack.c.l.b16 %v2522
  %v4605 = vunpack.c.l.b16 %v2523
  %v4606 = vunpack.c.h.b16 %v2523
  %v4607 = vunpack.c.l.b16 %v2524
  %v4608 = vunpack.c.h.b16 %v2524
  %v4609 = vunpack.c.l.b16 %v2525
  %v4610 = vunpack.c.h.b16 %v2525
  %v4611 = vunpack.c.l.b16 %v2526
  %v4612 = vunpack.c.l.b16 %v2527
  %v4613 = vunpack.c.h.b16 %v2527
  %v4614 = vunpack.c.l.b16 %v2528
  %v4615 = vunpack.c.h.b16 %v2528
  %v4616 = vunpack.c.l.b16 %v2529
  %v4617 = vunpack.c.h.b16 %v2529
  %v4618 = vunpack.c.l.b16 %v2530
  %v4619 = vunpack.c.l.b16 %v2531
  %v4620 = vunpack.c.h.b16 %v2531
  %v4621 = vunpack.c.l.b16 %v2532
  %v4622 = vunpack.c.h.b16 %v2532
  %v4623 = vunpack.c.l.b16 %v2533
  %v4624 = vunpack.c.h.b16 %v2533
  %v4625 = vunpack.c.l.b16 %v2534
  %v4626 = vunpack.c.l.b16 %v2535
  %v4627 = vunpack.c.h.b16 %v2535
  %v4628 = vunpack.c.l.b16 %v2536
  %v4629 = vunpack.c.h.b16 %v2536
  %v4630 = vunpack.c.l.b16 %v2537
  %v4631 = vunpack.c.h.b16 %v2537
  %v4632 = vunpack.c.l.b16 %v2538
  %v4633 = vunpack.c.l.b16 %v2539
  %v4634 = vunpack.c.h.b16 %v2539
  %v4635 = vunpack.c.l.b16 %v2540
  %v4636 = vunpack.c.h.b16 %v2540
  %v4637 = vunpack.c.l.b16 %v2541
  %v4638 = vunpack.c.h.b16 %v2541
  %v4639 = vunpack.c.l.b16 %v2542
  %v4640 = vunpack.c.l.b16 %v2543
  %v4641 = vunpack.c.h.b16 %v2543
  %v4642 = vunpack.c.l.b16 %v2544
  %v4643 = vunpack.c.h.b16 %v2544
  %v4644 = vunpack.c.l.b16 %v2545
  %v4645 = vunpack.c.h.b16 %v2545
  %v4646 = vunpack.c.l.b16 %v2546
  %v4647 = vunpack.c.l.b16 %v2547
  %v4648 = vunpack.c.h.b16 %v2547
  %v4649 = vunpack.c.l.b16 %v2548
  %v4650 = vunpack.c.h.b16 %v2548
  %v4651 = vunpack.c.l.b16 %v2549
  %v4652 = vunpack.c.h.b16 %v2549
  %v4653 = vunpack.c.l.b16 %v2550
  %v4654 = vunpack.c.l.b16 %v2551
  %v4655 = vunpack.c.h.b16 %v2551
  %v4656 = vunpack.c.l.b16 %v2552
  %v4657 = vunpack.c.h.b16 %v2552
  %v4658 = vunpack.c.l.b16 %v2553
  %v4659 = vunpack.c.h.b16 %v2553
  %v4660 = vunpack.c.l.b16 %v2554
  %v4661 = vunpack.c.l.b16 %v2555
  %v4662 = vunpack.c.h.b16 %v2555
  %v4663 = vunpack.c.l.b16 %v2556
  %v4664 = vunpack.c.h.b16 %v2556
  %v4665 = vunpack.c.l.b16 %v2557
  %v4666 = vunpack.c.h.b16 %v2557
  %v4667 = vunpack.c.l.b16 %v2558
  %v4668 = vunpack.c.l.b16 %v2559
  %v4669 = vunpack.c.h.b16 %v2559
  %v4670 = vunpack.c.l.b16 %v2560
  %v4671 = vunpack.c.h.b16 %v2560
  %v4672 = vunpack.c.l.b16 %v2561
  %v4673 = vunpack.c.h.b16 %v2561
  %v4674 = vunpack.c.l.b16 %v2562
  %v4675 = vunpack.c.l.b16 %v2563
  %v4676 = vunpack.c.h.b16 %v2563
  %v4677 = vunpack.c.l.b16 %v2564
  %v4678 = vunpack.c.h.b16 %v2564
  %v4679 = vunpack.c.l.b16 %v2565
  %v4680 = vunpack.c.h.b16 %v2565
  %v4681 = vunpack.c.l.b16 %v2566
  %v4682 = vunpack.c.l.b16 %v2567
  %v4683 = vunpack.c.h.b16 %v2567
  %v4684 = vunpack.c.l.b16 %v2568
  %v4685 = vunpack.c.h.b16 %v2568
  %v4686 = vunpack.c.l.b16 %v2569
  %v4687 = vunpack.c.h.b16 %v2569
  %v4688 = vunpack.c.l.b16 %v2570
  %v4689 = vunpack.c.l.b16 %v2571
  %v4690 = vunpack.c.h.b16 %v2571
  %v4691 = vunpack.c.l.b16 %v2572
  %v4692 = vunpack.c.h.b16 %v2572
  %v4693 = vunpack.c.l.b16 %v2573
  %v4694 = vunpack.c.h.b16 %v2573
  %v4695 = vunpack.c.l.b16 %v2574
  %v4696 = vunpack.c.l.b16 %v2575
  %v4697 = vunpack.c.h.b16 %v2575
  %v4698 = vunpack.c.l.b16 %v2576
  %v4699 = vunpack.c.h.b16 %v2576
  %v4700 = vunpack.c.l.b16 %v2577
  %v4701 = vunpack.c.h.b16 %v2577
  %v4702 = vunpack.c.l.b16 %v2578
  %v4703 = vunpack.c.l.b16 %v2579
  %v4704 = vunpack.c.h.b16 %v2579
  %v4705 = vunpack.c.l.b16 %v2580
  %v4706 = vunpack.c.h.b16 %v2580
  %v4707 = vunpack.c.l.b16 %v2581
  %v4708 = vunpack.c.h.b16 %v2581
  %v4709 = vunpack.c.l.b16 %v2582
  %v4710 = vunpack.c.l.b16 %v2583
  %v4711 = vunpack.c.h.b16 %v2583
  %v4712 = vunpack.c.l.b16 %v2584
  %v4713 = vunpack.c.h.b16 %v2584
  %v4714 = vunpack.c.l.b16 %v2585
  %v4715 = vunpack.c.h.b16 %v2585
  %v4716 = vunpack.c.l.b16 %v2586
  %v4717 = vunpack.c.l.b16 %v2587
  %v4718 = vunpack.c.h.b16 %v2587
  %v4719 = vunpack.c.l.b16 %v2588
  %v4720 = vunpack.c.h.b16 %v2588
  %v4721 = vunpack.c.l.b16 %v2589
  %v4722 = vunpack.c.h.b16 %v2589
  %v4723 = vunpack.c.l.b16 %v2590
  %v4724 = vunpack.c.l.b16 %v2591
  %v4725 = vunpack.c.h.b16 %v2591
  %v4726 = vunpack.c.l.b16 %v2592
  %v4727 = vunpack.c.h.b16 %v2592
  %v4728 = vunpack.c.l.b16 %v2593
  %v4729 = vunpack.c.h.b16 %v2593
  %v4730 = vunpack.c.l.b16 %v2594
  %v4731 = vunpack.c.l.b16 %v2595
  %v4732 = vunpack.c.h.b16 %v2595
  %v4733 = vunpack.c.l.b16 %v2596
  %v4734 = vunpack.c.h.b16 %v2596
  %v4735 = vunpack.c.l.b16 %v2597
  %v4736 = vunpack.c.h.b16 %v2597
  %v4737 = vunpack.c.l.b16 %v2598
  %v4738 = vunpack.c.l.b16 %v2599
  %v4739 = vunpack.c.h.b16 %v2599
  %v4740 = vunpack.c.l.b16 %v2600
  %v4741 = vunpack.c.h.b16 %v2600
  %v4742 = vunpack.c.l.b16 %v2601
  %v4743 = vunpack.c.h.b16 %v2601
  %v4744 = vunpack.c.l.b16 %v2602
  %v4745 = vunpack.c.l.b16 %v2603
  %v4746 = vunpack.c.h.b16 %v2603
  %v4747 = vunpack.c.l.b16 %v2604
  %v4748 = vunpack.c.h.b16 %v2604
  %v4749 = vunpack.c.l.b16 %v2605
  %v4750 = vunpack.c.h.b16 %v2605
  %v4751 = vunpack.c.l.b16 %v2606
  %v4752 = vunpack.c.l.b16 %v2607
  %v4753 = vunpack.c.h.b16 %v2607
  %v4754 = vunpack.c.l.b16 %v2608
  %v4755 = vunpack.c.h.b16 %v2608
  %v4756 = vunpack.c.l.b16 %v2609
  %v4757 = vunpack.c.h.b16 %v2609
  %v4758 = vunpack.c.l.b16 %v2610
  %v4759 = vunpack.c.l.b16 %v2611
  %v4760 = vunpack.c.h.b16 %v2611
  %v4761 = vunpack.c.l.b16 %v2612
  %v4762 = vunpack.c.h.b16 %v2612
  %v4763 = vunpack.c.l.b16 %v2613
  %v4764 = vunpack.c.h.b16 %v2613
  %v4765 = vunpack.c.l.b16 %v2614
  %v4766 = vunpack.c.l.b16 %v2615
  %v4767 = vunpack.c.h.b16 %v2615
  %v4768 = vunpack.c.l.b16 %v2616
  %v4769 = vunpack.c.h.b16 %v2616
  %v4770 = vunpack.c.l.b16 %v2617
  %v4771 = vunpack.c.h.b16 %v2617
  %v4772 = vunpack.c.l.b16 %v2618
  %v4773 = vunpack.c.l.b16 %v2619
  %v4774 = vunpack.c.h.b16 %v2619
  %v4775 = vunpack.c.l.b16 %v2620
  %v4776 = vunpack.c.h.b16 %v2620
  %v4777 = vunpack.c.l.b16 %v2621
  %v4778 = vunpack.c.h.b16 %v2621
  %v4779 = vunpack.c.l.b16 %v2622
  %v4780 = vunpack.c.l.b16 %v2623
  %v4781 = vunpack.c.h.b16 %v2623
  %v4782 = vunpack.c.l.b16 %v2624
  %v4783 = vunpack.c.h.b16 %v2624
  %v4784 = vunpack.c.l.b16 %v2625
  %v4785 = vunpack.c.h.b16 %v2625
  %v4786 = vunpack.c.l.b16 %v2626
  %v4787 = vunpack.c.l.b16 %v2627
  %v4788 = vunpack.c.h.b16 %v2627
  %v4789 = vunpack.c.l.b16 %v2628
  %v4790 = vunpack.c.h.b16 %v2628
  %v4791 = vunpack.c.l.b16 %v2629
  %v4792 = vunpack.c.h.b16 %v2629
  %v4793 = vunpack.c.l.b16 %v2630
  %v4794 = vunpack.c.l.b16 %v2631
  %v4795 = vunpack.c.h.b16 %v2631
  %v4796 = vunpack.c.l.b16 %v2632
  %v4797 = vunpack.c.h.b16 %v2632
  %v4798 = vunpack.c.l.b16 %v2633
  %v4799 = vunpack.c.h.b16 %v2633
  %v4800 = vunpack.c.l.b16 %v2634
  %v4801 = vunpack.c.l.b16 %v2635
  %v4802 = vunpack.c.h.b16 %v2635
  %v4803 = vunpack.c.l.b16 %v2636
  %v4804 = vunpack.c.h.b16 %v2636
  %v4805 = vunpack.c.l.b16 %v2637
  %v4806 = vunpack.c.h.b16 %v2637
  %v4807 = vunpack.c.l.b16 %v2638
  %v4808 = vunpack.c.l.b16 %v2639
  %v4809 = vunpack.c.h.b16 %v2639
  %v4810 = vunpack.c.l.b16 %v2640
  %v4811 = vunpack.c.h.b16 %v2640
  %v4812 = vunpack.c.l.b16 %v2641
  %v4813 = vunpack.c.h.b16 %v2641
  %v4814 = vunpack.c.l.b16 %v2642
  %v4815 = vunpack.c.l.b16 %v2643
  %v4816 = vunpack.c.h.b16 %v2643
  %v4817 = vunpack.c.l.b16 %v2644
  %v4818 = vunpack.c.h.b16 %v2644
  %v4819 = vunpack.c.l.b16 %v2645
  %v4820 = vunpack.c.h.b16 %v2645
  %v4821 = vunpack.c.l.b16 %v2646
  %v4822 = vunpack.c.l.b16 %v2647
  %v4823 = vunpack.c.h.b16 %v2647
  %v4824 = vunpack.c.l.b16 %v2648
  %v4825 = vunpack.c.h.b16 %v2648
  %v4826 = vunpack.c.l.b16 %v2649
  %v4827 = vunpack.c.h.b16 %v2649
  %v4828 = vunpack.c.l.b16 %v2650
  %v4829 = vunpack.c.l.b16 %v2651
  %v4830 = vunpack.c.h.b16 %v2651
  %v4831 = vunpack.c.l.b16 %v2652
  %v4832 = vunpack.c.h.b16 %v2652
  %v4833 = vunpack.c.l.b16 %v2653
  %v4834 = vunpack.c.h.b16 %v2653
  %v4835 = vunpack.c.l.b16 %v2654
  %v4836 = vunpack.c.l.b16 %v2655
  %v4837 = vunpack.c.h.b16 %v2655
  %v4838 = vunpack.c.l.b16 %v2656
  %v4839 = vunpack.c.h.b16 %v2656
  %v4840 = vunpack.c.l.b16 %v2657
  %v4841 = vunpack.c.h.b16 %v2657
  %v4842 = vunpack.c.l.b16 %v2658
  %v4843 = vunpack.c.l.b16 %v2659
  %v4844 = vunpack.c.h.b16 %v2659
  %v4845 = vunpack.c.l.b16 %v2660
  %v4846 = vunpack.c.h.b16 %v2660
  %v4847 = vunpack.c.l.b16 %v2661
  %v4848 = vunpack.c.h.b16 %v2661
  %v4849 = vunpack.c.l.b16 %v2662
  %v4850 = vunpack.c.l.b16 %v2663
  %v4851 = vunpack.c.h.b16 %v2663
  %v4852 = vunpack.c.l.b16 %v2664
  %v4853 = vunpack.c.h.b16 %v2664
  %v4854 = vunpack.c.l.b16 %v2665
  %v4855 = vunpack.c.h.b16 %v2665
  %v4856 = vunpack.c.l.b16 %v2666
  %v4857 = vunpack.c.l.b16 %v2667
  %v4858 = vunpack.c.h.b16 %v2667
  %v4859 = vunpack.c.l.b16 %v2668
  %v4860 = vunpack.c.h.b16 %v2668
  %v4861 = vunpack.c.l.b16 %v2669
  %v4862 = vunpack.c.h.b16 %v2669
  %v4863 = vunpack.c.l.b16 %v2670
  %v4864 = vpack.c.b16 %v3499, %v3492
  %v4865 = vpack.c.b16 %v3500, %v3493
  %v4866 = vpack.c.b16 %v3501, %v3494
  %v4867 = vpack.c.b16 %v3502, %v3495
  %v4868 = vpack.c.b16 %v3503, %v3496
  %v4869 = vpack.c.b16 %v3504, %v3497
  %v4870 = vpack.c.b16 %v3505, %v3498
  %v4871 = vpack.c.b16 %v3513, %v3506
  %v4872 = vpack.c.b16 %v3514, %v3507
  %v4873 = vpack.c.b16 %v3515, %v3508
  %v4874 = vpack.c.b16 %v3516, %v3509
  %v4875 = vpack.c.b16 %v3517, %v3510
  %v4876 = vpack.c.b16 %v3518, %v3511
  %v4877 = vpack.c.b16 %v3519, %v3512
  %v4878 = vpack.c.b16 %v3527, %v3520
  %v4879 = vpack.c.b16 %v3528, %v3521
  %v4880 = vpack.c.b16 %v3529, %v3522
  %v4881 = vpack.c.b16 %v3530, %v3523
  %v4882 = vpack.c.b16 %v3531, %v3524
  %v4883 = vpack.c.b16 %v3532, %v3525
  %v4884 = vpack.c.b16 %v3533, %v3526
  %v4885 = vpack.c.b16 %v3541, %v3534
  %v4886 = vpack.c.b16 %v3542, %v3535
  %v4887 = vpack.c.b16 %v3543, %v3536
  %v4888 = vpack.c.b16 %v3544, %v3537
  %v4889 = vpack.c.b16 %v3545, %v3538
  %v4890 = vpack.c.b16 %v3546, %v3539
  %v4891 = vpack.c.b16 %v3547, %v3540
  %v4892 = vpack.c.b16 %v3555, %v3548
  %v4893 = vpack.c.b16 %v3556, %v3549
  %v4894 = vpack.c.b16 %v3557, %v3550
  %v4895 = vpack.c.b16 %v3558, %v3551
  %v4896 = vpack.c.b16 %v3559, %v3552
  %v4897 = vpack.c.b16 %v3560, %v3553
  %v4898 = vpack.c.b16 %v3561, %v3554
  %v4899 = vpack.c.b16 %v3569, %v3562
  %v4900 = vpack.c.b16 %v3570, %v3563
  %v4901 = vpack.c.b16 %v3571, %v3564
  %v4902 = vpack.c.b16 %v3572, %v3565
  %v4903 = vpack.c.b16 %v3573, %v3566
  %v4904 = vpack.c.b16 %v3574, %v3567
  %v4905 = vpack.c.b16 %v3575, %v3568
  %v4906 = vpack.c.b16 %v3583, %v3576
  %v4907 = vpack.c.b16 %v3584, %v3577
  %v4908 = vpack.c.b16 %v3585, %v3578
  %v4909 = vpack.c.b16 %v3586, %v3579
  %v4910 = vpack.c.b16 %v3587, %v3580
  %v4911 = vpack.c.b16 %v3588, %v3581
  %v4912 = vpack.c.b16 %v3589, %v3582
  %v4913 = vpack.c.b16 %v3597, %v3590
  %v4914 = vpack.c.b16 %v3598, %v3591
  %v4915 = vpack.c.b16 %v3599, %v3592
  %v4916 = vpack.c.b16 %v3600, %v3593
  %v4917 = vpack.c.b16 %v3601, %v3594
  %v4918 = vpack.c.b16 %v3602, %v3595
  %v4919 = vpack.c.b16 %v3603, %v3596
  %v4920 = vpack.c.b16 %v3611, %v3604
  %v4921 = vpack.c.b16 %v3612, %v3605
  %v4922 = vpack.c.b16 %v3613, %v3606
  %v4923 = vpack.c.b16 %v3614, %v3607
  %v4924 = vpack.c.b16 %v3615, %v3608
  %v4925 = vpack.c.b16 %v3616, %v3609
  %v4926 = vpack.c.b16 %v3617, %v3610
  %v4927 = vpack.c.b16 %v3625, %v3618
  %v4928 = vpack.c.b16 %v3626, %v3619
  %v4929 = vpack.c.b16 %v3627, %v3620
  %v4930 = vpack.c.b16 %v3628, %v3621
  %v4931 = vpack.c.b16 %v3629, %v3622
  %v4932 = vpack.c.b16 %v3630, %v3623
  %v4933 = vpack.c.b16 %v3631, %v3624
  %v4934 = vpack.c.b16 %v3639, %v3632
  %v4935 = vpack.c.b16 %v3640, %v3633
  %v4936 = vpack.c.b16 %v3641, %v3634
  %v4937 = vpack.c.b16 %v3642, %v3635
  %v4938 = vpack.c.b16 %v3643, %v3636
  %v4939 = vpack.c.b16 %v3644, %v3637
  %v4940 = vpack.c.b16 %v3645, %v3638
  %v4941 = vpack.c.b16 %v3653, %v3646
  %v4942 = vpack.c.b16 %v3654, %v3647
  %v4943 = vpack.c.b16 %v3655, %v3648
  %v4944 = vpack.c.b16 %v3656, %v3649
  %v4945 = vpack.c.b16 %v3657, %v3650
  %v4946 = vpack.c.b16 %v3658, %v3651
  %v4947 = vpack.c.b16 %v3659, %v3652
  %v4948 = vpack.c.b16 %v3667, %v3660
  %v4949 = vpack.c.b16 %v3668, %v3661
  %v4950 = vpack.c.b16 %v3669, %v3662
  %v4951 = vpack.c.b16 %v3670, %v3663
  %v4952 = vpack.c.b16 %v3671, %v3664
  %v4953 = vpack.c.b16 %v3672, %v3665
  %v4954 = vpack.c.b16 %v3673, %v3666
  %v4955 = vpack.c.b16 %v3681, %v3674
  %v4956 = vpack.c.b16 %v3682, %v3675
  %v4957 = vpack.c.b16 %v3683, %v3676
  %v4958 = vpack.c.b16 %v3684, %v3677
  %v4959 = vpack.c.b16 %v3685, %v3678
  %v4960 = vpack.c.b16 %v3686, %v3679
  %v4961 = vpack.c.b16 %v3687, %v3680
  %v4962 = vpack.c.b16 %v3695, %v3688
  %v4963 = vpack.c.b16 %v3696, %v3689
  %v4964 = vpack.c.b16 %v3697, %v3690
  %v4965 = vpack.c.b16 %v3698, %v3691
  %v4966 = vpack.c.b16 %v3699, %v3692
  %v4967 = vpack.c.b16 %v3700, %v3693
  %v4968 = vpack.c.b16 %v3701, %v3694
  %v4969 = vpack.c.b16 %v3709, %v3702
  %v4970 = vpack.c.b16 %v3710, %v3703
  %v4971 = vpack.c.b16 %v3711, %v3704
  %v4972 = vpack.c.b16 %v3712, %v3705
  %v4973 = vpack.c.b16 %v3713, %v3706
  %v4974 = vpack.c.b16 %v3714, %v3707
  %v4975 = vpack.c.b16 %v3715, %v3708
  %v4976 = vpack.c.b16 %v3723, %v3716
  %v4977 = vpack.c.b16 %v3724, %v3717
  %v4978 = vpack.c.b16 %v3725, %v3718
  %v4979 = vpack.c.b16 %v3726, %v3719
  %v4980 = vpack.c.b16 %v3727, %v3720
  %v4981 = vpack.c.b16 %v3728, %v3721
  %v4982 = vpack.c.b16 %v3729, %v3722
  %v4983 = vpack.c.b16 %v3737, %v3730
  %v4984 = vpack.c.b16 %v3738, %v3731
  %v4985 = vpack.c.b16 %v3739, %v3732
  %v4986 = vpack.c.b16 %v3740, %v3733
  %v4987 = vpack.c.b16 %v3741, %v3734
  %v4988 = vpack.c.b16 %v3742, %v3735
  %v4989 = vpack.c.b16 %v3743, %v3736
  %v4990 = vpack.c.b16 %v3751, %v3744
  %v4991 = vpack.c.b16 %v3752, %v3745
  %v4992 = vpack.c.b16 %v3753, %v3746
  %v4993 = vpack.c.b16 %v3754, %v3747
  %v4994 = vpack.c.b16 %v3755, %v3748
  %v4995 = vpack.c.b16 %v3756, %v3749
  %v4996 = vpack.c.b16 %v3757, %v3750
  %v4997 = vpack.c.b16 %v3765, %v3758
  %v4998 = vpack.c.b16 %v3766, %v3759
  %v4999 = vpack.c.b16 %v3767, %v3760
  %v5000 = vpack.c.b16 %v3768, %v3761
  %v5001 = vpack.c.b16 %v3769, %v3762
  %v5002 = vpack.c.b16 %v3770, %v3763
  %v5003 = vpack.c.b16 %v3771, %v3764
  %v5004 = vpack.c.b16 %v3779, %v3772
  %v5005 = vpack.c.b16 %v3780, %v3773
  %v5006 = vpack.c.b16 %v3781, %v3774
  %v5007 = vpack.c.b16 %v3782, %v3775
  %v5008 = vpack.c.b16 %v3783, %v3776
  %v5009 = vpack.c.b16 %v3784, %v3777
  %v5010 = vpack.c.b16 %v3785, %v3778
  %v5011 = vpack.c.b16 %v3793, %v3786
  %v5012 = vpack.c.b16 %v3794, %v3787
  %v5013 = vpack.c.b16 %v3795, %v3788
  %v5014 = vpack.c.b16 %v3796, %v3789
  %v5015 = vpack.c.b16 %v3797, %v3790
  %v5016 = vpack.c.b16 %v3798, %v3791
  %v5017 = vpack.c.b16 %v3799, %v3792
  %v5018 = vpack.c.b16 %v3807, %v3800
  %v5019 = vpack.c.b16 %v3808, %v3801
  %v5020 = vpack.c.b16 %v3809, %v3802
  %v5021 = vpack.c.b16 %v3810, %v3803
  %v5022 = vpack.c.b16 %v3811, %v3804
  %v5023 = vpack.c.b16 %v3812, %v3805
  %v5024 = vpack.c.b16 %v3813, %v3806
  %v5025 = vpack.c.b16 %v3821, %v3814
  %v5026 = vpack.c.b16 %v3822, %v3815
  %v5027 = vpack.c.b16 %v3823, %v3816
  %v5028 = vpack.c.b16 %v3824, %v3817
  %v5029 = vpack.c.b16 %v3825, %v3818
  %v5030 = vpack.c.b16 %v3826, %v3819
  %v5031 = vpack.c.b16 %v3827, %v3820
  %v5032 = vpack.c.b16 %v3835, %v3828
  %v5033 = vpack.c.b16 %v3836, %v3829
  %v5034 = vpack.c.b16 %v3837, %v3830
  %v5035 = vpack.c.b16 %v3838, %v3831
  %v5036 = vpack.c.b16 %v3839, %v3832
  %v5037 = vpack.c.b16 %v3840, %v3833
  %v5038 = vpack.c.b16 %v3841, %v3834
  %v5039 = vpack.c.b16 %v3849, %v3842
  %v5040 = vpack.c.b16 %v3850, %v3843
  %v5041 = vpack.c.b16 %v3851, %v3844
  %v5042 = vpack.c.b16 %v3852, %v3845
  %v5043 = vpack.c.b16 %v3853, %v3846
  %v5044 = vpack.c.b16 %v3854, %v3847
  %v5045 = vpack.c.b16 %v3855, %v3848
  %v5046 = vpack.c.b16 %v3863, %v3856
  %v5047 = vpack.c.b16 %v3864, %v3857
  %v5048 = vpack.c.b16 %v3865, %v3858
  %v5049 = vpack.c.b16 %v3866, %v3859
  %v5050 = vpack.c.b16 %v3867, %v3860
  %v5051 = vpack.c.b16 %v3868, %v3861
  %v5052 = vpack.c.b16 %v3869, %v3862
  %v5053 = vpack.c.b16 %v3877, %v3870
  %v5054 = vpack.c.b16 %v3878, %v3871
  %v5055 = vpack.c.b16 %v3879, %v3872
  %v5056 = vpack.c.b16 %v3880, %v3873
  %v5057 = vpack.c.b16 %v3881, %v3874
  %v5058 = vpack.c.b16 %v3882, %v3875
  %v5059 = vpack.c.b16 %v3883, %v3876
  %v5060 = vpack.c.b16 %v3891, %v3884
  %v5061 = vpack.c.b16 %v3892, %v3885
  %v5062 = vpack.c.b16 %v3893, %v3886
  %v5063 = vpack.c.b16 %v3894, %v3887
  %v5064 = vpack.c.b16 %v3895, %v3888
  %v5065 = vpack.c.b16 %v3896, %v3889
  %v5066 = vpack.c.b16 %v3897, %v3890
  %v5067 = vpack.c.b16 %v3905, %v3898
  %v5068 = vpack.c.b16 %v3906, %v3899
  %v5069 = vpack.c.b16 %v3907, %v3900
  %v5070 = vpack.c.b16 %v3908, %v3901
  %v5071 = vpack.c.b16 %v3909, %v3902
  %v5072 = vpack.c.b16 %v3910, %v3903
  %v5073 = vpack.c.b16 %v3911, %v3904
  %v5074 = vpack.c.b16 %v3919, %v3912
  %v5075 = vpack.c.b16 %v3920, %v3913
  %v5076 = vpack.c.b16 %v3921, %v3914
  %v5077 = vpack.c.b16 %v3922, %v3915
  %v5078 = vpack.c.b16 %v3923, %v3916
  %v5079 = vpack.c.b16 %v3924, %v3917
  %v5080 = vpack.c.b16 %v3925, %v3918
  %v5081 = vpack.c.b16 %v3933, %v3926
  %v5082 = vpack.c.b16 %v3934, %v3927
  %v5083 = vpack.c.b16 %v3935, %v3928
  %v5084 = vpack.c.b16 %v3936, %v3929
  %v5085 = vpack.c.b16 %v3937, %v3930
  %v5086 = vpack.c.b16 %v3938, %v3931
  %v5087 = vpack.c.b16 %v3939, %v3932
  %v5088 = vpack.c.b16 %v3947, %v3940
  %v5089 = vpack.c.b16 %v3948, %v3941
  %v5090 = vpack.c.b16 %v3949, %v3942
  %v5091 = vpack.c.b16 %v3950, %v3943
  %v5092 = vpack.c.b16 %v3951, %v3944
  %v5093 = vpack.c.b16 %v3952, %v3945
  %v5094 = vpack.c.b16 %v3953, %v3946
  %v5095 = vpack.c.b16 %v3961, %v3954
  %v5096 = vpack.c.b16 %v3962, %v3955
  %v5097 = vpack.c.b16 %v3963, %v3956
  %v5098 = vpack.c.b16 %v3964, %v3957
  %v5099 = vpack.c.b16 %v3965, %v3958
  %v5100 = vpack.c.b16 %v3966, %v3959
  %v5101 = vpack.c.b16 %v3967, %v3960
  %v5102 = vpack.c.b16 %v3975, %v3968
  %v5103 = vpack.c.b16 %v3976, %v3969
  %v5104 = vpack.c.b16 %v3977, %v3970
  %v5105 = vpack.c.b16 %v3978, %v3971
  %v5106 = vpack.c.b16 %v3979, %v3972
  %v5107 = vpack.c.b16 %v3980, %v3973
  %v5108 = vpack.c.b16 %v3981, %v3974
  %v5109 = vpack.c.b16 %v3989, %v3982
  %v5110 = vpack.c.b16 %v3990, %v3983
  %v5111 = vpack.c.b16 %v3991, %v3984
  %v5112 = vpack.c.b16 %v3992, %v3985
  %v5113 = vpack.c.b16 %v3993, %v3986
  %v5114 = vpack.c.b16 %v3994, %v3987
  %v5115 = vpack.c.b16 %v3995, %v3988
  %v5116 = vpack.c.b16 %v4003, %v3996
  %v5117 = vpack.c.b16 %v4004, %v3997
  %v5118 = vpack.c.b16 %v4005, %v3998
  %v5119 = vpack.c.b16 %v4006, %v3999
  %v5120 = vpack.c.b16 %v4007, %v4000
  %v5121 = vpack.c.b16 %v4008, %v4001
  %v5122 = vpack.c.b16 %v4009, %v4002
  %v5123 = vpack.c.b16 %v4017, %v4010
  %v5124 = vpack.c.b16 %v4018, %v4011
  %v5125 = vpack.c.b16 %v4019, %v4012
  %v5126 = vpack.c.b16 %v4020, %v4013
  %v5127 = vpack.c.b16 %v4021, %v4014
  %v5128 = vpack.c.b16 %v4022, %v4015
  %v5129 = vpack.c.b16 %v4023, %v4016
  %v5130 = vpack.c.b16 %v4031, %v4024
  %v5131 = vpack.c.b16 %v4032, %v4025
  %v5132 = vpack.c.b16 %v4033, %v4026
  %v5133 = vpack.c.b16 %v4034, %v4027
  %v5134 = vpack.c.b16 %v4035, %v4028
  %v5135 = vpack.c.b16 %v4036, %v4029
  %v5136 = vpack.c.b16 %v4037, %v4030
  %v5137 = vpack.c.b16 %v4045, %v4038
  %v5138 = vpack.c.b16 %v4046, %v4039
  %v5139 = vpack.c.b16 %v4047, %v4040
  %v5140 = vpack.c.b16 %v4048, %v4041
  %v5141 = vpack.c.b16 %v4049, %v4042
  %v5142 = vpack.c.b16 %v4050, %v4043
  %v5143 = vpack.c.b16 %v4051, %v4044
  %v5144 = vpack.c.b16 %v4059, %v4052
  %v5145 = vpack.c.b16 %v4060, %v4053
  %v5146 = vpack.c.b16 %v4061, %v4054
  %v5147 = vpack.c.b16 %v4062, %v4055
  %v5148 = vpack.c.b16 %v4063, %v4056
  %v5149 = vpack.c.b16 %v4064, %v4057
  %v5150 = vpack.c.b16 %v4065, %v4058
  %v5151 = vpack.c.b16 %v4073, %v4066
  %v5152 = vpack.c.b16 %v4074, %v4067
  %v5153 = vpack.c.b16 %v4075, %v4068
  %v5154 = vpack.c.b16 %v4076, %v4069
  %v5155 = vpack.c.b16 %v4077, %v4070
  %v5156 = vpack.c.b16 %v4078, %v4071
  %v5157 = vpack.c.b16 %v4079, %v4072
  %v5158 = vpack.c.b16 %v4087, %v4080
  %v5159 = vpack.c.b16 %v4088, %v4081
  %v5160 = vpack.c.b16 %v4089, %v4082
  %v5161 = vpack.c.b16 %v4090, %v4083
  %v5162 = vpack.c.b16 %v4091, %v4084
  %v5163 = vpack.c.b16 %v4092, %v4085
  %v5164 = vpack.c.b16 %v4093, %v4086
  %v5165 = vpack.c.b16 %v4101, %v4094
  %v5166 = vpack.c.b16 %v4102, %v4095
  %v5167 = vpack.c.b16 %v4103, %v4096
  %v5168 = vpack.c.b16 %v4104, %v4097
  %v5169 = vpack.c.b16 %v4105, %v4098
  %v5170 = vpack.c.b16 %v4106, %v4099
  %v5171 = vpack.c.b16 %v4107, %v4100
  %v5172 = vpack.c.b16 %v4115, %v4108
  %v5173 = vpack.c.b16 %v4116, %v4109
  %v5174 = vpack.c.b16 %v4117, %v4110
  %v5175 = vpack.c.b16 %v4118, %v4111
  %v5176 = vpack.c.b16 %v4119, %v4112
  %v5177 = vpack.c.b16 %v4120, %v4113
  %v5178 = vpack.c.b16 %v4121, %v4114
  %v5179 = vpack.c.b16 %v4129, %v4122
  %v5180 = vpack.c.b16 %v4130, %v4123
  %v5181 = vpack.c.b16 %v4131, %v4124
  %v5182 = vpack.c.b16 %v4132, %v4125
  %v5183 = vpack.c.b16 %v4133, %v4126
  %v5184 = vpack.c.b16 %v4134, %v4127
  %v5185 = vpack.c.b16 %v4135, %v4128
  %v5186 = vpack.c.b16 %v4143, %v4136
  %v5187 = vpack.c.b16 %v4144, %v4137
  %v5188 = vpack.c.b16 %v4145, %v4138
  %v5189 = vpack.c.b16 %v4146, %v4139
  %v5190 = vpack.c.b16 %v4147, %v4140
  %v5191 = vpack.c.b16 %v4148, %v4141
  %v5192 = vpack.c.b16 %v4149, %v4142
  %v5193 = vpack.c.b16 %v4157, %v4150
  %v5194 = vpack.c.b16 %v4158, %v4151
  %v5195 = vpack.c.b16 %v4159, %v4152
  %v5196 = vpack.c.b16 %v4160, %v4153
  %v5197 = vpack.c.b16 %v4161, %v4154
  %v5198 = vpack.c.b16 %v4162, %v4155
  %v5199 = vpack.c.b16 %v4163, %v4156
  %v5200 = vpack.c.b16 %v4171, %v4164
  %v5201 = vpack.c.b16 %v4172, %v4165
  %v5202 = vpack.c.b16 %v4173, %v4166
  %v5203 = vpack.c.b16 %v4174, %v4167
  %v5204 = vpack.c.b16 %v4175, %v4168
  %v5205 = vpack.c.b16 %v4176, %v4169
  %v5206 = vpack.c.b16 %v4177, %v4170
  %v5207 = vpack.c.b16 %v4185, %v4178
  %v5208 = vpack.c.b16 %v4186, %v4179
  %v5209 = vpack.c.b16 %v4187, %v4180
  %v5210 = vpack.c.b16 %v4188, %v4181
  %v5211 = vpack.c.b16 %v4189, %v4182
  %v5212 = vpack.c.b16 %v4190, %v4183
  %v5213 = vpack.c.b16 %v4191, %v4184
  %v5214 = vpack.c.b16 %v4199, %v4192
  %v5215 = vpack.c.b16 %v4200, %v4193
  %v5216 = vpack.c.b16 %v4201, %v4194
  %v5217 = vpack.c.b16 %v4202, %v4195
  %v5218 = vpack.c.b16 %v4203, %v4196
  %v5219 = vpack.c.b16 %v4204, %v4197
  %v5220 = vpack.c.b16 %v4205, %v4198
  %v5221 = vpack.c.b16 %v4213, %v4206
  %v5222 = vpack.c.b16 %v4214, %v4207
  %v5223 = vpack.c.b16 %v4215, %v4208
  %v5224 = vpack.c.b16 %v4216, %v4209
  %v5225 = vpack.c.b16 %v4217, %v4210
  %v5226 = vpack.c.b16 %v4218, %v4211
  %v5227 = vpack.c.b16 %v4219, %v4212
  %v5228 = vpack.c.b16 %v4227, %v4220
  %v5229 = vpack.c.b16 %v4228, %v4221
  %v5230 = vpack.c.b16 %v4229, %v4222
  %v5231 = vpack.c.b16 %v4230, %v4223
  %v5232 = vpack.c.b16 %v4231, %v4224
  %v5233 = vpack.c.b16 %v4232, %v4225
  %v5234 = vpack.c.b16 %v4233, %v4226
  %v5235 = vpack.c.b16 %v4241, %v4234
  %v5236 = vpack.c.b16 %v4242, %v4235
  %v5237 = vpack.c.b16 %v4243, %v4236
  %v5238 = vpack.c.b16 %v4244, %v4237
  %v5239 = vpack.c.b16 %v4245, %v4238
  %v5240 = vpack.c.b16 %v4246, %v4239
  %v5241 = vpack.c.b16 %v4247, %v4240
  %v5242 = vpack.c.b16 %v4255, %v4248
  %v5243 = vpack.c.b16 %v4256, %v4249
  %v5244 = vpack.c.b16 %v4257, %v4250
  %v5245 = vpack.c.b16 %v4258, %v4251
  %v5246 = vpack.c.b16 %v4259, %v4252
  %v5247 = vpack.c.b16 %v4260, %v4253
  %v5248 = vpack.c.b16 %v4261, %v4254
  %v5249 = vpack.c.b16 %v4269, %v4262
  %v5250 = vpack.c.b16 %v4270, %v4263
  %v5251 = vpack.c.b16 %v4271, %v4264
  %v5252 = vpack.c.b16 %v4272, %v4265
  %v5253 = vpack.c.b16 %v4273, %v4266
  %v5254 = vpack.c.b16 %v4274, %v4267
  %v5255 = vpack.c.b16 %v4275, %v4268
  %v5256 = vpack.c.b16 %v4283, %v4276
  %v5257 = vpack.c.b16 %v4284, %v4277
  %v5258 = vpack.c.b16 %v4285, %v4278
  %v5259 = vpack.c.b16 %v4286, %v4279
  %v5260 = vpack.c.b16 %v4287, %v4280
  %v5261 = vpack.c.b16 %v4288, %v4281
  %v5262 = vpack.c.b16 %v4289, %v4282
  %v5263 = vpack.c.b16 %v4297, %v4290
  %v5264 = vpack.c.b16 %v4298, %v4291
  %v5265 = vpack.c.b16 %v4299, %v4292
  %v5266 = vpack.c.b16 %v4300, %v4293
  %v5267 = vpack.c.b16 %v4301, %v4294
  %v5268 = vpack.c.b16 %v4302, %v4295
  %v5269 = vpack.c.b16 %v4303, %v4296
  %v5270 = vpack.c.b16 %v4311, %v4304
  %v5271 = vpack.c.b16 %v4312, %v4305
  %v5272 = vpack.c.b16 %v4313, %v4306
  %v5273 = vpack.c.b16 %v4314, %v4307
  %v5274 = vpack.c.b16 %v4315, %v4308
  %v5275 = vpack.c.b16 %v4316, %v4309
  %v5276 = vpack.c.b16 %v4317, %v4310
  %v5277 = vpack.c.b16 %v4325, %v4318
  %v5278 = vpack.c.b16 %v4326, %v4319
  %v5279 = vpack.c.b16 %v4327, %v4320
  %v5280 = vpack.c.b16 %v4328, %v4321
  %v5281 = vpack.c.b16 %v4329, %v4322
  %v5282 = vpack.c.b16 %v4330, %v4323
  %v5283 = vpack.c.b16 %v4331, %v4324
  %v5284 = vpack.c.b16 %v4339, %v4332
  %v5285 = vpack.c.b16 %v4340, %v4333
  %v5286 = vpack.c.b16 %v4341, %v4334
  %v5287 = vpack.c.b16 %v4342, %v4335
  %v5288 = vpack.c.b16 %v4343, %v4336
  %v5289 = vpack.c.b16 %v4344, %v4337
  %v5290 = vpack.c.b16 %v4345, %v4338
  %v5291 = vpack.c.b16 %v4353, %v4346
  %v5292 = vpack.c.b16 %v4354, %v4347
  %v5293 = vpack.c.b16 %v4355, %v4348
  %v5294 = vpack.c.b16 %v4356, %v4349
  %v5295 = vpack.c.b16 %v4357, %v4350
  %v5296 = vpack.c.b16 %v4358, %v4351
  %v5297 = vpack.c.b16 %v4359, %v4352
  %v5298 = vpack.c.b16 %v4367, %v4360
  %v5299 = vpack.c.b16 %v4368, %v4361
  %v5300 = vpack.c.b16 %v4369, %v4362
  %v5301 = vpack.c.b16 %v4370, %v4363
  %v5302 = vpack.c.b16 %v4371, %v4364
  %v5303 = vpack.c.b16 %v4372, %v4365
  %v5304 = vpack.c.b16 %v4373, %v4366
  %v5305 = vpack.c.b16 %v4381, %v4374
  %v5306 = vpack.c.b16 %v4382, %v4375
  %v5307 = vpack.c.b16 %v4383, %v4376
  %v5308 = vpack.c.b16 %v4384, %v4377
  %v5309 = vpack.c.b16 %v4385, %v4378
  %v5310 = vpack.c.b16 %v4386, %v4379
  %v5311 = vpack.c.b16 %v4387, %v4380
  %v5312 = vpack.c.b16 %v4395, %v4388
  %v5313 = vpack.c.b16 %v4396, %v4389
  %v5314 = vpack.c.b16 %v4397, %v4390
  %v5315 = vpack.c.b16 %v4398, %v4391
  %v5316 = vpack.c.b16 %v4399, %v4392
  %v5317 = vpack.c.b16 %v4400, %v4393
  %v5318 = vpack.c.b16 %v4401, %v4394
  %v5319 = vpack.c.b16 %v4409, %v4402
  %v5320 = vpack.c.b16 %v4410, %v4403
  %v5321 = vpack.c.b16 %v4411, %v4404
  %v5322 = vpack.c.b16 %v4412, %v4405
  %v5323 = vpack.c.b16 %v4413, %v4406
  %v5324 = vpack.c.b16 %v4414, %v4407
  %v5325 = vpack.c.b16 %v4415, %v4408
  %v5326 = vpack.c.b16 %v4423, %v4416
  %v5327 = vpack.c.b16 %v4424, %v4417
  %v5328 = vpack.c.b16 %v4425, %v4418
  %v5329 = vpack.c.b16 %v4426, %v4419
  %v5330 = vpack.c.b16 %v4427, %v4420
  %v5331 = vpack.c.b16 %v4428, %v4421
  %v5332 = vpack.c.b16 %v4429, %v4422
  %v5333 = vpack.c.b16 %v4437, %v4430
  %v5334 = vpack.c.b16 %v4438, %v4431
  %v5335 = vpack.c.b16 %v4439, %v4432
  %v5336 = vpack.c.b16 %v4440, %v4433
  %v5337 = vpack.c.b16 %v4441, %v4434
  %v5338 = vpack.c.b16 %v4442, %v4435
  %v5339 = vpack.c.b16 %v4443, %v4436
  %v5340 = vpack.c.b16 %v4451, %v4444
  %v5341 = vpack.c.b16 %v4452, %v4445
  %v5342 = vpack.c.b16 %v4453, %v4446
  %v5343 = vpack.c.b16 %v4454, %v4447
  %v5344 = vpack.c.b16 %v4455, %v4448
  %v5345 = vpack.c.b16 %v4456, %v4449
  %v5346 = vpack.c.b16 %v4457, %v4450
  %v5347 = vpack.c.b16 %v4465, %v4458
  %v5348 = vpack.c.b16 %v4466, %v4459
  %v5349 = vpack.c.b16 %v4467, %v4460
  %v5350 = vpack.c.b16 %v4468, %v4461
  %v5351 = vpack.c.b16 %v4469, %v4462
  %v5352 = vpack.c.b16 %v4470, %v4463
  %v5353 = vpack.c.b16 %v4471, %v4464
  %v5354 = vpack.c.b16 %v4479, %v4472
  %v5355 = vpack.c.b16 %v4480, %v4473
  %v5356 = vpack.c.b16 %v4481, %v4474
  %v5357 = vpack.c.b16 %v4482, %v4475
  %v5358 = vpack.c.b16 %v4483, %v4476
  %v5359 = vpack.c.b16 %v4484, %v4477
  %v5360 = vpack.c.b16 %v4485, %v4478
  %v5361 = vpack.c.b16 %v4493, %v4486
  %v5362 = vpack.c.b16 %v4494, %v4487
  %v5363 = vpack.c.b16 %v4495, %v4488
  %v5364 = vpack.c.b16 %v4496, %v4489
  %v5365 = vpack.c.b16 %v4497, %v4490
  %v5366 = vpack.c.b16 %v4498, %v4491
  %v5367 = vpack.c.b16 %v4499, %v4492
  %v5368 = vpack.c.b16 %v4507, %v4500
  %v5369 = vpack.c.b16 %v4508, %v4501
  %v5370 = vpack.c.b16 %v4509, %v4502
  %v5371 = vpack.c.b16 %v4510, %v4503
  %v5372 = vpack.c.b16 %v4511, %v4504
  %v5373 = vpack.c.b16 %v4512, %v4505
  %v5374 = vpack.c.b16 %v4513, %v4506
  %v5375 = vpack.c.b16 %v4521, %v4514
  %v5376 = vpack.c.b16 %v4522, %v4515
  %v5377 = vpack.c.b16 %v4523, %v4516
  %v5378 = vpack.c.b16 %v4524, %v4517
  %v5379 = vpack.c.b16 %v4525, %v4518
  %v5380 = vpack.c.b16 %v4526, %v4519
  %v5381 = vpack.c.b16 %v4527, %v4520
  %v5382 = vpack.c.b16 %v4535, %v4528
  %v5383 = vpack.c.b16 %v4536, %v4529
  %v5384 = vpack.c.b16 %v4537, %v4530
  %v5385 = vpack.c.b16 %v4538, %v4531
  %v5386 = vpack.c.b16 %v4539, %v4532
  %v5387 = vpack.c.b16 %v4540, %v4533
  %v5388 = vpack.c.b16 %v4541, %v4534
  %v5389 = vpack.c.b16 %v4549, %v4542
  %v5390 = vpack.c.b16 %v4550, %v4543
  %v5391 = vpack.c.b16 %v4551, %v4544
  %v5392 = vpack.c.b16 %v4552, %v4545
  %v5393 = vpack.c.b16 %v4553, %v4546
  %v5394 = vpack.c.b16 %v4554, %v4547
  %v5395 = vpack.c.b16 %v4555, %v4548
  %v5396 = vpack.c.b16 %v4563, %v4556
  %v5397 = vpack.c.b16 %v4564, %v4557
  %v5398 = vpack.c.b16 %v4565, %v4558
  %v5399 = vpack.c.b16 %v4566, %v4559
  %v5400 = vpack.c.b16 %v4567, %v4560
  %v5401 = vpack.c.b16 %v4568, %v4561
  %v5402 = vpack.c.b16 %v4569, %v4562
  %v5403 = vpack.c.b16 %v4577, %v4570
  %v5404 = vpack.c.b16 %v4578, %v4571
  %v5405 = vpack.c.b16 %v4579, %v4572
  %v5406 = vpack.c.b16 %v4580, %v4573
  %v5407 = vpack.c.b16 %v4581, %v4574
  %v5408 = vpack.c.b16 %v4582, %v4575
  %v5409 = vpack.c.b16 %v4583, %v4576
  %v5410 = vpack.c.b16 %v4591, %v4584
  %v5411 = vpack.c.b16 %v4592, %v4585
  %v5412 = vpack.c.b16 %v4593, %v4586
  %v5413 = vpack.c.b16 %v4594, %v4587
  %v5414 = vpack.c.b16 %v4595, %v4588
  %v5415 = vpack.c.b16 %v4596, %v4589
  %v5416 = vpack.c.b16 %v4597, %v4590
  %v5417 = vpack.c.b16 %v4605, %v4598
  %v5418 = vpack.c.b16 %v4606, %v4599
  %v5419 = vpack.c.b16 %v4607, %v4600
  %v5420 = vpack.c.b16 %v4608, %v4601
  %v5421 = vpack.c.b16 %v4609, %v4602
  %v5422 = vpack.c.b16 %v4610, %v4603
  %v5423 = vpack.c.b16 %v4611, %v4604
  %v5424 = vpack.c.b16 %v4619, %v4612
  %v5425 = vpack.c.b16 %v4620, %v4613
  %v5426 = vpack.c.b16 %v4621, %v4614
  %v5427 = vpack.c.b16 %v4622, %v4615
  %v5428 = vpack.c.b16 %v4623, %v4616
  %v5429 = vpack.c.b16 %v4624, %v4617
  %v5430 = vpack.c.b16 %v4625, %v4618
  %v5431 = vpack.c.b16 %v4633, %v4626
  %v5432 = vpack.c.b16 %v4634, %v4627
  %v5433 = vpack.c.b16 %v4635, %v4628
  %v5434 = vpack.c.b16 %v4636, %v4629
  %v5435 = vpack.c.b16 %v4637, %v4630
  %v5436 = vpack.c.b16 %v4638, %v4631
  %v5437 = vpack.c.b16 %v4639, %v4632
  %v5438 = vpack.c.b16 %v4647, %v4640
  %v5439 = vpack.c.b16 %v4648, %v4641
  %v5440 = vpack.c.b16 %v4649, %v4642
  %v5441 = vpack.c.b16 %v4650, %v4643
  %v5442 = vpack.c.b16 %v4651, %v4644
  %v5443 = vpack.c.b16 %v4652, %v4645
  %v5444 = vpack.c.b16 %v4653, %v4646
  %v5445 = vpack.c.b16 %v4661, %v4654
  %v5446 = vpack.c.b16 %v4662, %v4655
  %v5447 = vpack.c.b16 %v4663, %v4656
  %v5448 = vpack.c.b16 %v4664, %v4657
  %v5449 = vpack.c.b16 %v4665, %v4658
  %v5450 = vpack.c.b16 %v4666, %v4659
  %v5451 = vpack.c.b16 %v4667, %v4660
  %v5452 = vpack.c.b16 %v4675, %v4668
  %v5453 = vpack.c.b16 %v4676, %v4669
  %v5454 = vpack.c.b16 %v4677, %v4670
  %v5455 = vpack.c.b16 %v4678, %v4671
  %v5456 = vpack.c.b16 %v4679, %v4672
  %v5457 = vpack.c.b16 %v4680, %v4673
  %v5458 = vpack.c.b16 %v4681, %v4674
  %v5459 = vpack.c.b16 %v4689, %v4682
  %v5460 = vpack.c.b16 %v4690, %v4683
  %v5461 = vpack.c.b16 %v4691, %v4684
  %v5462 = vpack.c.b16 %v4692, %v4685
  %v5463 = vpack.c.b16 %v4693, %v4686
  %v5464 = vpack.c.b16 %v4694, %v4687
  %v5465 = vpack.c.b16 %v4695, %v4688
  %v5466 = vpack.c.b16 %v4703, %v4696
  %v5467 = vpack.c.b16 %v4704, %v4697
  %v5468 = vpack.c.b16 %v4705, %v4698
  %v5469 = vpack.c.b16 %v4706, %v4699
  %v5470 = vpack.c.b16 %v4707, %v4700
  %v5471 = vpack.c.b16 %v4708, %v4701
  %v5472 = vpack.c.b16 %v4709, %v4702
  %v5473 = vpack.c.b16 %v4717, %v4710
  %v5474 = vpack.c.b16 %v4718, %v4711
  %v5475 = vpack.c.b16 %v4719, %v4712
  %v5476 = vpack.c.b16 %v4720, %v4713
  %v5477 = vpack.c.b16 %v4721, %v4714
  %v5478 = vpack.c.b16 %v4722, %v4715
  %v5479 = vpack.c.b16 %v4723, %v4716
  %v5480 = vpack.c.b16 %v4731, %v4724
  %v5481 = vpack.c.b16 %v4732, %v4725
  %v5482 = vpack.c.b16 %v4733, %v4726
  %v5483 = vpack.c.b16 %v4734, %v4727
  %v5484 = vpack.c.b16 %v4735, %v4728
  %v5485 = vpack.c.b16 %v4736, %v4729
  %v5486 = vpack.c.b16 %v4737, %v4730
  %v5487 = vpack.c.b16 %v4745, %v4738
  %v5488 = vpack.c.b16 %v4746, %v4739
  %v5489 = vpack.c.b16 %v4747, %v4740
  %v5490 = vpack.c.b16 %v4748, %v4741
  %v5491 = vpack.c.b16 %v4749, %v4742
  %v5492 = vpack.c.b16 %v4750, %v4743
  %v5493 = vpack.c.b16 %v4751, %v4744
  %v5494 = vpack.c.b16 %v4759, %v4752
  %v5495 = vpack.c.b16 %v4760, %v4753
  %v5496 = vpack.c.b16 %v4761, %v4754
  %v5497 = vpack.c.b16 %v4762, %v4755
  %v5498 = vpack.c.b16 %v4763, %v4756
  %v5499 = vpack.c.b16 %v4764, %v4757
  %v5500 = vpack.c.b16 %v4765, %v4758
  %v5501 = vpack.c.b16 %v4773, %v4766
  %v5502 = vpack.c.b16 %v4774, %v4767
  %v5503 = vpack.c.b16 %v4775, %v4768
  %v5504 = vpack.c.b16 %v4776, %v4769
  %v5505 = vpack.c.b16 %v4777, %v4770
  %v5506 = vpack.c.b16 %v4778, %v4771
  %v5507 = vpack.c.b16 %v4779, %v4772
  %v5508 = vpack.c.b16 %v4787, %v4780
  %v5509 = vpack.c.b16 %v4788, %v4781
  %v5510 = vpack.c.b16 %v4789, %v4782
  %v5511 = vpack.c.b16 %v4790, %v4783
  %v5512 = vpack.c.b16 %v4791, %v4784
  %v5513 = vpack.c.b16 %v4792, %v4785
  %v5514 = vpack.c.b16 %v4793, %v4786
  %v5515 = vpack.c.b16 %v4801, %v4794
  %v5516 = vpack.c.b16 %v4802, %v4795
  %v5517 = vpack.c.b16 %v4803, %v4796
  %v5518 = vpack.c.b16 %v4804, %v4797
  %v5519 = vpack.c.b16 %v4805, %v4798
  %v5520 = vpack.c.b16 %v4806, %v4799
  %v5521 = vpack.c.b16 %v4807, %v4800
  %v5522 = vpack.c.b16 %v4815, %v4808
  %v5523 = vpack.c.b16 %v4816, %v4809
  %v5524 = vpack.c.b16 %v4817, %v4810
  %v5525 = vpack.c.b16 %v4818, %v4811
  %v5526 = vpack.c.b16 %v4819, %v4812
  %v5527 = vpack.c.b16 %v4820, %v4813
  %v5528 = vpack.c.b16 %v4821, %v4814
  %v5529 = vpack.c.b16 %v4829, %v4822
  %v5530 = vpack.c.b16 %v4830, %v4823
  %v5531 = vpack.c.b16 %v4831, %v4824
  %v5532 = vpack.c.b16 %v4832, %v4825
  %v5533 = vpack.c.b16 %v4833, %v4826
  %v5534 = vpack.c.b16 %v4834, %v4827
  %v5535 = vpack.c.b16 %v4835, %v4828
  %v5536 = vpack.c.b16 %v4843, %v4836
  %v5537 = vpack.c.b16 %v4844, %v4837
  %v5538 = vpack.c.b16 %v4845, %v4838
  %v5539 = vpack.c.b16 %v4846, %v4839
  %v5540 = vpack.c.b16 %v4847, %v4840
  %v5541 = vpack.c.b16 %v4848, %v4841
  %v5542 = vpack.c.b16 %v4849, %v4842
  %v5543 = vpack.c.b16 %v4857, %v4850
  %v5544 = vpack.c.b16 %v4858, %v4851
  %v5545 = vpack.c.b16 %v4859, %v4852
  %v5546 = vpack.c.b16 %v4860, %v4853
  %v5547 = vpack.c.b16 %v4861, %v4854
  %v5548 = vpack.c.b16 %v4862, %v4855
  %v5549 = vpack.c.b16 %v4863, %v4856
  %v6237 = vsel %vm1247, %v1886, 0
  %6239 = vmatprep.subr.bf16.mxu0 %v4865
  %6240 = vmatpush1.bf16.msra.mxu0 %v4864
  %6241 = vmatprep.subr.bf16.mxu0 %v4872
  %6242 = vmatpush1.bf16.msra.mxu0 %v4871
  %6243 = vmatprep.subr.bf16.mxu0 %v4879
  %6244 = vmatpush1.bf16.msra.mxu0 %v4878
  %6245 = vmatprep.subr.bf16.mxu0 %v4886
  %6246 = vmatpush1.bf16.msra.mxu0 %v4885
  %6247 = vmatprep.subr.bf16.mxu0 %v4893
  %6248 = vmatpush1.bf16.msra.mxu0 %v4892
  %6249 = vmatprep.subr.bf16.mxu0 %v4900
  %6250 = vmatpush1.bf16.msra.mxu0 %v4899
  %6251 = vmatprep.subr.bf16.mxu0 %v4907
  %6252 = vmatpush1.bf16.msra.mxu0 %v4906
  %6253 = vmatprep.subr.bf16.mxu0 %v4914
  %6254 = vmatpush1.bf16.msra.mxu0 %v4913
  %6255 = vmatprep.subr.bf16.mxu0 %v4921
  %6256 = vmatpush1.bf16.msra.mxu0 %v4920
  %6257 = vmatprep.subr.bf16.mxu0 %v4928
  %6258 = vmatpush1.bf16.msra.mxu0 %v4927
  %6259 = vmatprep.subr.bf16.mxu0 %v4935
  %6260 = vmatpush1.bf16.msra.mxu0 %v4934
  %6261 = vmatprep.subr.bf16.mxu0 %v4942
  %6262 = vmatpush1.bf16.msra.mxu0 %v4941
  %6263 = vmatprep.subr.bf16.mxu0 %v4949
  %6264 = vmatpush1.bf16.msra.mxu0 %v4948
  %6265 = vmatprep.subr.bf16.mxu0 %v4956
  %6266 = vmatpush1.bf16.msra.mxu0 %v4955
  %6267 = vmatprep.subr.bf16.mxu0 %v4963
  %6268 = vmatpush1.bf16.msra.mxu0 %v4962
  %6269 = vmatprep.subr.bf16.mxu0 %v4970
  %6270 = vmatpush1.bf16.msra.mxu0 %v4969
  %6271 = vmatprep.mubr.bf16.mxu0 %v1875
  %6272 = vmatmul.mubr.bf16.gmra.mrb[0].mxu0 %v1874
  %v6273 = vpop.f32.mrb[0].mxu0
  %v6274 = vadd.f32 %v2676, %v6273
  %v6275 = vpop.f32.mrb[0].mxu0
  %v6276 = vadd.f32 %v2680, %v6275
  %v6277 = vpop.f32.mrb[0].mxu0
  %v6278 = vpop.f32.mrb[0].mxu0
  %6279 = vdwg.mxu0
  %6280 = vmatprep.subr.bf16.mxu0 %v4977
  %6281 = vmatpush1.bf16.msra.mxu0 %v4976
  %6282 = vmatprep.subr.bf16.mxu0 %v4984
  %6283 = vmatpush1.bf16.msra.mxu0 %v4983
  %6284 = vmatprep.subr.bf16.mxu0 %v4991
  %6285 = vmatpush1.bf16.msra.mxu0 %v4990
  %6286 = vmatprep.subr.bf16.mxu0 %v4998
  %6287 = vmatpush1.bf16.msra.mxu0 %v4997
  %6288 = vmatprep.subr.bf16.mxu0 %v5005
  %6289 = vmatpush1.bf16.msra.mxu0 %v5004
  %6290 = vmatprep.subr.bf16.mxu0 %v5012
  %6291 = vmatpush1.bf16.msra.mxu0 %v5011
  %6292 = vmatprep.subr.bf16.mxu0 %v5019
  %6293 = vmatpush1.bf16.msra.mxu0 %v5018
  %6294 = vmatprep.subr.bf16.mxu0 %v5026
  %6295 = vmatpush1.bf16.msra.mxu0 %v5025
  %6296 = vmatprep.subr.bf16.mxu0 %v5033
  %6297 = vmatpush1.bf16.msra.mxu0 %v5032
  %6298 = vmatprep.subr.bf16.mxu0 %v5040
  %6299 = vmatpush1.bf16.msra.mxu0 %v5039
  %6300 = vmatprep.subr.bf16.mxu0 %v5047
  %6301 = vmatpush1.bf16.msra.mxu0 %v5046
  %6302 = vmatprep.subr.bf16.mxu0 %v5054
  %6303 = vmatpush1.bf16.msra.mxu0 %v5053
  %6304 = vmatprep.subr.bf16.mxu0 %v5061
  %6305 = vmatpush1.bf16.msra.mxu0 %v5060
  %6306 = vmatprep.subr.bf16.mxu0 %v5068
  %6307 = vmatpush1.bf16.msra.mxu0 %v5067
  %6308 = vmatprep.subr.bf16.mxu0 %v5075
  %6309 = vmatpush1.bf16.msra.mxu0 %v5074
  %6310 = vmatprep.subr.bf16.mxu0 %v5082
  %6311 = vmatpush1.bf16.msra.mxu0 %v5081
  %6312 = vmatprep.mubr.bf16.mxu0 %v1877
  %6313 = vmatmul.mubr.bf16.gmra.mrb[0].mxu0 %v1876
  %v6314 = vpop.f32.mrb[0].mxu0
  %v6315 = vadd.f32 %v6274, %v6314
  %v6316 = vpop.f32.mrb[0].mxu0
  %v6317 = vadd.f32 %v6276, %v6316
  %v6318 = vpop.f32.mrb[0].mxu0
  %v6319 = vpop.f32.mrb[0].mxu0
  %6320 = vdwg.mxu0
  %6321 = vmatprep.subr.bf16.mxu0 %v5089
  %6322 = vmatpush1.bf16.msra.mxu0 %v5088
  %6323 = vmatprep.subr.bf16.mxu0 %v5096
  %6324 = vmatpush1.bf16.msra.mxu0 %v5095
  %6325 = vmatprep.subr.bf16.mxu0 %v5103
  %6326 = vmatpush1.bf16.msra.mxu0 %v5102
  %6327 = vmatprep.subr.bf16.mxu0 %v5110
  %6328 = vmatpush1.bf16.msra.mxu0 %v5109
  %6329 = vmatprep.subr.bf16.mxu0 %v5117
  %6330 = vmatpush1.bf16.msra.mxu0 %v5116
  %6331 = vmatprep.subr.bf16.mxu0 %v5124
  %6332 = vmatpush1.bf16.msra.mxu0 %v5123
  %6333 = vmatprep.subr.bf16.mxu0 %v5131
  %6334 = vmatpush1.bf16.msra.mxu0 %v5130
  %6335 = vmatprep.subr.bf16.mxu0 %v5138
  %6336 = vmatpush1.bf16.msra.mxu0 %v5137
  %6337 = vmatprep.subr.bf16.mxu0 %v5145
  %6338 = vmatpush1.bf16.msra.mxu0 %v5144
  %6339 = vmatprep.subr.bf16.mxu0 %v5152
  %6340 = vmatpush1.bf16.msra.mxu0 %v5151
  %6341 = vmatprep.subr.bf16.mxu0 %v5159
  %6342 = vmatpush1.bf16.msra.mxu0 %v5158
  %6343 = vmatprep.subr.bf16.mxu0 %v5166
  %6344 = vmatpush1.bf16.msra.mxu0 %v5165
  %6345 = vmatprep.subr.bf16.mxu0 %v5173
  %6346 = vmatpush1.bf16.msra.mxu0 %v5172
  %6347 = vmatprep.subr.bf16.mxu0 %v5180
  %6348 = vmatpush1.bf16.msra.mxu0 %v5179
  %6349 = vmatprep.subr.bf16.mxu0 %v5187
  %6350 = vmatpush1.bf16.msra.mxu0 %v5186
  %6351 = vmatprep.subr.bf16.mxu0 %v5194
  %6352 = vmatpush1.bf16.msra.mxu0 %v5193
  %6353 = vmatprep.mubr.bf16.mxu0 %v1879
  %6354 = vmatmul.mubr.bf16.gmra.mrb[0].mxu0 %v1878
  %v6355 = vpop.f32.mrb[0].mxu0
  %v6356 = vadd.f32 %v6315, %v6355
  %v6357 = vpop.f32.mrb[0].mxu0
  %v6358 = vadd.f32 %v6317, %v6357
  %v6359 = vpop.f32.mrb[0].mxu0
  %v6360 = vpop.f32.mrb[0].mxu0
  %6361 = vdwg.mxu0
  %6362 = vmatprep.subr.bf16.mxu0 %v5201
  %6363 = vmatpush1.bf16.msra.mxu0 %v5200
  %6364 = vmatprep.subr.bf16.mxu0 %v5208
  %6365 = vmatpush1.bf16.msra.mxu0 %v5207
  %6366 = vmatprep.subr.bf16.mxu0 %v5215
  %6367 = vmatpush1.bf16.msra.mxu0 %v5214
  %6368 = vmatprep.subr.bf16.mxu0 %v5222
  %6369 = vmatpush1.bf16.msra.mxu0 %v5221
  %6370 = vmatprep.subr.bf16.mxu0 %v5229
  %6371 = vmatpush1.bf16.msra.mxu0 %v5228
  %6372 = vmatprep.subr.bf16.mxu0 %v5236
  %6373 = vmatpush1.bf16.msra.mxu0 %v5235
  %6374 = vmatprep.subr.bf16.mxu0 %v5243
  %6375 = vmatpush1.bf16.msra.mxu0 %v5242
  %6376 = vmatprep.subr.bf16.mxu0 %v5250
  %6377 = vmatpush1.bf16.msra.mxu0 %v5249
  %6378 = vmatprep.subr.bf16.mxu0 %v5257
  %6379 = vmatpush1.bf16.msra.mxu0 %v5256
  %6380 = vmatprep.subr.bf16.mxu0 %v5264
  %6381 = vmatpush1.bf16.msra.mxu0 %v5263
  %6382 = vmatprep.subr.bf16.mxu0 %v5271
  %6383 = vmatpush1.bf16.msra.mxu0 %v5270
  %6384 = vmatprep.subr.bf16.mxu0 %v5278
  %6385 = vmatpush1.bf16.msra.mxu0 %v5277
  %6386 = vmatprep.subr.bf16.mxu0 %v5285
  %6387 = vmatpush1.bf16.msra.mxu0 %v5284
  %6388 = vmatprep.subr.bf16.mxu0 %v5292
  %6389 = vmatpush1.bf16.msra.mxu0 %v5291
  %6390 = vmatprep.subr.bf16.mxu0 %v5299
  %6391 = vmatpush1.bf16.msra.mxu0 %v5298
  %6392 = vmatprep.subr.bf16.mxu0 %v5306
  %6393 = vmatpush1.bf16.msra.mxu0 %v5305
  %6394 = vmatprep.mubr.bf16.mxu0 %v1881
  %6395 = vmatmul.mubr.bf16.gmra.mrb[0].mxu0 %v1880
  %v6396 = vpop.f32.mrb[0].mxu0
  %v6397 = vadd.f32 %v6356, %v6396
  %v6398 = vpop.f32.mrb[0].mxu0
  %v6399 = vadd.f32 %v6358, %v6398
  %v6400 = vpop.f32.mrb[0].mxu0
  %v6401 = vpop.f32.mrb[0].mxu0
  %6402 = vdwg.mxu0
  %6403 = vmatprep.subr.bf16.mxu0 %v5313
  %6404 = vmatpush1.bf16.msra.mxu0 %v5312
  %6405 = vmatprep.subr.bf16.mxu0 %v5320
  %6406 = vmatpush1.bf16.msra.mxu0 %v5319
  %6407 = vmatprep.subr.bf16.mxu0 %v5327
  %6408 = vmatpush1.bf16.msra.mxu0 %v5326
  %6409 = vmatprep.subr.bf16.mxu0 %v5334
  %6410 = vmatpush1.bf16.msra.mxu0 %v5333
  %6411 = vmatprep.subr.bf16.mxu0 %v5341
  %6412 = vmatpush1.bf16.msra.mxu0 %v5340
  %6413 = vmatprep.subr.bf16.mxu0 %v5348
  %6414 = vmatpush1.bf16.msra.mxu0 %v5347
  %6415 = vmatprep.subr.bf16.mxu0 %v5355
  %6416 = vmatpush1.bf16.msra.mxu0 %v5354
  %6417 = vmatprep.subr.bf16.mxu0 %v5362
  %6418 = vmatpush1.bf16.msra.mxu0 %v5361
  %6419 = vmatprep.subr.bf16.mxu0 %v5369
  %6420 = vmatpush1.bf16.msra.mxu0 %v5368
  %6421 = vmatprep.subr.bf16.mxu0 %v5376
  %6422 = vmatpush1.bf16.msra.mxu0 %v5375
  %6423 = vmatprep.subr.bf16.mxu0 %v5383
  %6424 = vmatpush1.bf16.msra.mxu0 %v5382
  %6425 = vmatprep.subr.bf16.mxu0 %v5390
  %6426 = vmatpush1.bf16.msra.mxu0 %v5389
  %6427 = vmatprep.subr.bf16.mxu0 %v5397
  %6428 = vmatpush1.bf16.msra.mxu0 %v5396
  %6429 = vmatprep.subr.bf16.mxu0 %v5404
  %6430 = vmatpush1.bf16.msra.mxu0 %v5403
  %6431 = vmatprep.subr.bf16.mxu0 %v5411
  %6432 = vmatpush1.bf16.msra.mxu0 %v5410
  %6433 = vmatprep.subr.bf16.mxu0 %v5418
  %6434 = vmatpush1.bf16.msra.mxu0 %v5417
  %6435 = vmatprep.mubr.bf16.mxu0 %v1883
  %6436 = vmatmul.mubr.bf16.gmra.mrb[0].mxu0 %v1882
  %v6437 = vpop.f32.mrb[0].mxu0
  %v6438 = vadd.f32 %v6397, %v6437
  %v6439 = vpop.f32.mrb[0].mxu0
  %v6440 = vadd.f32 %v6399, %v6439
  %v6441 = vpop.f32.mrb[0].mxu0
  %v6442 = vpop.f32.mrb[0].mxu0
  %6443 = vdwg.mxu0
  %6444 = vmatprep.subr.bf16.mxu0 %v5425
  %6445 = vmatpush1.bf16.msra.mxu0 %v5424
  %6446 = vmatprep.subr.bf16.mxu0 %v5432
  %6447 = vmatpush1.bf16.msra.mxu0 %v5431
  %6448 = vmatprep.subr.bf16.mxu0 %v5439
  %6449 = vmatpush1.bf16.msra.mxu0 %v5438
  %6450 = vmatprep.subr.bf16.mxu0 %v5446
  %6451 = vmatpush1.bf16.msra.mxu0 %v5445
  %6452 = vmatprep.subr.bf16.mxu0 %v5453
  %6453 = vmatpush1.bf16.msra.mxu0 %v5452
  %6454 = vmatprep.subr.bf16.mxu0 %v5460
  %6455 = vmatpush1.bf16.msra.mxu0 %v5459
  %6456 = vmatprep.subr.bf16.mxu0 %v5467
  %6457 = vmatpush1.bf16.msra.mxu0 %v5466
  %6458 = vmatprep.subr.bf16.mxu0 %v5474
  %6459 = vmatpush1.bf16.msra.mxu0 %v5473
  %6460 = vmatprep.subr.bf16.mxu0 %v5481
  %6461 = vmatpush1.bf16.msra.mxu0 %v5480
  %6462 = vmatprep.subr.bf16.mxu0 %v5488
  %6463 = vmatpush1.bf16.msra.mxu0 %v5487
  %6464 = vmatprep.subr.bf16.mxu0 %v5495
  %6465 = vmatpush1.bf16.msra.mxu0 %v5494
  %6466 = vmatprep.subr.bf16.mxu0 %v5502
  %6467 = vmatpush1.bf16.msra.mxu0 %v5501
  %6468 = vmatprep.subr.bf16.mxu0 %v5509
  %6469 = vmatpush1.bf16.msra.mxu0 %v5508
  %6470 = vmatprep.subr.bf16.mxu0 %v5516
  %6471 = vmatpush1.bf16.msra.mxu0 %v5515
  %6472 = vmatprep.subr.bf16.mxu0 %v5523
  %6473 = vmatpush1.bf16.msra.mxu0 %v5522
  %6474 = vmatprep.subr.bf16.mxu0 %v5530
  %6475 = vmatpush1.bf16.msra.mxu0 %v5529
  %6476 = vmatprep.mubr.bf16.mxu0 %v1885
  %6477 = vmatmul.mubr.bf16.gmra.mrb[0].mxu0 %v1884
  %v6478 = vpop.f32.mrb[0].mxu0
  %v6479 = vadd.f32 %v6438, %v6478
  %v6480 = vpop.f32.mrb[0].mxu0
  %v6481 = vadd.f32 %v6440, %v6480
  %v6482 = vpop.f32.mrb[0].mxu0
  %v6483 = vpop.f32.mrb[0].mxu0
  %6484 = vdwg.mxu0
  %6485 = vmatprep.subr.bf16.mxu0 %v5537
  %6486 = vmatpush1.bf16.msra.mxu0 %v5536
  %6487 = vmatprep.subr.bf16.mxu0 %v5544
  %6488 = vmatpush1.bf16.msra.mxu0 %v5543
  %6489 = vmatprep.subr.bf16.mxu0 0
  %6490 = vmatpush1.bf16.msra.mxu0 0
  %6491 = vmatprep.subr.bf16.mxu0 0
  %6492 = vmatpush1.bf16.msra.mxu0 0
  %6493 = vmatprep.subr.bf16.mxu0 0
  %6494 = vmatpush1.bf16.msra.mxu0 0
  %6495 = vmatprep.subr.bf16.mxu0 0
  %6496 = vmatpush1.bf16.msra.mxu0 0
  %6497 = vmatprep.subr.bf16.mxu0 0
  %6498 = vmatpush1.bf16.msra.mxu0 0
  %6499 = vmatprep.subr.bf16.mxu0 0
  %6500 = vmatpush1.bf16.msra.mxu0 0
  %6501 = vmatprep.subr.bf16.mxu0 0
  %6502 = vmatpush1.bf16.msra.mxu0 0
  %6503 = vmatprep.subr.bf16.mxu0 0
  %6504 = vmatpush1.bf16.msra.mxu0 0
  %6505 = vmatprep.subr.bf16.mxu0 0
  %6506 = vmatpush1.bf16.msra.mxu0 0
  %6507 = vmatprep.subr.bf16.mxu0 0
  %6508 = vmatpush1.bf16.msra.mxu0 0
  %6509 = vmatprep.subr.bf16.mxu0 0
  %6510 = vmatpush1.bf16.msra.mxu0 0
  %6511 = vmatprep.subr.bf16.mxu0 0
  %6512 = vmatpush1.bf16.msra.mxu0 0
  %6513 = vmatprep.subr.bf16.mxu0 0
  %6514 = vmatpush1.bf16.msra.mxu0 0
  %6515 = vmatprep.subr.bf16.mxu0 0
  %6516 = vmatpush1.bf16.msra.mxu0 0
  %6517 = vmatprep.mubr.bf16.mxu0 0
  %6518 = vmatmul.mubr.bf16.gmra.mrb[0].mxu0 %v6237
  %v6519 = vpop.f32.mrb[0].mxu0
  %v6520 = vadd.f32 %v6479, %v6519
  %v6521 = vpop.f32.mrb[0].mxu0
  %v6522 = vadd.f32 %v6481, %v6521
  %v6523 = vpop.f32.mrb[0].mxu0
  %v6524 = vpop.f32.mrb[0].mxu0
  %6525 = vdwg.mxu0
  %6526 = vmatprep.subr.bf16.mxu0 %v4867
  %6527 = vmatpush1.bf16.msra.mxu0 %v4866
  %6528 = vmatprep.subr.bf16.mxu0 %v4874
  %6529 = vmatpush1.bf16.msra.mxu0 %v4873
  %6530 = vmatprep.subr.bf16.mxu0 %v4881
  %6531 = vmatpush1.bf16.msra.mxu0 %v4880
  %6532 = vmatprep.subr.bf16.mxu0 %v4888
  %6533 = vmatpush1.bf16.msra.mxu0 %v4887
  %6534 = vmatprep.subr.bf16.mxu0 %v4895
  %6535 = vmatpush1.bf16.msra.mxu0 %v4894
  %6536 = vmatprep.subr.bf16.mxu0 %v4902
  %6537 = vmatpush1.bf16.msra.mxu0 %v4901
  %6538 = vmatprep.subr.bf16.mxu0 %v4909
  %6539 = vmatpush1.bf16.msra.mxu0 %v4908
  %6540 = vmatprep.subr.bf16.mxu0 %v4916
  %6541 = vmatpush1.bf16.msra.mxu0 %v4915
  %6542 = vmatprep.subr.bf16.mxu0 %v4923
  %6543 = vmatpush1.bf16.msra.mxu0 %v4922
  %6544 = vmatprep.subr.bf16.mxu0 %v4930
  %6545 = vmatpush1.bf16.msra.mxu0 %v4929
  %6546 = vmatprep.subr.bf16.mxu0 %v4937
  %6547 = vmatpush1.bf16.msra.mxu0 %v4936
  %6548 = vmatprep.subr.bf16.mxu0 %v4944
  %6549 = vmatpush1.bf16.msra.mxu0 %v4943
  %6550 = vmatprep.subr.bf16.mxu0 %v4951
  %6551 = vmatpush1.bf16.msra.mxu0 %v4950
  %6552 = vmatprep.subr.bf16.mxu0 %v4958
  %6553 = vmatpush1.bf16.msra.mxu0 %v4957
  %6554 = vmatprep.subr.bf16.mxu0 %v4965
  %6555 = vmatpush1.bf16.msra.mxu0 %v4964
  %6556 = vmatprep.subr.bf16.mxu0 %v4972
  %6557 = vmatpush1.bf16.msra.mxu0 %v4971
  %6558 = vmatprep.mubr.bf16.mxu0 %v1875
  %6559 = vmatmul.mubr.bf16.gmra.mrb[0].mxu0 %v1874
  %v6560 = vpop.f32.mrb[0].mxu0
  %v6561 = vadd.f32 %v2684, %v6560
  %v6562 = vpop.f32.mrb[0].mxu0
  %v6563 = vadd.f32 %v2688, %v6562
  %v6564 = vpop.f32.mrb[0].mxu0
  %v6565 = vpop.f32.mrb[0].mxu0
  %6566 = vdwg.mxu0
  %6567 = vmatprep.subr.bf16.mxu0 %v4979
  %6568 = vmatpush1.bf16.msra.mxu0 %v4978
  %6569 = vmatprep.subr.bf16.mxu0 %v4986
  %6570 = vmatpush1.bf16.msra.mxu0 %v4985
  %6571 = vmatprep.subr.bf16.mxu0 %v4993
  %6572 = vmatpush1.bf16.msra.mxu0 %v4992
  %6573 = vmatprep.subr.bf16.mxu0 %v5000
  %6574 = vmatpush1.bf16.msra.mxu0 %v4999
  %6575 = vmatprep.subr.bf16.mxu0 %v5007
  %6576 = vmatpush1.bf16.msra.mxu0 %v5006
  %6577 = vmatprep.subr.bf16.mxu0 %v5014
  %6578 = vmatpush1.bf16.msra.mxu0 %v5013
  %6579 = vmatprep.subr.bf16.mxu0 %v5021
  %6580 = vmatpush1.bf16.msra.mxu0 %v5020
  %6581 = vmatprep.subr.bf16.mxu0 %v5028
  %6582 = vmatpush1.bf16.msra.mxu0 %v5027
  %6583 = vmatprep.subr.bf16.mxu0 %v5035
  %6584 = vmatpush1.bf16.msra.mxu0 %v5034
  %6585 = vmatprep.subr.bf16.mxu0 %v5042
  %6586 = vmatpush1.bf16.msra.mxu0 %v5041
  %6587 = vmatprep.subr.bf16.mxu0 %v5049
  %6588 = vmatpush1.bf16.msra.mxu0 %v5048
  %6589 = vmatprep.subr.bf16.mxu0 %v5056
  %6590 = vmatpush1.bf16.msra.mxu0 %v5055
  %6591 = vmatprep.subr.bf16.mxu0 %v5063
  %6592 = vmatpush1.bf16.msra.mxu0 %v5062
  %6593 = vmatprep.subr.bf16.mxu0 %v5070
  %6594 = vmatpush1.bf16.msra.mxu0 %v5069
  %6595 = vmatprep.subr.bf16.mxu0 %v5077
  %6596 = vmatpush1.bf16.msra.mxu0 %v5076
  %6597 = vmatprep.subr.bf16.mxu0 %v5084
  %6598 = vmatpush1.bf16.msra.mxu0 %v5083
  %6599 = vmatprep.mubr.bf16.mxu0 %v1877
  %6600 = vmatmul.mubr.bf16.gmra.mrb[0].mxu0 %v1876
  %v6601 = vpop.f32.mrb[0].mxu0
  %v6602 = vadd.f32 %v6561, %v6601
  %v6603 = vpop.f32.mrb[0].mxu0
  %v6604 = vadd.f32 %v6563, %v6603
  %v6605 = vpop.f32.mrb[0].mxu0
  %v6606 = vpop.f32.mrb[0].mxu0
  %6607 = vdwg.mxu0
  %6608 = vmatprep.subr.bf16.mxu0 %v5091
  %6609 = vmatpush1.bf16.msra.mxu0 %v5090
  %6610 = vmatprep.subr.bf16.mxu0 %v5098
  %6611 = vmatpush1.bf16.msra.mxu0 %v5097
  %6612 = vmatprep.subr.bf16.mxu0 %v5105
  %6613 = vmatpush1.bf16.msra.mxu0 %v5104
  %6614 = vmatprep.subr.bf16.mxu0 %v5112
  %6615 = vmatpush1.bf16.msra.mxu0 %v5111
  %6616 = vmatprep.subr.bf16.mxu0 %v5119
  %6617 = vmatpush1.bf16.msra.mxu0 %v5118
  %6618 = vmatprep.subr.bf16.mxu0 %v5126
  %6619 = vmatpush1.bf16.msra.mxu0 %v5125
  %6620 = vmatprep.subr.bf16.mxu0 %v5133
  %6621 = vmatpush1.bf16.msra.mxu0 %v5132
  %6622 = vmatprep.subr.bf16.mxu0 %v5140
  %6623 = vmatpush1.bf16.msra.mxu0 %v5139
  %6624 = vmatprep.subr.bf16.mxu0 %v5147
  %6625 = vmatpush1.bf16.msra.mxu0 %v5146
  %6626 = vmatprep.subr.bf16.mxu0 %v5154
  %6627 = vmatpush1.bf16.msra.mxu0 %v5153
  %6628 = vmatprep.subr.bf16.mxu0 %v5161
  %6629 = vmatpush1.bf16.msra.mxu0 %v5160
  %6630 = vmatprep.subr.bf16.mxu0 %v5168
  %6631 = vmatpush1.bf16.msra.mxu0 %v5167
  %6632 = vmatprep.subr.bf16.mxu0 %v5175
  %6633 = vmatpush1.bf16.msra.mxu0 %v5174
  %6634 = vmatprep.subr.bf16.mxu0 %v5182
  %6635 = vmatpush1.bf16.msra.mxu0 %v5181
  %6636 = vmatprep.subr.bf16.mxu0 %v5189
  %6637 = vmatpush1.bf16.msra.mxu0 %v5188
  %6638 = vmatprep.subr.bf16.mxu0 %v5196
  %6639 = vmatpush1.bf16.msra.mxu0 %v5195
  %6640 = vmatprep.mubr.bf16.mxu0 %v1879
  %6641 = vmatmul.mubr.bf16.gmra.mrb[0].mxu0 %v1878
  %v6642 = vpop.f32.mrb[0].mxu0
  %v6643 = vadd.f32 %v6602, %v6642
  %v6644 = vpop.f32.mrb[0].mxu0
  %v6645 = vadd.f32 %v6604, %v6644
  %v6646 = vpop.f32.mrb[0].mxu0
  %v6647 = vpop.f32.mrb[0].mxu0
  %6648 = vdwg.mxu0
  %6649 = vmatprep.subr.bf16.mxu0 %v5203
  %6650 = vmatpush1.bf16.msra.mxu0 %v5202
  %6651 = vmatprep.subr.bf16.mxu0 %v5210
  %6652 = vmatpush1.bf16.msra.mxu0 %v5209
  %6653 = vmatprep.subr.bf16.mxu0 %v5217
  %6654 = vmatpush1.bf16.msra.mxu0 %v5216
  %6655 = vmatprep.subr.bf16.mxu0 %v5224
  %6656 = vmatpush1.bf16.msra.mxu0 %v5223
  %6657 = vmatprep.subr.bf16.mxu0 %v5231
  %6658 = vmatpush1.bf16.msra.mxu0 %v5230
  %6659 = vmatprep.subr.bf16.mxu0 %v5238
  %6660 = vmatpush1.bf16.msra.mxu0 %v5237
  %6661 = vmatprep.subr.bf16.mxu0 %v5245
  %6662 = vmatpush1.bf16.msra.mxu0 %v5244
  %6663 = vmatprep.subr.bf16.mxu0 %v5252
  %6664 = vmatpush1.bf16.msra.mxu0 %v5251
  %6665 = vmatprep.subr.bf16.mxu0 %v5259
  %6666 = vmatpush1.bf16.msra.mxu0 %v5258
  %6667 = vmatprep.subr.bf16.mxu0 %v5266
  %6668 = vmatpush1.bf16.msra.mxu0 %v5265
  %6669 = vmatprep.subr.bf16.mxu0 %v5273
  %6670 = vmatpush1.bf16.msra.mxu0 %v5272
  %6671 = vmatprep.subr.bf16.mxu0 %v5280
  %6672 = vmatpush1.bf16.msra.mxu0 %v5279
  %6673 = vmatprep.subr.bf16.mxu0 %v5287
  %6674 = vmatpush1.bf16.msra.mxu0 %v5286
  %6675 = vmatprep.subr.bf16.mxu0 %v5294
  %6676 = vmatpush1.bf16.msra.mxu0 %v5293
  %6677 = vmatprep.subr.bf16.mxu0 %v5301
  %6678 = vmatpush1.bf16.msra.mxu0 %v5300
  %6679 = vmatprep.subr.bf16.mxu0 %v5308
  %6680 = vmatpush1.bf16.msra.mxu0 %v5307
  %6681 = vmatprep.mubr.bf16.mxu0 %v1881
  %6682 = vmatmul.mubr.bf16.gmra.mrb[0].mxu0 %v1880
  %v6683 = vpop.f32.mrb[0].mxu0
  %v6684 = vadd.f32 %v6643, %v6683
  %v6685 = vpop.f32.mrb[0].mxu0
  %v6686 = vadd.f32 %v6645, %v6685
  %v6687 = vpop.f32.mrb[0].mxu0
  %v6688 = vpop.f32.mrb[0].mxu0
  %6689 = vdwg.mxu0
  %6690 = vmatprep.subr.bf16.mxu0 %v5315
  %6691 = vmatpush1.bf16.msra.mxu0 %v5314
  %6692 = vmatprep.subr.bf16.mxu0 %v5322
  %6693 = vmatpush1.bf16.msra.mxu0 %v5321
  %6694 = vmatprep.subr.bf16.mxu0 %v5329
  %6695 = vmatpush1.bf16.msra.mxu0 %v5328
  %6696 = vmatprep.subr.bf16.mxu0 %v5336
  %6697 = vmatpush1.bf16.msra.mxu0 %v5335
  %6698 = vmatprep.subr.bf16.mxu0 %v5343
  %6699 = vmatpush1.bf16.msra.mxu0 %v5342
  %6700 = vmatprep.subr.bf16.mxu0 %v5350
  %6701 = vmatpush1.bf16.msra.mxu0 %v5349
  %6702 = vmatprep.subr.bf16.mxu0 %v5357
  %6703 = vmatpush1.bf16.msra.mxu0 %v5356
  %6704 = vmatprep.subr.bf16.mxu0 %v5364
  %6705 = vmatpush1.bf16.msra.mxu0 %v5363
  %6706 = vmatprep.subr.bf16.mxu0 %v5371
  %6707 = vmatpush1.bf16.msra.mxu0 %v5370
  %6708 = vmatprep.subr.bf16.mxu0 %v5378
  %6709 = vmatpush1.bf16.msra.mxu0 %v5377
  %6710 = vmatprep.subr.bf16.mxu0 %v5385
  %6711 = vmatpush1.bf16.msra.mxu0 %v5384
  %6712 = vmatprep.subr.bf16.mxu0 %v5392
  %6713 = vmatpush1.bf16.msra.mxu0 %v5391
  %6714 = vmatprep.subr.bf16.mxu0 %v5399
  %6715 = vmatpush1.bf16.msra.mxu0 %v5398
  %6716 = vmatprep.subr.bf16.mxu0 %v5406
  %6717 = vmatpush1.bf16.msra.mxu0 %v5405
  %6718 = vmatprep.subr.bf16.mxu0 %v5413
  %6719 = vmatpush1.bf16.msra.mxu0 %v5412
  %6720 = vmatprep.subr.bf16.mxu0 %v5420
  %6721 = vmatpush1.bf16.msra.mxu0 %v5419
  %6722 = vmatprep.mubr.bf16.mxu0 %v1883
  %6723 = vmatmul.mubr.bf16.gmra.mrb[0].mxu0 %v1882
  %v6724 = vpop.f32.mrb[0].mxu0
  %v6725 = vadd.f32 %v6684, %v6724
  %v6726 = vpop.f32.mrb[0].mxu0
  %v6727 = vadd.f32 %v6686, %v6726
  %v6728 = vpop.f32.mrb[0].mxu0
  %v6729 = vpop.f32.mrb[0].mxu0
  %6730 = vdwg.mxu0
  %6731 = vmatprep.subr.bf16.mxu0 %v5427
  %6732 = vmatpush1.bf16.msra.mxu0 %v5426
  %6733 = vmatprep.subr.bf16.mxu0 %v5434
  %6734 = vmatpush1.bf16.msra.mxu0 %v5433
  %6735 = vmatprep.subr.bf16.mxu0 %v5441
  %6736 = vmatpush1.bf16.msra.mxu0 %v5440
  %6737 = vmatprep.subr.bf16.mxu0 %v5448
  %6738 = vmatpush1.bf16.msra.mxu0 %v5447
  %6739 = vmatprep.subr.bf16.mxu0 %v5455
  %6740 = vmatpush1.bf16.msra.mxu0 %v5454
  %6741 = vmatprep.subr.bf16.mxu0 %v5462
  %6742 = vmatpush1.bf16.msra.mxu0 %v5461
  %6743 = vmatprep.subr.bf16.mxu0 %v5469
  %6744 = vmatpush1.bf16.msra.mxu0 %v5468
  %6745 = vmatprep.subr.bf16.mxu0 %v5476
  %6746 = vmatpush1.bf16.msra.mxu0 %v5475
  %6747 = vmatprep.subr.bf16.mxu0 %v5483
  %6748 = vmatpush1.bf16.msra.mxu0 %v5482
  %6749 = vmatprep.subr.bf16.mxu0 %v5490
  %6750 = vmatpush1.bf16.msra.mxu0 %v5489
  %6751 = vmatprep.subr.bf16.mxu0 %v5497
  %6752 = vmatpush1.bf16.msra.mxu0 %v5496
  %6753 = vmatprep.subr.bf16.mxu0 %v5504
  %6754 = vmatpush1.bf16.msra.mxu0 %v5503
  %6755 = vmatprep.subr.bf16.mxu0 %v5511
  %6756 = vmatpush1.bf16.msra.mxu0 %v5510
  %6757 = vmatprep.subr.bf16.mxu0 %v5518
  %6758 = vmatpush1.bf16.msra.mxu0 %v5517
  %6759 = vmatprep.subr.bf16.mxu0 %v5525
  %6760 = vmatpush1.bf16.msra.mxu0 %v5524
  %6761 = vmatprep.subr.bf16.mxu0 %v5532
  %6762 = vmatpush1.bf16.msra.mxu0 %v5531
  %6763 = vmatprep.mubr.bf16.mxu0 %v1885
  %6764 = vmatmul.mubr.bf16.gmra.mrb[0].mxu0 %v1884
  %v6765 = vpop.f32.mrb[0].mxu0
  %v6766 = vadd.f32 %v6725, %v6765
  %v6767 = vpop.f32.mrb[0].mxu0
  %v6768 = vadd.f32 %v6727, %v6767
  %v6769 = vpop.f32.mrb[0].mxu0
  %v6770 = vpop.f32.mrb[0].mxu0
  %6771 = vdwg.mxu0
  %6772 = vmatprep.subr.bf16.mxu0 %v5539
  %6773 = vmatpush1.bf16.msra.mxu0 %v5538
  %6774 = vmatprep.subr.bf16.mxu0 %v5546
  %6775 = vmatpush1.bf16.msra.mxu0 %v5545
  %6776 = vmatprep.subr.bf16.mxu0 0
  %6777 = vmatpush1.bf16.msra.mxu0 0
  %6778 = vmatprep.subr.bf16.mxu0 0
  %6779 = vmatpush1.bf16.msra.mxu0 0
  %6780 = vmatprep.subr.bf16.mxu0 0
  %6781 = vmatpush1.bf16.msra.mxu0 0
  %6782 = vmatprep.subr.bf16.mxu0 0
  %6783 = vmatpush1.bf16.msra.mxu0 0
  %6784 = vmatprep.subr.bf16.mxu0 0
  %6785 = vmatpush1.bf16.msra.mxu0 0
  %6786 = vmatprep.subr.bf16.mxu0 0
  %6787 = vmatpush1.bf16.msra.mxu0 0
  %6788 = vmatprep.subr.bf16.mxu0 0
  %6789 = vmatpush1.bf16.msra.mxu0 0
  %6790 = vmatprep.subr.bf16.mxu0 0
  %6791 = vmatpush1.bf16.msra.mxu0 0
  %6792 = vmatprep.subr.bf16.mxu0 0
  %6793 = vmatpush1.bf16.msra.mxu0 0
  %6794 = vmatprep.subr.bf16.mxu0 0
  %6795 = vmatpush1.bf16.msra.mxu0 0
  %6796 = vmatprep.subr.bf16.mxu0 0
  %6797 = vmatpush1.bf16.msra.mxu0 0
  %6798 = vmatprep.subr.bf16.mxu0 0
  %6799 = vmatpush1.bf16.msra.mxu0 0
  %6800 = vmatprep.subr.bf16.mxu0 0
  %6801 = vmatpush1.bf16.msra.mxu0 0
  %6802 = vmatprep.subr.bf16.mxu0 0
  %6803 = vmatpush1.bf16.msra.mxu0 0
  %6804 = vmatprep.mubr.bf16.mxu0 0
  %6805 = vmatmul.mubr.bf16.gmra.mrb[0].mxu0 %v6237
  %v6806 = vpop.f32.mrb[0].mxu0
  %v6807 = vadd.f32 %v6766, %v6806
  %v6808 = vpop.f32.mrb[0].mxu0
  %v6809 = vadd.f32 %v6768, %v6808
  %v6810 = vpop.f32.mrb[0].mxu0
  %v6811 = vpop.f32.mrb[0].mxu0
  %6812 = vdwg.mxu0
  %6813 = vmatprep.subr.bf16.mxu0 %v4869
  %6814 = vmatpush1.bf16.msra.mxu0 %v4868
  %6815 = vmatprep.subr.bf16.mxu0 %v4876
  %6816 = vmatpush1.bf16.msra.mxu0 %v4875
  %6817 = vmatprep.subr.bf16.mxu0 %v4883
  %6818 = vmatpush1.bf16.msra.mxu0 %v4882
  %6819 = vmatprep.subr.bf16.mxu0 %v4890
  %6820 = vmatpush1.bf16.msra.mxu0 %v4889
  %6821 = vmatprep.subr.bf16.mxu0 %v4897
  %6822 = vmatpush1.bf16.msra.mxu0 %v4896
  %6823 = vmatprep.subr.bf16.mxu0 %v4904
  %6824 = vmatpush1.bf16.msra.mxu0 %v4903
  %6825 = vmatprep.subr.bf16.mxu0 %v4911
  %6826 = vmatpush1.bf16.msra.mxu0 %v4910
  %6827 = vmatprep.subr.bf16.mxu0 %v4918
  %6828 = vmatpush1.bf16.msra.mxu0 %v4917
  %6829 = vmatprep.subr.bf16.mxu0 %v4925
  %6830 = vmatpush1.bf16.msra.mxu0 %v4924
  %6831 = vmatprep.subr.bf16.mxu0 %v4932
  %6832 = vmatpush1.bf16.msra.mxu0 %v4931
  %6833 = vmatprep.subr.bf16.mxu0 %v4939
  %6834 = vmatpush1.bf16.msra.mxu0 %v4938
  %6835 = vmatprep.subr.bf16.mxu0 %v4946
  %6836 = vmatpush1.bf16.msra.mxu0 %v4945
  %6837 = vmatprep.subr.bf16.mxu0 %v4953
  %6838 = vmatpush1.bf16.msra.mxu0 %v4952
  %6839 = vmatprep.subr.bf16.mxu0 %v4960
  %6840 = vmatpush1.bf16.msra.mxu0 %v4959
  %6841 = vmatprep.subr.bf16.mxu0 %v4967
  %6842 = vmatpush1.bf16.msra.mxu0 %v4966
  %6843 = vmatprep.subr.bf16.mxu0 %v4974
  %6844 = vmatpush1.bf16.msra.mxu0 %v4973
  %6845 = vmatprep.mubr.bf16.mxu0 %v1875
  %6846 = vmatmul.mubr.bf16.gmra.mrb[0].mxu0 %v1874
  %v6847 = vpop.f32.mrb[0].mxu0
  %v6848 = vadd.f32 %v2692, %v6847
  %v6849 = vpop.f32.mrb[0].mxu0
  %v6850 = vadd.f32 %v2696, %v6849
  %v6851 = vpop.f32.mrb[0].mxu0
  %v6852 = vpop.f32.mrb[0].mxu0
  %6853 = vdwg.mxu0
  %6854 = vmatprep.subr.bf16.mxu0 %v4981
  %6855 = vmatpush1.bf16.msra.mxu0 %v4980
  %6856 = vmatprep.subr.bf16.mxu0 %v4988
  %6857 = vmatpush1.bf16.msra.mxu0 %v4987
  %6858 = vmatprep.subr.bf16.mxu0 %v4995
  %6859 = vmatpush1.bf16.msra.mxu0 %v4994
  %6860 = vmatprep.subr.bf16.mxu0 %v5002
  %6861 = vmatpush1.bf16.msra.mxu0 %v5001
  %6862 = vmatprep.subr.bf16.mxu0 %v5009
  %6863 = vmatpush1.bf16.msra.mxu0 %v5008
  %6864 = vmatprep.subr.bf16.mxu0 %v5016
  %6865 = vmatpush1.bf16.msra.mxu0 %v5015
  %6866 = vmatprep.subr.bf16.mxu0 %v5023
  %6867 = vmatpush1.bf16.msra.mxu0 %v5022
  %6868 = vmatprep.subr.bf16.mxu0 %v5030
  %6869 = vmatpush1.bf16.msra.mxu0 %v5029
  %6870 = vmatprep.subr.bf16.mxu0 %v5037
  %6871 = vmatpush1.bf16.msra.mxu0 %v5036
  %6872 = vmatprep.subr.bf16.mxu0 %v5044
  %6873 = vmatpush1.bf16.msra.mxu0 %v5043
  %6874 = vmatprep.subr.bf16.mxu0 %v5051
  %6875 = vmatpush1.bf16.msra.mxu0 %v5050
  %6876 = vmatprep.subr.bf16.mxu0 %v5058
  %6877 = vmatpush1.bf16.msra.mxu0 %v5057
  %6878 = vmatprep.subr.bf16.mxu0 %v5065
  %6879 = vmatpush1.bf16.msra.mxu0 %v5064
  %6880 = vmatprep.subr.bf16.mxu0 %v5072
  %6881 = vmatpush1.bf16.msra.mxu0 %v5071
  %6882 = vmatprep.subr.bf16.mxu0 %v5079
  %6883 = vmatpush1.bf16.msra.mxu0 %v5078
  %6884 = vmatprep.subr.bf16.mxu0 %v5086
  %6885 = vmatpush1.bf16.msra.mxu0 %v5085
  %6886 = vmatprep.mubr.bf16.mxu0 %v1877
  %6887 = vmatmul.mubr.bf16.gmra.mrb[0].mxu0 %v1876
  %v6888 = vpop.f32.mrb[0].mxu0
  %v6889 = vadd.f32 %v6848, %v6888
  %v6890 = vpop.f32.mrb[0].mxu0
  %v6891 = vadd.f32 %v6850, %v6890
  %v6892 = vpop.f32.mrb[0].mxu0
  %v6893 = vpop.f32.mrb[0].mxu0
  %6894 = vdwg.mxu0
  %6895 = vmatprep.subr.bf16.mxu0 %v5093
  %6896 = vmatpush1.bf16.msra.mxu0 %v5092
  %6897 = vmatprep.subr.bf16.mxu0 %v5100
  %6898 = vmatpush1.bf16.msra.mxu0 %v5099
  %6899 = vmatprep.subr.bf16.mxu0 %v5107
  %6900 = vmatpush1.bf16.msra.mxu0 %v5106
  %6901 = vmatprep.subr.bf16.mxu0 %v5114
  %6902 = vmatpush1.bf16.msra.mxu0 %v5113
  %6903 = vmatprep.subr.bf16.mxu0 %v5121
  %6904 = vmatpush1.bf16.msra.mxu0 %v5120
  %6905 = vmatprep.subr.bf16.mxu0 %v5128
  %6906 = vmatpush1.bf16.msra.mxu0 %v5127
  %6907 = vmatprep.subr.bf16.mxu0 %v5135
  %6908 = vmatpush1.bf16.msra.mxu0 %v5134
  %6909 = vmatprep.subr.bf16.mxu0 %v5142
  %6910 = vmatpush1.bf16.msra.mxu0 %v5141
  %6911 = vmatprep.subr.bf16.mxu0 %v5149
  %6912 = vmatpush1.bf16.msra.mxu0 %v5148
  %6913 = vmatprep.subr.bf16.mxu0 %v5156
  %6914 = vmatpush1.bf16.msra.mxu0 %v5155
  %6915 = vmatprep.subr.bf16.mxu0 %v5163
  %6916 = vmatpush1.bf16.msra.mxu0 %v5162
  %6917 = vmatprep.subr.bf16.mxu0 %v5170
  %6918 = vmatpush1.bf16.msra.mxu0 %v5169
  %6919 = vmatprep.subr.bf16.mxu0 %v5177
  %6920 = vmatpush1.bf16.msra.mxu0 %v5176
  %6921 = vmatprep.subr.bf16.mxu0 %v5184
  %6922 = vmatpush1.bf16.msra.mxu0 %v5183
  %6923 = vmatprep.subr.bf16.mxu0 %v5191
  %6924 = vmatpush1.bf16.msra.mxu0 %v5190
  %6925 = vmatprep.subr.bf16.mxu0 %v5198
  %6926 = vmatpush1.bf16.msra.mxu0 %v5197
  %6927 = vmatprep.mubr.bf16.mxu0 %v1879
  %6928 = vmatmul.mubr.bf16.gmra.mrb[0].mxu0 %v1878
  %v6929 = vpop.f32.mrb[0].mxu0
  %v6930 = vadd.f32 %v6889, %v6929
  %v6931 = vpop.f32.mrb[0].mxu0
  %v6932 = vadd.f32 %v6891, %v6931
  %v6933 = vpop.f32.mrb[0].mxu0
  %v6934 = vpop.f32.mrb[0].mxu0
  %6935 = vdwg.mxu0
  %6936 = vmatprep.subr.bf16.mxu0 %v5205
  %6937 = vmatpush1.bf16.msra.mxu0 %v5204
  %6938 = vmatprep.subr.bf16.mxu0 %v5212
  %6939 = vmatpush1.bf16.msra.mxu0 %v5211
  %6940 = vmatprep.subr.bf16.mxu0 %v5219
  %6941 = vmatpush1.bf16.msra.mxu0 %v5218
  %6942 = vmatprep.subr.bf16.mxu0 %v5226
  %6943 = vmatpush1.bf16.msra.mxu0 %v5225
  %6944 = vmatprep.subr.bf16.mxu0 %v5233
  %6945 = vmatpush1.bf16.msra.mxu0 %v5232
  %6946 = vmatprep.subr.bf16.mxu0 %v5240
  %6947 = vmatpush1.bf16.msra.mxu0 %v5239
  %6948 = vmatprep.subr.bf16.mxu0 %v5247
  %6949 = vmatpush1.bf16.msra.mxu0 %v5246
  %6950 = vmatprep.subr.bf16.mxu0 %v5254
  %6951 = vmatpush1.bf16.msra.mxu0 %v5253
  %6952 = vmatprep.subr.bf16.mxu0 %v5261
  %6953 = vmatpush1.bf16.msra.mxu0 %v5260
  %6954 = vmatprep.subr.bf16.mxu0 %v5268
  %6955 = vmatpush1.bf16.msra.mxu0 %v5267
  %6956 = vmatprep.subr.bf16.mxu0 %v5275
  %6957 = vmatpush1.bf16.msra.mxu0 %v5274
  %6958 = vmatprep.subr.bf16.mxu0 %v5282
  %6959 = vmatpush1.bf16.msra.mxu0 %v5281
  %6960 = vmatprep.subr.bf16.mxu0 %v5289
  %6961 = vmatpush1.bf16.msra.mxu0 %v5288
  %6962 = vmatprep.subr.bf16.mxu0 %v5296
  %6963 = vmatpush1.bf16.msra.mxu0 %v5295
  %6964 = vmatprep.subr.bf16.mxu0 %v5303
  %6965 = vmatpush1.bf16.msra.mxu0 %v5302
  %6966 = vmatprep.subr.bf16.mxu0 %v5310
  %6967 = vmatpush1.bf16.msra.mxu0 %v5309
  %6968 = vmatprep.mubr.bf16.mxu0 %v1881
  %6969 = vmatmul.mubr.bf16.gmra.mrb[0].mxu0 %v1880
  %v6970 = vpop.f32.mrb[0].mxu0
  %v6971 = vadd.f32 %v6930, %v6970
  %v6972 = vpop.f32.mrb[0].mxu0
  %v6973 = vadd.f32 %v6932, %v6972
  %v6974 = vpop.f32.mrb[0].mxu0
  %v6975 = vpop.f32.mrb[0].mxu0
  %6976 = vdwg.mxu0
  %6977 = vmatprep.subr.bf16.mxu0 %v5317
  %6978 = vmatpush1.bf16.msra.mxu0 %v5316
  %6979 = vmatprep.subr.bf16.mxu0 %v5324
  %6980 = vmatpush1.bf16.msra.mxu0 %v5323
  %6981 = vmatprep.subr.bf16.mxu0 %v5331
  %6982 = vmatpush1.bf16.msra.mxu0 %v5330
  %6983 = vmatprep.subr.bf16.mxu0 %v5338
  %6984 = vmatpush1.bf16.msra.mxu0 %v5337
  %6985 = vmatprep.subr.bf16.mxu0 %v5345
  %6986 = vmatpush1.bf16.msra.mxu0 %v5344
  %6987 = vmatprep.subr.bf16.mxu0 %v5352
  %6988 = vmatpush1.bf16.msra.mxu0 %v5351
  %6989 = vmatprep.subr.bf16.mxu0 %v5359
  %6990 = vmatpush1.bf16.msra.mxu0 %v5358
  %6991 = vmatprep.subr.bf16.mxu0 %v5366
  %6992 = vmatpush1.bf16.msra.mxu0 %v5365
  %6993 = vmatprep.subr.bf16.mxu0 %v5373
  %6994 = vmatpush1.bf16.msra.mxu0 %v5372
  %6995 = vmatprep.subr.bf16.mxu0 %v5380
  %6996 = vmatpush1.bf16.msra.mxu0 %v5379
  %6997 = vmatprep.subr.bf16.mxu0 %v5387
  %6998 = vmatpush1.bf16.msra.mxu0 %v5386
  %6999 = vmatprep.subr.bf16.mxu0 %v5394
  %7000 = vmatpush1.bf16.msra.mxu0 %v5393
  %7001 = vmatprep.subr.bf16.mxu0 %v5401
  %7002 = vmatpush1.bf16.msra.mxu0 %v5400
  %7003 = vmatprep.subr.bf16.mxu0 %v5408
  %7004 = vmatpush1.bf16.msra.mxu0 %v5407
  %7005 = vmatprep.subr.bf16.mxu0 %v5415
  %7006 = vmatpush1.bf16.msra.mxu0 %v5414
  %7007 = vmatprep.subr.bf16.mxu0 %v5422
  %7008 = vmatpush1.bf16.msra.mxu0 %v5421
  %7009 = vmatprep.mubr.bf16.mxu0 %v1883
  %7010 = vmatmul.mubr.bf16.gmra.mrb[0].mxu0 %v1882
  %v7011 = vpop.f32.mrb[0].mxu0
  %v7012 = vadd.f32 %v6971, %v7011
  %v7013 = vpop.f32.mrb[0].mxu0
  %v7014 = vadd.f32 %v6973, %v7013
  %v7015 = vpop.f32.mrb[0].mxu0
  %v7016 = vpop.f32.mrb[0].mxu0
  %7017 = vdwg.mxu0
  %7018 = vmatprep.subr.bf16.mxu0 %v5429
  %7019 = vmatpush1.bf16.msra.mxu0 %v5428
  %7020 = vmatprep.subr.bf16.mxu0 %v5436
  %7021 = vmatpush1.bf16.msra.mxu0 %v5435
  %7022 = vmatprep.subr.bf16.mxu0 %v5443
  %7023 = vmatpush1.bf16.msra.mxu0 %v5442
  %7024 = vmatprep.subr.bf16.mxu0 %v5450
  %7025 = vmatpush1.bf16.msra.mxu0 %v5449
  %7026 = vmatprep.subr.bf16.mxu0 %v5457
  %7027 = vmatpush1.bf16.msra.mxu0 %v5456
  %7028 = vmatprep.subr.bf16.mxu0 %v5464
  %7029 = vmatpush1.bf16.msra.mxu0 %v5463
  %7030 = vmatprep.subr.bf16.mxu0 %v5471
  %7031 = vmatpush1.bf16.msra.mxu0 %v5470
  %7032 = vmatprep.subr.bf16.mxu0 %v5478
  %7033 = vmatpush1.bf16.msra.mxu0 %v5477
  %7034 = vmatprep.subr.bf16.mxu0 %v5485
  %7035 = vmatpush1.bf16.msra.mxu0 %v5484
  %7036 = vmatprep.subr.bf16.mxu0 %v5492
  %7037 = vmatpush1.bf16.msra.mxu0 %v5491
  %7038 = vmatprep.subr.bf16.mxu0 %v5499
  %7039 = vmatpush1.bf16.msra.mxu0 %v5498
  %7040 = vmatprep.subr.bf16.mxu0 %v5506
  %7041 = vmatpush1.bf16.msra.mxu0 %v5505
  %7042 = vmatprep.subr.bf16.mxu0 %v5513
  %7043 = vmatpush1.bf16.msra.mxu0 %v5512
  %7044 = vmatprep.subr.bf16.mxu0 %v5520
  %7045 = vmatpush1.bf16.msra.mxu0 %v5519
  %7046 = vmatprep.subr.bf16.mxu0 %v5527
  %7047 = vmatpush1.bf16.msra.mxu0 %v5526
  %7048 = vmatprep.subr.bf16.mxu0 %v5534
  %7049 = vmatpush1.bf16.msra.mxu0 %v5533
  %7050 = vmatprep.mubr.bf16.mxu0 %v1885
  %7051 = vmatmul.mubr.bf16.gmra.mrb[0].mxu0 %v1884
  %v7052 = vpop.f32.mrb[0].mxu0
  %v7053 = vadd.f32 %v7012, %v7052
  %v7054 = vpop.f32.mrb[0].mxu0
  %v7055 = vadd.f32 %v7014, %v7054
  %v7056 = vpop.f32.mrb[0].mxu0
  %v7057 = vpop.f32.mrb[0].mxu0
  %7058 = vdwg.mxu0
  %7059 = vmatprep.subr.bf16.mxu0 %v5541
  %7060 = vmatpush1.bf16.msra.mxu0 %v5540
  %7061 = vmatprep.subr.bf16.mxu0 %v5548
  %7062 = vmatpush1.bf16.msra.mxu0 %v5547
  %7063 = vmatprep.subr.bf16.mxu0 0
  %7064 = vmatpush1.bf16.msra.mxu0 0
  %7065 = vmatprep.subr.bf16.mxu0 0
  %7066 = vmatpush1.bf16.msra.mxu0 0
  %7067 = vmatprep.subr.bf16.mxu0 0
  %7068 = vmatpush1.bf16.msra.mxu0 0
  %7069 = vmatprep.subr.bf16.mxu0 0
  %7070 = vmatpush1.bf16.msra.mxu0 0
  %7071 = vmatprep.subr.bf16.mxu0 0
  %7072 = vmatpush1.bf16.msra.mxu0 0
  %7073 = vmatprep.subr.bf16.mxu0 0
  %7074 = vmatpush1.bf16.msra.mxu0 0
  %7075 = vmatprep.subr.bf16.mxu0 0
  %7076 = vmatpush1.bf16.msra.mxu0 0
  %7077 = vmatprep.subr.bf16.mxu0 0
  %7078 = vmatpush1.bf16.msra.mxu0 0
  %7079 = vmatprep.subr.bf16.mxu0 0
  %7080 = vmatpush1.bf16.msra.mxu0 0
  %7081 = vmatprep.subr.bf16.mxu0 0
  %7082 = vmatpush1.bf16.msra.mxu0 0
  %7083 = vmatprep.subr.bf16.mxu0 0
  %7084 = vmatpush1.bf16.msra.mxu0 0
  %7085 = vmatprep.subr.bf16.mxu0 0
  %7086 = vmatpush1.bf16.msra.mxu0 0
  %7087 = vmatprep.subr.bf16.mxu0 0
  %7088 = vmatpush1.bf16.msra.mxu0 0
  %7089 = vmatprep.subr.bf16.mxu0 0
  %7090 = vmatpush1.bf16.msra.mxu0 0
  %7091 = vmatprep.mubr.bf16.mxu0 0
  %7092 = vmatmul.mubr.bf16.gmra.mrb[0].mxu0 %v6237
  %v7093 = vpop.f32.mrb[0].mxu0
  %v7094 = vadd.f32 %v7053, %v7093
  %v7095 = vpop.f32.mrb[0].mxu0
  %v7096 = vadd.f32 %v7055, %v7095
  %v7097 = vpop.f32.mrb[0].mxu0
  %v7098 = vpop.f32.mrb[0].mxu0
  %7099 = vdwg.mxu0
  %7100 = vmatprep.subr.bf16.mxu0 0
  %7101 = vmatpush1.bf16.msra.mxu0 %v4870
  %7102 = vmatprep.subr.bf16.mxu0 0
  %7103 = vmatpush1.bf16.msra.mxu0 %v4877
  %7104 = vmatprep.subr.bf16.mxu0 0
  %7105 = vmatpush1.bf16.msra.mxu0 %v4884
  %7106 = vmatprep.subr.bf16.mxu0 0
  %7107 = vmatpush1.bf16.msra.mxu0 %v4891
  %7108 = vmatprep.subr.bf16.mxu0 0
  %7109 = vmatpush1.bf16.msra.mxu0 %v4898
  %7110 = vmatprep.subr.bf16.mxu0 0
  %7111 = vmatpush1.bf16.msra.mxu0 %v4905
  %7112 = vmatprep.subr.bf16.mxu0 0
  %7113 = vmatpush1.bf16.msra.mxu0 %v4912
  %7114 = vmatprep.subr.bf16.mxu0 0
  %7115 = vmatpush1.bf16.msra.mxu0 %v4919
  %7116 = vmatprep.subr.bf16.mxu0 0
  %7117 = vmatpush1.bf16.msra.mxu0 %v4926
  %7118 = vmatprep.subr.bf16.mxu0 0
  %7119 = vmatpush1.bf16.msra.mxu0 %v4933
  %7120 = vmatprep.subr.bf16.mxu0 0
  %7121 = vmatpush1.bf16.msra.mxu0 %v4940
  %7122 = vmatprep.subr.bf16.mxu0 0
  %7123 = vmatpush1.bf16.msra.mxu0 %v4947
  %7124 = vmatprep.subr.bf16.mxu0 0
  %7125 = vmatpush1.bf16.msra.mxu0 %v4954
  %7126 = vmatprep.subr.bf16.mxu0 0
  %7127 = vmatpush1.bf16.msra.mxu0 %v4961
  %7128 = vmatprep.subr.bf16.mxu0 0
  %7129 = vmatpush1.bf16.msra.mxu0 %v4968
  %7130 = vmatprep.subr.bf16.mxu0 0
  %7131 = vmatpush1.bf16.msra.mxu0 %v4975
  %7132 = vmatprep.mubr.bf16.mxu0 %v1875
  %7133 = vmatmul.mubr.bf16.gmra.mrb[0].mxu0 %v1874
  %v7134 = vpop.f32.mrb[0].mxu0
  %v7135 = vadd.f32 %v2700, %v7134
  %v7136 = vpop.f32.mrb[0].mxu0
  %v7137 = vpop.f32.mrb[0].mxu0
  %v7138 = vpop.f32.mrb[0].mxu0
  %7139 = vdwg.mxu0
  %7140 = vmatprep.subr.bf16.mxu0 0
  %7141 = vmatpush1.bf16.msra.mxu0 %v4982
  %7142 = vmatprep.subr.bf16.mxu0 0
  %7143 = vmatpush1.bf16.msra.mxu0 %v4989
  %7144 = vmatprep.subr.bf16.mxu0 0
  %7145 = vmatpush1.bf16.msra.mxu0 %v4996
  %7146 = vmatprep.subr.bf16.mxu0 0
  %7147 = vmatpush1.bf16.msra.mxu0 %v5003
  %7148 = vmatprep.subr.bf16.mxu0 0
  %7149 = vmatpush1.bf16.msra.mxu0 %v5010
  %7150 = vmatprep.subr.bf16.mxu0 0
  %7151 = vmatpush1.bf16.msra.mxu0 %v5017
  %7152 = vmatprep.subr.bf16.mxu0 0
  %7153 = vmatpush1.bf16.msra.mxu0 %v5024
  %7154 = vmatprep.subr.bf16.mxu0 0
  %7155 = vmatpush1.bf16.msra.mxu0 %v5031
  %7156 = vmatprep.subr.bf16.mxu0 0
  %7157 = vmatpush1.bf16.msra.mxu0 %v5038
  %7158 = vmatprep.subr.bf16.mxu0 0
  %7159 = vmatpush1.bf16.msra.mxu0 %v5045
  %7160 = vmatprep.subr.bf16.mxu0 0
  %7161 = vmatpush1.bf16.msra.mxu0 %v5052
  %7162 = vmatprep.subr.bf16.mxu0 0
  %7163 = vmatpush1.bf16.msra.mxu0 %v5059
  %7164 = vmatprep.subr.bf16.mxu0 0
  %7165 = vmatpush1.bf16.msra.mxu0 %v5066
  %7166 = vmatprep.subr.bf16.mxu0 0
  %7167 = vmatpush1.bf16.msra.mxu0 %v5073
  %7168 = vmatprep.subr.bf16.mxu0 0
  %7169 = vmatpush1.bf16.msra.mxu0 %v5080
  %7170 = vmatprep.subr.bf16.mxu0 0
  %7171 = vmatpush1.bf16.msra.mxu0 %v5087
  %7172 = vmatprep.mubr.bf16.mxu0 %v1877
  %7173 = vmatmul.mubr.bf16.gmra.mrb[0].mxu0 %v1876
  %v7174 = vpop.f32.mrb[0].mxu0
  %v7175 = vadd.f32 %v7135, %v7174
  %v7176 = vpop.f32.mrb[0].mxu0
  %v7177 = vpop.f32.mrb[0].mxu0
  %v7178 = vpop.f32.mrb[0].mxu0
  %7179 = vdwg.mxu0
  %7180 = vmatprep.subr.bf16.mxu0 0
  %7181 = vmatpush1.bf16.msra.mxu0 %v5094
  %7182 = vmatprep.subr.bf16.mxu0 0
  %7183 = vmatpush1.bf16.msra.mxu0 %v5101
  %7184 = vmatprep.subr.bf16.mxu0 0
  %7185 = vmatpush1.bf16.msra.mxu0 %v5108
  %7186 = vmatprep.subr.bf16.mxu0 0
  %7187 = vmatpush1.bf16.msra.mxu0 %v5115
  %7188 = vmatprep.subr.bf16.mxu0 0
  %7189 = vmatpush1.bf16.msra.mxu0 %v5122
  %7190 = vmatprep.subr.bf16.mxu0 0
  %7191 = vmatpush1.bf16.msra.mxu0 %v5129
  %7192 = vmatprep.subr.bf16.mxu0 0
  %7193 = vmatpush1.bf16.msra.mxu0 %v5136
  %7194 = vmatprep.subr.bf16.mxu0 0
  %7195 = vmatpush1.bf16.msra.mxu0 %v5143
  %7196 = vmatprep.subr.bf16.mxu0 0
  %7197 = vmatpush1.bf16.msra.mxu0 %v5150
  %7198 = vmatprep.subr.bf16.mxu0 0
  %7199 = vmatpush1.bf16.msra.mxu0 %v5157
  %7200 = vmatprep.subr.bf16.mxu0 0
  %7201 = vmatpush1.bf16.msra.mxu0 %v5164
  %7202 = vmatprep.subr.bf16.mxu0 0
  %7203 = vmatpush1.bf16.msra.mxu0 %v5171
  %7204 = vmatprep.subr.bf16.mxu0 0
  %7205 = vmatpush1.bf16.msra.mxu0 %v5178
  %7206 = vmatprep.subr.bf16.mxu0 0
  %7207 = vmatpush1.bf16.msra.mxu0 %v5185
  %7208 = vmatprep.subr.bf16.mxu0 0
  %7209 = vmatpush1.bf16.msra.mxu0 %v5192
  %7210 = vmatprep.subr.bf16.mxu0 0
  %7211 = vmatpush1.bf16.msra.mxu0 %v5199
  %7212 = vmatprep.mubr.bf16.mxu0 %v1879
  %7213 = vmatmul.mubr.bf16.gmra.mrb[0].mxu0 %v1878
  %v7214 = vpop.f32.mrb[0].mxu0
  %v7215 = vadd.f32 %v7175, %v7214
  %v7216 = vpop.f32.mrb[0].mxu0
  %v7217 = vpop.f32.mrb[0].mxu0
  %v7218 = vpop.f32.mrb[0].mxu0
  %7219 = vdwg.mxu0
  %7220 = vmatprep.subr.bf16.mxu0 0
  %7221 = vmatpush1.bf16.msra.mxu0 %v5206
  %7222 = vmatprep.subr.bf16.mxu0 0
  %7223 = vmatpush1.bf16.msra.mxu0 %v5213
  %7224 = vmatprep.subr.bf16.mxu0 0
  %7225 = vmatpush1.bf16.msra.mxu0 %v5220
  %7226 = vmatprep.subr.bf16.mxu0 0
  %7227 = vmatpush1.bf16.msra.mxu0 %v5227
  %7228 = vmatprep.subr.bf16.mxu0 0
  %7229 = vmatpush1.bf16.msra.mxu0 %v5234
  %7230 = vmatprep.subr.bf16.mxu0 0
  %7231 = vmatpush1.bf16.msra.mxu0 %v5241
  %7232 = vmatprep.subr.bf16.mxu0 0
  %7233 = vmatpush1.bf16.msra.mxu0 %v5248
  %7234 = vmatprep.subr.bf16.mxu0 0
  %7235 = vmatpush1.bf16.msra.mxu0 %v5255
  %7236 = vmatprep.subr.bf16.mxu0 0
  %7237 = vmatpush1.bf16.msra.mxu0 %v5262
  %7238 = vmatprep.subr.bf16.mxu0 0
  %7239 = vmatpush1.bf16.msra.mxu0 %v5269
  %7240 = vmatprep.subr.bf16.mxu0 0
  %7241 = vmatpush1.bf16.msra.mxu0 %v5276
  %7242 = vmatprep.subr.bf16.mxu0 0
  %7243 = vmatpush1.bf16.msra.mxu0 %v5283
  %7244 = vmatprep.subr.bf16.mxu0 0
  %7245 = vmatpush1.bf16.msra.mxu0 %v5290
  %7246 = vmatprep.subr.bf16.mxu0 0
  %7247 = vmatpush1.bf16.msra.mxu0 %v5297
  %7248 = vmatprep.subr.bf16.mxu0 0
  %7249 = vmatpush1.bf16.msra.mxu0 %v5304
  %7250 = vmatprep.subr.bf16.mxu0 0
  %7251 = vmatpush1.bf16.msra.mxu0 %v5311
  %7252 = vmatprep.mubr.bf16.mxu0 %v1881
  %7253 = vmatmul.mubr.bf16.gmra.mrb[0].mxu0 %v1880
  %v7254 = vpop.f32.mrb[0].mxu0
  %v7255 = vadd.f32 %v7215, %v7254
  %v7256 = vpop.f32.mrb[0].mxu0
  %v7257 = vpop.f32.mrb[0].mxu0
  %v7258 = vpop.f32.mrb[0].mxu0
  %7259 = vdwg.mxu0
  %7260 = vmatprep.subr.bf16.mxu0 0
  %7261 = vmatpush1.bf16.msra.mxu0 %v5318
  %7262 = vmatprep.subr.bf16.mxu0 0
  %7263 = vmatpush1.bf16.msra.mxu0 %v5325
  %7264 = vmatprep.subr.bf16.mxu0 0
  %7265 = vmatpush1.bf16.msra.mxu0 %v5332
  %7266 = vmatprep.subr.bf16.mxu0 0
  %7267 = vmatpush1.bf16.msra.mxu0 %v5339
  %7268 = vmatprep.subr.bf16.mxu0 0
  %7269 = vmatpush1.bf16.msra.mxu0 %v5346
  %7270 = vmatprep.subr.bf16.mxu0 0
  %7271 = vmatpush1.bf16.msra.mxu0 %v5353
  %7272 = vmatprep.subr.bf16.mxu0 0
  %7273 = vmatpush1.bf16.msra.mxu0 %v5360
  %7274 = vmatprep.subr.bf16.mxu0 0
  %7275 = vmatpush1.bf16.msra.mxu0 %v5367
  %7276 = vmatprep.subr.bf16.mxu0 0
  %7277 = vmatpush1.bf16.msra.mxu0 %v5374
  %7278 = vmatprep.subr.bf16.mxu0 0
  %7279 = vmatpush1.bf16.msra.mxu0 %v5381
  %7280 = vmatprep.subr.bf16.mxu0 0
  %7281 = vmatpush1.bf16.msra.mxu0 %v5388
  %7282 = vmatprep.subr.bf16.mxu0 0
  %7283 = vmatpush1.bf16.msra.mxu0 %v5395
  %7284 = vmatprep.subr.bf16.mxu0 0
  %7285 = vmatpush1.bf16.msra.mxu0 %v5402
  %7286 = vmatprep.subr.bf16.mxu0 0
  %7287 = vmatpush1.bf16.msra.mxu0 %v5409
  %7288 = vmatprep.subr.bf16.mxu0 0
  %7289 = vmatpush1.bf16.msra.mxu0 %v5416
  %7290 = vmatprep.subr.bf16.mxu0 0
  %7291 = vmatpush1.bf16.msra.mxu0 %v5423
  %7292 = vmatprep.mubr.bf16.mxu0 %v1883
  %7293 = vmatmul.mubr.bf16.gmra.mrb[0].mxu0 %v1882
  %v7294 = vpop.f32.mrb[0].mxu0
  %v7295 = vadd.f32 %v7255, %v7294
  %v7296 = vpop.f32.mrb[0].mxu0
  %v7297 = vpop.f32.mrb[0].mxu0
  %v7298 = vpop.f32.mrb[0].mxu0
  %7299 = vdwg.mxu0
  %7300 = vmatprep.subr.bf16.mxu0 0
  %7301 = vmatpush1.bf16.msra.mxu0 %v5430
  %7302 = vmatprep.subr.bf16.mxu0 0
  %7303 = vmatpush1.bf16.msra.mxu0 %v5437
  %7304 = vmatprep.subr.bf16.mxu0 0
  %7305 = vmatpush1.bf16.msra.mxu0 %v5444
  %7306 = vmatprep.subr.bf16.mxu0 0
  %7307 = vmatpush1.bf16.msra.mxu0 %v5451
  %7308 = vmatprep.subr.bf16.mxu0 0
  %7309 = vmatpush1.bf16.msra.mxu0 %v5458
  %7310 = vmatprep.subr.bf16.mxu0 0
  %7311 = vmatpush1.bf16.msra.mxu0 %v5465
  %7312 = vmatprep.subr.bf16.mxu0 0
  %7313 = vmatpush1.bf16.msra.mxu0 %v5472
  %7314 = vmatprep.subr.bf16.mxu0 0
  %7315 = vmatpush1.bf16.msra.mxu0 %v5479
  %7316 = vmatprep.subr.bf16.mxu0 0
  %7317 = vmatpush1.bf16.msra.mxu0 %v5486
  %7318 = vmatprep.subr.bf16.mxu0 0
  %7319 = vmatpush1.bf16.msra.mxu0 %v5493
  %7320 = vmatprep.subr.bf16.mxu0 0
  %7321 = vmatpush1.bf16.msra.mxu0 %v5500
  %7322 = vmatprep.subr.bf16.mxu0 0
  %7323 = vmatpush1.bf16.msra.mxu0 %v5507
  %7324 = vmatprep.subr.bf16.mxu0 0
  %7325 = vmatpush1.bf16.msra.mxu0 %v5514
  %7326 = vmatprep.subr.bf16.mxu0 0
  %7327 = vmatpush1.bf16.msra.mxu0 %v5521
  %7328 = vmatprep.subr.bf16.mxu0 0
  %7329 = vmatpush1.bf16.msra.mxu0 %v5528
  %7330 = vmatprep.subr.bf16.mxu0 0
  %7331 = vmatpush1.bf16.msra.mxu0 %v5535
  %7332 = vmatprep.mubr.bf16.mxu0 %v1885
  %7333 = vmatmul.mubr.bf16.gmra.mrb[0].mxu0 %v1884
  %v7334 = vpop.f32.mrb[0].mxu0
  %v7335 = vadd.f32 %v7295, %v7334
  %v7336 = vpop.f32.mrb[0].mxu0
  %v7337 = vpop.f32.mrb[0].mxu0
  %v7338 = vpop.f32.mrb[0].mxu0
  %7339 = vdwg.mxu0
  %7340 = vmatprep.subr.bf16.mxu0 0
  %7341 = vmatpush1.bf16.msra.mxu0 %v5542
  %7342 = vmatprep.subr.bf16.mxu0 0
  %7343 = vmatpush1.bf16.msra.mxu0 %v5549
  %7344 = vmatprep.subr.bf16.mxu0 0
  %7345 = vmatpush1.bf16.msra.mxu0 0
  %7346 = vmatprep.subr.bf16.mxu0 0
  %7347 = vmatpush1.bf16.msra.mxu0 0
  %7348 = vmatprep.subr.bf16.mxu0 0
  %7349 = vmatpush1.bf16.msra.mxu0 0
  %7350 = vmatprep.subr.bf16.mxu0 0
  %7351 = vmatpush1.bf16.msra.mxu0 0
  %7352 = vmatprep.subr.bf16.mxu0 0
  %7353 = vmatpush1.bf16.msra.mxu0 0
  %7354 = vmatprep.subr.bf16.mxu0 0
  %7355 = vmatpush1.bf16.msra.mxu0 0
  %7356 = vmatprep.subr.bf16.mxu0 0
  %7357 = vmatpush1.bf16.msra.mxu0 0
  %7358 = vmatprep.subr.bf16.mxu0 0
  %7359 = vmatpush1.bf16.msra.mxu0 0
  %7360 = vmatprep.subr.bf16.mxu0 0
  %7361 = vmatpush1.bf16.msra.mxu0 0
  %7362 = vmatprep.subr.bf16.mxu0 0
  %7363 = vmatpush1.bf16.msra.mxu0 0
  %7364 = vmatprep.subr.bf16.mxu0 0
  %7365 = vmatpush1.bf16.msra.mxu0 0
  %7366 = vmatprep.subr.bf16.mxu0 0
  %7367 = vmatpush1.bf16.msra.mxu0 0
  %7368 = vmatprep.subr.bf16.mxu0 0
  %7369 = vmatpush1.bf16.msra.mxu0 0
  %7370 = vmatprep.subr.bf16.mxu0 0
  %7371 = vmatpush1.bf16.msra.mxu0 0
  %7372 = vmatprep.mubr.bf16.mxu0 0
  %7373 = vmatmul.mubr.bf16.gmra.mrb[0].mxu0 %v6237
  %v7374 = vpop.f32.mrb[0].mxu0
  %v7375 = vadd.f32 %v7335, %v7374
  %v7376 = vpop.f32.mrb[0].mxu0
  %v7377 = vpop.f32.mrb[0].mxu0
  %v7378 = vpop.f32.mrb[0].mxu0
  %7379 = vdwg.mxu0
  %v7380 = vmax.f32 %v6520, 0.0
  %v7381 = vmax.f32 %v6522, 0.0
  %v7382 = vmax.f32 %v6807, 0.0
  %v7383 = vmax.f32 %v6809, 0.0
  %v7384 = vmax.f32 %v7094, 0.0
  %v7385 = vmax.f32 %v7096, 0.0
  %v7386 = vmax.f32 %v7375, 0.0
  %v7387 = vpack.c.bf16 %v7380, %v7380
  %v7388 = vpack.c.bf16 %v7381, %v7381
  %v7389 = vpack.c.bf16 %v7382, %v7382
  %v7390 = vpack.c.bf16 %v7383, %v7383
  %v7391 = vpack.c.bf16 %v7384, %v7384
  %v7392 = vpack.c.bf16 %v7385, %v7385
  %v7393 = vpack.c.bf16 %v7386, %v7386
  %v7394 = vld [vmem:[%s6] sm:$0xff]
  %v7395 = vld [vmem:[%s6 + $0x8] sm:$0xff]
  %v7396 = vld [vmem:[%s6 + $0x10] sm:$0xff]
  %v7397 = vld [vmem:[%s6 + $0x18] sm:$0xff]
  %v7398 = vld [vmem:[%s6 + $0x20] sm:$0xff]
  %v7399 = vld [vmem:[%s6 + $0x28] sm:$0xff]
  %v7400 = vld [vmem:[%s6 + $0x30] sm:$0xff]
  %v7401 = vld [vmem:[%s6 + $0x38] sm:$0xff]
  %v7402 = vld [vmem:[%s6 + $0x40] sm:$0xff]
  %v7403 = vld [vmem:[%s6 + $0x48] sm:$0xff]
  %v7404 = vld [vmem:[%s6 + $0x50] sm:$0xff]
  %v7405 = vld [vmem:[%s6 + $0x58] sm:$0xff]
  %v7406 = vld [vmem:[%s6 + $0x60] sm:$0xff]
  %v7407 = vld [vmem:[%s6 + $0x68] sm:$0xff]
  %v7408 = vld [vmem:[%s6 + $0x70] sm:$0xff]
  %v7409 = vld [vmem:[%s6 + $0x78] sm:$0xff]
  %v7410 = vld [vmem:[%s6 + $0x80] sm:$0xff]
  %v7411 = vld [vmem:[%s6 + $0x88] sm:$0xff]
  %v7412 = vld [vmem:[%s6 + $0x90] sm:$0xff]
  %v7413 = vld [vmem:[%s6 + $0x98] sm:$0xff]
  %v7414 = vld [vmem:[%s6 + $0xa0] sm:$0xff]
  %v7415 = vld [vmem:[%s6 + $0xa8] sm:$0xff]
  %v7416 = vld [vmem:[%s6 + $0xb0] sm:$0xff]
  %v7417 = vld [vmem:[%s6 + $0xb8] sm:$0xff]
  %v7418 = vld [vmem:[%s6 + $0xc0] sm:$0xff]
  %v7419 = vld [vmem:[%s6 + $0xc8] sm:$0xff]
  %v7420 = vld [vmem:[%s6 + $0xd0] sm:$0xff]
  %v7421 = vld [vmem:[%s6 + $0xd8] sm:$0xff]
  %v7422 = vld [vmem:[%s6 + $0xe0] sm:$0xff]
  %v7423 = vld [vmem:[%s6 + $0xe8] sm:$0xff]
  %v7424 = vld [vmem:[%s6 + $0xf0] sm:$0xff]
  %v7425 = vld [vmem:[%s6 + $0xf8] sm:$0xff]
  %v7426 = vld [vmem:[%s6 + $0x100] sm:$0xff]
  %v7427 = vld [vmem:[%s6 + $0x108] sm:$0xff]
  %v7428 = vld [vmem:[%s6 + $0x110] sm:$0xff]
  %v7429 = vld [vmem:[%s6 + $0x118] sm:$0xff]
  %v7430 = vld [vmem:[%s6 + $0x120] sm:$0xff]
  %v7431 = vld [vmem:[%s6 + $0x128] sm:$0xff]
  %v7432 = vld [vmem:[%s6 + $0x130] sm:$0xff]
  %v7433 = vld [vmem:[%s6 + $0x138] sm:$0xff]
  %v7434 = vld [vmem:[%s6 + $0x140] sm:$0xff]
  %v7435 = vld [vmem:[%s6 + $0x148] sm:$0xff]
  %v7436 = vld [vmem:[%s6 + $0x150] sm:$0xff]
  %v7437 = vld [vmem:[%s6 + $0x158] sm:$0xff]
  %v7438 = vld [vmem:[%s6 + $0x160] sm:$0xff]
  %v7439 = vld [vmem:[%s6 + $0x168] sm:$0xff]
  %v7440 = vld [vmem:[%s6 + $0x170] sm:$0xff]
  %v7441 = vld [vmem:[%s6 + $0x178] sm:$0xff]
  %v7442 = vld [vmem:[%s6 + $0x180] sm:$0xff]
  %v7443 = vld [vmem:[%s6 + $0x188] sm:$0xff]
  %v7444 = vld [vmem:[%s6 + $0x190] sm:$0xff]
  %v7445 = vld [vmem:[%s6 + $0x198] sm:$0xff]
  %v7446 = vld [vmem:[%s6 + $0x1a0] sm:$0xff]
  %v7447 = vld [vmem:[%s6 + $0x1a8] sm:$0xff]
  %v7448 = vld [vmem:[%s6 + $0x1b0] sm:$0xff]
  %v7449 = vld [vmem:[%s6 + $0x1b8] sm:$0xff]
  %v7450 = vld [vmem:[%s6 + $0x1c0] sm:$0xff]
  %v7451 = vld [vmem:[%s6 + $0x1c8] sm:$0xff]
  %v7452 = vld [vmem:[%s6 + $0x1d0] sm:$0xff]
  %v7453 = vld [vmem:[%s6 + $0x1d8] sm:$0xff]
  %v7454 = vld [vmem:[%s6 + $0x1e0] sm:$0xff]
  %v7455 = vld [vmem:[%s6 + $0x1e8] sm:$0xff]
  %v7456 = vld [vmem:[%s6 + $0x1f0] sm:$0xff]
  %v7457 = vld [vmem:[%s6 + $0x1f8] sm:$0xff]
  %v7458 = vld [vmem:[%s6 + $0x200] sm:$0xff]
  %v7459 = vld [vmem:[%s6 + $0x208] sm:$0xff]
  %v7460 = vld [vmem:[%s6 + $0x210] sm:$0xff]
  %v7461 = vld [vmem:[%s6 + $0x218] sm:$0xff]
  %v7462 = vld [vmem:[%s6 + $0x220] sm:$0xff]
  %v7463 = vld [vmem:[%s6 + $0x228] sm:$0xff]
  %v7464 = vld [vmem:[%s6 + $0x230] sm:$0xff]
  %v7465 = vld [vmem:[%s6 + $0x238] sm:$0xff]
  %v7466 = vld [vmem:[%s6 + $0x240] sm:$0xff]
  %v7467 = vld [vmem:[%s6 + $0x248] sm:$0xff]
  %v7468 = vld [vmem:[%s6 + $0x250] sm:$0xff]
  %v7469 = vld [vmem:[%s6 + $0x258] sm:$0xff]
  %v7470 = vld [vmem:[%s6 + $0x260] sm:$0xff]
  %v7471 = vld [vmem:[%s6 + $0x268] sm:$0xff]
  %v7472 = vld [vmem:[%s6 + $0x270] sm:$0xff]
  %v7473 = vld [vmem:[%s6 + $0x278] sm:$0xff]
  %v7474 = vld [vmem:[%s6 + $0x280] sm:$0xff]
  %v7475 = vld [vmem:[%s6 + $0x288] sm:$0xff]
  %v7476 = vld [vmem:[%s6 + $0x290] sm:$0xff]
  %v7477 = vld [vmem:[%s6 + $0x298] sm:$0xff]
  %v7478 = vld [vmem:[%s6 + $0x2a0] sm:$0xff]
  %v7479 = vld [vmem:[%s6 + $0x2a8] sm:$0xff]
  %v7480 = vld [vmem:[%s6 + $0x2b0] sm:$0xff]
  %v7481 = vld [vmem:[%s6 + $0x2b8] sm:$0xff]
  %v7482 = vld [vmem:[%s6 + $0x2c0] sm:$0xff]
  %v7483 = vld [vmem:[%s6 + $0x2c8] sm:$0xff]
  %v7484 = vld [vmem:[%s6 + $0x2d0] sm:$0xff]
  %v7485 = vld [vmem:[%s6 + $0x2d8] sm:$0xff]
  %v7486 = vld [vmem:[%s6 + $0x2e0] sm:$0xff]
  %v7487 = vld [vmem:[%s6 + $0x2e8] sm:$0xff]
  %v7488 = vld [vmem:[%s6 + $0x2f0] sm:$0xff]
  %v7489 = vld [vmem:[%s6 + $0x2f8] sm:$0xff]
  %v7490 = vld [vmem:[%s6 + $0x300] sm:$0xff]
  %v7491 = vld [vmem:[%s6 + $0x308] sm:$0xff]
  %v7492 = vld [vmem:[%s6 + $0x310] sm:$0xff]
  %v7493 = vld [vmem:[%s6 + $0x318] sm:$0xff]
  %v7494 = vld [vmem:[%s7] sm:$0x3]
  %v7496 = vlaneseq
  %v7497 = vshrl.u32 %v7496, 7
  %v7498 = vsub.s32 0, %v7497
  %v7499 = vrot.slane %v7494, %v7498
  %v7500 = vlaneseq
  %v7501 = vshrl.u32 %v7500, 7
  %v7502 = vsub.s32 1, %v7501
  %v7503 = vrot.slane %v7494, %v7502
  %v7606 = vunpack.c.l.b16 %v7394
  %v7607 = vunpack.c.h.b16 %v7394
  %v7608 = vunpack.c.l.b16 %v7395
  %v7609 = vunpack.c.h.b16 %v7395
  %v7610 = vunpack.c.l.b16 %v7396
  %v7611 = vunpack.c.h.b16 %v7396
  %v7612 = vunpack.c.l.b16 %v7397
  %v7613 = vunpack.c.h.b16 %v7397
  %v7614 = vunpack.c.l.b16 %v7398
  %v7615 = vunpack.c.h.b16 %v7398
  %v7616 = vunpack.c.l.b16 %v7399
  %v7617 = vunpack.c.h.b16 %v7399
  %v7618 = vunpack.c.l.b16 %v7400
  %v7619 = vunpack.c.h.b16 %v7400
  %v7620 = vunpack.c.l.b16 %v7401
  %v7621 = vunpack.c.h.b16 %v7401
  %v7622 = vunpack.c.l.b16 %v7402
  %v7623 = vunpack.c.h.b16 %v7402
  %v7624 = vunpack.c.l.b16 %v7403
  %v7625 = vunpack.c.h.b16 %v7403
  %v7626 = vunpack.c.l.b16 %v7404
  %v7627 = vunpack.c.h.b16 %v7404
  %v7628 = vunpack.c.l.b16 %v7405
  %v7629 = vunpack.c.h.b16 %v7405
  %v7630 = vunpack.c.l.b16 %v7406
  %v7631 = vunpack.c.h.b16 %v7406
  %v7632 = vunpack.c.l.b16 %v7407
  %v7633 = vunpack.c.h.b16 %v7407
  %v7634 = vunpack.c.l.b16 %v7408
  %v7635 = vunpack.c.h.b16 %v7408
  %v7636 = vunpack.c.l.b16 %v7409
  %v7637 = vunpack.c.h.b16 %v7409
  %v7638 = vunpack.c.l.b16 %v7410
  %v7639 = vunpack.c.h.b16 %v7410
  %v7640 = vunpack.c.l.b16 %v7411
  %v7641 = vunpack.c.h.b16 %v7411
  %v7642 = vunpack.c.l.b16 %v7412
  %v7643 = vunpack.c.h.b16 %v7412
  %v7644 = vunpack.c.l.b16 %v7413
  %v7645 = vunpack.c.h.b16 %v7413
  %v7646 = vunpack.c.l.b16 %v7414
  %v7647 = vunpack.c.h.b16 %v7414
  %v7648 = vunpack.c.l.b16 %v7415
  %v7649 = vunpack.c.h.b16 %v7415
  %v7650 = vunpack.c.l.b16 %v7416
  %v7651 = vunpack.c.h.b16 %v7416
  %v7652 = vunpack.c.l.b16 %v7417
  %v7653 = vunpack.c.h.b16 %v7417
  %v7654 = vunpack.c.l.b16 %v7418
  %v7655 = vunpack.c.h.b16 %v7418
  %v7656 = vunpack.c.l.b16 %v7419
  %v7657 = vunpack.c.h.b16 %v7419
  %v7658 = vunpack.c.l.b16 %v7420
  %v7659 = vunpack.c.h.b16 %v7420
  %v7660 = vunpack.c.l.b16 %v7421
  %v7661 = vunpack.c.h.b16 %v7421
  %v7662 = vunpack.c.l.b16 %v7422
  %v7663 = vunpack.c.h.b16 %v7422
  %v7664 = vunpack.c.l.b16 %v7423
  %v7665 = vunpack.c.h.b16 %v7423
  %v7666 = vunpack.c.l.b16 %v7424
  %v7667 = vunpack.c.h.b16 %v7424
  %v7668 = vunpack.c.l.b16 %v7425
  %v7669 = vunpack.c.h.b16 %v7425
  %v7670 = vunpack.c.l.b16 %v7426
  %v7671 = vunpack.c.h.b16 %v7426
  %v7672 = vunpack.c.l.b16 %v7427
  %v7673 = vunpack.c.h.b16 %v7427
  %v7674 = vunpack.c.l.b16 %v7428
  %v7675 = vunpack.c.h.b16 %v7428
  %v7676 = vunpack.c.l.b16 %v7429
  %v7677 = vunpack.c.h.b16 %v7429
  %v7678 = vunpack.c.l.b16 %v7430
  %v7679 = vunpack.c.h.b16 %v7430
  %v7680 = vunpack.c.l.b16 %v7431
  %v7681 = vunpack.c.h.b16 %v7431
  %v7682 = vunpack.c.l.b16 %v7432
  %v7683 = vunpack.c.h.b16 %v7432
  %v7684 = vunpack.c.l.b16 %v7433
  %v7685 = vunpack.c.h.b16 %v7433
  %v7686 = vunpack.c.l.b16 %v7434
  %v7687 = vunpack.c.h.b16 %v7434
  %v7688 = vunpack.c.l.b16 %v7435
  %v7689 = vunpack.c.h.b16 %v7435
  %v7690 = vunpack.c.l.b16 %v7436
  %v7691 = vunpack.c.h.b16 %v7436
  %v7692 = vunpack.c.l.b16 %v7437
  %v7693 = vunpack.c.h.b16 %v7437
  %v7694 = vunpack.c.l.b16 %v7438
  %v7695 = vunpack.c.h.b16 %v7438
  %v7696 = vunpack.c.l.b16 %v7439
  %v7697 = vunpack.c.h.b16 %v7439
  %v7698 = vunpack.c.l.b16 %v7440
  %v7699 = vunpack.c.h.b16 %v7440
  %v7700 = vunpack.c.l.b16 %v7441
  %v7701 = vunpack.c.h.b16 %v7441
  %v7702 = vunpack.c.l.b16 %v7442
  %v7703 = vunpack.c.h.b16 %v7442
  %v7704 = vunpack.c.l.b16 %v7443
  %v7705 = vunpack.c.h.b16 %v7443
  %v7706 = vunpack.c.l.b16 %v7444
  %v7707 = vunpack.c.h.b16 %v7444
  %v7708 = vunpack.c.l.b16 %v7445
  %v7709 = vunpack.c.h.b16 %v7445
  %v7710 = vunpack.c.l.b16 %v7446
  %v7711 = vunpack.c.h.b16 %v7446
  %v7712 = vunpack.c.l.b16 %v7447
  %v7713 = vunpack.c.h.b16 %v7447
  %v7714 = vunpack.c.l.b16 %v7448
  %v7715 = vunpack.c.h.b16 %v7448
  %v7716 = vunpack.c.l.b16 %v7449
  %v7717 = vunpack.c.h.b16 %v7449
  %v7718 = vunpack.c.l.b16 %v7450
  %v7719 = vunpack.c.h.b16 %v7450
  %v7720 = vunpack.c.l.b16 %v7451
  %v7721 = vunpack.c.h.b16 %v7451
  %v7722 = vunpack.c.l.b16 %v7452
  %v7723 = vunpack.c.h.b16 %v7452
  %v7724 = vunpack.c.l.b16 %v7453
  %v7725 = vunpack.c.h.b16 %v7453
  %v7726 = vunpack.c.l.b16 %v7454
  %v7727 = vunpack.c.h.b16 %v7454
  %v7728 = vunpack.c.l.b16 %v7455
  %v7729 = vunpack.c.h.b16 %v7455
  %v7730 = vunpack.c.l.b16 %v7456
  %v7731 = vunpack.c.h.b16 %v7456
  %v7732 = vunpack.c.l.b16 %v7457
  %v7733 = vunpack.c.h.b16 %v7457
  %v7734 = vunpack.c.l.b16 %v7458
  %v7735 = vunpack.c.h.b16 %v7458
  %v7736 = vunpack.c.l.b16 %v7459
  %v7737 = vunpack.c.h.b16 %v7459
  %v7738 = vunpack.c.l.b16 %v7460
  %v7739 = vunpack.c.h.b16 %v7460
  %v7740 = vunpack.c.l.b16 %v7461
  %v7741 = vunpack.c.h.b16 %v7461
  %v7742 = vunpack.c.l.b16 %v7462
  %v7743 = vunpack.c.h.b16 %v7462
  %v7744 = vunpack.c.l.b16 %v7463
  %v7745 = vunpack.c.h.b16 %v7463
  %v7746 = vunpack.c.l.b16 %v7464
  %v7747 = vunpack.c.h.b16 %v7464
  %v7748 = vunpack.c.l.b16 %v7465
  %v7749 = vunpack.c.h.b16 %v7465
  %v7750 = vunpack.c.l.b16 %v7466
  %v7751 = vunpack.c.h.b16 %v7466
  %v7752 = vunpack.c.l.b16 %v7467
  %v7753 = vunpack.c.h.b16 %v7467
  %v7754 = vunpack.c.l.b16 %v7468
  %v7755 = vunpack.c.h.b16 %v7468
  %v7756 = vunpack.c.l.b16 %v7469
  %v7757 = vunpack.c.h.b16 %v7469
  %v7758 = vunpack.c.l.b16 %v7470
  %v7759 = vunpack.c.h.b16 %v7470
  %v7760 = vunpack.c.l.b16 %v7471
  %v7761 = vunpack.c.h.b16 %v7471
  %v7762 = vunpack.c.l.b16 %v7472
  %v7763 = vunpack.c.h.b16 %v7472
  %v7764 = vunpack.c.l.b16 %v7473
  %v7765 = vunpack.c.h.b16 %v7473
  %v7766 = vunpack.c.l.b16 %v7474
  %v7767 = vunpack.c.h.b16 %v7474
  %v7768 = vunpack.c.l.b16 %v7475
  %v7769 = vunpack.c.h.b16 %v7475
  %v7770 = vunpack.c.l.b16 %v7476
  %v7771 = vunpack.c.h.b16 %v7476
  %v7772 = vunpack.c.l.b16 %v7477
  %v7773 = vunpack.c.h.b16 %v7477
  %v7774 = vunpack.c.l.b16 %v7478
  %v7775 = vunpack.c.h.b16 %v7478
  %v7776 = vunpack.c.l.b16 %v7479
  %v7777 = vunpack.c.h.b16 %v7479
  %v7778 = vunpack.c.l.b16 %v7480
  %v7779 = vunpack.c.h.b16 %v7480
  %v7780 = vunpack.c.l.b16 %v7481
  %v7781 = vunpack.c.h.b16 %v7481
  %v7782 = vunpack.c.l.b16 %v7482
  %v7783 = vunpack.c.h.b16 %v7482
  %v7784 = vunpack.c.l.b16 %v7483
  %v7785 = vunpack.c.h.b16 %v7483
  %v7786 = vunpack.c.l.b16 %v7484
  %v7787 = vunpack.c.h.b16 %v7484
  %v7788 = vunpack.c.l.b16 %v7485
  %v7789 = vunpack.c.h.b16 %v7485
  %v7790 = vunpack.c.l.b16 %v7486
  %v7791 = vunpack.c.h.b16 %v7486
  %v7792 = vunpack.c.l.b16 %v7487
  %v7793 = vunpack.c.h.b16 %v7487
  %v7794 = vunpack.c.l.b16 %v7488
  %v7795 = vunpack.c.h.b16 %v7488
  %v7796 = vunpack.c.l.b16 %v7489
  %v7797 = vunpack.c.h.b16 %v7489
  %v7798 = vunpack.c.l.b16 %v7490
  %v7799 = vunpack.c.h.b16 %v7490
  %v7800 = vunpack.c.l.b16 %v7491
  %v7801 = vunpack.c.h.b16 %v7491
  %v7802 = vunpack.c.l.b16 %v7492
  %v7803 = vunpack.c.h.b16 %v7492
  %v7804 = vunpack.c.l.b16 %v7493
  %v7805 = vunpack.c.h.b16 %v7493
  %v7806 = vpack.c.b16 %v7608, %v7606
  %v7807 = vpack.c.b16 %v7609, %v7607
  %v7808 = vpack.c.b16 %v7612, %v7610
  %v7809 = vpack.c.b16 %v7613, %v7611
  %v7810 = vpack.c.b16 %v7616, %v7614
  %v7811 = vpack.c.b16 %v7617, %v7615
  %v7812 = vpack.c.b16 %v7620, %v7618
  %v7813 = vpack.c.b16 %v7621, %v7619
  %v7814 = vpack.c.b16 %v7624, %v7622
  %v7815 = vpack.c.b16 %v7625, %v7623
  %v7816 = vpack.c.b16 %v7628, %v7626
  %v7817 = vpack.c.b16 %v7629, %v7627
  %v7818 = vpack.c.b16 %v7632, %v7630
  %v7819 = vpack.c.b16 %v7633, %v7631
  %v7820 = vpack.c.b16 %v7636, %v7634
  %v7821 = vpack.c.b16 %v7637, %v7635
  %v7822 = vpack.c.b16 %v7640, %v7638
  %v7823 = vpack.c.b16 %v7641, %v7639
  %v7824 = vpack.c.b16 %v7644, %v7642
  %v7825 = vpack.c.b16 %v7645, %v7643
  %v7826 = vpack.c.b16 %v7648, %v7646
  %v7827 = vpack.c.b16 %v7649, %v7647
  %v7828 = vpack.c.b16 %v7652, %v7650
  %v7829 = vpack.c.b16 %v7653, %v7651
  %v7830 = vpack.c.b16 %v7656, %v7654
  %v7831 = vpack.c.b16 %v7657, %v7655
  %v7832 = vpack.c.b16 %v7660, %v7658
  %v7833 = vpack.c.b16 %v7661, %v7659
  %v7834 = vpack.c.b16 %v7664, %v7662
  %v7835 = vpack.c.b16 %v7665, %v7663
  %v7836 = vpack.c.b16 %v7668, %v7666
  %v7837 = vpack.c.b16 %v7669, %v7667
  %v7838 = vpack.c.b16 %v7672, %v7670
  %v7839 = vpack.c.b16 %v7673, %v7671
  %v7840 = vpack.c.b16 %v7676, %v7674
  %v7841 = vpack.c.b16 %v7677, %v7675
  %v7842 = vpack.c.b16 %v7680, %v7678
  %v7843 = vpack.c.b16 %v7681, %v7679
  %v7844 = vpack.c.b16 %v7684, %v7682
  %v7845 = vpack.c.b16 %v7685, %v7683
  %v7846 = vpack.c.b16 %v7688, %v7686
  %v7847 = vpack.c.b16 %v7689, %v7687
  %v7848 = vpack.c.b16 %v7692, %v7690
  %v7849 = vpack.c.b16 %v7693, %v7691
  %v7850 = vpack.c.b16 %v7696, %v7694
  %v7851 = vpack.c.b16 %v7697, %v7695
  %v7852 = vpack.c.b16 %v7700, %v7698
  %v7853 = vpack.c.b16 %v7701, %v7699
  %v7854 = vpack.c.b16 %v7704, %v7702
  %v7855 = vpack.c.b16 %v7705, %v7703
  %v7856 = vpack.c.b16 %v7708, %v7706
  %v7857 = vpack.c.b16 %v7709, %v7707
  %v7858 = vpack.c.b16 %v7712, %v7710
  %v7859 = vpack.c.b16 %v7713, %v7711
  %v7860 = vpack.c.b16 %v7716, %v7714
  %v7861 = vpack.c.b16 %v7717, %v7715
  %v7862 = vpack.c.b16 %v7720, %v7718
  %v7863 = vpack.c.b16 %v7721, %v7719
  %v7864 = vpack.c.b16 %v7724, %v7722
  %v7865 = vpack.c.b16 %v7725, %v7723
  %v7866 = vpack.c.b16 %v7728, %v7726
  %v7867 = vpack.c.b16 %v7729, %v7727
  %v7868 = vpack.c.b16 %v7732, %v7730
  %v7869 = vpack.c.b16 %v7733, %v7731
  %v7870 = vpack.c.b16 %v7736, %v7734
  %v7871 = vpack.c.b16 %v7737, %v7735
  %v7872 = vpack.c.b16 %v7740, %v7738
  %v7873 = vpack.c.b16 %v7741, %v7739
  %v7874 = vpack.c.b16 %v7744, %v7742
  %v7875 = vpack.c.b16 %v7745, %v7743
  %v7876 = vpack.c.b16 %v7748, %v7746
  %v7877 = vpack.c.b16 %v7749, %v7747
  %v7878 = vpack.c.b16 %v7752, %v7750
  %v7879 = vpack.c.b16 %v7753, %v7751
  %v7880 = vpack.c.b16 %v7756, %v7754
  %v7881 = vpack.c.b16 %v7757, %v7755
  %v7882 = vpack.c.b16 %v7760, %v7758
  %v7883 = vpack.c.b16 %v7761, %v7759
  %v7884 = vpack.c.b16 %v7764, %v7762
  %v7885 = vpack.c.b16 %v7765, %v7763
  %v7886 = vpack.c.b16 %v7768, %v7766
  %v7887 = vpack.c.b16 %v7769, %v7767
  %v7888 = vpack.c.b16 %v7772, %v7770
  %v7889 = vpack.c.b16 %v7773, %v7771
  %v7890 = vpack.c.b16 %v7776, %v7774
  %v7891 = vpack.c.b16 %v7777, %v7775
  %v7892 = vpack.c.b16 %v7780, %v7778
  %v7893 = vpack.c.b16 %v7781, %v7779
  %v7894 = vpack.c.b16 %v7784, %v7782
  %v7895 = vpack.c.b16 %v7785, %v7783
  %v7896 = vpack.c.b16 %v7788, %v7786
  %v7897 = vpack.c.b16 %v7789, %v7787
  %v7898 = vpack.c.b16 %v7792, %v7790
  %v7899 = vpack.c.b16 %v7793, %v7791
  %v7900 = vpack.c.b16 %v7796, %v7794
  %v7901 = vpack.c.b16 %v7797, %v7795
  %v7902 = vpack.c.b16 %v7800, %v7798
  %v7903 = vpack.c.b16 %v7801, %v7799
  %v7904 = vpack.c.b16 %v7804, %v7802
  %v7905 = vpack.c.b16 %v7805, %v7803
  %v8007 = vsel %vm1247, %v7393, 0
  %8009 = vmatprep.subr.bf16.mxu0 %v7807
  %8010 = vmatpush1.bf16.msra.mxu0 %v7806
  %8011 = vmatprep.subr.bf16.mxu0 %v7809
  %8012 = vmatpush1.bf16.msra.mxu0 %v7808
  %8013 = vmatprep.subr.bf16.mxu0 %v7811
  %8014 = vmatpush1.bf16.msra.mxu0 %v7810
  %8015 = vmatprep.subr.bf16.mxu0 %v7813
  %8016 = vmatpush1.bf16.msra.mxu0 %v7812
  %8017 = vmatprep.subr.bf16.mxu0 %v7815
  %8018 = vmatpush1.bf16.msra.mxu0 %v7814
  %8019 = vmatprep.subr.bf16.mxu0 %v7817
  %8020 = vmatpush1.bf16.msra.mxu0 %v7816
  %8021 = vmatprep.subr.bf16.mxu0 %v7819
  %8022 = vmatpush1.bf16.msra.mxu0 %v7818
  %8023 = vmatprep.subr.bf16.mxu0 %v7821
  %8024 = vmatpush1.bf16.msra.mxu0 %v7820
  %8025 = vmatprep.subr.bf16.mxu0 %v7823
  %8026 = vmatpush1.bf16.msra.mxu0 %v7822
  %8027 = vmatprep.subr.bf16.mxu0 %v7825
  %8028 = vmatpush1.bf16.msra.mxu0 %v7824
  %8029 = vmatprep.subr.bf16.mxu0 %v7827
  %8030 = vmatpush1.bf16.msra.mxu0 %v7826
  %8031 = vmatprep.subr.bf16.mxu0 %v7829
  %8032 = vmatpush1.bf16.msra.mxu0 %v7828
  %8033 = vmatprep.subr.bf16.mxu0 %v7831
  %8034 = vmatpush1.bf16.msra.mxu0 %v7830
  %8035 = vmatprep.subr.bf16.mxu0 %v7833
  %8036 = vmatpush1.bf16.msra.mxu0 %v7832
  %8037 = vmatprep.subr.bf16.mxu0 %v7835
  %8038 = vmatpush1.bf16.msra.mxu0 %v7834
  %8039 = vmatprep.subr.bf16.mxu0 %v7837
  %8040 = vmatpush1.bf16.msra.mxu0 %v7836
  %8041 = vmatprep.mubr.bf16.mxu0 %v7388
  %8042 = vmatmul.mubr.bf16.gmra.mrb[0].mxu0 %v7387
  %v8043 = vpop.f32.mrb[0].mxu0
  %v8044 = vadd.f32 %v7499, %v8043
  %v8045 = vpop.f32.mrb[0].mxu0
  %v8046 = vadd.f32 %v7503, %v8045
  %v8047 = vpop.f32.mrb[0].mxu0
  %v8048 = vpop.f32.mrb[0].mxu0
  %8049 = vdwg.mxu0
  %8050 = vmatprep.subr.bf16.mxu0 %v7839
  %8051 = vmatpush1.bf16.msra.mxu0 %v7838
  %8052 = vmatprep.subr.bf16.mxu0 %v7841
  %8053 = vmatpush1.bf16.msra.mxu0 %v7840
  %8054 = vmatprep.subr.bf16.mxu0 %v7843
  %8055 = vmatpush1.bf16.msra.mxu0 %v7842
  %8056 = vmatprep.subr.bf16.mxu0 %v7845
  %8057 = vmatpush1.bf16.msra.mxu0 %v7844
  %8058 = vmatprep.subr.bf16.mxu0 %v7847
  %8059 = vmatpush1.bf16.msra.mxu0 %v7846
  %8060 = vmatprep.subr.bf16.mxu0 %v7849
  %8061 = vmatpush1.bf16.msra.mxu0 %v7848
  %8062 = vmatprep.subr.bf16.mxu0 %v7851
  %8063 = vmatpush1.bf16.msra.mxu0 %v7850
  %8064 = vmatprep.subr.bf16.mxu0 %v7853
  %8065 = vmatpush1.bf16.msra.mxu0 %v7852
  %8066 = vmatprep.subr.bf16.mxu0 %v7855
  %8067 = vmatpush1.bf16.msra.mxu0 %v7854
  %8068 = vmatprep.subr.bf16.mxu0 %v7857
  %8069 = vmatpush1.bf16.msra.mxu0 %v7856
  %8070 = vmatprep.subr.bf16.mxu0 %v7859
  %8071 = vmatpush1.bf16.msra.mxu0 %v7858
  %8072 = vmatprep.subr.bf16.mxu0 %v7861
  %8073 = vmatpush1.bf16.msra.mxu0 %v7860
  %8074 = vmatprep.subr.bf16.mxu0 %v7863
  %8075 = vmatpush1.bf16.msra.mxu0 %v7862
  %8076 = vmatprep.subr.bf16.mxu0 %v7865
  %8077 = vmatpush1.bf16.msra.mxu0 %v7864
  %8078 = vmatprep.subr.bf16.mxu0 %v7867
  %8079 = vmatpush1.bf16.msra.mxu0 %v7866
  %8080 = vmatprep.subr.bf16.mxu0 %v7869
  %8081 = vmatpush1.bf16.msra.mxu0 %v7868
  %8082 = vmatprep.mubr.bf16.mxu0 %v7390
  %8083 = vmatmul.mubr.bf16.gmra.mrb[0].mxu0 %v7389
  %v8084 = vpop.f32.mrb[0].mxu0
  %v8085 = vadd.f32 %v8044, %v8084
  %v8086 = vpop.f32.mrb[0].mxu0
  %v8087 = vadd.f32 %v8046, %v8086
  %v8088 = vpop.f32.mrb[0].mxu0
  %v8089 = vpop.f32.mrb[0].mxu0
  %8090 = vdwg.mxu0
  %8091 = vmatprep.subr.bf16.mxu0 %v7871
  %8092 = vmatpush1.bf16.msra.mxu0 %v7870
  %8093 = vmatprep.subr.bf16.mxu0 %v7873
  %8094 = vmatpush1.bf16.msra.mxu0 %v7872
  %8095 = vmatprep.subr.bf16.mxu0 %v7875
  %8096 = vmatpush1.bf16.msra.mxu0 %v7874
  %8097 = vmatprep.subr.bf16.mxu0 %v7877
  %8098 = vmatpush1.bf16.msra.mxu0 %v7876
  %8099 = vmatprep.subr.bf16.mxu0 %v7879
  %8100 = vmatpush1.bf16.msra.mxu0 %v7878
  %8101 = vmatprep.subr.bf16.mxu0 %v7881
  %8102 = vmatpush1.bf16.msra.mxu0 %v7880
  %8103 = vmatprep.subr.bf16.mxu0 %v7883
  %8104 = vmatpush1.bf16.msra.mxu0 %v7882
  %8105 = vmatprep.subr.bf16.mxu0 %v7885
  %8106 = vmatpush1.bf16.msra.mxu0 %v7884
  %8107 = vmatprep.subr.bf16.mxu0 %v7887
  %8108 = vmatpush1.bf16.msra.mxu0 %v7886
  %8109 = vmatprep.subr.bf16.mxu0 %v7889
  %8110 = vmatpush1.bf16.msra.mxu0 %v7888
  %8111 = vmatprep.subr.bf16.mxu0 %v7891
  %8112 = vmatpush1.bf16.msra.mxu0 %v7890
  %8113 = vmatprep.subr.bf16.mxu0 %v7893
  %8114 = vmatpush1.bf16.msra.mxu0 %v7892
  %8115 = vmatprep.subr.bf16.mxu0 %v7895
  %8116 = vmatpush1.bf16.msra.mxu0 %v7894
  %8117 = vmatprep.subr.bf16.mxu0 %v7897
  %8118 = vmatpush1.bf16.msra.mxu0 %v7896
  %8119 = vmatprep.subr.bf16.mxu0 %v7899
  %8120 = vmatpush1.bf16.msra.mxu0 %v7898
  %8121 = vmatprep.subr.bf16.mxu0 %v7901
  %8122 = vmatpush1.bf16.msra.mxu0 %v7900
  %8123 = vmatprep.mubr.bf16.mxu0 %v7392
  %8124 = vmatmul.mubr.bf16.gmra.mrb[0].mxu0 %v7391
  %v8125 = vpop.f32.mrb[0].mxu0
  %v8126 = vadd.f32 %v8085, %v8125
  %v8127 = vpop.f32.mrb[0].mxu0
  %v8128 = vadd.f32 %v8087, %v8127
  %v8129 = vpop.f32.mrb[0].mxu0
  %v8130 = vpop.f32.mrb[0].mxu0
  %8131 = vdwg.mxu0
  %8132 = vmatprep.subr.bf16.mxu0 %v7903
  %8133 = vmatpush1.bf16.msra.mxu0 %v7902
  %8134 = vmatprep.subr.bf16.mxu0 %v7905
  %8135 = vmatpush1.bf16.msra.mxu0 %v7904
  %8136 = vmatprep.subr.bf16.mxu0 0
  %8137 = vmatpush1.bf16.msra.mxu0 0
  %8138 = vmatprep.subr.bf16.mxu0 0
  %8139 = vmatpush1.bf16.msra.mxu0 0
  %8140 = vmatprep.subr.bf16.mxu0 0
  %8141 = vmatpush1.bf16.msra.mxu0 0
  %8142 = vmatprep.subr.bf16.mxu0 0
  %8143 = vmatpush1.bf16.msra.mxu0 0
  %8144 = vmatprep.subr.bf16.mxu0 0
  %8145 = vmatpush1.bf16.msra.mxu0 0
  %8146 = vmatprep.subr.bf16.mxu0 0
  %8147 = vmatpush1.bf16.msra.mxu0 0
  %8148 = vmatprep.subr.bf16.mxu0 0
  %8149 = vmatpush1.bf16.msra.mxu0 0
  %8150 = vmatprep.subr.bf16.mxu0 0
  %8151 = vmatpush1.bf16.msra.mxu0 0
  %8152 = vmatprep.subr.bf16.mxu0 0
  %8153 = vmatpush1.bf16.msra.mxu0 0
  %8154 = vmatprep.subr.bf16.mxu0 0
  %8155 = vmatpush1.bf16.msra.mxu0 0
  %8156 = vmatprep.subr.bf16.mxu0 0
  %8157 = vmatpush1.bf16.msra.mxu0 0
  %8158 = vmatprep.subr.bf16.mxu0 0
  %8159 = vmatpush1.bf16.msra.mxu0 0
  %8160 = vmatprep.subr.bf16.mxu0 0
  %8161 = vmatpush1.bf16.msra.mxu0 0
  %8162 = vmatprep.subr.bf16.mxu0 0
  %8163 = vmatpush1.bf16.msra.mxu0 0
  %8164 = vmatprep.mubr.bf16.mxu0 0
  %8165 = vmatmul.mubr.bf16.gmra.mrb[0].mxu0 %v8007
  %v8166 = vpop.f32.mrb[0].mxu0
  %v8167 = vadd.f32 %v8126, %v8166
  %v8168 = vpop.f32.mrb[0].mxu0
  %v8169 = vadd.f32 %v8128, %v8168
  %v8170 = vpop.f32.mrb[0].mxu0
  %v8171 = vpop.f32.mrb[0].mxu0
  %8172 = vdwg.mxu0
  %v8173 = vlaneseq
  %v8174 = vand.u32 %v8173, 127
  %v8175 = vadd.s32 %v8174, 128
  %vm8176 = vcmp.ge.s32.totalorder %v8174, 0
  %vm8177 = vcmp.ge.s32.totalorder %v8175, 0
  %vm8178 = vcmp.lt.s32.totalorder %v8174, 51
  %vm8179 = vcmp.lt.s32.totalorder %v8175, 51
  %vm8180 = vmand %vm8176, %vm8178
  %vm8181 = vmand %vm8177, %vm8179
  %v8182 = vsel %vm8180, %v8167, -1e+30
  %v8183 = vsel %vm8181, %v8169, -1e+30
  %v8184 = vsel %vm251, %v8182, -inf
  %v8185 = vsel %vm251, %v8183, -inf
  %v8186 = vmax.f32 %v8184, %v8185
  %8187 = vmax.xlane.f32.xlu0 %v8186
  %v8188 = vpop.xlane.xlu0 %8187
  %v8189 = vsel %vm8180, %v8167, %v8188
  %v8190 = vsel %vm8181, %v8169, %v8188
  %v8191 = vsub.f32 %v8189, %v8188
  %v8192 = vsub.f32 %v8190, %v8188
  %v8193 = vmul.f32 %v8191, 1.442695
  %v8194 = vpow.pop %v8193
  %v8195 = vmul.f32 %v8192, 1.442695
  %v8196 = vpow.pop %v8195
  %v8197 = vsel %vm8180, %v8194, 0.0
  %v8198 = vsel %vm8181, %v8196, 0.0
  %v8199 = vsel %vm251, %v8197, 0.0
  %v8200 = vsel %vm251, %v8198, 0.0
  %v8201 = vadd.f32 %v8199, %v8200
  %8202 = vadd.xlane.f32.xlu0 %v8201
  %v8203 = vpop.xlane.xlu0 %8202
  %v8204 = vrcp.pop %v8203
  %v8205 = vmul.f32 %v8197, %v8204
  %v8206 = vmul.f32 %v8198, %v8204
  %v8207 = vadd.f32 %v8205, 0.0
  %v8208 = vadd.f32 %v8206, 0.0
  %vm8209 = vcmp.ge.s32.totalorder %v8174, 64
  %vm8210 = vcmp.ge.s32.totalorder %v8175, 64
  %vm8211 = vcmp.lt.s32.totalorder %v8174, 115
  %vm8212 = vcmp.lt.s32.totalorder %v8175, 115
  %vm8213 = vmand %vm8209, %vm8211
  %vm8214 = vmand %vm8210, %vm8212
  %v8215 = vsel %vm8213, %v8167, -1e+30
  %v8216 = vsel %vm8214, %v8169, -1e+30
  %v8217 = vsel %vm251, %v8215, -inf
  %v8218 = vsel %vm251, %v8216, -inf
  %v8219 = vmax.f32 %v8217, %v8218
  %8220 = vmax.xlane.f32.xlu0 %v8219
  %v8221 = vpop.xlane.xlu0 %8220
  %v8222 = vsel %vm8213, %v8167, %v8221
  %v8223 = vsel %vm8214, %v8169, %v8221
  %v8224 = vsub.f32 %v8222, %v8221
  %v8225 = vsub.f32 %v8223, %v8221
  %v8226 = vmul.f32 %v8224, 1.442695
  %v8227 = vpow.pop %v8226
  %v8228 = vmul.f32 %v8225, 1.442695
  %v8229 = vpow.pop %v8228
  %v8230 = vsel %vm8213, %v8227, 0.0
  %v8231 = vsel %vm8214, %v8229, 0.0
  %v8232 = vsel %vm251, %v8230, 0.0
  %v8233 = vsel %vm251, %v8231, 0.0
  %v8234 = vadd.f32 %v8232, %v8233
  %8235 = vadd.xlane.f32.xlu0 %v8234
  %v8236 = vpop.xlane.xlu0 %8235
  %v8237 = vrcp.pop %v8236
  %v8238 = vmul.f32 %v8230, %v8237
  %v8239 = vmul.f32 %v8231, %v8237
  %v8240 = vadd.f32 %v8207, %v8238
  %v8241 = vadd.f32 %v8208, %v8239
  %vm8242 = vcmp.ge.s32.totalorder %v8174, 128
  %vm8243 = vcmp.ge.s32.totalorder %v8175, 128
  %vm8244 = vcmp.lt.s32.totalorder %v8174, 179
  %vm8245 = vcmp.lt.s32.totalorder %v8175, 179
  %vm8246 = vmand %vm8242, %vm8244
  %vm8247 = vmand %vm8243, %vm8245
  %v8248 = vsel %vm8246, %v8167, -1e+30
  %v8249 = vsel %vm8247, %v8169, -1e+30
  %v8250 = vsel %vm251, %v8248, -inf
  %v8251 = vsel %vm251, %v8249, -inf
  %v8252 = vmax.f32 %v8250, %v8251
  %8253 = vmax.xlane.f32.xlu0 %v8252
  %v8254 = vpop.xlane.xlu0 %8253
  %v8255 = vsel %vm8246, %v8167, %v8254
  %v8256 = vsel %vm8247, %v8169, %v8254
  %v8257 = vsub.f32 %v8255, %v8254
  %v8258 = vsub.f32 %v8256, %v8254
  %v8259 = vmul.f32 %v8257, 1.442695
  %v8260 = vpow.pop %v8259
  %v8261 = vmul.f32 %v8258, 1.442695
  %v8262 = vpow.pop %v8261
  %v8263 = vsel %vm8246, %v8260, 0.0
  %v8264 = vsel %vm8247, %v8262, 0.0
  %v8265 = vsel %vm251, %v8263, 0.0
  %v8266 = vsel %vm251, %v8264, 0.0
  %v8267 = vadd.f32 %v8265, %v8266
  %8268 = vadd.xlane.f32.xlu0 %v8267
  %v8269 = vpop.xlane.xlu0 %8268
  %v8270 = vrcp.pop %v8269
  %v8271 = vmul.f32 %v8263, %v8270
  %v8272 = vmul.f32 %v8264, %v8270
  %v8273 = vadd.f32 %v8240, %v8271
  %v8274 = vadd.f32 %v8241, %v8272
  %vm8275 = vcmp.ge.s32.totalorder %v8174, 192
  %vm8276 = vcmp.ge.s32.totalorder %v8175, 192
  %vm8277 = vcmp.lt.s32.totalorder %v8174, 243
  %vm8278 = vcmp.lt.s32.totalorder %v8175, 243
  %vm8279 = vmand %vm8275, %vm8277
  %vm8280 = vmand %vm8276, %vm8278
  %v8281 = vsel %vm8279, %v8167, -1e+30
  %v8282 = vsel %vm8280, %v8169, -1e+30
  %v8283 = vsel %vm251, %v8281, -inf
  %v8284 = vsel %vm251, %v8282, -inf
  %v8285 = vmax.f32 %v8283, %v8284
  %8286 = vmax.xlane.f32.xlu0 %v8285
  %v8287 = vpop.xlane.xlu0 %8286
  %v8288 = vsel %vm8279, %v8167, %v8287
  %v8289 = vsel %vm8280, %v8169, %v8287
  %v8290 = vsub.f32 %v8288, %v8287
  %v8291 = vsub.f32 %v8289, %v8287
  %v8292 = vmul.f32 %v8290, 1.442695
  %v8293 = vpow.pop %v8292
  %v8294 = vmul.f32 %v8291, 1.442695
  %v8295 = vpow.pop %v8294
  %v8296 = vsel %vm8279, %v8293, 0.0
  %v8297 = vsel %vm8280, %v8295, 0.0
  %v8298 = vsel %vm251, %v8296, 0.0
  %v8299 = vsel %vm251, %v8297, 0.0
  %v8300 = vadd.f32 %v8298, %v8299
  %8301 = vadd.xlane.f32.xlu0 %v8300
  %v8302 = vpop.xlane.xlu0 %8301
  %v8303 = vrcp.pop %v8302
  %v8304 = vmul.f32 %v8296, %v8303
  %v8305 = vmul.f32 %v8297, %v8303
  %v8306 = vadd.f32 %v8273, %v8304
  %v8307 = vadd.f32 %v8274, %v8305
  %v8310 = vcombine.low %v8306, %v8307
  %v8312 = vunpack.c.l.s4 1983009808
  %v8313 = vunpack.c.0.s8 %v8312
  %v8314 = vlaneseq
  %v8315 = vshrl.u32 %v8314, 7
  %v8316 = vsub.s32 %v8313, %v8315
  %v8317 = vrot.slane %v8310, %v8316
  %8319 = vst [vmem:[%s8] sm:$0xf] %v8317
  // Predicated region
  $region34: #{actor_img_forward.1} parent=0 // pred_check
    _
  $region35: #{actor_img_forward.1} parent=0 // pred_check_branch
    %8321 = sbr.rel (0) target = $region37
  $region36: #{actor_img_forward.1} parent=0 // pred_region
    _
  $region37: #{actor_img_forward.1} parent=0 // pred_fallthru
    _
  // Predicated region
  $region38: #{actor_img_forward.1} parent=0 // pred_check
    _
  $region39: #{actor_img_forward.1} parent=0 // pred_check_branch
    %8323 = sbr.rel (0) target = $region41
  $region40: #{actor_img_forward.1} parent=0 // pred_region
    _
  $region41: #{actor_img_forward.1} parent=0 // pred_fallthru
    _

</llo_original>
